<compile_context>
chip_gen: v7x
topology: tpu7x:2x2x1
jax: 0.10.0
libtpu: 0.0.40
codegen_flags: <defaults>
</compile_context>

<pallas_src>
import jax
import jax.numpy as jnp
from jax import lax
from jax.experimental import pallas as pl
from jax.experimental.pallas import tpu as pltpu

EPS = 1e-5


def _vmem_limit_bytes():
    """Per-generation VMEM budget: ~3/4 of physical capacity (=> ~96 MiB on 128 MiB v5e/v6e,
    ~48 MiB on 64 MiB v7x), with a conservative fallback if the query is unavailable."""
    try:
        cap = int(pltpu.get_tpu_info().vmem_capacity_bytes)
    except Exception:
        cap = 64 * 1024 * 1024
    return max(32 * 1024 * 1024, (cap * 3) // 4)


def _largest_tile(total, multiple, cap):
    """Largest divisor of `total` that is a multiple of `multiple` and <= cap, else `total`."""
    cap = min(cap, total)
    for cand in range(cap, 0, -1):
        if cand % multiple == 0 and total % cand == 0:
            return cand
    return total


def _scale_shift(sum_ref, sumsq_ref, g_ref, b_ref, count):
    """Fold training-mode BatchNorm (batch stats, biased var, eps) into scale & shift (f32)."""
    mean = sum_ref[...] / count
    var = sumsq_ref[...] / count - mean * mean
    inv = lax.rsqrt(var + EPS)
    scale = g_ref[...] * inv
    shift = b_ref[...] - mean * scale
    return scale, shift


def bottleneck_forward(x_nchw, w1_hwio, w2_hwio, w3_hwio, g1, b1, g2, b2, g3, b3):
    """x_nchw: (N, Cin, H, W) float32, PyTorch layout. Returns NCHW float32 output."""
    N, Cin, H, W = x_nchw.shape
    P = w1_hwio.shape[-1]
    Cout = w3_hwio.shape[-1]
    assert Cout == Cin, "downsample=None requires inplanes == 4 * planes"

    HW = H * W
    M = N * HW
    count = float(M)                       # BN batch-stat count (per-channel over N,H,W)
    vmem_limit = _vmem_limit_bytes()

    # NCHW stays NCHW: this reshape is free (no transposed HBM copy is ever made).
    x3 = x_nchw.reshape(N, Cin, HW).astype(jnp.float32)

    # Conv weights as bf16 MXU operands (accumulation is f32 in-kernel).
    w1f = w1_hwio.reshape(Cin, P).astype(jnp.bfloat16)        # (Cin, P)
    w2f = w2_hwio.reshape(9 * P, P).astype(jnp.bfloat16)      # (ky*3+kx)*P + i  ->  o
    w3f = w3_hwio.reshape(P, Cout).astype(jnp.bfloat16)       # (P, Cout)

    g1r = g1.reshape(1, P).astype(jnp.float32)
    b1r = b1.reshape(1, P).astype(jnp.float32)
    g2r = g2.reshape(1, P).astype(jnp.float32)
    b2r = b2.reshape(1, P).astype(jnp.float32)
    g3r = g3.reshape(1, Cout).astype(jnp.float32)
    b3r = b3.reshape(1, Cout).astype(jnp.float32)

    def cparams(sem):
        return pltpu.CompilerParams(dimension_semantics=sem,
                                    vmem_limit_bytes=vmem_limit)

    # ------------------------------------------------------------------------------
    # Kernel 1: conv1 (1x1) from NCHW tiles + per-tile batch sum / sumsq of its output.
    # ------------------------------------------------------------------------------
    # VMEM per step ~ 2*(Cin*THW1*4) [x, dbl-buffered] + 2*(THW1*P*2) [h1] + f32 temps.
    bytes_per_col1 = 2 * Cin * 4 + 2 * P * 2 + 6 * max(Cin, P) * 4
    cap1 = max(128, ((vmem_limit // 3) // max(bytes_per_col1, 1)) // 128 * 128)
    THW1 = _largest_tile(HW, 128, cap1)
    G1 = HW // THW1

    def conv1_kernel(x_ref, w_ref, h_ref, s_ref, ss_ref):
        # Fold NCHW->NHWC into the kernel: transpose the (Cin, THW1) tile (XLU has slack).
        xt = jnp.transpose(x_ref[0])                                    # (THW1, Cin) f32
        h = jnp.dot(xt.astype(jnp.bfloat16), w_ref[...],
                    preferred_element_type=jnp.float32)                 # (THW1, P) f32
        h_ref[0] = h.astype(jnp.bfloat16)                               # bf16 HBM stream
        s_ref[0, 0] = jnp.sum(h, axis=0, keepdims=True)                 # f32 partial stats
        ss_ref[0, 0] = jnp.sum(h * h, axis=0, keepdims=True)

    h1, s1p, ss1p = pl.pallas_call(
        conv1_kernel,
        grid=(N, G1),
        in_specs=[pl.BlockSpec((1, Cin, THW1), lambda n, j: (n, 0, j)),
                  pl.BlockSpec((Cin, P), lambda n, j: (0, 0))],
        out_specs=[pl.BlockSpec((1, THW1, P), lambda n, j: (n, j, 0)),
                   pl.BlockSpec((1, 1, 1, P), lambda n, j: (n, j, 0, 0)),
                   pl.BlockSpec((1, 1, 1, P), lambda n, j: (n, j, 0, 0))],
        out_shape=[jax.ShapeDtypeStruct((N, HW, P), jnp.bfloat16),
                   jax.ShapeDtypeStruct((N, G1, 1, P), jnp.float32),
                   jax.ShapeDtypeStruct((N, G1, 1, P), jnp.float32)],
        compiler_params=cparams(("parallel", "parallel")),
    )(x3, w1f)

    s1 = jnp.sum(s1p, axis=(0, 1))       # (1, P) exact batch stats (tiny XLA reduce)
    ss1 = jnp.sum(ss1p, axis=(0, 1))

    # ------------------------------------------------------------------------------
    # Kernel 2: bn1 + relu + conv2 (3x3, padding=1) as nine accumulating MXU matmuls.
    # ------------------------------------------------------------------------------
    h1_4d = h1.reshape(N, H, W, P)       # free reshape

    def conv2_kernel(h1_ref, s1_ref, ss1_ref, g_ref, b_ref, w_ref,
                     h2_ref, s2_ref, ss2_ref, pad_ref):
        # Zero only the 1-pixel border each step (parallel-safe: no cross-step state;
        # the interior is fully rewritten below).
        zrow = jnp.zeros((1, W + 2, P), jnp.float32)
        zcol = jnp.zeros((H + 2, 1, P), jnp.float32)
        pad_ref[0:1, :, :] = zrow
        pad_ref[H + 1:H + 2, :, :] = zrow
        pad_ref[:, 0:1, :] = zcol
        pad_ref[:, W + 1:W + 2, :] = zcol

        scale, shift = _scale_shift(s1_ref, ss1_ref, g_ref, b_ref, count)    # (1, P)
        hn = jnp.maximum(h1_ref[0].astype(jnp.float32) * scale.reshape(1, 1, P)
                         + shift.reshape(1, 1, P), 0.0)                      # (H, W, P) f32
        pad_ref[1:H + 1, 1:W + 1, :] = hn

        # 3x3 conv: nine accumulating (HW, P) x (P, P) matmuls -- no im2col concatenate.
        acc = jnp.zeros((HW, P), jnp.float32)
        t = 0
        for dy in range(3):
            for dx in range(3):
                tap = pad_ref[dy:dy + H, dx:dx + W, :].reshape(HW, P)
                acc = acc + jnp.dot(tap.astype(jnp.bfloat16),
                                    w_ref[t * P:(t + 1) * P, :],
                                    preferred_element_type=jnp.float32)
                t += 1

        h2_ref[0] = acc.astype(jnp.bfloat16)
        s2_ref[0] = jnp.sum(acc, axis=0, keepdims=True)
        ss2_ref[0] = jnp.sum(acc * acc, axis=0, keepdims=True)

    h2, s2p, ss2p = pl.pallas_call(
        conv2_kernel,
        grid=(N,),
        in_specs=[pl.BlockSpec((1, H, W, P), lambda n: (n, 0, 0, 0)),
                  pl.BlockSpec((1, P), lambda n: (0, 0)),
                  pl.BlockSpec((1, P), lambda n: (0, 0)),
                  pl.BlockSpec((1, P), lambda n: (0, 0)),
                  pl.BlockSpec((1, P), lambda n: (0, 0)),
                  pl.BlockSpec((9 * P, P), lambda n: (0, 0))],
        out_specs=[pl.BlockSpec((1, HW, P), lambda n: (n, 0, 0)),
                   pl.BlockSpec((1, 1, P), lambda n: (n, 0, 0)),
                   pl.BlockSpec((1, 1, P), lambda n: (n, 0, 0))],
        out_shape=[jax.ShapeDtypeStruct((N, HW, P), jnp.bfloat16),
                   jax.ShapeDtypeStruct((N, 1, P), jnp.float32),
                   jax.ShapeDtypeStruct((N, 1, P), jnp.float32)],
        scratch_shapes=[pltpu.VMEM((H + 2, W + 2, P), jnp.float32)],
        compiler_params=cparams(("parallel",)),
    )(h1_4d, s1, ss1, g1r, b1r, w2f)

    s2 = jnp.sum(s2p, axis=0)            # (1, P)
    ss2 = jnp.sum(ss2p, axis=0)

    # ------------------------------------------------------------------------------
    # Kernel 3: bn2 + relu + conv3 (1x1) with large VMEM-sized row tiles.
    # ------------------------------------------------------------------------------
    h2_2d = h2.reshape(M, P)             # free reshape
    bytes_per_row3 = 2 * P * 2 + 2 * Cout * 2 + 6 * (P + Cout)
    cap3 = max(256, min(8192, ((vmem_limit // 3) // max(bytes_per_row3, 1)) // 8 * 8))
    TM3 = _largest_tile(M, 8, cap3)
    G3 = M // TM3

    def conv3_kernel(h2_ref, s2_ref, ss2_ref, g_ref, b_ref, w_ref,
                     h3_ref, s3_ref, ss3_ref):
        scale, shift = _scale_shift(s2_ref, ss2_ref, g_ref, b_ref, count)
        hn = jnp.maximum(h2_ref[...].astype(jnp.float32) * scale + shift, 0.0)
        h3 = jnp.dot(hn.astype(jnp.bfloat16), w_ref[...],
                     preferred_element_type=jnp.float32)                  # (TM3, Cout) f32
        h3_ref[...] = h3.astype(jnp.bfloat16)
        s3_ref[0] = jnp.sum(h3, axis=0, keepdims=True)
        ss3_ref[0] = jnp.sum(h3 * h3, axis=0, keepdims=True)

    h3, s3p, ss3p = pl.pallas_call(
        conv3_kernel,
        grid=(G3,),
        in_specs=[pl.BlockSpec((TM3, P), lambda i: (i, 0)),
                  pl.BlockSpec((1, P), lambda i: (0, 0)),
                  pl.BlockSpec((1, P), lambda i: (0, 0)),
                  pl.BlockSpec((1, P), lambda i: (0, 0)),
                  pl.BlockSpec((1, P), lambda i: (0, 0)),
                  pl.BlockSpec((P, Cout), lambda i: (0, 0))],
        out_specs=[pl.BlockSpec((TM3, Cout), lambda i: (i, 0)),
                   pl.BlockSpec((1, 1, Cout), lambda i: (i, 0, 0)),
                   pl.BlockSpec((1, 1, Cout), lambda i: (i, 0, 0))],
        out_shape=[jax.ShapeDtypeStruct((M, Cout), jnp.bfloat16),
                   jax.ShapeDtypeStruct((G3, 1, Cout), jnp.float32),
                   jax.ShapeDtypeStruct((G3, 1, Cout), jnp.float32)],
        compiler_params=cparams(("parallel",)),
    )(h2_2d, s2, ss2, g2r, b2r, w3f)

    s3 = jnp.sum(s3p, axis=0)            # (1, Cout)
    ss3 = jnp.sum(ss3p, axis=0)

    # ------------------------------------------------------------------------------
    # Kernel 4: bn3 + residual + relu. Residual read and output store are NCHW tiles
    # (lane dim = HW tile, lane-dense); the NHWC->NCHW transpose happens in-kernel.
    # ------------------------------------------------------------------------------
    h3_3d = h3.reshape(N, HW, Cout)      # free reshape
    bytes_per_col4 = 2 * Cout * 2 + 4 * Cout * 4 + 6 * Cout * 4
    cap4 = max(128, ((vmem_limit // 3) // max(bytes_per_col4, 1)) // 128 * 128)
    THW4 = _largest_tile(HW, 128, cap4)
    G4 = HW // THW4

    def fuse_kernel(h3_ref, x_ref, s_ref, ss_ref, g_ref, b_ref, o_ref):
        scale, shift = _scale_shift(s_ref, ss_ref, g_ref, b_ref, count)      # (1, Cout)
        hn = h3_ref[0].astype(jnp.float32) * scale + shift                   # (THW4, Cout)
        o_ref[0] = jnp.maximum(jnp.transpose(hn) + x_ref[0], 0.0)            # (Cout, THW4)

    out3 = pl.pallas_call(
        fuse_kernel,
        grid=(N, G4),
        in_specs=[pl.BlockSpec((1, THW4, Cout), lambda n, j: (n, j, 0)),
                  pl.BlockSpec((1, Cout, THW4), lambda n, j: (n, 0, j)),
                  pl.BlockSpec((1, Cout), lambda n, j: (0, 0)),
                  pl.BlockSpec((1, Cout), lambda n, j: (0, 0)),
                  pl.BlockSpec((1, Cout), lambda n, j: (0, 0)),
                  pl.BlockSpec((1, Cout), lambda n, j: (0, 0))],
        out_specs=pl.BlockSpec((1, Cout, THW4), lambda n, j: (n, 0, j)),
        out_shape=jax.ShapeDtypeStruct((N, Cout, HW), jnp.float32),
        compiler_params=cparams(("parallel", "parallel")),
    )(h3_3d, x3, s3, ss3, g3r, b3r)

    return out3.reshape(N, Cout, H, W)   # free reshape, already NCHW


def reference_forward(x_nchw, w1, w2, w3, g1, b1, g2, b2, g3, b3):
    """Pure-JAX f32 reference (XLA convs) for validation."""
    dn = ("NHWC", "HWIO", "NHWC")

    def bn(h, g, b):
        mean = jnp.mean(h, axis=(0, 1, 2), keepdims=True)
        var = jnp.mean(jnp.square(h - mean), axis=(0, 1, 2), keepdims=True)
        return (h - mean) * lax.rsqrt(var + EPS) * g + b

    x = jnp.transpose(x_nchw, (0, 2, 3, 1))
    h = lax.conv_general_dilated(x, w1, (1, 1), "VALID", dimension_numbers=dn)
    h = jax.nn.relu(bn(h, g1, b1))
    h = lax.conv_general_dilated(h, w2, (1, 1), ((1, 1), (1, 1)), dimension_numbers=dn)
    h = jax.nn.relu(bn(h, g2, b2))
    h = lax.conv_general_dilated(h, w3, (1, 1), "VALID", dimension_numbers=dn)
    h = bn(h, g3, b3)
    h = jax.nn.relu(h + x)
    return jnp.transpose(h, (0, 3, 1, 2))


if __name__ == "__main__":
    # Shapes implied by the module: inplanes = planes * expansion (expansion = 4).
    N, H, W = 2, 16, 16
    planes = 4
    Cin = planes * 4    # 16
    Cout = planes * 4   # 16

    key = jax.random.PRNGKey(0)
    kx, k1, k2, k3 = jax.random.split(key, 4)

    x = jax.random.normal(kx, (N, Cin, H, W), jnp.float32)

    # Deterministic synthetic parameters (HWIO conv weights; conv layers have no bias).
    w1 = 0.2 * jax.random.normal(k1, (1, 1, Cin, planes), jnp.float32)
    w2 = 0.2 * jax.random.normal(k2, (3, 3, planes, planes), jnp.float32)
    w3 = 0.2 * jax.random.normal(k3, (1, 1, planes, Cout), jnp.float32)

    g1 = 1.0 + 0.05 * jnp.arange(planes, dtype=jnp.float32)
    b1 = 0.02 * jnp.arange(planes, dtype=jnp.float32) - 0.03
    g2 = 1.0 - 0.04 * jnp.arange(planes, dtype=jnp.float32)
    b2 = 0.01 * jnp.arange(planes, dtype=jnp.float32)
    g3 = 1.0 + 0.03 * jnp.arange(Cout, dtype=jnp.float32)
    b3 = 0.015 * jnp.arange(Cout, dtype=jnp.float32) - 0.05

    fwd = jax.jit(bottleneck_forward)
    out = jax.block_until_ready(fwd(x, w1, w2, w3, g1, b1, g2, b2, g3, b3))
    ref = jax.block_until_ready(
        reference_forward(x, w1, w2, w3, g1, b1, g2, b2, g3, b3))

    assert out.shape == (N, Cout, H, W)
    max_err = float(jnp.max(jnp.abs(out - ref)))
    # Tolerance covers bf16 MXU operands and bf16 HBM intermediates (h1/h2/h3) vs the
    # all-f32 XLA reference; BN statistics, normalization and the residual add are f32.
    assert bool(jnp.allclose(out, ref, atol=1.5e-1, rtol=1.5e-1)), (
        f"mismatch vs JAX reference (max abs err {max_err})")
    print("KERNEL_OK")
</pallas_src>

<mosaic_0001>
module attributes {stable_mosaic.version = 11 : i64} {
  func.func @conv1_kernel(%arg0: i32, %arg1: i32, %arg2: memref<1x16x256xf32, #tpu.memory_space<vmem>>, %arg3: memref<16x4xbf16, #tpu.memory_space<vmem>>, %arg4: memref<1x256x4xbf16, #tpu.memory_space<vmem>>, %arg5: memref<1x1x1x4xf32, #tpu.memory_space<vmem>>, %arg6: memref<1x1x1x4xf32, #tpu.memory_space<vmem>>) attributes {dimension_semantics = [#tpu.dimension_semantics<parallel>, #tpu.dimension_semantics<parallel>], iteration_bounds = array<i64: 2, 1>, scalar_prefetch = 0 : i64, scratch_operands = 0 : i64, tpu.core_type = #tpu.core_type<tc>, window_params = [{transform_indices = @transform_0, window_bounds = array<i64: 1, 16, 256>}, {pipeline_mode = #tpu.pipeline_mode<synchronous>, transform_indices = @transform_1, window_bounds = array<i64: 16, 4>}, {transform_indices = @transform_2, window_bounds = array<i64: 1, 256, 4>}, {transform_indices = @transform_3, window_bounds = array<i64: 1, 1, 1, 4>}, {transform_indices = @transform_4, window_bounds = array<i64: 1, 1, 1, 4>}]} {
    %c0 = arith.constant 0 : index
    %c0_0 = arith.constant 0 : index
    %c0_1 = arith.constant 0 : index
    %0 = vector.load %arg2[%c0, %c0_0, %c0_1] : memref<1x16x256xf32, #tpu.memory_space<vmem>>, vector<1x16x256xf32>
    %1 = vector.shape_cast %0 : vector<1x16x256xf32> to vector<16x256xf32>
    %2 = tpu.transpose %1, [1, 0] : vector<16x256xf32> -> vector<256x16xf32>
    %3 = arith.truncf %2 : vector<256x16xf32> to vector<256x16xbf16>
    %c0_2 = arith.constant 0 : index
    %c0_3 = arith.constant 0 : index
    %4 = vector.load %arg3[%c0_2, %c0_3] : memref<16x4xbf16, #tpu.memory_space<vmem>>, vector<16x4xbf16>
    %cst = arith.constant dense<0.000000e+00> : vector<256x4xf32>
    %5 = tpu.matmul %3, %4, %cst {dimension_numbers = #tpu.dot_dimension_numbers<[1], [0], [0], [1], [0, 0, 1, 1], [], []>} : vector<256x16xbf16>, vector<16x4xbf16>, vector<256x4xf32> -> vector<256x4xf32>
    %6 = arith.truncf %5 : vector<256x4xf32> to vector<256x4xbf16>
    %c0_4 = arith.constant 0 : index
    %c0_5 = arith.constant 0 : index
    %c0_6 = arith.constant 0 : index
    %7 = vector.load %arg4[%c0_4, %c0_5, %c0_6] : memref<1x256x4xbf16, #tpu.memory_space<vmem>>, vector<1x256x4xbf16>
    %8 = vector.shape_cast %7 : vector<1x256x4xbf16> to vector<256x4xbf16>
    %9 = vector.shape_cast %6 : vector<256x4xbf16> to vector<1x256x4xbf16>
    tpu.vector_store %arg4[%c0_4, %c0_5, %c0_6], %9 {strides = array<i32>} : memref<1x256x4xbf16, #tpu.memory_space<vmem>>, vector<1x256x4xbf16>,
    %cst_7 = arith.constant dense<0.000000e+00> : vector<4xf32>
    %10 = vector.multi_reduction <add>, %5, %cst_7 [0] : vector<256x4xf32> to vector<4xf32>
    %11 = vector.shape_cast %10 : vector<4xf32> to vector<1x4xf32>
    %c0_8 = arith.constant 0 : index
    %c0_9 = arith.constant 0 : index
    %c0_10 = arith.constant 0 : index
    %c0_11 = arith.constant 0 : index
    %12 = vector.load %arg5[%c0_8, %c0_9, %c0_10, %c0_11] : memref<1x1x1x4xf32, #tpu.memory_space<vmem>>, vector<1x1x1x4xf32>
    %13 = vector.shape_cast %12 : vector<1x1x1x4xf32> to vector<1x4xf32>
    %14 = vector.shape_cast %11 : vector<1x4xf32> to vector<1x1x1x4xf32>
    tpu.vector_store %arg5[%c0_8, %c0_9, %c0_10, %c0_11], %14 {strides = array<i32>} : memref<1x1x1x4xf32, #tpu.memory_space<vmem>>, vector<1x1x1x4xf32>,
    %15 = arith.mulf %5, %5 : vector<256x4xf32>
    %cst_12 = arith.constant dense<0.000000e+00> : vector<4xf32>
    %16 = vector.multi_reduction <add>, %15, %cst_12 [0] : vector<256x4xf32> to vector<4xf32>
    %17 = vector.shape_cast %16 : vector<4xf32> to vector<1x4xf32>
    %c0_13 = arith.constant 0 : index
    %c0_14 = arith.constant 0 : index
    %c0_15 = arith.constant 0 : index
    %c0_16 = arith.constant 0 : index
    %18 = vector.load %arg6[%c0_13, %c0_14, %c0_15, %c0_16] : memref<1x1x1x4xf32, #tpu.memory_space<vmem>>, vector<1x1x1x4xf32>
    %19 = vector.shape_cast %18 : vector<1x1x1x4xf32> to vector<1x4xf32>
    %20 = vector.shape_cast %17 : vector<1x4xf32> to vector<1x1x1x4xf32>
    tpu.vector_store %arg6[%c0_13, %c0_14, %c0_15, %c0_16], %20 {strides = array<i32>} : memref<1x1x1x4xf32, #tpu.memory_space<vmem>>, vector<1x1x1x4xf32>,
    return
  }
  func.func @transform_0(%arg0: i32, %arg1: i32) -> (i32, i32, i32) {
    %c0_i32 = arith.constant 0 : i32
    %c0_i32_0 = arith.constant 0 : i32
    return %arg0, %c0_i32, %arg1 : i32, i32, i32
  }
  func.func @transform_1(%arg0: i32, %arg1: i32) -> (i32, i32) {
    %c0_i32 = arith.constant 0 : i32
    %c0_i32_0 = arith.constant 0 : i32
    %c0_i32_1 = arith.constant 0 : i32
    return %c0_i32, %c0_i32_0 : i32, i32
  }
  func.func @transform_2(%arg0: i32, %arg1: i32) -> (i32, i32, i32) {
    %c0_i32 = arith.constant 0 : i32
    %c0_i32_0 = arith.constant 0 : i32
    return %arg0, %arg1, %c0_i32 : i32, i32, i32
  }
  func.func @transform_3(%arg0: i32, %arg1: i32) -> (i32, i32, i32, i32) {
    %c0_i32 = arith.constant 0 : i32
    %c0_i32_0 = arith.constant 0 : i32
    %c0_i32_1 = arith.constant 0 : i32
    return %arg0, %arg1, %c0_i32, %c0_i32_0 : i32, i32, i32, i32
  }
  func.func @transform_4(%arg0: i32, %arg1: i32) -> (i32, i32, i32, i32) {
    %c0_i32 = arith.constant 0 : i32
    %c0_i32_0 = arith.constant 0 : i32
    %c0_i32_1 = arith.constant 0 : i32
    return %arg0, %arg1, %c0_i32, %c0_i32_0 : i32, i32, i32, i32
  }
}

module attributes {stable_mosaic.version = 11 : i64} {
  func.func @conv2_kernel(%arg0: i32, %arg1: memref<1x16x16x4xbf16, #tpu.memory_space<vmem>>, %arg2: memref<1x4xf32, #tpu.memory_space<vmem>>, %arg3: memref<1x4xf32, #tpu.memory_space<vmem>>, %arg4: memref<1x4xf32, #tpu.memory_space<vmem>>, %arg5: memref<1x4xf32, #tpu.memory_space<vmem>>, %arg6: memref<36x4xbf16, #tpu.memory_space<vmem>>, %arg7: memref<1x256x4xbf16, #tpu.memory_space<vmem>>, %arg8: memref<1x1x4xf32, #tpu.memory_space<vmem>>, %arg9: memref<1x1x4xf32, #tpu.memory_space<vmem>>, %arg10: memref<18x18x4xf32, #tpu.memory_space<vmem>>) attributes {dimension_semantics = [#tpu.dimension_semantics<parallel>], iteration_bounds = array<i64: 2>, scalar_prefetch = 0 : i64, scratch_operands = 1 : i64, tpu.core_type = #tpu.core_type<tc>, window_params = [{transform_indices = @transform_0, window_bounds = array<i64: 1, 16, 16, 4>}, {pipeline_mode = #tpu.pipeline_mode<synchronous>, transform_indices = @transform_1, window_bounds = array<i64: 1, 4>}, {pipeline_mode = #tpu.pipeline_mode<synchronous>, transform_indices = @transform_2, window_bounds = array<i64: 1, 4>}, {pipeline_mode = #tpu.pipeline_mode<synchronous>, transform_indices = @transform_3, window_bounds = array<i64: 1, 4>}, {pipeline_mode = #tpu.pipeline_mode<synchronous>, transform_indices = @transform_4, window_bounds = array<i64: 1, 4>}, {pipeline_mode = #tpu.pipeline_mode<synchronous>, transform_indices = @transform_5, window_bounds = array<i64: 36, 4>}, {transform_indices = @transform_6, window_bounds = array<i64: 1, 256, 4>}, {transform_indices = @transform_7, window_bounds = array<i64: 1, 1, 4>}, {transform_indices = @transform_8, window_bounds = array<i64: 1, 1, 4>}]} {
    %cst = arith.constant 0.000000e+00 : f32
    %0 = vector.broadcast %cst : f32 to vector<1x18x4xf32>
    %cst_0 = arith.constant 0.000000e+00 : f32
    %1 = vector.broadcast %cst_0 : f32 to vector<18x1x4xf32>
    %c0 = arith.constant 0 : index
    %c0_1 = arith.constant 0 : index
    %c0_2 = arith.constant 0 : index
    %2 = vector.load %arg10[%c0, %c0_1, %c0_2] : memref<18x18x4xf32, #tpu.memory_space<vmem>>, vector<1x18x4xf32>
    tpu.vector_store %arg10[%c0, %c0_1, %c0_2], %0 {strides = array<i32>} : memref<18x18x4xf32, #tpu.memory_space<vmem>>, vector<1x18x4xf32>,
    %c17 = arith.constant 17 : index
    %c0_3 = arith.constant 0 : index
    %c0_4 = arith.constant 0 : index
    %3 = vector.load %arg10[%c17, %c0_3, %c0_4] : memref<18x18x4xf32, #tpu.memory_space<vmem>>, vector<1x18x4xf32>
    tpu.vector_store %arg10[%c17, %c0_3, %c0_4], %0 {strides = array<i32>} : memref<18x18x4xf32, #tpu.memory_space<vmem>>, vector<1x18x4xf32>,
    %c0_5 = arith.constant 0 : index
    %c0_6 = arith.constant 0 : index
    %c0_7 = arith.constant 0 : index
    %4 = vector.load %arg10[%c0_5, %c0_6, %c0_7] : memref<18x18x4xf32, #tpu.memory_space<vmem>>, vector<18x1x4xf32>
    tpu.vector_store %arg10[%c0_5, %c0_6, %c0_7], %1 {strides = array<i32>} : memref<18x18x4xf32, #tpu.memory_space<vmem>>, vector<18x1x4xf32>,
    %c0_8 = arith.constant 0 : index
    %c17_9 = arith.constant 17 : index
    %c0_10 = arith.constant 0 : index
    %5 = vector.load %arg10[%c0_8, %c17_9, %c0_10] : memref<18x18x4xf32, #tpu.memory_space<vmem>>, vector<18x1x4xf32>
    tpu.vector_store %arg10[%c0_8, %c17_9, %c0_10], %1 {strides = array<i32>} : memref<18x18x4xf32, #tpu.memory_space<vmem>>, vector<18x1x4xf32>,
    %c0_11 = arith.constant 0 : index
    %c0_12 = arith.constant 0 : index
    %6 = vector.load %arg2[%c0_11, %c0_12] : memref<1x4xf32, #tpu.memory_space<vmem>>, vector<1x4xf32>
    %cst_13 = arith.constant 5.120000e+02 : f32
    %7 = vector.broadcast %cst_13 : f32 to vector<1x4xf32>
    %8 = arith.divf %6, %7 : vector<1x4xf32>
    %c0_14 = arith.constant 0 : index
    %c0_15 = arith.constant 0 : index
    %9 = vector.load %arg3[%c0_14, %c0_15] : memref<1x4xf32, #tpu.memory_space<vmem>>, vector<1x4xf32>
    %cst_16 = arith.constant 5.120000e+02 : f32
    %10 = vector.broadcast %cst_16 : f32 to vector<1x4xf32>
    %11 = arith.divf %9, %10 : vector<1x4xf32>
    %12 = arith.mulf %8, %8 : vector<1x4xf32>
    %13 = arith.subf %11, %12 : vector<1x4xf32>
    %cst_17 = arith.constant 9.99999974E-6 : f32
    %14 = vector.broadcast %cst_17 : f32 to vector<1x4xf32>
    %15 = arith.addf %13, %14 : vector<1x4xf32>
    %16 = math.rsqrt %15 : vector<1x4xf32>
    %c0_18 = arith.constant 0 : index
    %c0_19 = arith.constant 0 : index
    %17 = vector.load %arg4[%c0_18, %c0_19] : memref<1x4xf32, #tpu.memory_space<vmem>>, vector<1x4xf32>
    %18 = arith.mulf %17, %16 : vector<1x4xf32>
    %c0_20 = arith.constant 0 : index
    %c0_21 = arith.constant 0 : index
    %19 = vector.load %arg5[%c0_20, %c0_21] : memref<1x4xf32, #tpu.memory_space<vmem>>, vector<1x4xf32>
    %20 = arith.mulf %8, %18 : vector<1x4xf32>
    %21 = arith.subf %19, %20 : vector<1x4xf32>
    %c0_22 = arith.constant 0 : index
    %c0_23 = arith.constant 0 : index
    %c0_24 = arith.constant 0 : index
    %c0_25 = arith.constant 0 : index
    %22 = vector.load %arg1[%c0_22, %c0_23, %c0_24, %c0_25] : memref<1x16x16x4xbf16, #tpu.memory_space<vmem>>, vector<1x16x16x4xbf16>
    %23 = vector.shape_cast %22 : vector<1x16x16x4xbf16> to vector<16x16x4xbf16>
    %24 = arith.extf %23 : vector<16x16x4xbf16> to vector<16x16x4xf32>
    %25 = vector.shape_cast %18 : vector<1x4xf32> to vector<1x1x4xf32>
    %26 = vector.broadcast %25 : vector<1x1x4xf32> to vector<16x16x4xf32>
    %27 = arith.mulf %24, %26 : vector<16x16x4xf32>
    %28 = vector.shape_cast %21 : vector<1x4xf32> to vector<1x1x4xf32>
    %29 = vector.broadcast %28 : vector<1x1x4xf32> to vector<16x16x4xf32>
    %30 = arith.addf %27, %29 : vector<16x16x4xf32>
    %cst_26 = arith.constant 0.000000e+00 : f32
    %31 = vector.broadcast %cst_26 : f32 to vector<16x16x4xf32>
    %32 = arith.maximumf %30, %31 : vector<16x16x4xf32>
    %c1 = arith.constant 1 : index
    %c1_27 = arith.constant 1 : index
    %c0_28 = arith.constant 0 : index
    %33 = vector.load %arg10[%c1, %c1_27, %c0_28] : memref<18x18x4xf32, #tpu.memory_space<vmem>>, vector<16x16x4xf32>
    tpu.vector_store %arg10[%c1, %c1_27, %c0_28], %32 {strides = array<i32>} : memref<18x18x4xf32, #tpu.memory_space<vmem>>, vector<16x16x4xf32>,
    %cst_29 = arith.constant 0.000000e+00 : f32
    %34 = vector.broadcast %cst_29 : f32 to vector<256x4xf32>
    %c0_30 = arith.constant 0 : index
    %c0_31 = arith.constant 0 : index
    %c0_32 = arith.constant 0 : index
    %35 = vector.load %arg10[%c0_30, %c0_31, %c0_32] : memref<18x18x4xf32, #tpu.memory_space<vmem>>, vector<16x16x4xf32>
    %36 = vector.shape_cast %35 : vector<16x16x4xf32> to vector<256x4xf32>
    %37 = arith.truncf %36 : vector<256x4xf32> to vector<256x4xbf16>
    %c0_33 = arith.constant 0 : index
    %c0_34 = arith.constant 0 : index
    %38 = vector.load %arg6[%c0_33, %c0_34] : memref<36x4xbf16, #tpu.memory_space<vmem>>, vector<4x4xbf16>
    %cst_35 = arith.constant dense<0.000000e+00> : vector<256x4xf32>
    %39 = tpu.matmul %37, %38, %cst_35 {dimension_numbers = #tpu.dot_dimension_numbers<[1], [0], [0], [1], [0, 0, 1, 1], [], []>} : vector<256x4xbf16>, vector<4x4xbf16>, vector<256x4xf32> -> vector<256x4xf32>
    %40 = arith.addf %34, %39 : vector<256x4xf32>
    %c0_36 = arith.constant 0 : index
    %c1_37 = arith.constant 1 : index
    %c0_38 = arith.constant 0 : index
    %41 = vector.load %arg10[%c0_36, %c1_37, %c0_38] : memref<18x18x4xf32, #tpu.memory_space<vmem>>, vector<16x16x4xf32>
    %42 = vector.shape_cast %41 : vector<16x16x4xf32> to vector<256x4xf32>
    %43 = arith.truncf %42 : vector<256x4xf32> to vector<256x4xbf16>
    %c4 = arith.constant 4 : index
    %c0_39 = arith.constant 0 : index
    %44 = vector.load %arg6[%c4, %c0_39] : memref<36x4xbf16, #tpu.memory_space<vmem>>, vector<4x4xbf16>
    %cst_40 = arith.constant dense<0.000000e+00> : vector<256x4xf32>
    %45 = tpu.matmul %43, %44, %cst_40 {dimension_numbers = #tpu.dot_dimension_numbers<[1], [0], [0], [1], [0, 0, 1, 1], [], []>} : vector<256x4xbf16>, vector<4x4xbf16>, vector<256x4xf32> -> vector<256x4xf32>
    %46 = arith.addf %40, %45 : vector<256x4xf32>
    %c0_41 = arith.constant 0 : index
    %c2 = arith.constant 2 : index
    %c0_42 = arith.constant 0 : index
    %47 = vector.load %arg10[%c0_41, %c2, %c0_42] : memref<18x18x4xf32, #tpu.memory_space<vmem>>, vector<16x16x4xf32>
    %48 = vector.shape_cast %47 : vector<16x16x4xf32> to vector<256x4xf32>
    %49 = arith.truncf %48 : vector<256x4xf32> to vector<256x4xbf16>
    %c8 = arith.constant 8 : index
    %c0_43 = arith.constant 0 : index
    %50 = vector.load %arg6[%c8, %c0_43] : memref<36x4xbf16, #tpu.memory_space<vmem>>, vector<4x4xbf16>
    %cst_44 = arith.constant dense<0.000000e+00> : vector<256x4xf32>
    %51 = tpu.matmul %49, %50, %cst_44 {dimension_numbers = #tpu.dot_dimension_numbers<[1], [0], [0], [1], [0, 0, 1, 1], [], []>} : vector<256x4xbf16>, vector<4x4xbf16>, vector<256x4xf32> -> vector<256x4xf32>
    %52 = arith.addf %46, %51 : vector<256x4xf32>
    %c1_45 = arith.constant 1 : index
    %c0_46 = arith.constant 0 : index
    %c0_47 = arith.constant 0 : index
    %53 = vector.load %arg10[%c1_45, %c0_46, %c0_47] : memref<18x18x4xf32, #tpu.memory_space<vmem>>, vector<16x16x4xf32>
    %54 = vector.shape_cast %53 : vector<16x16x4xf32> to vector<256x4xf32>
    %55 = arith.truncf %54 : vector<256x4xf32> to vector<256x4xbf16>
    %c12 = arith.constant 12 : index
    %c0_48 = arith.constant 0 : index
    %56 = vector.load %arg6[%c12, %c0_48] : memref<36x4xbf16, #tpu.memory_space<vmem>>, vector<4x4xbf16>
    %cst_49 = arith.constant dense<0.000000e+00> : vector<256x4xf32>
    %57 = tpu.matmul %55, %56, %cst_49 {dimension_numbers = #tpu.dot_dimension_numbers<[1], [0], [0], [1], [0, 0, 1, 1], [], []>} : vector<256x4xbf16>, vector<4x4xbf16>, vector<256x4xf32> -> vector<256x4xf32>
    %58 = arith.addf %52, %57 : vector<256x4xf32>
    %c1_50 = arith.constant 1 : index
    %c1_51 = arith.constant 1 : index
    %c0_52 = arith.constant 0 : index
    %59 = vector.load %arg10[%c1_50, %c1_51, %c0_52] : memref<18x18x4xf32, #tpu.memory_space<vmem>>, vector<16x16x4xf32>
    %60 = vector.shape_cast %59 : vector<16x16x4xf32> to vector<256x4xf32>
    %61 = arith.truncf %60 : vector<256x4xf32> to vector<256x4xbf16>
    %c16 = arith.constant 16 : index
    %c0_53 = arith.constant 0 : index
    %62 = vector.load %arg6[%c16, %c0_53] : memref<36x4xbf16, #tpu.memory_space<vmem>>, vector<4x4xbf16>
    %cst_54 = arith.constant dense<0.000000e+00> : vector<256x4xf32>
    %63 = tpu.matmul %61, %62, %cst_54 {dimension_numbers = #tpu.dot_dimension_numbers<[1], [0], [0], [1], [0, 0, 1, 1], [], []>} : vector<256x4xbf16>, vector<4x4xbf16>, vector<256x4xf32> -> vector<256x4xf32>
    %64 = arith.addf %58, %63 : vector<256x4xf32>
    %c1_55 = arith.constant 1 : index
    %c2_56 = arith.constant 2 : index
    %c0_57 = arith.constant 0 : index
    %65 = vector.load %arg10[%c1_55, %c2_56, %c0_57] : memref<18x18x4xf32, #tpu.memory_space<vmem>>, vector<16x16x4xf32>
    %66 = vector.shape_cast %65 : vector<16x16x4xf32> to vector<256x4xf32>
    %67 = arith.truncf %66 : vector<256x4xf32> to vector<256x4xbf16>
    %c20 = arith.constant 20 : index
    %c0_58 = arith.constant 0 : index
    %68 = vector.load %arg6[%c20, %c0_58] : memref<36x4xbf16, #tpu.memory_space<vmem>>, vector<4x4xbf16>
    %cst_59 = arith.constant dense<0.000000e+00> : vector<256x4xf32>
    %69 = tpu.matmul %67, %68, %cst_59 {dimension_numbers = #tpu.dot_dimension_numbers<[1], [0], [0], [1], [0, 0, 1, 1], [], []>} : vector<256x4xbf16>, vector<4x4xbf16>, vector<256x4xf32> -> vector<256x4xf32>
    %70 = arith.addf %64, %69 : vector<256x4xf32>
    %c2_60 = arith.constant 2 : index
    %c0_61 = arith.constant 0 : index
    %c0_62 = arith.constant 0 : index
    %71 = vector.load %arg10[%c2_60, %c0_61, %c0_62] : memref<18x18x4xf32, #tpu.memory_space<vmem>>, vector<16x16x4xf32>
    %72 = vector.shape_cast %71 : vector<16x16x4xf32> to vector<256x4xf32>
    %73 = arith.truncf %72 : vector<256x4xf32> to vector<256x4xbf16>
    %c24 = arith.constant 24 : index
    %c0_63 = arith.constant 0 : index
    %74 = vector.load %arg6[%c24, %c0_63] : memref<36x4xbf16, #tpu.memory_space<vmem>>, vector<4x4xbf16>
    %cst_64 = arith.constant dense<0.000000e+00> : vector<256x4xf32>
    %75 = tpu.matmul %73, %74, %cst_64 {dimension_numbers = #tpu.dot_dimension_numbers<[1], [0], [0], [1], [0, 0, 1, 1], [], []>} : vector<256x4xbf16>, vector<4x4xbf16>, vector<256x4xf32> -> vector<256x4xf32>
    %76 = arith.addf %70, %75 : vector<256x4xf32>
    %c2_65 = arith.constant 2 : index
    %c1_66 = arith.constant 1 : index
    %c0_67 = arith.constant 0 : index
    %77 = vector.load %arg10[%c2_65, %c1_66, %c0_67] : memref<18x18x4xf32, #tpu.memory_space<vmem>>, vector<16x16x4xf32>
    %78 = vector.shape_cast %77 : vector<16x16x4xf32> to vector<256x4xf32>
    %79 = arith.truncf %78 : vector<256x4xf32> to vector<256x4xbf16>
    %c28 = arith.constant 28 : index
    %c0_68 = arith.constant 0 : index
    %80 = vector.load %arg6[%c28, %c0_68] : memref<36x4xbf16, #tpu.memory_space<vmem>>, vector<4x4xbf16>
    %cst_69 = arith.constant dense<0.000000e+00> : vector<256x4xf32>
    %81 = tpu.matmul %79, %80, %cst_69 {dimension_numbers = #tpu.dot_dimension_numbers<[1], [0], [0], [1], [0, 0, 1, 1], [], []>} : vector<256x4xbf16>, vector<4x4xbf16>, vector<256x4xf32> -> vector<256x4xf32>
    %82 = arith.addf %76, %81 : vector<256x4xf32>
    %c2_70 = arith.constant 2 : index
    %c2_71 = arith.constant 2 : index
    %c0_72 = arith.constant 0 : index
    %83 = vector.load %arg10[%c2_70, %c2_71, %c0_72] : memref<18x18x4xf32, #tpu.memory_space<vmem>>, vector<16x16x4xf32>
    %84 = vector.shape_cast %83 : vector<16x16x4xf32> to vector<256x4xf32>
    %85 = arith.truncf %84 : vector<256x4xf32> to vector<256x4xbf16>
    %c32 = arith.constant 32 : index
    %c0_73 = arith.constant 0 : index
    %86 = vector.load %arg6[%c32, %c0_73] : memref<36x4xbf16, #tpu.memory_space<vmem>>, vector<4x4xbf16>
    %cst_74 = arith.constant dense<0.000000e+00> : vector<256x4xf32>
    %87 = tpu.matmul %85, %86, %cst_74 {dimension_numbers = #tpu.dot_dimension_numbers<[1], [0], [0], [1], [0, 0, 1, 1], [], []>} : vector<256x4xbf16>, vector<4x4xbf16>, vector<256x4xf32> -> vector<256x4xf32>
    %88 = arith.addf %82, %87 : vector<256x4xf32>
    %89 = arith.truncf %88 : vector<256x4xf32> to vector<256x4xbf16>
    %c0_75 = arith.constant 0 : index
    %c0_76 = arith.constant 0 : index
    %c0_77 = arith.constant 0 : index
    %90 = vector.load %arg7[%c0_75, %c0_76, %c0_77] : memref<1x256x4xbf16, #tpu.memory_space<vmem>>, vector<1x256x4xbf16>
    %91 = vector.shape_cast %90 : vector<1x256x4xbf16> to vector<256x4xbf16>
    %92 = vector.shape_cast %89 : vector<256x4xbf16> to vector<1x256x4xbf16>
    tpu.vector_store %arg7[%c0_75, %c0_76, %c0_77], %92 {strides = array<i32>} : memref<1x256x4xbf16, #tpu.memory_space<vmem>>, vector<1x256x4xbf16>,
    %cst_78 = arith.constant dense<0.000000e+00> : vector<4xf32>
    %93 = vector.multi_reduction <add>, %88, %cst_78 [0] : vector<256x4xf32> to vector<4xf32>
    %94 = vector.shape_cast %93 : vector<4xf32> to vector<1x4xf32>
    %c0_79 = arith.constant 0 : index
    %c0_80 = arith.constant 0 : index
    %c0_81 = arith.constant 0 : index
    %95 = vector.load %arg8[%c0_79, %c0_80, %c0_81] : memref<1x1x4xf32, #tpu.memory_space<vmem>>, vector<1x1x4xf32>
    %96 = vector.shape_cast %95 : vector<1x1x4xf32> to vector<1x4xf32>
    %97 = vector.shape_cast %94 : vector<1x4xf32> to vector<1x1x4xf32>
    tpu.vector_store %arg8[%c0_79, %c0_80, %c0_81], %97 {strides = array<i32>} : memref<1x1x4xf32, #tpu.memory_space<vmem>>, vector<1x1x4xf32>,
    %98 = arith.mulf %88, %88 : vector<256x4xf32>
    %cst_82 = arith.constant dense<0.000000e+00> : vector<4xf32>
    %99 = vector.multi_reduction <add>, %98, %cst_82 [0] : vector<256x4xf32> to vector<4xf32>
    %100 = vector.shape_cast %99 : vector<4xf32> to vector<1x4xf32>
    %c0_83 = arith.constant 0 : index
    %c0_84 = arith.constant 0 : index
    %c0_85 = arith.constant 0 : index
    %101 = vector.load %arg9[%c0_83, %c0_84, %c0_85] : memref<1x1x4xf32, #tpu.memory_space<vmem>>, vector<1x1x4xf32>
    %102 = vector.shape_cast %101 : vector<1x1x4xf32> to vector<1x4xf32>
    %103 = vector.shape_cast %100 : vector<1x4xf32> to vector<1x1x4xf32>
    tpu.vector_store %arg9[%c0_83, %c0_84, %c0_85], %103 {strides = array<i32>} : memref<1x1x4xf32, #tpu.memory_space<vmem>>, vector<1x1x4xf32>,
    return
  }
  func.func @transform_0(%arg0: i32) -> (i32, i32, i32, i32) {
    %c0_i32 = arith.constant 0 : i32
    %c0_i32_0 = arith.constant 0 : i32
    %c0_i32_1 = arith.constant 0 : i32
    %c0_i32_2 = arith.constant 0 : i32
    return %arg0, %c0_i32, %c0_i32_0, %c0_i32_1 : i32, i32, i32, i32
  }
  func.func @transform_1(%arg0: i32) -> (i32, i32) {
    %c0_i32 = arith.constant 0 : i32
    %c0_i32_0 = arith.constant 0 : i32
    %c0_i32_1 = arith.constant 0 : i32
    return %c0_i32, %c0_i32_0 : i32, i32
  }
  func.func @transform_2(%arg0: i32) -> (i32, i32) {
    %c0_i32 = arith.constant 0 : i32
    %c0_i32_0 = arith.constant 0 : i32
    %c0_i32_1 = arith.constant 0 : i32
    return %c0_i32, %c0_i32_0 : i32, i32
  }
  func.func @transform_3(%arg0: i32) -> (i32, i32) {
    %c0_i32 = arith.constant 0 : i32
    %c0_i32_0 = arith.constant 0 : i32
    %c0_i32_1 = arith.constant 0 : i32
    return %c0_i32, %c0_i32_0 : i32, i32
  }
  func.func @transform_4(%arg0: i32) -> (i32, i32) {
    %c0_i32 = arith.constant 0 : i32
    %c0_i32_0 = arith.constant 0 : i32
    %c0_i32_1 = arith.constant 0 : i32
    return %c0_i32, %c0_i32_0 : i32, i32
  }
  func.func @transform_5(%arg0: i32) -> (i32, i32) {
    %c0_i32 = arith.constant 0 : i32
    %c0_i32_0 = arith.constant 0 : i32
    %c0_i32_1 = arith.constant 0 : i32
    return %c0_i32, %c0_i32_0 : i32, i32
  }
  func.func @transform_6(%arg0: i32) -> (i32, i32, i32) {
    %c0_i32 = arith.constant 0 : i32
    %c0_i32_0 = arith.constant 0 : i32
    %c0_i32_1 = arith.constant 0 : i32
    return %arg0, %c0_i32, %c0_i32_0 : i32, i32, i32
  }
  func.func @transform_7(%arg0: i32) -> (i32, i32, i32) {
    %c0_i32 = arith.constant 0 : i32
    %c0_i32_0 = arith.constant 0 : i32
    %c0_i32_1 = arith.constant 0 : i32
    return %arg0, %c0_i32, %c0_i32_0 : i32, i32, i32
  }
  func.func @transform_8(%arg0: i32) -> (i32, i32, i32) {
    %c0_i32 = arith.constant 0 : i32
    %c0_i32_0 = arith.constant 0 : i32
    %c0_i32_1 = arith.constant 0 : i32
    return %arg0, %c0_i32, %c0_i32_0 : i32, i32, i32
  }
}

module attributes {stable_mosaic.version = 11 : i64} {
  func.func @conv3_kernel(%arg0: i32, %arg1: memref<512x4xbf16, #tpu.memory_space<vmem>>, %arg2: memref<1x4xf32, #tpu.memory_space<vmem>>, %arg3: memref<1x4xf32, #tpu.memory_space<vmem>>, %arg4: memref<1x4xf32, #tpu.memory_space<vmem>>, %arg5: memref<1x4xf32, #tpu.memory_space<vmem>>, %arg6: memref<4x16xbf16, #tpu.memory_space<vmem>>, %arg7: memref<512x16xbf16, #tpu.memory_space<vmem>>, %arg8: memref<1x1x16xf32, #tpu.memory_space<vmem>>, %arg9: memref<1x1x16xf32, #tpu.memory_space<vmem>>) attributes {dimension_semantics = [#tpu.dimension_semantics<parallel>], iteration_bounds = array<i64: 1>, scalar_prefetch = 0 : i64, scratch_operands = 0 : i64, tpu.core_type = #tpu.core_type<tc>, window_params = [{transform_indices = @transform_0, window_bounds = array<i64: 512, 4>}, {pipeline_mode = #tpu.pipeline_mode<synchronous>, transform_indices = @transform_1, window_bounds = array<i64: 1, 4>}, {pipeline_mode = #tpu.pipeline_mode<synchronous>, transform_indices = @transform_2, window_bounds = array<i64: 1, 4>}, {pipeline_mode = #tpu.pipeline_mode<synchronous>, transform_indices = @transform_3, window_bounds = array<i64: 1, 4>}, {pipeline_mode = #tpu.pipeline_mode<synchronous>, transform_indices = @transform_4, window_bounds = array<i64: 1, 4>}, {pipeline_mode = #tpu.pipeline_mode<synchronous>, transform_indices = @transform_5, window_bounds = array<i64: 4, 16>}, {transform_indices = @transform_6, window_bounds = array<i64: 512, 16>}, {transform_indices = @transform_7, window_bounds = array<i64: 1, 1, 16>}, {transform_indices = @transform_8, window_bounds = array<i64: 1, 1, 16>}]} {
    %c0 = arith.constant 0 : index
    %c0_0 = arith.constant 0 : index
    %0 = vector.load %arg2[%c0, %c0_0] : memref<1x4xf32, #tpu.memory_space<vmem>>, vector<1x4xf32>
    %cst = arith.constant 5.120000e+02 : f32
    %1 = vector.broadcast %cst : f32 to vector<1x4xf32>
    %2 = arith.divf %0, %1 : vector<1x4xf32>
    %c0_1 = arith.constant 0 : index
    %c0_2 = arith.constant 0 : index
    %3 = vector.load %arg3[%c0_1, %c0_2] : memref<1x4xf32, #tpu.memory_space<vmem>>, vector<1x4xf32>
    %cst_3 = arith.constant 5.120000e+02 : f32
    %4 = vector.broadcast %cst_3 : f32 to vector<1x4xf32>
    %5 = arith.divf %3, %4 : vector<1x4xf32>
    %6 = arith.mulf %2, %2 : vector<1x4xf32>
    %7 = arith.subf %5, %6 : vector<1x4xf32>
    %cst_4 = arith.constant 9.99999974E-6 : f32
    %8 = vector.broadcast %cst_4 : f32 to vector<1x4xf32>
    %9 = arith.addf %7, %8 : vector<1x4xf32>
    %10 = math.rsqrt %9 : vector<1x4xf32>
    %c0_5 = arith.constant 0 : index
    %c0_6 = arith.constant 0 : index
    %11 = vector.load %arg4[%c0_5, %c0_6] : memref<1x4xf32, #tpu.memory_space<vmem>>, vector<1x4xf32>
    %12 = arith.mulf %11, %10 : vector<1x4xf32>
    %c0_7 = arith.constant 0 : index
    %c0_8 = arith.constant 0 : index
    %13 = vector.load %arg5[%c0_7, %c0_8] : memref<1x4xf32, #tpu.memory_space<vmem>>, vector<1x4xf32>
    %14 = arith.mulf %2, %12 : vector<1x4xf32>
    %15 = arith.subf %13, %14 : vector<1x4xf32>
    %c0_9 = arith.constant 0 : index
    %c0_10 = arith.constant 0 : index
    %16 = vector.load %arg1[%c0_9, %c0_10] : memref<512x4xbf16, #tpu.memory_space<vmem>>, vector<512x4xbf16>
    %17 = arith.extf %16 : vector<512x4xbf16> to vector<512x4xf32>
    %18 = vector.broadcast %12 : vector<1x4xf32> to vector<512x4xf32>
    %19 = arith.mulf %17, %18 : vector<512x4xf32>
    %20 = vector.broadcast %15 : vector<1x4xf32> to vector<512x4xf32>
    %21 = arith.addf %19, %20 : vector<512x4xf32>
    %cst_11 = arith.constant 0.000000e+00 : f32
    %22 = vector.broadcast %cst_11 : f32 to vector<512x4xf32>
    %23 = arith.maximumf %21, %22 : vector<512x4xf32>
    %24 = arith.truncf %23 : vector<512x4xf32> to vector<512x4xbf16>
    %c0_12 = arith.constant 0 : index
    %c0_13 = arith.constant 0 : index
    %25 = vector.load %arg6[%c0_12, %c0_13] : memref<4x16xbf16, #tpu.memory_space<vmem>>, vector<4x16xbf16>
    %cst_14 = arith.constant dense<0.000000e+00> : vector<512x16xf32>
    %26 = tpu.matmul %24, %25, %cst_14 {dimension_numbers = #tpu.dot_dimension_numbers<[1], [0], [0], [1], [0, 0, 1, 1], [], []>} : vector<512x4xbf16>, vector<4x16xbf16>, vector<512x16xf32> -> vector<512x16xf32>
    %27 = arith.truncf %26 : vector<512x16xf32> to vector<512x16xbf16>
    %c0_15 = arith.constant 0 : index
    %c0_16 = arith.constant 0 : index
    %28 = vector.load %arg7[%c0_15, %c0_16] : memref<512x16xbf16, #tpu.memory_space<vmem>>, vector<512x16xbf16>
    tpu.vector_store %arg7[%c0_15, %c0_16], %27 {strides = array<i32>} : memref<512x16xbf16, #tpu.memory_space<vmem>>, vector<512x16xbf16>,
    %cst_17 = arith.constant dense<0.000000e+00> : vector<16xf32>
    %29 = vector.multi_reduction <add>, %26, %cst_17 [0] : vector<512x16xf32> to vector<16xf32>
    %30 = vector.shape_cast %29 : vector<16xf32> to vector<1x16xf32>
    %c0_18 = arith.constant 0 : index
    %c0_19 = arith.constant 0 : index
    %c0_20 = arith.constant 0 : index
    %31 = vector.load %arg8[%c0_18, %c0_19, %c0_20] : memref<1x1x16xf32, #tpu.memory_space<vmem>>, vector<1x1x16xf32>
    %32 = vector.shape_cast %31 : vector<1x1x16xf32> to vector<1x16xf32>
    %33 = vector.shape_cast %30 : vector<1x16xf32> to vector<1x1x16xf32>
    tpu.vector_store %arg8[%c0_18, %c0_19, %c0_20], %33 {strides = array<i32>} : memref<1x1x16xf32, #tpu.memory_space<vmem>>, vector<1x1x16xf32>,
    %34 = arith.mulf %26, %26 : vector<512x16xf32>
    %cst_21 = arith.constant dense<0.000000e+00> : vector<16xf32>
    %35 = vector.multi_reduction <add>, %34, %cst_21 [0] : vector<512x16xf32> to vector<16xf32>
    %36 = vector.shape_cast %35 : vector<16xf32> to vector<1x16xf32>
    %c0_22 = arith.constant 0 : index
    %c0_23 = arith.constant 0 : index
    %c0_24 = arith.constant 0 : index
    %37 = vector.load %arg9[%c0_22, %c0_23, %c0_24] : memref<1x1x16xf32, #tpu.memory_space<vmem>>, vector<1x1x16xf32>
    %38 = vector.shape_cast %37 : vector<1x1x16xf32> to vector<1x16xf32>
    %39 = vector.shape_cast %36 : vector<1x16xf32> to vector<1x1x16xf32>
    tpu.vector_store %arg9[%c0_22, %c0_23, %c0_24], %39 {strides = array<i32>} : memref<1x1x16xf32, #tpu.memory_space<vmem>>, vector<1x1x16xf32>,
    return
  }
  func.func @transform_0(%arg0: i32) -> (i32, i32) {
    %c0_i32 = arith.constant 0 : i32
    %c0_i32_0 = arith.constant 0 : i32
    return %arg0, %c0_i32 : i32, i32
  }
  func.func @transform_1(%arg0: i32) -> (i32, i32) {
    %c0_i32 = arith.constant 0 : i32
    %c0_i32_0 = arith.constant 0 : i32
    %c0_i32_1 = arith.constant 0 : i32
    return %c0_i32, %c0_i32_0 : i32, i32
  }
  func.func @transform_2(%arg0: i32) -> (i32, i32) {
    %c0_i32 = arith.constant 0 : i32
    %c0_i32_0 = arith.constant 0 : i32
    %c0_i32_1 = arith.constant 0 : i32
    return %c0_i32, %c0_i32_0 : i32, i32
  }
  func.func @transform_3(%arg0: i32) -> (i32, i32) {
    %c0_i32 = arith.constant 0 : i32
    %c0_i32_0 = arith.constant 0 : i32
    %c0_i32_1 = arith.constant 0 : i32
    return %c0_i32, %c0_i32_0 : i32, i32
  }
  func.func @transform_4(%arg0: i32) -> (i32, i32) {
    %c0_i32 = arith.constant 0 : i32
    %c0_i32_0 = arith.constant 0 : i32
    %c0_i32_1 = arith.constant 0 : i32
    return %c0_i32, %c0_i32_0 : i32, i32
  }
  func.func @transform_5(%arg0: i32) -> (i32, i32) {
    %c0_i32 = arith.constant 0 : i32
    %c0_i32_0 = arith.constant 0 : i32
    %c0_i32_1 = arith.constant 0 : i32
    return %c0_i32, %c0_i32_0 : i32, i32
  }
  func.func @transform_6(%arg0: i32) -> (i32, i32) {
    %c0_i32 = arith.constant 0 : i32
    %c0_i32_0 = arith.constant 0 : i32
    return %arg0, %c0_i32 : i32, i32
  }
  func.func @transform_7(%arg0: i32) -> (i32, i32, i32) {
    %c0_i32 = arith.constant 0 : i32
    %c0_i32_0 = arith.constant 0 : i32
    %c0_i32_1 = arith.constant 0 : i32
    return %arg0, %c0_i32, %c0_i32_0 : i32, i32, i32
  }
  func.func @transform_8(%arg0: i32) -> (i32, i32, i32) {
    %c0_i32 = arith.constant 0 : i32
    %c0_i32_0 = arith.constant 0 : i32
    %c0_i32_1 = arith.constant 0 : i32
    return %arg0, %c0_i32, %c0_i32_0 : i32, i32, i32
  }
}

module attributes {stable_mosaic.version = 11 : i64} {
  func.func @fuse_kernel(%arg0: i32, %arg1: i32, %arg2: memref<1x256x16xbf16, #tpu.memory_space<vmem>>, %arg3: memref<1x16x256xf32, #tpu.memory_space<vmem>>, %arg4: memref<1x16xf32, #tpu.memory_space<vmem>>, %arg5: memref<1x16xf32, #tpu.memory_space<vmem>>, %arg6: memref<1x16xf32, #tpu.memory_space<vmem>>, %arg7: memref<1x16xf32, #tpu.memory_space<vmem>>, %arg8: memref<1x16x256xf32, #tpu.memory_space<vmem>>) attributes {dimension_semantics = [#tpu.dimension_semantics<parallel>, #tpu.dimension_semantics<parallel>], iteration_bounds = array<i64: 2, 1>, scalar_prefetch = 0 : i64, scratch_operands = 0 : i64, tpu.core_type = #tpu.core_type<tc>, window_params = [{transform_indices = @transform_0, window_bounds = array<i64: 1, 256, 16>}, {transform_indices = @transform_1, window_bounds = array<i64: 1, 16, 256>}, {pipeline_mode = #tpu.pipeline_mode<synchronous>, transform_indices = @transform_2, window_bounds = array<i64: 1, 16>}, {pipeline_mode = #tpu.pipeline_mode<synchronous>, transform_indices = @transform_3, window_bounds = array<i64: 1, 16>}, {pipeline_mode = #tpu.pipeline_mode<synchronous>, transform_indices = @transform_4, window_bounds = array<i64: 1, 16>}, {pipeline_mode = #tpu.pipeline_mode<synchronous>, transform_indices = @transform_5, window_bounds = array<i64: 1, 16>}, {transform_indices = @transform_6, window_bounds = array<i64: 1, 16, 256>}]} {
    %c0 = arith.constant 0 : index
    %c0_0 = arith.constant 0 : index
    %0 = vector.load %arg4[%c0, %c0_0] : memref<1x16xf32, #tpu.memory_space<vmem>>, vector<1x16xf32>
    %cst = arith.constant 5.120000e+02 : f32
    %1 = vector.broadcast %cst : f32 to vector<1x16xf32>
    %2 = arith.divf %0, %1 : vector<1x16xf32>
    %c0_1 = arith.constant 0 : index
    %c0_2 = arith.constant 0 : index
    %3 = vector.load %arg5[%c0_1, %c0_2] : memref<1x16xf32, #tpu.memory_space<vmem>>, vector<1x16xf32>
    %cst_3 = arith.constant 5.120000e+02 : f32
    %4 = vector.broadcast %cst_3 : f32 to vector<1x16xf32>
    %5 = arith.divf %3, %4 : vector<1x16xf32>
    %6 = arith.mulf %2, %2 : vector<1x16xf32>
    %7 = arith.subf %5, %6 : vector<1x16xf32>
    %cst_4 = arith.constant 9.99999974E-6 : f32
    %8 = vector.broadcast %cst_4 : f32 to vector<1x16xf32>
    %9 = arith.addf %7, %8 : vector<1x16xf32>
    %10 = math.rsqrt %9 : vector<1x16xf32>
    %c0_5 = arith.constant 0 : index
    %c0_6 = arith.constant 0 : index
    %11 = vector.load %arg6[%c0_5, %c0_6] : memref<1x16xf32, #tpu.memory_space<vmem>>, vector<1x16xf32>
    %12 = arith.mulf %11, %10 : vector<1x16xf32>
    %c0_7 = arith.constant 0 : index
    %c0_8 = arith.constant 0 : index
    %13 = vector.load %arg7[%c0_7, %c0_8] : memref<1x16xf32, #tpu.memory_space<vmem>>, vector<1x16xf32>
    %14 = arith.mulf %2, %12 : vector<1x16xf32>
    %15 = arith.subf %13, %14 : vector<1x16xf32>
    %c0_9 = arith.constant 0 : index
    %c0_10 = arith.constant 0 : index
    %c0_11 = arith.constant 0 : index
    %16 = vector.load %arg2[%c0_9, %c0_10, %c0_11] : memref<1x256x16xbf16, #tpu.memory_space<vmem>>, vector<1x256x16xbf16>
    %17 = vector.shape_cast %16 : vector<1x256x16xbf16> to vector<256x16xbf16>
    %18 = arith.extf %17 : vector<256x16xbf16> to vector<256x16xf32>
    %19 = vector.broadcast %12 : vector<1x16xf32> to vector<256x16xf32>
    %20 = arith.mulf %18, %19 : vector<256x16xf32>
    %21 = vector.broadcast %15 : vector<1x16xf32> to vector<256x16xf32>
    %22 = arith.addf %20, %21 : vector<256x16xf32>
    %23 = tpu.transpose %22, [1, 0] : vector<256x16xf32> -> vector<16x256xf32>
    %c0_12 = arith.constant 0 : index
    %c0_13 = arith.constant 0 : index
    %c0_14 = arith.constant 0 : index
    %24 = vector.load %arg3[%c0_12, %c0_13, %c0_14] : memref<1x16x256xf32, #tpu.memory_space<vmem>>, vector<1x16x256xf32>
    %25 = vector.shape_cast %24 : vector<1x16x256xf32> to vector<16x256xf32>
    %26 = arith.addf %23, %25 : vector<16x256xf32>
    %cst_15 = arith.constant 0.000000e+00 : f32
    %27 = vector.broadcast %cst_15 : f32 to vector<16x256xf32>
    %28 = arith.maximumf %26, %27 : vector<16x256xf32>
    %c0_16 = arith.constant 0 : index
    %c0_17 = arith.constant 0 : index
    %c0_18 = arith.constant 0 : index
    %29 = vector.load %arg8[%c0_16, %c0_17, %c0_18] : memref<1x16x256xf32, #tpu.memory_space<vmem>>, vector<1x16x256xf32>
    %30 = vector.shape_cast %29 : vector<1x16x256xf32> to vector<16x256xf32>
    %31 = vector.shape_cast %28 : vector<16x256xf32> to vector<1x16x256xf32>
    tpu.vector_store %arg8[%c0_16, %c0_17, %c0_18], %31 {strides = array<i32>} : memref<1x16x256xf32, #tpu.memory_space<vmem>>, vector<1x16x256xf32>,
    return
  }
  func.func @transform_0(%arg0: i32, %arg1: i32) -> (i32, i32, i32) {
    %c0_i32 = arith.constant 0 : i32
    %c0_i32_0 = arith.constant 0 : i32
    return %arg0, %arg1, %c0_i32 : i32, i32, i32
  }
  func.func @transform_1(%arg0: i32, %arg1: i32) -> (i32, i32, i32) {
    %c0_i32 = arith.constant 0 : i32
    %c0_i32_0 = arith.constant 0 : i32
    return %arg0, %c0_i32, %arg1 : i32, i32, i32
  }
  func.func @transform_2(%arg0: i32, %arg1: i32) -> (i32, i32) {
    %c0_i32 = arith.constant 0 : i32
    %c0_i32_0 = arith.constant 0 : i32
    %c0_i32_1 = arith.constant 0 : i32
    return %c0_i32, %c0_i32_0 : i32, i32
  }
  func.func @transform_3(%arg0: i32, %arg1: i32) -> (i32, i32) {
    %c0_i32 = arith.constant 0 : i32
    %c0_i32_0 = arith.constant 0 : i32
    %c0_i32_1 = arith.constant 0 : i32
    return %c0_i32, %c0_i32_0 : i32, i32
  }
  func.func @transform_4(%arg0: i32, %arg1: i32) -> (i32, i32) {
    %c0_i32 = arith.constant 0 : i32
    %c0_i32_0 = arith.constant 0 : i32
    %c0_i32_1 = arith.constant 0 : i32
    return %c0_i32, %c0_i32_0 : i32, i32
  }
  func.func @transform_5(%arg0: i32, %arg1: i32) -> (i32, i32) {
    %c0_i32 = arith.constant 0 : i32
    %c0_i32_0 = arith.constant 0 : i32
    %c0_i32_1 = arith.constant 0 : i32
    return %c0_i32, %c0_i32_0 : i32, i32
  }
  func.func @transform_6(%arg0: i32, %arg1: i32) -> (i32, i32, i32) {
    %c0_i32 = arith.constant 0 : i32
    %c0_i32_0 = arith.constant 0 : i32
    return %arg0, %c0_i32, %arg1 : i32, i32, i32
  }
}

</mosaic_0001>

<llo_original>
// kernel: bottleneck_forward.4
$region0: #{bottleneck_forward.4}
  #allocation0 [shape = 'u32[]', space=smem, size = 0x4, offset = 0x4, fixed_abs, tag = 'smem constant byte address 0x4 - core index']
  #allocation1 [shape = 'u32[144,128]{1,0:T(1,128)}', space=vmem, size = 0x12000, scoped, tag = 'internal scratch']
  %s0 = inlined_call_operand.vmem [shape: f32[2,16,256], index: 0, kind: input, shape index: {}]
  %s1 = inlined_call_operand.vmem [shape: bf16[16,4], index: 1, kind: input, shape index: {}]
  %s2 = inlined_call_operand.vmem [shape: bf16[2,256,4], index: 2, kind: output, shape index: {0}]
  %s3 = inlined_call_operand.vmem [shape: f32[2,1,1,4], index: 3, kind: output, shape index: {1}]
  %s4 = inlined_call_operand.vmem [shape: f32[2,1,1,4], index: 4, kind: output, shape index: {2}]
  %5 = xla_tuple %s2, %s3, %s4
  %s6 = sld [smem:[#allocation0]]
  $region57: #{bottleneck_forward.4} parent=0
    _
  %s8 = ssub.s32 1, %s6
  %s9 = scalar_select 0, %s8, %s6
  loop: start=0, step=1, limit=4
  $region2: #{bottleneck_forward.4} parent=0 // loop_pre_header
    _
  $region3: #{bottleneck_forward.4} parent=0 // loop_header
    %s11 = sphi 0, %s15
    %p12 = scmp.ge.s32.totalorder %s11, 4
    %s18 = sphi 0, %s30
    %s19 = sphi 0, %s26
    %s20 = sphi 0, %s18
    %s21 = sphi 0, %s19
    %s22 = sphi 0, %s20
    %s23 = sphi 0, %s21
    %s35 = sphi 0, %s37
    %s38 = sphi 0, %s35
    %s39 = sphi 0, %s38
    %s55 = sphi 0, %s39
    %s59 = sphi 0, %s59
    %s61 = sphi 0, %s59
    %s62 = sphi 0, %s61
    %s76 = sphi 0, %s62
    %s84 = sphi 0, %s86
    %s87 = sphi 0, %s84
    %s88 = sphi 0, %s87
    %s104 = sphi 0, %s88
    %s112 = sphi 0, %s114
    %s115 = sphi 0, %s112
    %s116 = sphi 0, %s115
    %s132 = sphi 0, %s116
    %s140 = sphi 0, %s142
    %s143 = sphi 0, %s140
    %s144 = sphi 0, %s143
    %s160 = sphi 0, %s144
  $region4: #{bottleneck_forward.4} parent=0 // loop_header_branch
    %14 = sbr.rel (%p12) target = $region8
  $region5: #{bottleneck_forward.4} parent=0 // loop_body
    %s16 = ssub.s32 %s11, 1
    %s17 = ssub.s32 %s11, 2
    %s24 = sadd.s32 1, %s19
    %p25 = scmp.ge.s32.totalorder %s24, 1
    %s26 = scalar_select %p25, 0, %s24
    %s27 = sadd.s32 1, %s18
    %s28 = scalar_select %p25, %s27, %s18
    %p29 = scmp.ge.s32.totalorder %s28, 2
    %s30 = scalar_select %p29, 0, %s28
    %s31 = ssub.s32 %s18, %s30
    %s32 = ssub.s32 %s19, %s26
    %s33 = sor.u32 %s31, %s32
    %p34 = scmp.eq.s32.totalorder %s33, 0
    %s36 = sadd.s32 %s35, 1
    %s37 = scalar_select %p34, %s35, %s36
    %p40 = pneg %p34
    %p41 = scmp.eq.s32.totalorder %s11, 1
    %p42 = por %p40, %p41
    %p43 = scmp.ne.s32.totalorder %s35, %s38
    %p44 = scmp.eq.s32.totalorder %s11, 0
    %p45 = por %p43, %p44
    %p46 = scmp.ne.s32.totalorder %s35, %s38
    %p47 = scmp.eq.s32.totalorder %s16, 1
    %p48 = por %p46, %p47
    %p49 = scmp.ne.s32.totalorder %s38, %s39
    %p50 = scmp.eq.s32.totalorder %s16, 0
    %p51 = por %p49, %p50
    %p52 = scmp.ne.s32.totalorder %s38, %s39
    %p53 = scmp.eq.s32.totalorder %s17, 1
    %p54 = por %p52, %p53
    %p56 = scmp.ne.s32.totalorder %s39, %s55
    %p57 = scmp.eq.s32.totalorder %s17, 0
    %p58 = por %p56, %p57
    %s60 = sadd.s32 %s59, 1
    %p63 = scmp.eq.s32.totalorder %s11, 1
    %p64 = scmp.ne.s32.totalorder %s59, %s61
    %p65 = scmp.eq.s32.totalorder %s11, 0
    %p66 = por %p64, %p65
    %p67 = scmp.ne.s32.totalorder %s59, %s61
    %p68 = scmp.eq.s32.totalorder %s16, 1
    %p69 = por %p67, %p68
    %p70 = scmp.ne.s32.totalorder %s61, %s62
    %p71 = scmp.eq.s32.totalorder %s16, 0
    %p72 = por %p70, %p71
    %p73 = scmp.ne.s32.totalorder %s61, %s62
    %p74 = scmp.eq.s32.totalorder %s17, 1
    %p75 = por %p73, %p74
    %p77 = scmp.ne.s32.totalorder %s62, %s76
    %p78 = scmp.eq.s32.totalorder %s17, 0
    %p79 = por %p77, %p78
    %s80 = ssub.s32 %s18, %s30
    %s81 = ssub.s32 %s19, %s26
    %s82 = sor.u32 %s80, %s81
    %p83 = scmp.eq.s32.totalorder %s82, 0
    %s85 = sadd.s32 %s84, 1
    %s86 = scalar_select %p83, %s84, %s85
    %p89 = pneg %p83
    %p90 = scmp.eq.s32.totalorder %s11, 1
    %p91 = por %p89, %p90
    %p92 = scmp.ne.s32.totalorder %s84, %s87
    %p93 = scmp.eq.s32.totalorder %s11, 0
    %p94 = por %p92, %p93
    %p95 = scmp.ne.s32.totalorder %s84, %s87
    %p96 = scmp.eq.s32.totalorder %s16, 1
    %p97 = por %p95, %p96
    %p98 = scmp.ne.s32.totalorder %s87, %s88
    %p99 = scmp.eq.s32.totalorder %s16, 0
    %p100 = por %p98, %p99
    %p101 = scmp.ne.s32.totalorder %s87, %s88
    %p102 = scmp.eq.s32.totalorder %s17, 1
    %p103 = por %p101, %p102
    %p105 = scmp.ne.s32.totalorder %s88, %s104
    %p106 = scmp.eq.s32.totalorder %s17, 0
    %p107 = por %p105, %p106
    %s108 = ssub.s32 %s18, %s30
    %s109 = ssub.s32 %s19, %s26
    %s110 = sor.u32 %s108, %s109
    %p111 = scmp.eq.s32.totalorder %s110, 0
    %s113 = sadd.s32 %s112, 1
    %s114 = scalar_select %p111, %s112, %s113
    %p117 = pneg %p111
    %p118 = scmp.eq.s32.totalorder %s11, 1
    %p119 = por %p117, %p118
    %p120 = scmp.ne.s32.totalorder %s112, %s115
    %p121 = scmp.eq.s32.totalorder %s11, 0
    %p122 = por %p120, %p121
    %p123 = scmp.ne.s32.totalorder %s112, %s115
    %p124 = scmp.eq.s32.totalorder %s16, 1
    %p125 = por %p123, %p124
    %p126 = scmp.ne.s32.totalorder %s115, %s116
    %p127 = scmp.eq.s32.totalorder %s16, 0
    %p128 = por %p126, %p127
    %p129 = scmp.ne.s32.totalorder %s115, %s116
    %p130 = scmp.eq.s32.totalorder %s17, 1
    %p131 = por %p129, %p130
    %p133 = scmp.ne.s32.totalorder %s116, %s132
    %p134 = scmp.eq.s32.totalorder %s17, 0
    %p135 = por %p133, %p134
    %s136 = ssub.s32 %s18, %s30
    %s137 = ssub.s32 %s19, %s26
    %s138 = sor.u32 %s136, %s137
    %p139 = scmp.eq.s32.totalorder %s138, 0
    %s141 = sadd.s32 %s140, 1
    %s142 = scalar_select %p139, %s140, %s141
    %p145 = pneg %p139
    %p146 = scmp.eq.s32.totalorder %s11, 1
    %p147 = por %p145, %p146
    %p148 = scmp.ne.s32.totalorder %s140, %s143
    %p149 = scmp.eq.s32.totalorder %s11, 0
    %p150 = por %p148, %p149
    %p151 = scmp.ne.s32.totalorder %s140, %s143
    %p152 = scmp.eq.s32.totalorder %s16, 1
    %p153 = por %p151, %p152
    %p154 = scmp.ne.s32.totalorder %s143, %s144
    %p155 = scmp.eq.s32.totalorder %s16, 0
    %p156 = por %p154, %p155
    %p157 = scmp.ne.s32.totalorder %s143, %s144
    %p158 = scmp.eq.s32.totalorder %s17, 1
    %p159 = por %p157, %p158
    %p161 = scmp.ne.s32.totalorder %s144, %s160
    %p162 = scmp.eq.s32.totalorder %s17, 0
    %p163 = por %p161, %p162
    %p164 = scmp.le.s32.totalorder 1, %s11
    %p165 = scmp.lt.s32.totalorder %s11, 3
    %p166 = pnand %p164, %p165
    %p167 = pneg %p166
    // Predicated region
    $region9: #{bottleneck_forward.4} parent=5 // pred_check
      _
    $region10: #{bottleneck_forward.4} parent=5 // pred_check_branch
      %169 = sbr.rel (%p166) target = $region12
    $region11: #{bottleneck_forward.4} parent=5 // pred_region
      %s170 = ssub.s32 %s11, 1
      // Predicated region
      $region13: #{bottleneck_forward.4} parent=11 // pred_check
        %p171 = pneg %p72
      $region14: #{bottleneck_forward.4} parent=11 // pred_check_branch
        %173 = sbr.rel (%p171) target = $region16
      $region15: #{bottleneck_forward.4} parent=11 // pred_region
        _
      $region16: #{bottleneck_forward.4} parent=11 // pred_fallthru
        _
    $region12: #{bottleneck_forward.4} parent=5 // pred_fallthru
      _
    %p174 = scmp.lt.s32.totalorder %s11, 2
    // Predicated region
    $region17: #{bottleneck_forward.4} parent=5 // pred_check
      %p175 = pneg %p174
    $region18: #{bottleneck_forward.4} parent=5 // pred_check_branch
      %177 = sbr.rel (%p175) target = $region20
    $region19: #{bottleneck_forward.4} parent=5 // pred_region
      // Predicated region
      $region21: #{bottleneck_forward.4} parent=19 // pred_check
        %p178 = pneg %p45
      $region22: #{bottleneck_forward.4} parent=19 // pred_check_branch
        %180 = sbr.rel (%p178) target = $region24
      $region23: #{bottleneck_forward.4} parent=19 // pred_region
        %s181 = smul.u32 2, %s19
        %p182 = scmp.lt.s32.totalorder %s18, 1
        %s183 = scalar_select %p182, %s18, 1
        %p184 = scmp.lt.s32.totalorder %s181, 1
        %s185 = scalar_select %p184, %s181, 1
        %s186 = smul.addr %s183, 4
        %s187 = sadd.s32 %s185, %s186
        %s188 = smul.addr %s187, 8
        %s189 = scalar_lea.vmem %s0, %s188
        %s190 = smul.u32 2, %s19
      $region24: #{bottleneck_forward.4} parent=19 // pred_fallthru
        _
    $region20: #{bottleneck_forward.4} parent=5 // pred_fallthru
      _
    %p191 = scmp.le.s32.totalorder 1, %s11
    %p192 = scmp.lt.s32.totalorder %s11, 3
    %p193 = pnand %p191, %p192
    %p194 = pneg %p193
    // Predicated region
    $region25: #{bottleneck_forward.4} parent=5 // pred_check
      _
    $region26: #{bottleneck_forward.4} parent=5 // pred_check_branch
      %196 = sbr.rel (%p193) target = $region28
    $region27: #{bottleneck_forward.4} parent=5 // pred_region
      %s197 = ssub.s32 %s11, 1
      %s198 = smul.u32 2, %s21
      %p199 = scmp.lt.s32.totalorder %s20, 1
      %s200 = scalar_select %p199, %s20, 1
      %p201 = scmp.lt.s32.totalorder %s198, 1
      %s202 = scalar_select %p201, %s198, 1
      %s203 = smul.addr %s200, 4
      %s204 = sadd.s32 %s202, %s203
      %s205 = smul.addr %s204, 8
      %s206 = scalar_lea.vmem %s0, %s205
      %p207 = pneg %p51
      %p208 = pneg %p48
      %p209 = pneg %p72
      %p210 = pneg %p69
      %p211 = pneg %p100
      %p212 = pneg %p97
      %s213 = smul.u32 32, %s21
      %p214 = scmp.lt.s32.totalorder %s20, 1
      %s215 = scalar_select %p214, %s20, 1
      %p216 = scmp.lt.s32.totalorder %s213, 31
      %s217 = scalar_select %p216, %s213, 31
      %s218 = smul.addr %s215, 32
      %s219 = sadd.s32 %s217, %s218
      %s220 = smul.addr %s219, 4
      %s221 = scalar_lea.vmem %s2, %s220
      %p222 = pneg %p128
      %p223 = pneg %p125
      %p224 = scmp.lt.s32.totalorder %s20, 1
      %s225 = scalar_select %p224, %s20, 1
      %p226 = scmp.lt.s32.totalorder %s21, 0
      %s227 = scalar_select %p226, %s21, 0
      %s228 = sadd.s32 %s227, %s225
      %s229 = scalar_lea.vmem %s3, %s228
      %p230 = pneg %p156
      %p231 = pneg %p153
      %p232 = scmp.lt.s32.totalorder %s20, 1
      %s233 = scalar_select %p232, %s20, 1
      %p234 = scmp.lt.s32.totalorder %s21, 0
      %s235 = scalar_select %p234, %s21, 0
      %s236 = sadd.s32 %s235, %s233
      %s237 = scalar_lea.vmem %s4, %s236
      %s238 = smul.u32 2, %s21
      %p239 = scmp.lt.s32.totalorder %s20, 1
      %s240 = scalar_select %p239, %s20, 1
      %p241 = scmp.lt.s32.totalorder %s238, 1
      %s242 = scalar_select %p241, %s238, 1
      %s243 = smul.addr %s240, 4
      %s244 = sadd.s32 %s242, %s243
      %s245 = smul.addr %s244, 8
      %s246 = scalar_lea.vmem %s0, %s245
      %s247 = smul.u32 2, %s21
      %s248 = smul.u32 32, %s21
      %p249 = scmp.lt.s32.totalorder %s20, 1
      %s250 = scalar_select %p249, %s20, 1
      %p251 = scmp.lt.s32.totalorder %s248, 31
      %s252 = scalar_select %p251, %s248, 31
      %s253 = smul.addr %s250, 32
      %s254 = sadd.s32 %s252, %s253
      %s255 = smul.addr %s254, 4
      %s256 = scalar_lea.vmem %s2, %s255
      %s257 = smul.u32 32, %s21
      %p258 = scmp.lt.s32.totalorder %s20, 1
      %s259 = scalar_select %p258, %s20, 1
      %p260 = scmp.lt.s32.totalorder %s21, 0
      %s261 = scalar_select %p260, %s21, 0
      %s262 = sadd.s32 %s261, %s259
      %s263 = scalar_lea.vmem %s3, %s262
      %p264 = scmp.lt.s32.totalorder %s20, 1
      %s265 = scalar_select %p264, %s20, 1
      %p266 = scmp.lt.s32.totalorder %s21, 0
      %s267 = scalar_select %p266, %s21, 0
      %s268 = sadd.s32 %s267, %s265
      %s269 = scalar_lea.vmem %s4, %s268
      %v271 = vld [vmem:[%s246] sm:$0xff]
      %v272 = vld [vmem:[%s246 + $0x8] sm:$0xff]
      %v273 = vld [vmem:[%s246 + $0x10] sm:$0xff]
      %v274 = vld [vmem:[%s246 + $0x18] sm:$0xff]
      %275 = vxpose.xlu0.b32.start [1/16] %v271, 128
      %276 = vxpose.xlu0.b32.cont [2/16] %v273, 128
      %277 = vxpose.xlu0.b32.cont [3/16] 0.0, 128
      %278 = vxpose.xlu0.b32.cont [4/16] 0.0, 128
      %279 = vxpose.xlu0.b32.cont [5/16] 0.0, 128
      %280 = vxpose.xlu0.b32.cont [6/16] 0.0, 128
      %281 = vxpose.xlu0.b32.cont [7/16] 0.0, 128
      %282 = vxpose.xlu0.b32.cont [8/16] 0.0, 128
      %283 = vxpose.xlu0.b32.cont [9/16] 0.0, 128
      %284 = vxpose.xlu0.b32.cont [10/16] 0.0, 128
      %285 = vxpose.xlu0.b32.cont [11/16] 0.0, 128
      %286 = vxpose.xlu0.b32.cont [12/16] 0.0, 128
      %287 = vxpose.xlu0.b32.cont [13/16] 0.0, 128
      %288 = vxpose.xlu0.b32.cont [14/16] 0.0, 128
      %289 = vxpose.xlu0.b32.cont [15/16] 0.0, 128
      %290 = vxpose.xlu0.b32.end [16/16] 0.0, 128
      %v291 = vpop.trf.xlu0
      %v292 = vpop.trf.xlu0
      %v293 = vpop.trf.xlu0
      %v294 = vpop.trf.xlu0
      %v295 = vpop.trf.xlu0
      %v296 = vpop.trf.xlu0
      %v297 = vpop.trf.xlu0
      %v298 = vpop.trf.xlu0
      %v299 = vpop.trf.xlu0
      %v300 = vpop.trf.xlu0
      %v301 = vpop.trf.xlu0
      %v302 = vpop.trf.xlu0
      %v303 = vpop.trf.xlu0
      %v304 = vpop.trf.xlu0
      %v305 = vpop.trf.xlu0
      %v306 = vpop.trf.xlu0
      %307 = vxpose.xlu0.b32.start [1/16] %v272, 128
      %308 = vxpose.xlu0.b32.cont [2/16] %v274, 128
      %309 = vxpose.xlu0.b32.cont [3/16] 0.0, 128
      %310 = vxpose.xlu0.b32.cont [4/16] 0.0, 128
      %311 = vxpose.xlu0.b32.cont [5/16] 0.0, 128
      %312 = vxpose.xlu0.b32.cont [6/16] 0.0, 128
      %313 = vxpose.xlu0.b32.cont [7/16] 0.0, 128
      %314 = vxpose.xlu0.b32.cont [8/16] 0.0, 128
      %315 = vxpose.xlu0.b32.cont [9/16] 0.0, 128
      %316 = vxpose.xlu0.b32.cont [10/16] 0.0, 128
      %317 = vxpose.xlu0.b32.cont [11/16] 0.0, 128
      %318 = vxpose.xlu0.b32.cont [12/16] 0.0, 128
      %319 = vxpose.xlu0.b32.cont [13/16] 0.0, 128
      %320 = vxpose.xlu0.b32.cont [14/16] 0.0, 128
      %321 = vxpose.xlu0.b32.cont [15/16] 0.0, 128
      %322 = vxpose.xlu0.b32.end [16/16] 0.0, 128
      %v323 = vpop.trf.xlu0
      %v324 = vpop.trf.xlu0
      %v325 = vpop.trf.xlu0
      %v326 = vpop.trf.xlu0
      %v327 = vpop.trf.xlu0
      %v328 = vpop.trf.xlu0
      %v329 = vpop.trf.xlu0
      %v330 = vpop.trf.xlu0
      %v331 = vpop.trf.xlu0
      %v332 = vpop.trf.xlu0
      %v333 = vpop.trf.xlu0
      %v334 = vpop.trf.xlu0
      %v335 = vpop.trf.xlu0
      %v336 = vpop.trf.xlu0
      %v337 = vpop.trf.xlu0
      %v338 = vpop.trf.xlu0
      %v339 = vpack.c.bf16 %v292, %v291
      %v340 = vpack.c.bf16 %v294, %v293
      %v341 = vpack.c.bf16 %v296, %v295
      %v342 = vpack.c.bf16 %v298, %v297
      %v343 = vpack.c.bf16 %v300, %v299
      %v344 = vpack.c.bf16 %v302, %v301
      %v345 = vpack.c.bf16 %v304, %v303
      %v346 = vpack.c.bf16 %v306, %v305
      %v347 = vpack.c.bf16 %v324, %v323
      %v348 = vpack.c.bf16 %v326, %v325
      %v349 = vpack.c.bf16 %v328, %v327
      %v350 = vpack.c.bf16 %v330, %v329
      %v351 = vpack.c.bf16 %v332, %v331
      %v352 = vpack.c.bf16 %v334, %v333
      %v353 = vpack.c.bf16 %v336, %v335
      %v354 = vpack.c.bf16 %v338, %v337
      %v355 = vld [vmem:[%s1] sm:$0xf]
      %v356 = vld [vmem:[%s1 + $0x4] sm:$0xf]
      %v359 = vunpack.c.l.b16 %v355
      %v360 = vunpack.c.l.b16 %v356
      %v361 = vpack.c.b16 %v360, %v359
      %vm363 = vcmask 130048
      %v365 = vsel %vm363, %v339, 0
      %v368 = vsel %vm363, %v340, 0
      %v371 = vsel %vm363, %v341, 0
      %v374 = vsel %vm363, %v342, 0
      %v377 = vsel %vm363, %v343, 0
      %v380 = vsel %vm363, %v344, 0
      %v383 = vsel %vm363, %v345, 0
      %v386 = vsel %vm363, %v346, 0
      %v389 = vsel %vm363, %v347, 0
      %v392 = vsel %vm363, %v348, 0
      %v395 = vsel %vm363, %v349, 0
      %v398 = vsel %vm363, %v350, 0
      %v401 = vsel %vm363, %v351, 0
      %v404 = vsel %vm363, %v352, 0
      %v407 = vsel %vm363, %v353, 0
      %v410 = vsel %vm363, %v354, 0
      %412 = vmatprep.subr.bf16.mxu0 0
      %413 = vmatpush1.bf16.msra.mxu0 %v361
      %414 = vmatprep.subr.bf16.mxu0 0
      %415 = vmatpush1.bf16.msra.mxu0 0
      %416 = vmatprep.subr.bf16.mxu0 0
      %417 = vmatpush1.bf16.msra.mxu0 0
      %418 = vmatprep.subr.bf16.mxu0 0
      %419 = vmatpush1.bf16.msra.mxu0 0
      %420 = vmatprep.subr.bf16.mxu0 0
      %421 = vmatpush1.bf16.msra.mxu0 0
      %422 = vmatprep.subr.bf16.mxu0 0
      %423 = vmatpush1.bf16.msra.mxu0 0
      %424 = vmatprep.subr.bf16.mxu0 0
      %425 = vmatpush1.bf16.msra.mxu0 0
      %426 = vmatprep.subr.bf16.mxu0 0
      %427 = vmatpush1.bf16.msra.mxu0 0
      %428 = vmatprep.subr.bf16.mxu0 0
      %429 = vmatpush1.bf16.msra.mxu0 0
      %430 = vmatprep.subr.bf16.mxu0 0
      %431 = vmatpush1.bf16.msra.mxu0 0
      %432 = vmatprep.subr.bf16.mxu0 0
      %433 = vmatpush1.bf16.msra.mxu0 0
      %434 = vmatprep.subr.bf16.mxu0 0
      %435 = vmatpush1.bf16.msra.mxu0 0
      %436 = vmatprep.subr.bf16.mxu0 0
      %437 = vmatpush1.bf16.msra.mxu0 0
      %438 = vmatprep.subr.bf16.mxu0 0
      %439 = vmatpush1.bf16.msra.mxu0 0
      %440 = vmatprep.subr.bf16.mxu0 0
      %441 = vmatpush1.bf16.msra.mxu0 0
      %442 = vmatprep.subr.bf16.mxu0 0
      %443 = vmatpush1.bf16.msra.mxu0 0
      %444 = vmatprep.mubr.bf16.mxu0 0
      %445 = vmatmul.mubr.bf16.gmra.mrb[0].mxu0 %v365
      %v446 = vpop.f32.mrb[0].mxu0
      %v447 = vadd.f32 0.0, %v446
      %v448 = vpop.f32.mrb[0].mxu0
      %v449 = vpop.f32.mrb[0].mxu0
      %v450 = vadd.f32 0.0, %v449
      %v451 = vpop.f32.mrb[0].mxu0
      %452 = vmatprep.mubr.bf16.mxu0 0
      %453 = vmatmul.mubr.bf16.gmra.mrb[0].mxu0 %v368
      %v454 = vpop.f32.mrb[0].mxu0
      %v455 = vadd.f32 0.0, %v454
      %v456 = vpop.f32.mrb[0].mxu0
      %v457 = vpop.f32.mrb[0].mxu0
      %v458 = vadd.f32 0.0, %v457
      %v459 = vpop.f32.mrb[0].mxu0
      %460 = vmatprep.mubr.bf16.mxu0 0
      %461 = vmatmul.mubr.bf16.gmra.mrb[0].mxu0 %v371
      %v462 = vpop.f32.mrb[0].mxu0
      %v463 = vadd.f32 0.0, %v462
      %v464 = vpop.f32.mrb[0].mxu0
      %v465 = vpop.f32.mrb[0].mxu0
      %v466 = vadd.f32 0.0, %v465
      %v467 = vpop.f32.mrb[0].mxu0
      %468 = vmatprep.mubr.bf16.mxu0 0
      %469 = vmatmul.mubr.bf16.gmra.mrb[0].mxu0 %v374
      %v470 = vpop.f32.mrb[0].mxu0
      %v471 = vadd.f32 0.0, %v470
      %v472 = vpop.f32.mrb[0].mxu0
      %v473 = vpop.f32.mrb[0].mxu0
      %v474 = vadd.f32 0.0, %v473
      %v475 = vpop.f32.mrb[0].mxu0
      %476 = vmatprep.mubr.bf16.mxu0 0
      %477 = vmatmul.mubr.bf16.gmra.mrb[0].mxu0 %v377
      %v478 = vpop.f32.mrb[0].mxu0
      %v479 = vadd.f32 0.0, %v478
      %v480 = vpop.f32.mrb[0].mxu0
      %v481 = vpop.f32.mrb[0].mxu0
      %v482 = vadd.f32 0.0, %v481
      %v483 = vpop.f32.mrb[0].mxu0
      %484 = vmatprep.mubr.bf16.mxu0 0
      %485 = vmatmul.mubr.bf16.gmra.mrb[0].mxu0 %v380
      %v486 = vpop.f32.mrb[0].mxu0
      %v487 = vadd.f32 0.0, %v486
      %v488 = vpop.f32.mrb[0].mxu0
      %v489 = vpop.f32.mrb[0].mxu0
      %v490 = vadd.f32 0.0, %v489
      %v491 = vpop.f32.mrb[0].mxu0
      %492 = vmatprep.mubr.bf16.mxu0 0
      %493 = vmatmul.mubr.bf16.gmra.mrb[0].mxu0 %v383
      %v494 = vpop.f32.mrb[0].mxu0
      %v495 = vadd.f32 0.0, %v494
      %v496 = vpop.f32.mrb[0].mxu0
      %v497 = vpop.f32.mrb[0].mxu0
      %v498 = vadd.f32 0.0, %v497
      %v499 = vpop.f32.mrb[0].mxu0
      %500 = vmatprep.mubr.bf16.mxu0 0
      %501 = vmatmul.mubr.bf16.gmra.mrb[0].mxu0 %v386
      %v502 = vpop.f32.mrb[0].mxu0
      %v503 = vadd.f32 0.0, %v502
      %v504 = vpop.f32.mrb[0].mxu0
      %v505 = vpop.f32.mrb[0].mxu0
      %v506 = vadd.f32 0.0, %v505
      %v507 = vpop.f32.mrb[0].mxu0
      %508 = vmatprep.mubr.bf16.mxu0 0
      %509 = vmatmul.mubr.bf16.gmra.mrb[0].mxu0 %v389
      %v510 = vpop.f32.mrb[0].mxu0
      %v511 = vadd.f32 0.0, %v510
      %v512 = vpop.f32.mrb[0].mxu0
      %v513 = vpop.f32.mrb[0].mxu0
      %v514 = vadd.f32 0.0, %v513
      %v515 = vpop.f32.mrb[0].mxu0
      %516 = vmatprep.mubr.bf16.mxu0 0
      %517 = vmatmul.mubr.bf16.gmra.mrb[0].mxu0 %v392
      %v518 = vpop.f32.mrb[0].mxu0
      %v519 = vadd.f32 0.0, %v518
      %v520 = vpop.f32.mrb[0].mxu0
      %v521 = vpop.f32.mrb[0].mxu0
      %v522 = vadd.f32 0.0, %v521
      %v523 = vpop.f32.mrb[0].mxu0
      %524 = vmatprep.mubr.bf16.mxu0 0
      %525 = vmatmul.mubr.bf16.gmra.mrb[0].mxu0 %v395
      %v526 = vpop.f32.mrb[0].mxu0
      %v527 = vadd.f32 0.0, %v526
      %v528 = vpop.f32.mrb[0].mxu0
      %v529 = vpop.f32.mrb[0].mxu0
      %v530 = vadd.f32 0.0, %v529
      %v531 = vpop.f32.mrb[0].mxu0
      %532 = vmatprep.mubr.bf16.mxu0 0
      %533 = vmatmul.mubr.bf16.gmra.mrb[0].mxu0 %v398
      %v534 = vpop.f32.mrb[0].mxu0
      %v535 = vadd.f32 0.0, %v534
      %v536 = vpop.f32.mrb[0].mxu0
      %v537 = vpop.f32.mrb[0].mxu0
      %v538 = vadd.f32 0.0, %v537
      %v539 = vpop.f32.mrb[0].mxu0
      %540 = vmatprep.mubr.bf16.mxu0 0
      %541 = vmatmul.mubr.bf16.gmra.mrb[0].mxu0 %v401
      %v542 = vpop.f32.mrb[0].mxu0
      %v543 = vadd.f32 0.0, %v542
      %v544 = vpop.f32.mrb[0].mxu0
      %v545 = vpop.f32.mrb[0].mxu0
      %v546 = vadd.f32 0.0, %v545
      %v547 = vpop.f32.mrb[0].mxu0
      %548 = vmatprep.mubr.bf16.mxu0 0
      %549 = vmatmul.mubr.bf16.gmra.mrb[0].mxu0 %v404
      %v550 = vpop.f32.mrb[0].mxu0
      %v551 = vadd.f32 0.0, %v550
      %v552 = vpop.f32.mrb[0].mxu0
      %v553 = vpop.f32.mrb[0].mxu0
      %v554 = vadd.f32 0.0, %v553
      %v555 = vpop.f32.mrb[0].mxu0
      %556 = vmatprep.mubr.bf16.mxu0 0
      %557 = vmatmul.mubr.bf16.gmra.mrb[0].mxu0 %v407
      %v558 = vpop.f32.mrb[0].mxu0
      %v559 = vadd.f32 0.0, %v558
      %v560 = vpop.f32.mrb[0].mxu0
      %v561 = vpop.f32.mrb[0].mxu0
      %v562 = vadd.f32 0.0, %v561
      %v563 = vpop.f32.mrb[0].mxu0
      %564 = vmatprep.mubr.bf16.mxu0 0
      %565 = vmatmul.mubr.bf16.gmra.mrb[0].mxu0 %v410
      %v566 = vpop.f32.mrb[0].mxu0
      %v567 = vadd.f32 0.0, %v566
      %v568 = vpop.f32.mrb[0].mxu0
      %v569 = vpop.f32.mrb[0].mxu0
      %v570 = vadd.f32 0.0, %v569
      %v571 = vpop.f32.mrb[0].mxu0
      %572 = vdwg.mxu0
      %v573 = vpack.c.bf16 %v450, %v447
      %v574 = vpack.c.bf16 %v458, %v455
      %v575 = vpack.c.bf16 %v466, %v463
      %v576 = vpack.c.bf16 %v474, %v471
      %v577 = vpack.c.bf16 %v482, %v479
      %v578 = vpack.c.bf16 %v490, %v487
      %v579 = vpack.c.bf16 %v498, %v495
      %v580 = vpack.c.bf16 %v506, %v503
      %v581 = vpack.c.bf16 %v514, %v511
      %v582 = vpack.c.bf16 %v522, %v519
      %v583 = vpack.c.bf16 %v530, %v527
      %v584 = vpack.c.bf16 %v538, %v535
      %v585 = vpack.c.bf16 %v546, %v543
      %v586 = vpack.c.bf16 %v554, %v551
      %v587 = vpack.c.bf16 %v562, %v559
      %v588 = vpack.c.bf16 %v570, %v567
      %v605 = vunpack.c.l.b16 %v573
      %v606 = vunpack.c.h.b16 %v573
      %v607 = vunpack.c.l.b16 %v574
      %v608 = vunpack.c.h.b16 %v574
      %v609 = vunpack.c.l.b16 %v575
      %v610 = vunpack.c.h.b16 %v575
      %v611 = vunpack.c.l.b16 %v576
      %v612 = vunpack.c.h.b16 %v576
      %v613 = vunpack.c.l.b16 %v577
      %v614 = vunpack.c.h.b16 %v577
      %v615 = vunpack.c.l.b16 %v578
      %v616 = vunpack.c.h.b16 %v578
      %v617 = vunpack.c.l.b16 %v579
      %v618 = vunpack.c.h.b16 %v579
      %v619 = vunpack.c.l.b16 %v580
      %v620 = vunpack.c.h.b16 %v580
      %v621 = vunpack.c.l.b16 %v581
      %v622 = vunpack.c.h.b16 %v581
      %v623 = vunpack.c.l.b16 %v582
      %v624 = vunpack.c.h.b16 %v582
      %v625 = vunpack.c.l.b16 %v583
      %v626 = vunpack.c.h.b16 %v583
      %v627 = vunpack.c.l.b16 %v584
      %v628 = vunpack.c.h.b16 %v584
      %v629 = vunpack.c.l.b16 %v585
      %v630 = vunpack.c.h.b16 %v585
      %v631 = vunpack.c.l.b16 %v586
      %v632 = vunpack.c.h.b16 %v586
      %v633 = vunpack.c.l.b16 %v587
      %v634 = vunpack.c.h.b16 %v587
      %v635 = vunpack.c.l.b16 %v588
      %v636 = vunpack.c.h.b16 %v588
      %v637 = vpack.c.b16 %v605, %v605
      %v638 = vpack.c.b16 %v606, %v606
      %v639 = vpack.c.b16 %v607, %v607
      %v640 = vpack.c.b16 %v608, %v608
      %v641 = vpack.c.b16 %v609, %v609
      %v642 = vpack.c.b16 %v610, %v610
      %v643 = vpack.c.b16 %v611, %v611
      %v644 = vpack.c.b16 %v612, %v612
      %v645 = vpack.c.b16 %v613, %v613
      %v646 = vpack.c.b16 %v614, %v614
      %v647 = vpack.c.b16 %v615, %v615
      %v648 = vpack.c.b16 %v616, %v616
      %v649 = vpack.c.b16 %v617, %v617
      %v650 = vpack.c.b16 %v618, %v618
      %v651 = vpack.c.b16 %v619, %v619
      %v652 = vpack.c.b16 %v620, %v620
      %v653 = vpack.c.b16 %v621, %v621
      %v654 = vpack.c.b16 %v622, %v622
      %v655 = vpack.c.b16 %v623, %v623
      %v656 = vpack.c.b16 %v624, %v624
      %v657 = vpack.c.b16 %v625, %v625
      %v658 = vpack.c.b16 %v626, %v626
      %v659 = vpack.c.b16 %v627, %v627
      %v660 = vpack.c.b16 %v628, %v628
      %v661 = vpack.c.b16 %v629, %v629
      %v662 = vpack.c.b16 %v630, %v630
      %v663 = vpack.c.b16 %v631, %v631
      %v664 = vpack.c.b16 %v632, %v632
      %v665 = vpack.c.b16 %v633, %v633
      %v666 = vpack.c.b16 %v634, %v634
      %v667 = vpack.c.b16 %v635, %v635
      %v668 = vpack.c.b16 %v636, %v636
      %vm701 = vcmask 27648
      %702 = vst.msk [vmem:[%s256] sm:$0xf] %vm701, %v637
      %703 = vst.msk [vmem:[%s256 + $0x4] sm:$0xf] %vm701, %v638
      %704 = vst.msk [vmem:[%s256 + $0x8] sm:$0xf] %vm701, %v639
      %705 = vst.msk [vmem:[%s256 + $0xc] sm:$0xf] %vm701, %v640
      %706 = vst.msk [vmem:[%s256 + $0x10] sm:$0xf] %vm701, %v641
      %707 = vst.msk [vmem:[%s256 + $0x14] sm:$0xf] %vm701, %v642
      %708 = vst.msk [vmem:[%s256 + $0x18] sm:$0xf] %vm701, %v643
      %709 = vst.msk [vmem:[%s256 + $0x1c] sm:$0xf] %vm701, %v644
      %710 = vst.msk [vmem:[%s256 + $0x20] sm:$0xf] %vm701, %v645
      %711 = vst.msk [vmem:[%s256 + $0x24] sm:$0xf] %vm701, %v646
      %712 = vst.msk [vmem:[%s256 + $0x28] sm:$0xf] %vm701, %v647
      %713 = vst.msk [vmem:[%s256 + $0x2c] sm:$0xf] %vm701, %v648
      %714 = vst.msk [vmem:[%s256 + $0x30] sm:$0xf] %vm701, %v649
      %715 = vst.msk [vmem:[%s256 + $0x34] sm:$0xf] %vm701, %v650
      %716 = vst.msk [vmem:[%s256 + $0x38] sm:$0xf] %vm701, %v651
      %717 = vst.msk [vmem:[%s256 + $0x3c] sm:$0xf] %vm701, %v652
      %718 = vst.msk [vmem:[%s256 + $0x40] sm:$0xf] %vm701, %v653
      %719 = vst.msk [vmem:[%s256 + $0x44] sm:$0xf] %vm701, %v654
      %720 = vst.msk [vmem:[%s256 + $0x48] sm:$0xf] %vm701, %v655
      %721 = vst.msk [vmem:[%s256 + $0x4c] sm:$0xf] %vm701, %v656
      %722 = vst.msk [vmem:[%s256 + $0x50] sm:$0xf] %vm701, %v657
      %723 = vst.msk [vmem:[%s256 + $0x54] sm:$0xf] %vm701, %v658
      %724 = vst.msk [vmem:[%s256 + $0x58] sm:$0xf] %vm701, %v659
      %725 = vst.msk [vmem:[%s256 + $0x5c] sm:$0xf] %vm701, %v660
      %726 = vst.msk [vmem:[%s256 + $0x60] sm:$0xf] %vm701, %v661
      %727 = vst.msk [vmem:[%s256 + $0x64] sm:$0xf] %vm701, %v662
      %728 = vst.msk [vmem:[%s256 + $0x68] sm:$0xf] %vm701, %v663
      %729 = vst.msk [vmem:[%s256 + $0x6c] sm:$0xf] %vm701, %v664
      %730 = vst.msk [vmem:[%s256 + $0x70] sm:$0xf] %vm701, %v665
      %731 = vst.msk [vmem:[%s256 + $0x74] sm:$0xf] %vm701, %v666
      %732 = vst.msk [vmem:[%s256 + $0x78] sm:$0xf] %vm701, %v667
      %733 = vst.msk [vmem:[%s256 + $0x7c] sm:$0xf] %vm701, %v668
      %vm734 = vcmask 31744
      %v735 = vsel %vm734, %v447, 0.0
      %v736 = vsel %vm734, %v450, 0.0
      %v737 = vadd.f32 %v735, %v736
      %v738 = vsel %vm734, %v455, 0.0
      %v739 = vadd.f32 %v737, %v738
      %v740 = vsel %vm734, %v458, 0.0
      %v741 = vadd.f32 %v739, %v740
      %v742 = vsel %vm734, %v463, 0.0
      %v743 = vadd.f32 %v741, %v742
      %v744 = vsel %vm734, %v466, 0.0
      %v745 = vadd.f32 %v743, %v744
      %v746 = vsel %vm734, %v471, 0.0
      %v747 = vadd.f32 %v745, %v746
      %v748 = vsel %vm734, %v474, 0.0
      %v749 = vadd.f32 %v747, %v748
      %v750 = vsel %vm734, %v479, 0.0
      %v751 = vadd.f32 %v749, %v750
      %v752 = vsel %vm734, %v482, 0.0
      %v753 = vadd.f32 %v751, %v752
      %v754 = vsel %vm734, %v487, 0.0
      %v755 = vadd.f32 %v753, %v754
      %v756 = vsel %vm734, %v490, 0.0
      %v757 = vadd.f32 %v755, %v756
      %v758 = vsel %vm734, %v495, 0.0
      %v759 = vadd.f32 %v757, %v758
      %v760 = vsel %vm734, %v498, 0.0
      %v761 = vadd.f32 %v759, %v760
      %v762 = vsel %vm734, %v503, 0.0
      %v763 = vadd.f32 %v761, %v762
      %v764 = vsel %vm734, %v506, 0.0
      %v765 = vadd.f32 %v763, %v764
      %v766 = vsel %vm734, %v511, 0.0
      %v767 = vadd.f32 %v765, %v766
      %v768 = vsel %vm734, %v514, 0.0
      %v769 = vadd.f32 %v767, %v768
      %v770 = vsel %vm734, %v519, 0.0
      %v771 = vadd.f32 %v769, %v770
      %v772 = vsel %vm734, %v522, 0.0
      %v773 = vadd.f32 %v771, %v772
      %v774 = vsel %vm734, %v527, 0.0
      %v775 = vadd.f32 %v773, %v774
      %v776 = vsel %vm734, %v530, 0.0
      %v777 = vadd.f32 %v775, %v776
      %v778 = vsel %vm734, %v535, 0.0
      %v779 = vadd.f32 %v777, %v778
      %v780 = vsel %vm734, %v538, 0.0
      %v781 = vadd.f32 %v779, %v780
      %v782 = vsel %vm734, %v543, 0.0
      %v783 = vadd.f32 %v781, %v782
      %v784 = vsel %vm734, %v546, 0.0
      %v785 = vadd.f32 %v783, %v784
      %v786 = vsel %vm734, %v551, 0.0
      %v787 = vadd.f32 %v785, %v786
      %v788 = vsel %vm734, %v554, 0.0
      %v789 = vadd.f32 %v787, %v788
      %v790 = vsel %vm734, %v559, 0.0
      %v791 = vadd.f32 %v789, %v790
      %v792 = vsel %vm734, %v562, 0.0
      %v793 = vadd.f32 %v791, %v792
      %v794 = vsel %vm734, %v567, 0.0
      %v795 = vadd.f32 %v793, %v794
      %v796 = vsel %vm734, %v570, 0.0
      %v797 = vadd.f32 %v795, %v796
      %v798 = vrot.slane %v797, 4
      %v799 = vadd.f32 %v797, %v798
      %v800 = vrot.slane %v799, 2
      %v801 = vadd.f32 %v799, %v800
      %v802 = vrot.slane %v801, 1
      %v803 = vadd.f32 %v801, %v802
      %vm804 = vcmask 24576
      %805 = vst.msk [vmem:[%s263] sm:$0x1] %vm804, %v803
      %v806 = vmul.f32 %v447, %v447
      %v807 = vmul.f32 %v450, %v450
      %v808 = vmul.f32 %v455, %v455
      %v809 = vmul.f32 %v458, %v458
      %v810 = vmul.f32 %v463, %v463
      %v811 = vmul.f32 %v466, %v466
      %v812 = vmul.f32 %v471, %v471
      %v813 = vmul.f32 %v474, %v474
      %v814 = vmul.f32 %v479, %v479
      %v815 = vmul.f32 %v482, %v482
      %v816 = vmul.f32 %v487, %v487
      %v817 = vmul.f32 %v490, %v490
      %v818 = vmul.f32 %v495, %v495
      %v819 = vmul.f32 %v498, %v498
      %v820 = vmul.f32 %v503, %v503
      %v821 = vmul.f32 %v506, %v506
      %v822 = vmul.f32 %v511, %v511
      %v823 = vmul.f32 %v514, %v514
      %v824 = vmul.f32 %v519, %v519
      %v825 = vmul.f32 %v522, %v522
      %v826 = vmul.f32 %v527, %v527
      %v827 = vmul.f32 %v530, %v530
      %v828 = vmul.f32 %v535, %v535
      %v829 = vmul.f32 %v538, %v538
      %v830 = vmul.f32 %v543, %v543
      %v831 = vmul.f32 %v546, %v546
      %v832 = vmul.f32 %v551, %v551
      %v833 = vmul.f32 %v554, %v554
      %v834 = vmul.f32 %v559, %v559
      %v835 = vmul.f32 %v562, %v562
      %v836 = vmul.f32 %v567, %v567
      %v837 = vmul.f32 %v570, %v570
      %v838 = vsel %vm734, %v806, 0.0
      %v839 = vsel %vm734, %v807, 0.0
      %v840 = vadd.f32 %v838, %v839
      %v841 = vsel %vm734, %v808, 0.0
      %v842 = vadd.f32 %v840, %v841
      %v843 = vsel %vm734, %v809, 0.0
      %v844 = vadd.f32 %v842, %v843
      %v845 = vsel %vm734, %v810, 0.0
      %v846 = vadd.f32 %v844, %v845
      %v847 = vsel %vm734, %v811, 0.0
      %v848 = vadd.f32 %v846, %v847
      %v849 = vsel %vm734, %v812, 0.0
      %v850 = vadd.f32 %v848, %v849
      %v851 = vsel %vm734, %v813, 0.0
      %v852 = vadd.f32 %v850, %v851
      %v853 = vsel %vm734, %v814, 0.0
      %v854 = vadd.f32 %v852, %v853
      %v855 = vsel %vm734, %v815, 0.0
      %v856 = vadd.f32 %v854, %v855
      %v857 = vsel %vm734, %v816, 0.0
      %v858 = vadd.f32 %v856, %v857
      %v859 = vsel %vm734, %v817, 0.0
      %v860 = vadd.f32 %v858, %v859
      %v861 = vsel %vm734, %v818, 0.0
      %v862 = vadd.f32 %v860, %v861
      %v863 = vsel %vm734, %v819, 0.0
      %v864 = vadd.f32 %v862, %v863
      %v865 = vsel %vm734, %v820, 0.0
      %v866 = vadd.f32 %v864, %v865
      %v867 = vsel %vm734, %v821, 0.0
      %v868 = vadd.f32 %v866, %v867
      %v869 = vsel %vm734, %v822, 0.0
      %v870 = vadd.f32 %v868, %v869
      %v871 = vsel %vm734, %v823, 0.0
      %v872 = vadd.f32 %v870, %v871
      %v873 = vsel %vm734, %v824, 0.0
      %v874 = vadd.f32 %v872, %v873
      %v875 = vsel %vm734, %v825, 0.0
      %v876 = vadd.f32 %v874, %v875
      %v877 = vsel %vm734, %v826, 0.0
      %v878 = vadd.f32 %v876, %v877
      %v879 = vsel %vm734, %v827, 0.0
      %v880 = vadd.f32 %v878, %v879
      %v881 = vsel %vm734, %v828, 0.0
      %v882 = vadd.f32 %v880, %v881
      %v883 = vsel %vm734, %v829, 0.0
      %v884 = vadd.f32 %v882, %v883
      %v885 = vsel %vm734, %v830, 0.0
      %v886 = vadd.f32 %v884, %v885
      %v887 = vsel %vm734, %v831, 0.0
      %v888 = vadd.f32 %v886, %v887
      %v889 = vsel %vm734, %v832, 0.0
      %v890 = vadd.f32 %v888, %v889
      %v891 = vsel %vm734, %v833, 0.0
      %v892 = vadd.f32 %v890, %v891
      %v893 = vsel %vm734, %v834, 0.0
      %v894 = vadd.f32 %v892, %v893
      %v895 = vsel %vm734, %v835, 0.0
      %v896 = vadd.f32 %v894, %v895
      %v897 = vsel %vm734, %v836, 0.0
      %v898 = vadd.f32 %v896, %v897
      %v899 = vsel %vm734, %v837, 0.0
      %v900 = vadd.f32 %v898, %v899
      %v901 = vrot.slane %v900, 4
      %v902 = vadd.f32 %v900, %v901
      %v903 = vrot.slane %v902, 2
      %v904 = vadd.f32 %v902, %v903
      %v905 = vrot.slane %v904, 1
      %v906 = vadd.f32 %v904, %v905
      %907 = vst.msk [vmem:[%s269] sm:$0x1] %vm804, %v906
      %s908 = smul.u32 32, %s21
      %p909 = scmp.lt.s32.totalorder %s20, 1
      %s910 = scalar_select %p909, %s20, 1
      %p911 = scmp.lt.s32.totalorder %s908, 31
      %s912 = scalar_select %p911, %s908, 31
      %s913 = smul.addr %s910, 32
      %s914 = sadd.s32 %s912, %s913
      %s915 = smul.addr %s914, 4
      %s916 = scalar_lea.vmem %s2, %s915
      %p917 = scmp.lt.s32.totalorder %s20, 1
      %s918 = scalar_select %p917, %s20, 1
      %p919 = scmp.lt.s32.totalorder %s21, 0
      %s920 = scalar_select %p919, %s21, 0
      %s921 = sadd.s32 %s920, %s918
      %s922 = scalar_lea.vmem %s3, %s921
      %p923 = scmp.lt.s32.totalorder %s20, 1
      %s924 = scalar_select %p923, %s20, 1
      %p925 = scmp.lt.s32.totalorder %s21, 0
      %s926 = scalar_select %p925, %s21, 0
      %s927 = sadd.s32 %s926, %s924
      %s928 = scalar_lea.vmem %s4, %s927
      // Predicated region
      $region29: #{bottleneck_forward.4} parent=27 // pred_check
        %p929 = pneg %p97
      $region30: #{bottleneck_forward.4} parent=27 // pred_check_branch
        %931 = sbr.rel (%p929) target = $region32
      $region31: #{bottleneck_forward.4} parent=27 // pred_region
        %s932 = smul.u32 32, %s21
      $region32: #{bottleneck_forward.4} parent=27 // pred_fallthru
        _
      // Predicated region
      $region33: #{bottleneck_forward.4} parent=27 // pred_check
        %p933 = pneg %p125
      $region34: #{bottleneck_forward.4} parent=27 // pred_check_branch
        %935 = sbr.rel (%p933) target = $region36
      $region35: #{bottleneck_forward.4} parent=27 // pred_region
        _
      $region36: #{bottleneck_forward.4} parent=27 // pred_fallthru
        _
      // Predicated region
      $region37: #{bottleneck_forward.4} parent=27 // pred_check
        %p936 = pneg %p153
      $region38: #{bottleneck_forward.4} parent=27 // pred_check_branch
        %938 = sbr.rel (%p936) target = $region40
      $region39: #{bottleneck_forward.4} parent=27 // pred_region
        _
      $region40: #{bottleneck_forward.4} parent=27 // pred_fallthru
        _
    $region28: #{bottleneck_forward.4} parent=5 // pred_fallthru
      _
    %p939 = scmp.le.s32.totalorder 2, %s11
    // Predicated region
    $region41: #{bottleneck_forward.4} parent=5 // pred_check
      %p940 = pneg %p939
    $region42: #{bottleneck_forward.4} parent=5 // pred_check_branch
      %942 = sbr.rel (%p940) target = $region44
    $region43: #{bottleneck_forward.4} parent=5 // pred_region
      %s943 = ssub.s32 %s11, 2
      // Predicated region
      $region45: #{bottleneck_forward.4} parent=43 // pred_check
        %p944 = pneg %p103
      $region46: #{bottleneck_forward.4} parent=43 // pred_check_branch
        %946 = sbr.rel (%p944) target = $region48
      $region47: #{bottleneck_forward.4} parent=43 // pred_region
        %s947 = smul.u32 32, %s23
        %p948 = scmp.lt.s32.totalorder %s22, 1
        %s949 = scalar_select %p948, %s22, 1
        %p950 = scmp.lt.s32.totalorder %s947, 31
        %s951 = scalar_select %p950, %s947, 31
        %s952 = smul.addr %s949, 32
        %s953 = sadd.s32 %s951, %s952
        %s954 = smul.addr %s953, 4
        %s955 = scalar_lea.vmem %s2, %s954
      $region48: #{bottleneck_forward.4} parent=43 // pred_fallthru
        _
      // Predicated region
      $region49: #{bottleneck_forward.4} parent=43 // pred_check
        %p956 = pneg %p131
      $region50: #{bottleneck_forward.4} parent=43 // pred_check_branch
        %958 = sbr.rel (%p956) target = $region52
      $region51: #{bottleneck_forward.4} parent=43 // pred_region
        %p959 = scmp.lt.s32.totalorder %s22, 1
        %s960 = scalar_select %p959, %s22, 1
        %p961 = scmp.lt.s32.totalorder %s23, 0
        %s962 = scalar_select %p961, %s23, 0
        %s963 = sadd.s32 %s962, %s960
        %s964 = scalar_lea.vmem %s3, %s963
      $region52: #{bottleneck_forward.4} parent=43 // pred_fallthru
        _
      // Predicated region
      $region53: #{bottleneck_forward.4} parent=43 // pred_check
        %p965 = pneg %p159
      $region54: #{bottleneck_forward.4} parent=43 // pred_check_branch
        %967 = sbr.rel (%p965) target = $region56
      $region55: #{bottleneck_forward.4} parent=43 // pred_region
        %p968 = scmp.lt.s32.totalorder %s22, 1
        %s969 = scalar_select %p968, %s22, 1
        %p970 = scmp.lt.s32.totalorder %s23, 0
        %s971 = scalar_select %p970, %s23, 0
        %s972 = sadd.s32 %s971, %s969
        %s973 = scalar_lea.vmem %s4, %s972
      $region56: #{bottleneck_forward.4} parent=43 // pred_fallthru
        _
    $region44: #{bottleneck_forward.4} parent=5 // pred_fallthru
      _
  $region6: #{bottleneck_forward.4} parent=0 // loop_footer
    %s15 = sadd.s32 1, %s11
  $region7: #{bottleneck_forward.4} parent=0 // loop_footer_branch
    %10 = sbr.rel target = $region3
  $region8: #{bottleneck_forward.4} parent=0 // loop_exit
    _

// kernel: bottleneck_forward.7
$region0: #{bottleneck_forward.7}
  #allocation0 [shape = 'u32[]', space=smem, size = 0x4, offset = 0x4, fixed_abs, tag = 'smem constant byte address 0x4 - core index']
  #allocation1 [shape = 'u32[144,128]{1,0:T(1,128)}', space=vmem, size = 0x12000, scoped, tag = 'internal scratch']
  %s0 = inlined_call_operand.vmem [shape: bf16[2,256,16], index: 0, kind: input, shape index: {}]
  %s1 = inlined_call_operand.vmem [shape: f32[2,16,256], index: 1, kind: input, shape index: {}]
  %s2 = inlined_call_operand.vmem [shape: f32[1,16], index: 2, kind: input, shape index: {}]
  %s3 = inlined_call_operand.vmem [shape: f32[1,16], index: 3, kind: input, shape index: {}]
  %s4 = inlined_call_operand.vmem [shape: f32[1,16], index: 4, kind: input, shape index: {}]
  %s5 = inlined_call_operand.vmem [shape: f32[1,16], index: 5, kind: input, shape index: {}]
  %s6 = inlined_call_operand.vmem [shape: f32[2,16,256], index: 6, kind: output, shape index: {}]
  %s7 = sld [smem:[#allocation0]]
  $region57: #{bottleneck_forward.7} parent=0
    _
  %s9 = ssub.s32 1, %s7
  %s10 = scalar_select 0, %s9, %s7
  loop: start=0, step=1, limit=4
  $region2: #{bottleneck_forward.7} parent=0 // loop_pre_header
    _
  $region3: #{bottleneck_forward.7} parent=0 // loop_header
    %s12 = sphi 0, %s16
    %p13 = scmp.ge.s32.totalorder %s12, 4
    %s19 = sphi 0, %s31
    %s20 = sphi 0, %s27
    %s21 = sphi 0, %s19
    %s22 = sphi 0, %s20
    %s23 = sphi 0, %s21
    %s24 = sphi 0, %s22
    %s36 = sphi 0, %s38
    %s39 = sphi 0, %s36
    %s40 = sphi 0, %s39
    %s56 = sphi 0, %s40
    %s64 = sphi 0, %s66
    %s67 = sphi 0, %s64
    %s68 = sphi 0, %s67
    %s84 = sphi 0, %s68
    %s88 = sphi 0, %s88
    %s90 = sphi 0, %s88
    %s91 = sphi 0, %s90
    %s105 = sphi 0, %s91
    %s109 = sphi 0, %s109
    %s111 = sphi 0, %s109
    %s112 = sphi 0, %s111
    %s126 = sphi 0, %s112
    %s130 = sphi 0, %s130
    %s132 = sphi 0, %s130
    %s133 = sphi 0, %s132
    %s147 = sphi 0, %s133
    %s151 = sphi 0, %s151
    %s153 = sphi 0, %s151
    %s154 = sphi 0, %s153
    %s168 = sphi 0, %s154
    %s176 = sphi 0, %s178
    %s179 = sphi 0, %s176
    %s180 = sphi 0, %s179
    %s196 = sphi 0, %s180
  $region4: #{bottleneck_forward.7} parent=0 // loop_header_branch
    %15 = sbr.rel (%p13) target = $region8
  $region5: #{bottleneck_forward.7} parent=0 // loop_body
    %s17 = ssub.s32 %s12, 1
    %s18 = ssub.s32 %s12, 2
    %s25 = sadd.s32 1, %s20
    %p26 = scmp.ge.s32.totalorder %s25, 1
    %s27 = scalar_select %p26, 0, %s25
    %s28 = sadd.s32 1, %s19
    %s29 = scalar_select %p26, %s28, %s19
    %p30 = scmp.ge.s32.totalorder %s29, 2
    %s31 = scalar_select %p30, 0, %s29
    %s32 = ssub.s32 %s19, %s31
    %s33 = ssub.s32 %s20, %s27
    %s34 = sor.u32 %s32, %s33
    %p35 = scmp.eq.s32.totalorder %s34, 0
    %s37 = sadd.s32 %s36, 1
    %s38 = scalar_select %p35, %s36, %s37
    %p41 = pneg %p35
    %p42 = scmp.eq.s32.totalorder %s12, 1
    %p43 = por %p41, %p42
    %p44 = scmp.ne.s32.totalorder %s36, %s39
    %p45 = scmp.eq.s32.totalorder %s12, 0
    %p46 = por %p44, %p45
    %p47 = scmp.ne.s32.totalorder %s36, %s39
    %p48 = scmp.eq.s32.totalorder %s17, 1
    %p49 = por %p47, %p48
    %p50 = scmp.ne.s32.totalorder %s39, %s40
    %p51 = scmp.eq.s32.totalorder %s17, 0
    %p52 = por %p50, %p51
    %p53 = scmp.ne.s32.totalorder %s39, %s40
    %p54 = scmp.eq.s32.totalorder %s18, 1
    %p55 = por %p53, %p54
    %p57 = scmp.ne.s32.totalorder %s40, %s56
    %p58 = scmp.eq.s32.totalorder %s18, 0
    %p59 = por %p57, %p58
    %s60 = ssub.s32 %s19, %s31
    %s61 = ssub.s32 %s20, %s27
    %s62 = sor.u32 %s60, %s61
    %p63 = scmp.eq.s32.totalorder %s62, 0
    %s65 = sadd.s32 %s64, 1
    %s66 = scalar_select %p63, %s64, %s65
    %p69 = pneg %p63
    %p70 = scmp.eq.s32.totalorder %s12, 1
    %p71 = por %p69, %p70
    %p72 = scmp.ne.s32.totalorder %s64, %s67
    %p73 = scmp.eq.s32.totalorder %s12, 0
    %p74 = por %p72, %p73
    %p75 = scmp.ne.s32.totalorder %s64, %s67
    %p76 = scmp.eq.s32.totalorder %s17, 1
    %p77 = por %p75, %p76
    %p78 = scmp.ne.s32.totalorder %s67, %s68
    %p79 = scmp.eq.s32.totalorder %s17, 0
    %p80 = por %p78, %p79
    %p81 = scmp.ne.s32.totalorder %s67, %s68
    %p82 = scmp.eq.s32.totalorder %s18, 1
    %p83 = por %p81, %p82
    %p85 = scmp.ne.s32.totalorder %s68, %s84
    %p86 = scmp.eq.s32.totalorder %s18, 0
    %p87 = por %p85, %p86
    %s89 = sadd.s32 %s88, 1
    %p92 = scmp.eq.s32.totalorder %s12, 1
    %p93 = scmp.ne.s32.totalorder %s88, %s90
    %p94 = scmp.eq.s32.totalorder %s12, 0
    %p95 = por %p93, %p94
    %p96 = scmp.ne.s32.totalorder %s88, %s90
    %p97 = scmp.eq.s32.totalorder %s17, 1
    %p98 = por %p96, %p97
    %p99 = scmp.ne.s32.totalorder %s90, %s91
    %p100 = scmp.eq.s32.totalorder %s17, 0
    %p101 = por %p99, %p100
    %p102 = scmp.ne.s32.totalorder %s90, %s91
    %p103 = scmp.eq.s32.totalorder %s18, 1
    %p104 = por %p102, %p103
    %p106 = scmp.ne.s32.totalorder %s91, %s105
    %p107 = scmp.eq.s32.totalorder %s18, 0
    %p108 = por %p106, %p107
    %s110 = sadd.s32 %s109, 1
    %p113 = scmp.eq.s32.totalorder %s12, 1
    %p114 = scmp.ne.s32.totalorder %s109, %s111
    %p115 = scmp.eq.s32.totalorder %s12, 0
    %p116 = por %p114, %p115
    %p117 = scmp.ne.s32.totalorder %s109, %s111
    %p118 = scmp.eq.s32.totalorder %s17, 1
    %p119 = por %p117, %p118
    %p120 = scmp.ne.s32.totalorder %s111, %s112
    %p121 = scmp.eq.s32.totalorder %s17, 0
    %p122 = por %p120, %p121
    %p123 = scmp.ne.s32.totalorder %s111, %s112
    %p124 = scmp.eq.s32.totalorder %s18, 1
    %p125 = por %p123, %p124
    %p127 = scmp.ne.s32.totalorder %s112, %s126
    %p128 = scmp.eq.s32.totalorder %s18, 0
    %p129 = por %p127, %p128
    %s131 = sadd.s32 %s130, 1
    %p134 = scmp.eq.s32.totalorder %s12, 1
    %p135 = scmp.ne.s32.totalorder %s130, %s132
    %p136 = scmp.eq.s32.totalorder %s12, 0
    %p137 = por %p135, %p136
    %p138 = scmp.ne.s32.totalorder %s130, %s132
    %p139 = scmp.eq.s32.totalorder %s17, 1
    %p140 = por %p138, %p139
    %p141 = scmp.ne.s32.totalorder %s132, %s133
    %p142 = scmp.eq.s32.totalorder %s17, 0
    %p143 = por %p141, %p142
    %p144 = scmp.ne.s32.totalorder %s132, %s133
    %p145 = scmp.eq.s32.totalorder %s18, 1
    %p146 = por %p144, %p145
    %p148 = scmp.ne.s32.totalorder %s133, %s147
    %p149 = scmp.eq.s32.totalorder %s18, 0
    %p150 = por %p148, %p149
    %s152 = sadd.s32 %s151, 1
    %p155 = scmp.eq.s32.totalorder %s12, 1
    %p156 = scmp.ne.s32.totalorder %s151, %s153
    %p157 = scmp.eq.s32.totalorder %s12, 0
    %p158 = por %p156, %p157
    %p159 = scmp.ne.s32.totalorder %s151, %s153
    %p160 = scmp.eq.s32.totalorder %s17, 1
    %p161 = por %p159, %p160
    %p162 = scmp.ne.s32.totalorder %s153, %s154
    %p163 = scmp.eq.s32.totalorder %s17, 0
    %p164 = por %p162, %p163
    %p165 = scmp.ne.s32.totalorder %s153, %s154
    %p166 = scmp.eq.s32.totalorder %s18, 1
    %p167 = por %p165, %p166
    %p169 = scmp.ne.s32.totalorder %s154, %s168
    %p170 = scmp.eq.s32.totalorder %s18, 0
    %p171 = por %p169, %p170
    %s172 = ssub.s32 %s19, %s31
    %s173 = ssub.s32 %s20, %s27
    %s174 = sor.u32 %s172, %s173
    %p175 = scmp.eq.s32.totalorder %s174, 0
    %s177 = sadd.s32 %s176, 1
    %s178 = scalar_select %p175, %s176, %s177
    %p181 = pneg %p175
    %p182 = scmp.eq.s32.totalorder %s12, 1
    %p183 = por %p181, %p182
    %p184 = scmp.ne.s32.totalorder %s176, %s179
    %p185 = scmp.eq.s32.totalorder %s12, 0
    %p186 = por %p184, %p185
    %p187 = scmp.ne.s32.totalorder %s176, %s179
    %p188 = scmp.eq.s32.totalorder %s17, 1
    %p189 = por %p187, %p188
    %p190 = scmp.ne.s32.totalorder %s179, %s180
    %p191 = scmp.eq.s32.totalorder %s17, 0
    %p192 = por %p190, %p191
    %p193 = scmp.ne.s32.totalorder %s179, %s180
    %p194 = scmp.eq.s32.totalorder %s18, 1
    %p195 = por %p193, %p194
    %p197 = scmp.ne.s32.totalorder %s180, %s196
    %p198 = scmp.eq.s32.totalorder %s18, 0
    %p199 = por %p197, %p198
    %p200 = scmp.le.s32.totalorder 1, %s12
    %p201 = scmp.lt.s32.totalorder %s12, 3
    %p202 = pnand %p200, %p201
    %p203 = pneg %p202
    // Predicated region
    $region9: #{bottleneck_forward.7} parent=5 // pred_check
      _
    $region10: #{bottleneck_forward.7} parent=5 // pred_check_branch
      %205 = sbr.rel (%p202) target = $region12
    $region11: #{bottleneck_forward.7} parent=5 // pred_region
      %s206 = ssub.s32 %s12, 1
      // Predicated region
      $region13: #{bottleneck_forward.7} parent=11 // pred_check
        %p207 = pneg %p101
      $region14: #{bottleneck_forward.7} parent=11 // pred_check_branch
        %209 = sbr.rel (%p207) target = $region16
      $region15: #{bottleneck_forward.7} parent=11 // pred_region
        _
      $region16: #{bottleneck_forward.7} parent=11 // pred_fallthru
        _
      // Predicated region
      $region17: #{bottleneck_forward.7} parent=11 // pred_check
        %p210 = pneg %p122
      $region18: #{bottleneck_forward.7} parent=11 // pred_check_branch
        %212 = sbr.rel (%p210) target = $region20
      $region19: #{bottleneck_forward.7} parent=11 // pred_region
        _
      $region20: #{bottleneck_forward.7} parent=11 // pred_fallthru
        _
      // Predicated region
      $region21: #{bottleneck_forward.7} parent=11 // pred_check
        %p213 = pneg %p143
      $region22: #{bottleneck_forward.7} parent=11 // pred_check_branch
        %215 = sbr.rel (%p213) target = $region24
      $region23: #{bottleneck_forward.7} parent=11 // pred_region
        _
      $region24: #{bottleneck_forward.7} parent=11 // pred_fallthru
        _
      // Predicated region
      $region25: #{bottleneck_forward.7} parent=11 // pred_check
        %p216 = pneg %p164
      $region26: #{bottleneck_forward.7} parent=11 // pred_check_branch
        %218 = sbr.rel (%p216) target = $region28
      $region27: #{bottleneck_forward.7} parent=11 // pred_region
        _
      $region28: #{bottleneck_forward.7} parent=11 // pred_fallthru
        _
    $region12: #{bottleneck_forward.7} parent=5 // pred_fallthru
      _
    %p219 = scmp.lt.s32.totalorder %s12, 2
    // Predicated region
    $region29: #{bottleneck_forward.7} parent=5 // pred_check
      %p220 = pneg %p219
    $region30: #{bottleneck_forward.7} parent=5 // pred_check_branch
      %222 = sbr.rel (%p220) target = $region32
    $region31: #{bottleneck_forward.7} parent=5 // pred_region
      // Predicated region
      $region33: #{bottleneck_forward.7} parent=31 // pred_check
        %p223 = pneg %p46
      $region34: #{bottleneck_forward.7} parent=31 // pred_check_branch
        %225 = sbr.rel (%p223) target = $region36
      $region35: #{bottleneck_forward.7} parent=31 // pred_region
        %s226 = smul.u32 32, %s20
        %p227 = scmp.lt.s32.totalorder %s19, 1
        %s228 = scalar_select %p227, %s19, 1
        %p229 = scmp.lt.s32.totalorder %s226, 31
        %s230 = scalar_select %p229, %s226, 31
        %s231 = smul.addr %s228, 32
        %s232 = sadd.s32 %s230, %s231
        %s233 = smul.addr %s232, 4
        %s234 = scalar_lea.vmem %s0, %s233
        %s235 = smul.u32 32, %s20
      $region36: #{bottleneck_forward.7} parent=31 // pred_fallthru
        _
      // Predicated region
      $region37: #{bottleneck_forward.7} parent=31 // pred_check
        %p236 = pneg %p74
      $region38: #{bottleneck_forward.7} parent=31 // pred_check_branch
        %238 = sbr.rel (%p236) target = $region40
      $region39: #{bottleneck_forward.7} parent=31 // pred_region
        %s239 = smul.u32 2, %s20
        %p240 = scmp.lt.s32.totalorder %s19, 1
        %s241 = scalar_select %p240, %s19, 1
        %p242 = scmp.lt.s32.totalorder %s239, 1
        %s243 = scalar_select %p242, %s239, 1
        %s244 = smul.addr %s241, 4
        %s245 = sadd.s32 %s243, %s244
        %s246 = smul.addr %s245, 8
        %s247 = scalar_lea.vmem %s1, %s246
        %s248 = smul.u32 2, %s20
      $region40: #{bottleneck_forward.7} parent=31 // pred_fallthru
        _
    $region32: #{bottleneck_forward.7} parent=5 // pred_fallthru
      _
    %p249 = scmp.le.s32.totalorder 1, %s12
    %p250 = scmp.lt.s32.totalorder %s12, 3
    %p251 = pnand %p249, %p250
    %p252 = pneg %p251
    // Predicated region
    $region41: #{bottleneck_forward.7} parent=5 // pred_check
      _
    $region42: #{bottleneck_forward.7} parent=5 // pred_check_branch
      %254 = sbr.rel (%p251) target = $region44
    $region43: #{bottleneck_forward.7} parent=5 // pred_region
      %s255 = ssub.s32 %s12, 1
      %s256 = smul.u32 32, %s22
      %p257 = scmp.lt.s32.totalorder %s21, 1
      %s258 = scalar_select %p257, %s21, 1
      %p259 = scmp.lt.s32.totalorder %s256, 31
      %s260 = scalar_select %p259, %s256, 31
      %s261 = smul.addr %s258, 32
      %s262 = sadd.s32 %s260, %s261
      %s263 = smul.addr %s262, 4
      %s264 = scalar_lea.vmem %s0, %s263
      %p265 = pneg %p52
      %p266 = pneg %p49
      %s267 = smul.u32 2, %s22
      %p268 = scmp.lt.s32.totalorder %s21, 1
      %s269 = scalar_select %p268, %s21, 1
      %p270 = scmp.lt.s32.totalorder %s267, 1
      %s271 = scalar_select %p270, %s267, 1
      %s272 = smul.addr %s269, 4
      %s273 = sadd.s32 %s271, %s272
      %s274 = smul.addr %s273, 8
      %s275 = scalar_lea.vmem %s1, %s274
      %p276 = pneg %p80
      %p277 = pneg %p77
      %p278 = pneg %p101
      %p279 = pneg %p98
      %p280 = pneg %p122
      %p281 = pneg %p119
      %p282 = pneg %p143
      %p283 = pneg %p140
      %p284 = pneg %p164
      %p285 = pneg %p161
      %p286 = pneg %p192
      %p287 = pneg %p189
      %s288 = smul.u32 2, %s22
      %p289 = scmp.lt.s32.totalorder %s21, 1
      %s290 = scalar_select %p289, %s21, 1
      %p291 = scmp.lt.s32.totalorder %s288, 1
      %s292 = scalar_select %p291, %s288, 1
      %s293 = smul.addr %s290, 4
      %s294 = sadd.s32 %s292, %s293
      %s295 = smul.addr %s294, 8
      %s296 = scalar_lea.vmem %s6, %s295
      %s297 = smul.u32 32, %s22
      %p298 = scmp.lt.s32.totalorder %s21, 1
      %s299 = scalar_select %p298, %s21, 1
      %p300 = scmp.lt.s32.totalorder %s297, 31
      %s301 = scalar_select %p300, %s297, 31
      %s302 = smul.addr %s299, 32
      %s303 = sadd.s32 %s301, %s302
      %s304 = smul.addr %s303, 4
      %s305 = scalar_lea.vmem %s0, %s304
      %s306 = smul.u32 32, %s22
      %s307 = smul.u32 2, %s22
      %p308 = scmp.lt.s32.totalorder %s21, 1
      %s309 = scalar_select %p308, %s21, 1
      %p310 = scmp.lt.s32.totalorder %s307, 1
      %s311 = scalar_select %p310, %s307, 1
      %s312 = smul.addr %s309, 4
      %s313 = sadd.s32 %s311, %s312
      %s314 = smul.addr %s313, 8
      %s315 = scalar_lea.vmem %s1, %s314
      %s316 = smul.u32 2, %s22
      %s317 = smul.u32 2, %s22
      %p318 = scmp.lt.s32.totalorder %s21, 1
      %s319 = scalar_select %p318, %s21, 1
      %p320 = scmp.lt.s32.totalorder %s317, 1
      %s321 = scalar_select %p320, %s317, 1
      %s322 = smul.addr %s319, 4
      %s323 = sadd.s32 %s321, %s322
      %s324 = smul.addr %s323, 8
      %s325 = scalar_lea.vmem %s6, %s324
      %s326 = smul.u32 2, %s22
      %v327 = vld [vmem:[%s2] sm:$0x1]
      %v328 = vrcp.pop 512.0
      %v329 = vmul.f32 %v327, %v328
      %v330 = vld [vmem:[%s3] sm:$0x1]
      %v331 = vmul.f32 %v330, %v328
      %v332 = vmul.f32 %v329, %v329
      %v333 = vsub.f32 %v331, %v332
      %v334 = vadd.f32 %v333, 1e-05
      %v335 = vrsqrt.pop %v334
      %v336 = vld [vmem:[%s4] sm:$0x1]
      %v337 = vmul.f32 %v336, %v335
      %v338 = vld [vmem:[%s5] sm:$0x1]
      %v339 = vmul.f32 %v329, %v337
      %v340 = vsub.f32 %v338, %v339
      %v341 = vld [vmem:[%s305] sm:$0xf]
      %v342 = vld [vmem:[%s305 + $0x4] sm:$0xf]
      %v343 = vld [vmem:[%s305 + $0x8] sm:$0xf]
      %v344 = vld [vmem:[%s305 + $0xc] sm:$0xf]
      %v345 = vld [vmem:[%s305 + $0x10] sm:$0xf]
      %v346 = vld [vmem:[%s305 + $0x14] sm:$0xf]
      %v347 = vld [vmem:[%s305 + $0x18] sm:$0xf]
      %v348 = vld [vmem:[%s305 + $0x1c] sm:$0xf]
      %v349 = vld [vmem:[%s305 + $0x20] sm:$0xf]
      %v350 = vld [vmem:[%s305 + $0x24] sm:$0xf]
      %v351 = vld [vmem:[%s305 + $0x28] sm:$0xf]
      %v352 = vld [vmem:[%s305 + $0x2c] sm:$0xf]
      %v353 = vld [vmem:[%s305 + $0x30] sm:$0xf]
      %v354 = vld [vmem:[%s305 + $0x34] sm:$0xf]
      %v355 = vld [vmem:[%s305 + $0x38] sm:$0xf]
      %v356 = vld [vmem:[%s305 + $0x3c] sm:$0xf]
      %v357 = vld [vmem:[%s305 + $0x40] sm:$0xf]
      %v358 = vld [vmem:[%s305 + $0x44] sm:$0xf]
      %v359 = vld [vmem:[%s305 + $0x48] sm:$0xf]
      %v360 = vld [vmem:[%s305 + $0x4c] sm:$0xf]
      %v361 = vld [vmem:[%s305 + $0x50] sm:$0xf]
      %v362 = vld [vmem:[%s305 + $0x54] sm:$0xf]
      %v363 = vld [vmem:[%s305 + $0x58] sm:$0xf]
      %v364 = vld [vmem:[%s305 + $0x5c] sm:$0xf]
      %v365 = vld [vmem:[%s305 + $0x60] sm:$0xf]
      %v366 = vld [vmem:[%s305 + $0x64] sm:$0xf]
      %v367 = vld [vmem:[%s305 + $0x68] sm:$0xf]
      %v368 = vld [vmem:[%s305 + $0x6c] sm:$0xf]
      %v369 = vld [vmem:[%s305 + $0x70] sm:$0xf]
      %v370 = vld [vmem:[%s305 + $0x74] sm:$0xf]
      %v371 = vld [vmem:[%s305 + $0x78] sm:$0xf]
      %v372 = vld [vmem:[%s305 + $0x7c] sm:$0xf]
      %v373 = vunpack.c.l.bf16 %v341
      %v374 = vunpack.c.l.bf16 %v342
      %v375 = vunpack.c.l.bf16 %v343
      %v376 = vunpack.c.l.bf16 %v344
      %v377 = vunpack.c.l.bf16 %v345
      %v378 = vunpack.c.l.bf16 %v346
      %v379 = vunpack.c.l.bf16 %v347
      %v380 = vunpack.c.l.bf16 %v348
      %v381 = vunpack.c.l.bf16 %v349
      %v382 = vunpack.c.l.bf16 %v350
      %v383 = vunpack.c.l.bf16 %v351
      %v384 = vunpack.c.l.bf16 %v352
      %v385 = vunpack.c.l.bf16 %v353
      %v386 = vunpack.c.l.bf16 %v354
      %v387 = vunpack.c.l.bf16 %v355
      %v388 = vunpack.c.l.bf16 %v356
      %v389 = vunpack.c.l.bf16 %v357
      %v390 = vunpack.c.l.bf16 %v358
      %v391 = vunpack.c.l.bf16 %v359
      %v392 = vunpack.c.l.bf16 %v360
      %v393 = vunpack.c.l.bf16 %v361
      %v394 = vunpack.c.l.bf16 %v362
      %v395 = vunpack.c.l.bf16 %v363
      %v396 = vunpack.c.l.bf16 %v364
      %v397 = vunpack.c.l.bf16 %v365
      %v398 = vunpack.c.l.bf16 %v366
      %v399 = vunpack.c.l.bf16 %v367
      %v400 = vunpack.c.l.bf16 %v368
      %v401 = vunpack.c.l.bf16 %v369
      %v402 = vunpack.c.l.bf16 %v370
      %v403 = vunpack.c.l.bf16 %v371
      %v404 = vunpack.c.l.bf16 %v372
      %v406 = vlaneseq
      %v407 = vshrl.u32 %v406, 7
      %v408 = vsub.s32 0, %v407
      %v409 = vrot.slane %v337, %v408
      %v411 = vmul.f32 %v373, %v409
      %v412 = vmul.f32 %v374, %v409
      %v413 = vmul.f32 %v375, %v409
      %v414 = vmul.f32 %v376, %v409
      %v415 = vmul.f32 %v377, %v409
      %v416 = vmul.f32 %v378, %v409
      %v417 = vmul.f32 %v379, %v409
      %v418 = vmul.f32 %v380, %v409
      %v419 = vmul.f32 %v381, %v409
      %v420 = vmul.f32 %v382, %v409
      %v421 = vmul.f32 %v383, %v409
      %v422 = vmul.f32 %v384, %v409
      %v423 = vmul.f32 %v385, %v409
      %v424 = vmul.f32 %v386, %v409
      %v425 = vmul.f32 %v387, %v409
      %v426 = vmul.f32 %v388, %v409
      %v427 = vmul.f32 %v389, %v409
      %v428 = vmul.f32 %v390, %v409
      %v429 = vmul.f32 %v391, %v409
      %v430 = vmul.f32 %v392, %v409
      %v431 = vmul.f32 %v393, %v409
      %v432 = vmul.f32 %v394, %v409
      %v433 = vmul.f32 %v395, %v409
      %v434 = vmul.f32 %v396, %v409
      %v435 = vmul.f32 %v397, %v409
      %v436 = vmul.f32 %v398, %v409
      %v437 = vmul.f32 %v399, %v409
      %v438 = vmul.f32 %v400, %v409
      %v439 = vmul.f32 %v401, %v409
      %v440 = vmul.f32 %v402, %v409
      %v441 = vmul.f32 %v403, %v409
      %v442 = vmul.f32 %v404, %v409
      %v444 = vlaneseq
      %v445 = vshrl.u32 %v444, 7
      %v446 = vsub.s32 0, %v445
      %v447 = vrot.slane %v340, %v446
      %v449 = vadd.f32 %v411, %v447
      %v450 = vadd.f32 %v412, %v447
      %v451 = vadd.f32 %v413, %v447
      %v452 = vadd.f32 %v414, %v447
      %v453 = vadd.f32 %v415, %v447
      %v454 = vadd.f32 %v416, %v447
      %v455 = vadd.f32 %v417, %v447
      %v456 = vadd.f32 %v418, %v447
      %v457 = vadd.f32 %v419, %v447
      %v458 = vadd.f32 %v420, %v447
      %v459 = vadd.f32 %v421, %v447
      %v460 = vadd.f32 %v422, %v447
      %v461 = vadd.f32 %v423, %v447
      %v462 = vadd.f32 %v424, %v447
      %v463 = vadd.f32 %v425, %v447
      %v464 = vadd.f32 %v426, %v447
      %v465 = vadd.f32 %v427, %v447
      %v466 = vadd.f32 %v428, %v447
      %v467 = vadd.f32 %v429, %v447
      %v468 = vadd.f32 %v430, %v447
      %v469 = vadd.f32 %v431, %v447
      %v470 = vadd.f32 %v432, %v447
      %v471 = vadd.f32 %v433, %v447
      %v472 = vadd.f32 %v434, %v447
      %v473 = vadd.f32 %v435, %v447
      %v474 = vadd.f32 %v436, %v447
      %v475 = vadd.f32 %v437, %v447
      %v476 = vadd.f32 %v438, %v447
      %v477 = vadd.f32 %v439, %v447
      %v478 = vadd.f32 %v440, %v447
      %v479 = vadd.f32 %v441, %v447
      %v480 = vadd.f32 %v442, %v447
      %481 = vxpose.xlu0.b32.start [1/16] %v449, 128
      %482 = vxpose.xlu0.b32.cont [2/16] %v450, 128
      %483 = vxpose.xlu0.b32.cont [3/16] %v451, 128
      %484 = vxpose.xlu0.b32.cont [4/16] %v452, 128
      %485 = vxpose.xlu0.b32.cont [5/16] %v453, 128
      %486 = vxpose.xlu0.b32.cont [6/16] %v454, 128
      %487 = vxpose.xlu0.b32.cont [7/16] %v455, 128
      %488 = vxpose.xlu0.b32.cont [8/16] %v456, 128
      %489 = vxpose.xlu0.b32.cont [9/16] %v457, 128
      %490 = vxpose.xlu0.b32.cont [10/16] %v458, 128
      %491 = vxpose.xlu0.b32.cont [11/16] %v459, 128
      %492 = vxpose.xlu0.b32.cont [12/16] %v460, 128
      %493 = vxpose.xlu0.b32.cont [13/16] %v461, 128
      %494 = vxpose.xlu0.b32.cont [14/16] %v462, 128
      %495 = vxpose.xlu0.b32.cont [15/16] %v463, 128
      %496 = vxpose.xlu0.b32.end [16/16] %v464, 128
      %v497 = vpop.trf.xlu0
      %v498 = vpop.trf.xlu0
      %v499 = vpop.trf.xlu0
      %v500 = vpop.trf.xlu0
      %v501 = vpop.trf.xlu0
      %v502 = vpop.trf.xlu0
      %v503 = vpop.trf.xlu0
      %v504 = vpop.trf.xlu0
      %v505 = vpop.trf.xlu0
      %v506 = vpop.trf.xlu0
      %v507 = vpop.trf.xlu0
      %v508 = vpop.trf.xlu0
      %v509 = vpop.trf.xlu0
      %v510 = vpop.trf.xlu0
      %v511 = vpop.trf.xlu0
      %v512 = vpop.trf.xlu0
      %513 = vxpose.xlu0.b32.start [1/16] %v465, 128
      %514 = vxpose.xlu0.b32.cont [2/16] %v466, 128
      %515 = vxpose.xlu0.b32.cont [3/16] %v467, 128
      %516 = vxpose.xlu0.b32.cont [4/16] %v468, 128
      %517 = vxpose.xlu0.b32.cont [5/16] %v469, 128
      %518 = vxpose.xlu0.b32.cont [6/16] %v470, 128
      %519 = vxpose.xlu0.b32.cont [7/16] %v471, 128
      %520 = vxpose.xlu0.b32.cont [8/16] %v472, 128
      %521 = vxpose.xlu0.b32.cont [9/16] %v473, 128
      %522 = vxpose.xlu0.b32.cont [10/16] %v474, 128
      %523 = vxpose.xlu0.b32.cont [11/16] %v475, 128
      %524 = vxpose.xlu0.b32.cont [12/16] %v476, 128
      %525 = vxpose.xlu0.b32.cont [13/16] %v477, 128
      %526 = vxpose.xlu0.b32.cont [14/16] %v478, 128
      %527 = vxpose.xlu0.b32.cont [15/16] %v479, 128
      %528 = vxpose.xlu0.b32.end [16/16] %v480, 128
      %v529 = vpop.trf.xlu0
      %v530 = vpop.trf.xlu0
      %v531 = vpop.trf.xlu0
      %v532 = vpop.trf.xlu0
      %v533 = vpop.trf.xlu0
      %v534 = vpop.trf.xlu0
      %v535 = vpop.trf.xlu0
      %v536 = vpop.trf.xlu0
      %v537 = vpop.trf.xlu0
      %v538 = vpop.trf.xlu0
      %v539 = vpop.trf.xlu0
      %v540 = vpop.trf.xlu0
      %v541 = vpop.trf.xlu0
      %v542 = vpop.trf.xlu0
      %v543 = vpop.trf.xlu0
      %v544 = vpop.trf.xlu0
      %v545 = vld [vmem:[%s315] sm:$0xff]
      %v546 = vld [vmem:[%s315 + $0x8] sm:$0xff]
      %v547 = vld [vmem:[%s315 + $0x10] sm:$0xff]
      %v548 = vld [vmem:[%s315 + $0x18] sm:$0xff]
      %v549 = vadd.f32 %v497, %v545
      %v550 = vadd.f32 %v529, %v546
      %v551 = vadd.f32 %v498, %v547
      %v552 = vadd.f32 %v530, %v548
      %v553 = vmax.f32 %v549, 0.0
      %v554 = vmax.f32 %v550, 0.0
      %v555 = vmax.f32 %v551, 0.0
      %v556 = vmax.f32 %v552, 0.0
      %557 = vst [vmem:[%s325] sm:$0xff] %v553
      %558 = vst [vmem:[%s325 + $0x8] sm:$0xff] %v554
      %559 = vst [vmem:[%s325 + $0x10] sm:$0xff] %v555
      %560 = vst [vmem:[%s325 + $0x18] sm:$0xff] %v556
      %s561 = smul.u32 2, %s22
      %p562 = scmp.lt.s32.totalorder %s21, 1
      %s563 = scalar_select %p562, %s21, 1
      %p564 = scmp.lt.s32.totalorder %s561, 1
      %s565 = scalar_select %p564, %s561, 1
      %s566 = smul.addr %s563, 4
      %s567 = sadd.s32 %s565, %s566
      %s568 = smul.addr %s567, 8
      %s569 = scalar_lea.vmem %s6, %s568
      // Predicated region
      $region45: #{bottleneck_forward.7} parent=43 // pred_check
        %p570 = pneg %p189
      $region46: #{bottleneck_forward.7} parent=43 // pred_check_branch
        %572 = sbr.rel (%p570) target = $region48
      $region47: #{bottleneck_forward.7} parent=43 // pred_region
        %s573 = smul.u32 2, %s22
      $region48: #{bottleneck_forward.7} parent=43 // pred_fallthru
        _
    $region44: #{bottleneck_forward.7} parent=5 // pred_fallthru
      _
    %p574 = scmp.le.s32.totalorder 2, %s12
    // Predicated region
    $region49: #{bottleneck_forward.7} parent=5 // pred_check
      %p575 = pneg %p574
    $region50: #{bottleneck_forward.7} parent=5 // pred_check_branch
      %577 = sbr.rel (%p575) target = $region52
    $region51: #{bottleneck_forward.7} parent=5 // pred_region
      %s578 = ssub.s32 %s12, 2
      // Predicated region
      $region53: #{bottleneck_forward.7} parent=51 // pred_check
        %p579 = pneg %p195
      $region54: #{bottleneck_forward.7} parent=51 // pred_check_branch
        %581 = sbr.rel (%p579) target = $region56
      $region55: #{bottleneck_forward.7} parent=51 // pred_region
        %s582 = smul.u32 2, %s24
        %p583 = scmp.lt.s32.totalorder %s23, 1
        %s584 = scalar_select %p583, %s23, 1
        %p585 = scmp.lt.s32.totalorder %s582, 1
        %s586 = scalar_select %p585, %s582, 1
        %s587 = smul.addr %s584, 4
        %s588 = sadd.s32 %s586, %s587
        %s589 = smul.addr %s588, 8
        %s590 = scalar_lea.vmem %s6, %s589
      $region56: #{bottleneck_forward.7} parent=51 // pred_fallthru
        _
    $region52: #{bottleneck_forward.7} parent=5 // pred_fallthru
      _
  $region6: #{bottleneck_forward.7} parent=0 // loop_footer
    %s16 = sadd.s32 1, %s12
  $region7: #{bottleneck_forward.7} parent=0 // loop_footer_branch
    %11 = sbr.rel target = $region3
  $region8: #{bottleneck_forward.7} parent=0 // loop_exit
    _

// kernel: bottleneck_forward.6
$region0: #{bottleneck_forward.6}
  #allocation0 [shape = 'u32[]', space=smem, size = 0x4, offset = 0x4, fixed_abs, tag = 'smem constant byte address 0x4 - core index']
  #allocation1 [shape = 'u32[144,128]{1,0:T(1,128)}', space=vmem, size = 0x12000, scoped, tag = 'internal scratch']
  %s0 = inlined_call_operand.vmem [shape: bf16[512,4], index: 0, kind: input, shape index: {}]
  %s1 = inlined_call_operand.vmem [shape: f32[1,4], index: 1, kind: input, shape index: {}]
  %s2 = inlined_call_operand.vmem [shape: f32[1,4], index: 2, kind: input, shape index: {}]
  %s3 = inlined_call_operand.vmem [shape: f32[1,4], index: 3, kind: input, shape index: {}]
  %s4 = inlined_call_operand.vmem [shape: f32[1,4], index: 4, kind: input, shape index: {}]
  %s5 = inlined_call_operand.vmem [shape: bf16[4,16], index: 5, kind: input, shape index: {}]
  %s6 = inlined_call_operand.vmem [shape: bf16[512,16], index: 6, kind: output, shape index: {0}]
  %s7 = inlined_call_operand.vmem [shape: f32[1,1,16], index: 7, kind: output, shape index: {1}]
  %s8 = inlined_call_operand.vmem [shape: f32[1,1,16], index: 8, kind: output, shape index: {2}]
  %9 = xla_tuple %s6, %s7, %s8
  %s10 = sld [smem:[#allocation0]]
  $region50: #{bottleneck_forward.6} parent=0
    _
  %s12 = ssub.s32 1, %s10
  %s13 = scalar_select 0, %s12, %s10
  // Predicated region
  $region2: #{bottleneck_forward.6} parent=0 // pred_check
    _
  $region3: #{bottleneck_forward.6} parent=0 // pred_check_branch
    %15 = sbr.rel (0) target = $region5
  $region4: #{bottleneck_forward.6} parent=0 // pred_region
    _
  $region5: #{bottleneck_forward.6} parent=0 // pred_fallthru
    _
  // Predicated region
  $region6: #{bottleneck_forward.6} parent=0 // pred_check
    _
  $region7: #{bottleneck_forward.6} parent=0 // pred_check_branch
    %17 = sbr.rel (0) target = $region9
  $region8: #{bottleneck_forward.6} parent=0 // pred_region
    _
  $region9: #{bottleneck_forward.6} parent=0 // pred_fallthru
    _
  // Predicated region
  $region10: #{bottleneck_forward.6} parent=0 // pred_check
    _
  $region11: #{bottleneck_forward.6} parent=0 // pred_check_branch
    %19 = sbr.rel (0) target = $region13
  $region12: #{bottleneck_forward.6} parent=0 // pred_region
    _
  $region13: #{bottleneck_forward.6} parent=0 // pred_fallthru
    _
  // Predicated region
  $region14: #{bottleneck_forward.6} parent=0 // pred_check
    _
  $region15: #{bottleneck_forward.6} parent=0 // pred_check_branch
    %21 = sbr.rel (0) target = $region17
  $region16: #{bottleneck_forward.6} parent=0 // pred_region
    _
  $region17: #{bottleneck_forward.6} parent=0 // pred_fallthru
    _
  // Predicated region
  $region18: #{bottleneck_forward.6} parent=0 // pred_check
    _
  $region19: #{bottleneck_forward.6} parent=0 // pred_check_branch
    %23 = sbr.rel (0) target = $region21
  $region20: #{bottleneck_forward.6} parent=0 // pred_region
    _
  $region21: #{bottleneck_forward.6} parent=0 // pred_fallthru
    _
  // Predicated region
  $region22: #{bottleneck_forward.6} parent=0 // pred_check
    _
  $region23: #{bottleneck_forward.6} parent=0 // pred_check_branch
    %25 = sbr.rel (0) target = $region25
  $region24: #{bottleneck_forward.6} parent=0 // pred_region
    _
  $region25: #{bottleneck_forward.6} parent=0 // pred_fallthru
    _
  %v27 = vld [vmem:[%s1] sm:$0x1]
  %v28 = vrcp.pop 512.0
  %v29 = vmul.f32 %v27, %v28
  %v30 = vld [vmem:[%s2] sm:$0x1]
  %v31 = vmul.f32 %v30, %v28
  %v32 = vmul.f32 %v29, %v29
  %v33 = vsub.f32 %v31, %v32
  %v34 = vadd.f32 %v33, 1e-05
  %v35 = vrsqrt.pop %v34
  %v36 = vld [vmem:[%s3] sm:$0x1]
  %v37 = vmul.f32 %v36, %v35
  %v38 = vld [vmem:[%s4] sm:$0x1]
  %v39 = vmul.f32 %v29, %v37
  %v40 = vsub.f32 %v38, %v39
  %v41 = vld [vmem:[%s0] sm:$0xf]
  %v42 = vld [vmem:[%s0 + $0x4] sm:$0xf]
  %v43 = vld [vmem:[%s0 + $0x8] sm:$0xf]
  %v44 = vld [vmem:[%s0 + $0xc] sm:$0xf]
  %v45 = vld [vmem:[%s0 + $0x10] sm:$0xf]
  %v46 = vld [vmem:[%s0 + $0x14] sm:$0xf]
  %v47 = vld [vmem:[%s0 + $0x18] sm:$0xf]
  %v48 = vld [vmem:[%s0 + $0x1c] sm:$0xf]
  %v49 = vld [vmem:[%s0 + $0x20] sm:$0xf]
  %v50 = vld [vmem:[%s0 + $0x24] sm:$0xf]
  %v51 = vld [vmem:[%s0 + $0x28] sm:$0xf]
  %v52 = vld [vmem:[%s0 + $0x2c] sm:$0xf]
  %v53 = vld [vmem:[%s0 + $0x30] sm:$0xf]
  %v54 = vld [vmem:[%s0 + $0x34] sm:$0xf]
  %v55 = vld [vmem:[%s0 + $0x38] sm:$0xf]
  %v56 = vld [vmem:[%s0 + $0x3c] sm:$0xf]
  %v57 = vld [vmem:[%s0 + $0x40] sm:$0xf]
  %v58 = vld [vmem:[%s0 + $0x44] sm:$0xf]
  %v59 = vld [vmem:[%s0 + $0x48] sm:$0xf]
  %v60 = vld [vmem:[%s0 + $0x4c] sm:$0xf]
  %v61 = vld [vmem:[%s0 + $0x50] sm:$0xf]
  %v62 = vld [vmem:[%s0 + $0x54] sm:$0xf]
  %v63 = vld [vmem:[%s0 + $0x58] sm:$0xf]
  %v64 = vld [vmem:[%s0 + $0x5c] sm:$0xf]
  %v65 = vld [vmem:[%s0 + $0x60] sm:$0xf]
  %v66 = vld [vmem:[%s0 + $0x64] sm:$0xf]
  %v67 = vld [vmem:[%s0 + $0x68] sm:$0xf]
  %v68 = vld [vmem:[%s0 + $0x6c] sm:$0xf]
  %v69 = vld [vmem:[%s0 + $0x70] sm:$0xf]
  %v70 = vld [vmem:[%s0 + $0x74] sm:$0xf]
  %v71 = vld [vmem:[%s0 + $0x78] sm:$0xf]
  %v72 = vld [vmem:[%s0 + $0x7c] sm:$0xf]
  %v73 = vld [vmem:[%s0 + $0x80] sm:$0xf]
  %v74 = vld [vmem:[%s0 + $0x84] sm:$0xf]
  %v75 = vld [vmem:[%s0 + $0x88] sm:$0xf]
  %v76 = vld [vmem:[%s0 + $0x8c] sm:$0xf]
  %v77 = vld [vmem:[%s0 + $0x90] sm:$0xf]
  %v78 = vld [vmem:[%s0 + $0x94] sm:$0xf]
  %v79 = vld [vmem:[%s0 + $0x98] sm:$0xf]
  %v80 = vld [vmem:[%s0 + $0x9c] sm:$0xf]
  %v81 = vld [vmem:[%s0 + $0xa0] sm:$0xf]
  %v82 = vld [vmem:[%s0 + $0xa4] sm:$0xf]
  %v83 = vld [vmem:[%s0 + $0xa8] sm:$0xf]
  %v84 = vld [vmem:[%s0 + $0xac] sm:$0xf]
  %v85 = vld [vmem:[%s0 + $0xb0] sm:$0xf]
  %v86 = vld [vmem:[%s0 + $0xb4] sm:$0xf]
  %v87 = vld [vmem:[%s0 + $0xb8] sm:$0xf]
  %v88 = vld [vmem:[%s0 + $0xbc] sm:$0xf]
  %v89 = vld [vmem:[%s0 + $0xc0] sm:$0xf]
  %v90 = vld [vmem:[%s0 + $0xc4] sm:$0xf]
  %v91 = vld [vmem:[%s0 + $0xc8] sm:$0xf]
  %v92 = vld [vmem:[%s0 + $0xcc] sm:$0xf]
  %v93 = vld [vmem:[%s0 + $0xd0] sm:$0xf]
  %v94 = vld [vmem:[%s0 + $0xd4] sm:$0xf]
  %v95 = vld [vmem:[%s0 + $0xd8] sm:$0xf]
  %v96 = vld [vmem:[%s0 + $0xdc] sm:$0xf]
  %v97 = vld [vmem:[%s0 + $0xe0] sm:$0xf]
  %v98 = vld [vmem:[%s0 + $0xe4] sm:$0xf]
  %v99 = vld [vmem:[%s0 + $0xe8] sm:$0xf]
  %v100 = vld [vmem:[%s0 + $0xec] sm:$0xf]
  %v101 = vld [vmem:[%s0 + $0xf0] sm:$0xf]
  %v102 = vld [vmem:[%s0 + $0xf4] sm:$0xf]
  %v103 = vld [vmem:[%s0 + $0xf8] sm:$0xf]
  %v104 = vld [vmem:[%s0 + $0xfc] sm:$0xf]
  %v105 = vunpack.c.l.bf16 %v41
  %v106 = vunpack.c.l.bf16 %v42
  %v107 = vunpack.c.l.bf16 %v43
  %v108 = vunpack.c.l.bf16 %v44
  %v109 = vunpack.c.l.bf16 %v45
  %v110 = vunpack.c.l.bf16 %v46
  %v111 = vunpack.c.l.bf16 %v47
  %v112 = vunpack.c.l.bf16 %v48
  %v113 = vunpack.c.l.bf16 %v49
  %v114 = vunpack.c.l.bf16 %v50
  %v115 = vunpack.c.l.bf16 %v51
  %v116 = vunpack.c.l.bf16 %v52
  %v117 = vunpack.c.l.bf16 %v53
  %v118 = vunpack.c.l.bf16 %v54
  %v119 = vunpack.c.l.bf16 %v55
  %v120 = vunpack.c.l.bf16 %v56
  %v121 = vunpack.c.l.bf16 %v57
  %v122 = vunpack.c.l.bf16 %v58
  %v123 = vunpack.c.l.bf16 %v59
  %v124 = vunpack.c.l.bf16 %v60
  %v125 = vunpack.c.l.bf16 %v61
  %v126 = vunpack.c.l.bf16 %v62
  %v127 = vunpack.c.l.bf16 %v63
  %v128 = vunpack.c.l.bf16 %v64
  %v129 = vunpack.c.l.bf16 %v65
  %v130 = vunpack.c.l.bf16 %v66
  %v131 = vunpack.c.l.bf16 %v67
  %v132 = vunpack.c.l.bf16 %v68
  %v133 = vunpack.c.l.bf16 %v69
  %v134 = vunpack.c.l.bf16 %v70
  %v135 = vunpack.c.l.bf16 %v71
  %v136 = vunpack.c.l.bf16 %v72
  %v137 = vunpack.c.l.bf16 %v73
  %v138 = vunpack.c.l.bf16 %v74
  %v139 = vunpack.c.l.bf16 %v75
  %v140 = vunpack.c.l.bf16 %v76
  %v141 = vunpack.c.l.bf16 %v77
  %v142 = vunpack.c.l.bf16 %v78
  %v143 = vunpack.c.l.bf16 %v79
  %v144 = vunpack.c.l.bf16 %v80
  %v145 = vunpack.c.l.bf16 %v81
  %v146 = vunpack.c.l.bf16 %v82
  %v147 = vunpack.c.l.bf16 %v83
  %v148 = vunpack.c.l.bf16 %v84
  %v149 = vunpack.c.l.bf16 %v85
  %v150 = vunpack.c.l.bf16 %v86
  %v151 = vunpack.c.l.bf16 %v87
  %v152 = vunpack.c.l.bf16 %v88
  %v153 = vunpack.c.l.bf16 %v89
  %v154 = vunpack.c.l.bf16 %v90
  %v155 = vunpack.c.l.bf16 %v91
  %v156 = vunpack.c.l.bf16 %v92
  %v157 = vunpack.c.l.bf16 %v93
  %v158 = vunpack.c.l.bf16 %v94
  %v159 = vunpack.c.l.bf16 %v95
  %v160 = vunpack.c.l.bf16 %v96
  %v161 = vunpack.c.l.bf16 %v97
  %v162 = vunpack.c.l.bf16 %v98
  %v163 = vunpack.c.l.bf16 %v99
  %v164 = vunpack.c.l.bf16 %v100
  %v165 = vunpack.c.l.bf16 %v101
  %v166 = vunpack.c.l.bf16 %v102
  %v167 = vunpack.c.l.bf16 %v103
  %v168 = vunpack.c.l.bf16 %v104
  %v170 = vlaneseq
  %v171 = vshrl.u32 %v170, 7
  %v172 = vsub.s32 0, %v171
  %v173 = vrot.slane %v37, %v172
  %v175 = vmul.f32 %v105, %v173
  %v176 = vmul.f32 %v106, %v173
  %v177 = vmul.f32 %v107, %v173
  %v178 = vmul.f32 %v108, %v173
  %v179 = vmul.f32 %v109, %v173
  %v180 = vmul.f32 %v110, %v173
  %v181 = vmul.f32 %v111, %v173
  %v182 = vmul.f32 %v112, %v173
  %v183 = vmul.f32 %v113, %v173
  %v184 = vmul.f32 %v114, %v173
  %v185 = vmul.f32 %v115, %v173
  %v186 = vmul.f32 %v116, %v173
  %v187 = vmul.f32 %v117, %v173
  %v188 = vmul.f32 %v118, %v173
  %v189 = vmul.f32 %v119, %v173
  %v190 = vmul.f32 %v120, %v173
  %v191 = vmul.f32 %v121, %v173
  %v192 = vmul.f32 %v122, %v173
  %v193 = vmul.f32 %v123, %v173
  %v194 = vmul.f32 %v124, %v173
  %v195 = vmul.f32 %v125, %v173
  %v196 = vmul.f32 %v126, %v173
  %v197 = vmul.f32 %v127, %v173
  %v198 = vmul.f32 %v128, %v173
  %v199 = vmul.f32 %v129, %v173
  %v200 = vmul.f32 %v130, %v173
  %v201 = vmul.f32 %v131, %v173
  %v202 = vmul.f32 %v132, %v173
  %v203 = vmul.f32 %v133, %v173
  %v204 = vmul.f32 %v134, %v173
  %v205 = vmul.f32 %v135, %v173
  %v206 = vmul.f32 %v136, %v173
  %v207 = vmul.f32 %v137, %v173
  %v208 = vmul.f32 %v138, %v173
  %v209 = vmul.f32 %v139, %v173
  %v210 = vmul.f32 %v140, %v173
  %v211 = vmul.f32 %v141, %v173
  %v212 = vmul.f32 %v142, %v173
  %v213 = vmul.f32 %v143, %v173
  %v214 = vmul.f32 %v144, %v173
  %v215 = vmul.f32 %v145, %v173
  %v216 = vmul.f32 %v146, %v173
  %v217 = vmul.f32 %v147, %v173
  %v218 = vmul.f32 %v148, %v173
  %v219 = vmul.f32 %v149, %v173
  %v220 = vmul.f32 %v150, %v173
  %v221 = vmul.f32 %v151, %v173
  %v222 = vmul.f32 %v152, %v173
  %v223 = vmul.f32 %v153, %v173
  %v224 = vmul.f32 %v154, %v173
  %v225 = vmul.f32 %v155, %v173
  %v226 = vmul.f32 %v156, %v173
  %v227 = vmul.f32 %v157, %v173
  %v228 = vmul.f32 %v158, %v173
  %v229 = vmul.f32 %v159, %v173
  %v230 = vmul.f32 %v160, %v173
  %v231 = vmul.f32 %v161, %v173
  %v232 = vmul.f32 %v162, %v173
  %v233 = vmul.f32 %v163, %v173
  %v234 = vmul.f32 %v164, %v173
  %v235 = vmul.f32 %v165, %v173
  %v236 = vmul.f32 %v166, %v173
  %v237 = vmul.f32 %v167, %v173
  %v238 = vmul.f32 %v168, %v173
  %v240 = vlaneseq
  %v241 = vshrl.u32 %v240, 7
  %v242 = vsub.s32 0, %v241
  %v243 = vrot.slane %v40, %v242
  %v245 = vadd.f32 %v175, %v243
  %v246 = vadd.f32 %v176, %v243
  %v247 = vadd.f32 %v177, %v243
  %v248 = vadd.f32 %v178, %v243
  %v249 = vadd.f32 %v179, %v243
  %v250 = vadd.f32 %v180, %v243
  %v251 = vadd.f32 %v181, %v243
  %v252 = vadd.f32 %v182, %v243
  %v253 = vadd.f32 %v183, %v243
  %v254 = vadd.f32 %v184, %v243
  %v255 = vadd.f32 %v185, %v243
  %v256 = vadd.f32 %v186, %v243
  %v257 = vadd.f32 %v187, %v243
  %v258 = vadd.f32 %v188, %v243
  %v259 = vadd.f32 %v189, %v243
  %v260 = vadd.f32 %v190, %v243
  %v261 = vadd.f32 %v191, %v243
  %v262 = vadd.f32 %v192, %v243
  %v263 = vadd.f32 %v193, %v243
  %v264 = vadd.f32 %v194, %v243
  %v265 = vadd.f32 %v195, %v243
  %v266 = vadd.f32 %v196, %v243
  %v267 = vadd.f32 %v197, %v243
  %v268 = vadd.f32 %v198, %v243
  %v269 = vadd.f32 %v199, %v243
  %v270 = vadd.f32 %v200, %v243
  %v271 = vadd.f32 %v201, %v243
  %v272 = vadd.f32 %v202, %v243
  %v273 = vadd.f32 %v203, %v243
  %v274 = vadd.f32 %v204, %v243
  %v275 = vadd.f32 %v205, %v243
  %v276 = vadd.f32 %v206, %v243
  %v277 = vadd.f32 %v207, %v243
  %v278 = vadd.f32 %v208, %v243
  %v279 = vadd.f32 %v209, %v243
  %v280 = vadd.f32 %v210, %v243
  %v281 = vadd.f32 %v211, %v243
  %v282 = vadd.f32 %v212, %v243
  %v283 = vadd.f32 %v213, %v243
  %v284 = vadd.f32 %v214, %v243
  %v285 = vadd.f32 %v215, %v243
  %v286 = vadd.f32 %v216, %v243
  %v287 = vadd.f32 %v217, %v243
  %v288 = vadd.f32 %v218, %v243
  %v289 = vadd.f32 %v219, %v243
  %v290 = vadd.f32 %v220, %v243
  %v291 = vadd.f32 %v221, %v243
  %v292 = vadd.f32 %v222, %v243
  %v293 = vadd.f32 %v223, %v243
  %v294 = vadd.f32 %v224, %v243
  %v295 = vadd.f32 %v225, %v243
  %v296 = vadd.f32 %v226, %v243
  %v297 = vadd.f32 %v227, %v243
  %v298 = vadd.f32 %v228, %v243
  %v299 = vadd.f32 %v229, %v243
  %v300 = vadd.f32 %v230, %v243
  %v301 = vadd.f32 %v231, %v243
  %v302 = vadd.f32 %v232, %v243
  %v303 = vadd.f32 %v233, %v243
  %v304 = vadd.f32 %v234, %v243
  %v305 = vadd.f32 %v235, %v243
  %v306 = vadd.f32 %v236, %v243
  %v307 = vadd.f32 %v237, %v243
  %v308 = vadd.f32 %v238, %v243
  %v309 = vmax.f32 %v245, 0.0
  %v310 = vmax.f32 %v246, 0.0
  %v311 = vmax.f32 %v247, 0.0
  %v312 = vmax.f32 %v248, 0.0
  %v313 = vmax.f32 %v249, 0.0
  %v314 = vmax.f32 %v250, 0.0
  %v315 = vmax.f32 %v251, 0.0
  %v316 = vmax.f32 %v252, 0.0
  %v317 = vmax.f32 %v253, 0.0
  %v318 = vmax.f32 %v254, 0.0
  %v319 = vmax.f32 %v255, 0.0
  %v320 = vmax.f32 %v256, 0.0
  %v321 = vmax.f32 %v257, 0.0
  %v322 = vmax.f32 %v258, 0.0
  %v323 = vmax.f32 %v259, 0.0
  %v324 = vmax.f32 %v260, 0.0
  %v325 = vmax.f32 %v261, 0.0
  %v326 = vmax.f32 %v262, 0.0
  %v327 = vmax.f32 %v263, 0.0
  %v328 = vmax.f32 %v264, 0.0
  %v329 = vmax.f32 %v265, 0.0
  %v330 = vmax.f32 %v266, 0.0
  %v331 = vmax.f32 %v267, 0.0
  %v332 = vmax.f32 %v268, 0.0
  %v333 = vmax.f32 %v269, 0.0
  %v334 = vmax.f32 %v270, 0.0
  %v335 = vmax.f32 %v271, 0.0
  %v336 = vmax.f32 %v272, 0.0
  %v337 = vmax.f32 %v273, 0.0
  %v338 = vmax.f32 %v274, 0.0
  %v339 = vmax.f32 %v275, 0.0
  %v340 = vmax.f32 %v276, 0.0
  %v341 = vmax.f32 %v277, 0.0
  %v342 = vmax.f32 %v278, 0.0
  %v343 = vmax.f32 %v279, 0.0
  %v344 = vmax.f32 %v280, 0.0
  %v345 = vmax.f32 %v281, 0.0
  %v346 = vmax.f32 %v282, 0.0
  %v347 = vmax.f32 %v283, 0.0
  %v348 = vmax.f32 %v284, 0.0
  %v349 = vmax.f32 %v285, 0.0
  %v350 = vmax.f32 %v286, 0.0
  %v351 = vmax.f32 %v287, 0.0
  %v352 = vmax.f32 %v288, 0.0
  %v353 = vmax.f32 %v289, 0.0
  %v354 = vmax.f32 %v290, 0.0
  %v355 = vmax.f32 %v291, 0.0
  %v356 = vmax.f32 %v292, 0.0
  %v357 = vmax.f32 %v293, 0.0
  %v358 = vmax.f32 %v294, 0.0
  %v359 = vmax.f32 %v295, 0.0
  %v360 = vmax.f32 %v296, 0.0
  %v361 = vmax.f32 %v297, 0.0
  %v362 = vmax.f32 %v298, 0.0
  %v363 = vmax.f32 %v299, 0.0
  %v364 = vmax.f32 %v300, 0.0
  %v365 = vmax.f32 %v301, 0.0
  %v366 = vmax.f32 %v302, 0.0
  %v367 = vmax.f32 %v303, 0.0
  %v368 = vmax.f32 %v304, 0.0
  %v369 = vmax.f32 %v305, 0.0
  %v370 = vmax.f32 %v306, 0.0
  %v371 = vmax.f32 %v307, 0.0
  %v372 = vmax.f32 %v308, 0.0
  %v373 = vpack.c.bf16 %v310, %v309
  %v374 = vpack.c.bf16 %v312, %v311
  %v375 = vpack.c.bf16 %v314, %v313
  %v376 = vpack.c.bf16 %v316, %v315
  %v377 = vpack.c.bf16 %v318, %v317
  %v378 = vpack.c.bf16 %v320, %v319
  %v379 = vpack.c.bf16 %v322, %v321
  %v380 = vpack.c.bf16 %v324, %v323
  %v381 = vpack.c.bf16 %v326, %v325
  %v382 = vpack.c.bf16 %v328, %v327
  %v383 = vpack.c.bf16 %v330, %v329
  %v384 = vpack.c.bf16 %v332, %v331
  %v385 = vpack.c.bf16 %v334, %v333
  %v386 = vpack.c.bf16 %v336, %v335
  %v387 = vpack.c.bf16 %v338, %v337
  %v388 = vpack.c.bf16 %v340, %v339
  %v389 = vpack.c.bf16 %v342, %v341
  %v390 = vpack.c.bf16 %v344, %v343
  %v391 = vpack.c.bf16 %v346, %v345
  %v392 = vpack.c.bf16 %v348, %v347
  %v393 = vpack.c.bf16 %v350, %v349
  %v394 = vpack.c.bf16 %v352, %v351
  %v395 = vpack.c.bf16 %v354, %v353
  %v396 = vpack.c.bf16 %v356, %v355
  %v397 = vpack.c.bf16 %v358, %v357
  %v398 = vpack.c.bf16 %v360, %v359
  %v399 = vpack.c.bf16 %v362, %v361
  %v400 = vpack.c.bf16 %v364, %v363
  %v401 = vpack.c.bf16 %v366, %v365
  %v402 = vpack.c.bf16 %v368, %v367
  %v403 = vpack.c.bf16 %v370, %v369
  %v404 = vpack.c.bf16 %v372, %v371
  %v405 = vld [vmem:[%s5] sm:$0x3]
  %vm406 = vcmask 31744
  %v408 = vsel %vm406, %v373, 0
  %v411 = vsel %vm406, %v374, 0
  %v414 = vsel %vm406, %v375, 0
  %v417 = vsel %vm406, %v376, 0
  %v420 = vsel %vm406, %v377, 0
  %v423 = vsel %vm406, %v378, 0
  %v426 = vsel %vm406, %v379, 0
  %v429 = vsel %vm406, %v380, 0
  %v432 = vsel %vm406, %v381, 0
  %v435 = vsel %vm406, %v382, 0
  %v438 = vsel %vm406, %v383, 0
  %v441 = vsel %vm406, %v384, 0
  %v444 = vsel %vm406, %v385, 0
  %v447 = vsel %vm406, %v386, 0
  %v450 = vsel %vm406, %v387, 0
  %v453 = vsel %vm406, %v388, 0
  %v456 = vsel %vm406, %v389, 0
  %v459 = vsel %vm406, %v390, 0
  %v462 = vsel %vm406, %v391, 0
  %v465 = vsel %vm406, %v392, 0
  %v468 = vsel %vm406, %v393, 0
  %v471 = vsel %vm406, %v394, 0
  %v474 = vsel %vm406, %v395, 0
  %v477 = vsel %vm406, %v396, 0
  %v480 = vsel %vm406, %v397, 0
  %v483 = vsel %vm406, %v398, 0
  %v486 = vsel %vm406, %v399, 0
  %v489 = vsel %vm406, %v400, 0
  %v492 = vsel %vm406, %v401, 0
  %v495 = vsel %vm406, %v402, 0
  %v498 = vsel %vm406, %v403, 0
  %v501 = vsel %vm406, %v404, 0
  %vm503 = vcmask 1041408
  %v505 = vsel %vm503, %v405, 0
  %507 = vmatprep.subr.bf16.mxu0 0
  %508 = vmatpush1.bf16.msra.mxu0 %v505
  %509 = vmatprep.subr.bf16.mxu0 0
  %510 = vmatpush1.bf16.msra.mxu0 0
  %511 = vmatprep.subr.bf16.mxu0 0
  %512 = vmatpush1.bf16.msra.mxu0 0
  %513 = vmatprep.subr.bf16.mxu0 0
  %514 = vmatpush1.bf16.msra.mxu0 0
  %515 = vmatprep.subr.bf16.mxu0 0
  %516 = vmatpush1.bf16.msra.mxu0 0
  %517 = vmatprep.subr.bf16.mxu0 0
  %518 = vmatpush1.bf16.msra.mxu0 0
  %519 = vmatprep.subr.bf16.mxu0 0
  %520 = vmatpush1.bf16.msra.mxu0 0
  %521 = vmatprep.subr.bf16.mxu0 0
  %522 = vmatpush1.bf16.msra.mxu0 0
  %523 = vmatprep.subr.bf16.mxu0 0
  %524 = vmatpush1.bf16.msra.mxu0 0
  %525 = vmatprep.subr.bf16.mxu0 0
  %526 = vmatpush1.bf16.msra.mxu0 0
  %527 = vmatprep.subr.bf16.mxu0 0
  %528 = vmatpush1.bf16.msra.mxu0 0
  %529 = vmatprep.subr.bf16.mxu0 0
  %530 = vmatpush1.bf16.msra.mxu0 0
  %531 = vmatprep.subr.bf16.mxu0 0
  %532 = vmatpush1.bf16.msra.mxu0 0
  %533 = vmatprep.subr.bf16.mxu0 0
  %534 = vmatpush1.bf16.msra.mxu0 0
  %535 = vmatprep.subr.bf16.mxu0 0
  %536 = vmatpush1.bf16.msra.mxu0 0
  %537 = vmatprep.subr.bf16.mxu0 0
  %538 = vmatpush1.bf16.msra.mxu0 0
  %539 = vmatprep.mubr.bf16.mxu0 0
  %540 = vmatmul.mubr.bf16.gmra.mrb[0].mxu0 %v408
  %v541 = vpop.f32.mrb[0].mxu0
  %v542 = vadd.f32 0.0, %v541
  %v543 = vpop.f32.mrb[0].mxu0
  %v544 = vpop.f32.mrb[0].mxu0
  %v545 = vadd.f32 0.0, %v544
  %v546 = vpop.f32.mrb[0].mxu0
  %547 = vmatprep.mubr.bf16.mxu0 0
  %548 = vmatmul.mubr.bf16.gmra.mrb[0].mxu0 %v411
  %v549 = vpop.f32.mrb[0].mxu0
  %v550 = vadd.f32 0.0, %v549
  %v551 = vpop.f32.mrb[0].mxu0
  %v552 = vpop.f32.mrb[0].mxu0
  %v553 = vadd.f32 0.0, %v552
  %v554 = vpop.f32.mrb[0].mxu0
  %555 = vmatprep.mubr.bf16.mxu0 0
  %556 = vmatmul.mubr.bf16.gmra.mrb[0].mxu0 %v414
  %v557 = vpop.f32.mrb[0].mxu0
  %v558 = vadd.f32 0.0, %v557
  %v559 = vpop.f32.mrb[0].mxu0
  %v560 = vpop.f32.mrb[0].mxu0
  %v561 = vadd.f32 0.0, %v560
  %v562 = vpop.f32.mrb[0].mxu0
  %563 = vmatprep.mubr.bf16.mxu0 0
  %564 = vmatmul.mubr.bf16.gmra.mrb[0].mxu0 %v417
  %v565 = vpop.f32.mrb[0].mxu0
  %v566 = vadd.f32 0.0, %v565
  %v567 = vpop.f32.mrb[0].mxu0
  %v568 = vpop.f32.mrb[0].mxu0
  %v569 = vadd.f32 0.0, %v568
  %v570 = vpop.f32.mrb[0].mxu0
  %571 = vmatprep.mubr.bf16.mxu0 0
  %572 = vmatmul.mubr.bf16.gmra.mrb[0].mxu0 %v420
  %v573 = vpop.f32.mrb[0].mxu0
  %v574 = vadd.f32 0.0, %v573
  %v575 = vpop.f32.mrb[0].mxu0
  %v576 = vpop.f32.mrb[0].mxu0
  %v577 = vadd.f32 0.0, %v576
  %v578 = vpop.f32.mrb[0].mxu0
  %579 = vmatprep.mubr.bf16.mxu0 0
  %580 = vmatmul.mubr.bf16.gmra.mrb[0].mxu0 %v423
  %v581 = vpop.f32.mrb[0].mxu0
  %v582 = vadd.f32 0.0, %v581
  %v583 = vpop.f32.mrb[0].mxu0
  %v584 = vpop.f32.mrb[0].mxu0
  %v585 = vadd.f32 0.0, %v584
  %v586 = vpop.f32.mrb[0].mxu0
  %587 = vmatprep.mubr.bf16.mxu0 0
  %588 = vmatmul.mubr.bf16.gmra.mrb[0].mxu0 %v426
  %v589 = vpop.f32.mrb[0].mxu0
  %v590 = vadd.f32 0.0, %v589
  %v591 = vpop.f32.mrb[0].mxu0
  %v592 = vpop.f32.mrb[0].mxu0
  %v593 = vadd.f32 0.0, %v592
  %v594 = vpop.f32.mrb[0].mxu0
  %595 = vmatprep.mubr.bf16.mxu0 0
  %596 = vmatmul.mubr.bf16.gmra.mrb[0].mxu0 %v429
  %v597 = vpop.f32.mrb[0].mxu0
  %v598 = vadd.f32 0.0, %v597
  %v599 = vpop.f32.mrb[0].mxu0
  %v600 = vpop.f32.mrb[0].mxu0
  %v601 = vadd.f32 0.0, %v600
  %v602 = vpop.f32.mrb[0].mxu0
  %603 = vmatprep.mubr.bf16.mxu0 0
  %604 = vmatmul.mubr.bf16.gmra.mrb[0].mxu0 %v432
  %v605 = vpop.f32.mrb[0].mxu0
  %v606 = vadd.f32 0.0, %v605
  %v607 = vpop.f32.mrb[0].mxu0
  %v608 = vpop.f32.mrb[0].mxu0
  %v609 = vadd.f32 0.0, %v608
  %v610 = vpop.f32.mrb[0].mxu0
  %611 = vmatprep.mubr.bf16.mxu0 0
  %612 = vmatmul.mubr.bf16.gmra.mrb[0].mxu0 %v435
  %v613 = vpop.f32.mrb[0].mxu0
  %v614 = vadd.f32 0.0, %v613
  %v615 = vpop.f32.mrb[0].mxu0
  %v616 = vpop.f32.mrb[0].mxu0
  %v617 = vadd.f32 0.0, %v616
  %v618 = vpop.f32.mrb[0].mxu0
  %619 = vmatprep.mubr.bf16.mxu0 0
  %620 = vmatmul.mubr.bf16.gmra.mrb[0].mxu0 %v438
  %v621 = vpop.f32.mrb[0].mxu0
  %v622 = vadd.f32 0.0, %v621
  %v623 = vpop.f32.mrb[0].mxu0
  %v624 = vpop.f32.mrb[0].mxu0
  %v625 = vadd.f32 0.0, %v624
  %v626 = vpop.f32.mrb[0].mxu0
  %627 = vmatprep.mubr.bf16.mxu0 0
  %628 = vmatmul.mubr.bf16.gmra.mrb[0].mxu0 %v441
  %v629 = vpop.f32.mrb[0].mxu0
  %v630 = vadd.f32 0.0, %v629
  %v631 = vpop.f32.mrb[0].mxu0
  %v632 = vpop.f32.mrb[0].mxu0
  %v633 = vadd.f32 0.0, %v632
  %v634 = vpop.f32.mrb[0].mxu0
  %635 = vmatprep.mubr.bf16.mxu0 0
  %636 = vmatmul.mubr.bf16.gmra.mrb[0].mxu0 %v444
  %v637 = vpop.f32.mrb[0].mxu0
  %v638 = vadd.f32 0.0, %v637
  %v639 = vpop.f32.mrb[0].mxu0
  %v640 = vpop.f32.mrb[0].mxu0
  %v641 = vadd.f32 0.0, %v640
  %v642 = vpop.f32.mrb[0].mxu0
  %643 = vmatprep.mubr.bf16.mxu0 0
  %644 = vmatmul.mubr.bf16.gmra.mrb[0].mxu0 %v447
  %v645 = vpop.f32.mrb[0].mxu0
  %v646 = vadd.f32 0.0, %v645
  %v647 = vpop.f32.mrb[0].mxu0
  %v648 = vpop.f32.mrb[0].mxu0
  %v649 = vadd.f32 0.0, %v648
  %v650 = vpop.f32.mrb[0].mxu0
  %651 = vmatprep.mubr.bf16.mxu0 0
  %652 = vmatmul.mubr.bf16.gmra.mrb[0].mxu0 %v450
  %v653 = vpop.f32.mrb[0].mxu0
  %v654 = vadd.f32 0.0, %v653
  %v655 = vpop.f32.mrb[0].mxu0
  %v656 = vpop.f32.mrb[0].mxu0
  %v657 = vadd.f32 0.0, %v656
  %v658 = vpop.f32.mrb[0].mxu0
  %659 = vmatprep.mubr.bf16.mxu0 0
  %660 = vmatmul.mubr.bf16.gmra.mrb[0].mxu0 %v453
  %v661 = vpop.f32.mrb[0].mxu0
  %v662 = vadd.f32 0.0, %v661
  %v663 = vpop.f32.mrb[0].mxu0
  %v664 = vpop.f32.mrb[0].mxu0
  %v665 = vadd.f32 0.0, %v664
  %v666 = vpop.f32.mrb[0].mxu0
  %667 = vmatprep.mubr.bf16.mxu0 0
  %668 = vmatmul.mubr.bf16.gmra.mrb[0].mxu0 %v456
  %v669 = vpop.f32.mrb[0].mxu0
  %v670 = vadd.f32 0.0, %v669
  %v671 = vpop.f32.mrb[0].mxu0
  %v672 = vpop.f32.mrb[0].mxu0
  %v673 = vadd.f32 0.0, %v672
  %v674 = vpop.f32.mrb[0].mxu0
  %675 = vmatprep.mubr.bf16.mxu0 0
  %676 = vmatmul.mubr.bf16.gmra.mrb[0].mxu0 %v459
  %v677 = vpop.f32.mrb[0].mxu0
  %v678 = vadd.f32 0.0, %v677
  %v679 = vpop.f32.mrb[0].mxu0
  %v680 = vpop.f32.mrb[0].mxu0
  %v681 = vadd.f32 0.0, %v680
  %v682 = vpop.f32.mrb[0].mxu0
  %683 = vmatprep.mubr.bf16.mxu0 0
  %684 = vmatmul.mubr.bf16.gmra.mrb[0].mxu0 %v462
  %v685 = vpop.f32.mrb[0].mxu0
  %v686 = vadd.f32 0.0, %v685
  %v687 = vpop.f32.mrb[0].mxu0
  %v688 = vpop.f32.mrb[0].mxu0
  %v689 = vadd.f32 0.0, %v688
  %v690 = vpop.f32.mrb[0].mxu0
  %691 = vmatprep.mubr.bf16.mxu0 0
  %692 = vmatmul.mubr.bf16.gmra.mrb[0].mxu0 %v465
  %v693 = vpop.f32.mrb[0].mxu0
  %v694 = vadd.f32 0.0, %v693
  %v695 = vpop.f32.mrb[0].mxu0
  %v696 = vpop.f32.mrb[0].mxu0
  %v697 = vadd.f32 0.0, %v696
  %v698 = vpop.f32.mrb[0].mxu0
  %699 = vmatprep.mubr.bf16.mxu0 0
  %700 = vmatmul.mubr.bf16.gmra.mrb[0].mxu0 %v468
  %v701 = vpop.f32.mrb[0].mxu0
  %v702 = vadd.f32 0.0, %v701
  %v703 = vpop.f32.mrb[0].mxu0
  %v704 = vpop.f32.mrb[0].mxu0
  %v705 = vadd.f32 0.0, %v704
  %v706 = vpop.f32.mrb[0].mxu0
  %707 = vmatprep.mubr.bf16.mxu0 0
  %708 = vmatmul.mubr.bf16.gmra.mrb[0].mxu0 %v471
  %v709 = vpop.f32.mrb[0].mxu0
  %v710 = vadd.f32 0.0, %v709
  %v711 = vpop.f32.mrb[0].mxu0
  %v712 = vpop.f32.mrb[0].mxu0
  %v713 = vadd.f32 0.0, %v712
  %v714 = vpop.f32.mrb[0].mxu0
  %715 = vmatprep.mubr.bf16.mxu0 0
  %716 = vmatmul.mubr.bf16.gmra.mrb[0].mxu0 %v474
  %v717 = vpop.f32.mrb[0].mxu0
  %v718 = vadd.f32 0.0, %v717
  %v719 = vpop.f32.mrb[0].mxu0
  %v720 = vpop.f32.mrb[0].mxu0
  %v721 = vadd.f32 0.0, %v720
  %v722 = vpop.f32.mrb[0].mxu0
  %723 = vmatprep.mubr.bf16.mxu0 0
  %724 = vmatmul.mubr.bf16.gmra.mrb[0].mxu0 %v477
  %v725 = vpop.f32.mrb[0].mxu0
  %v726 = vadd.f32 0.0, %v725
  %v727 = vpop.f32.mrb[0].mxu0
  %v728 = vpop.f32.mrb[0].mxu0
  %v729 = vadd.f32 0.0, %v728
  %v730 = vpop.f32.mrb[0].mxu0
  %731 = vmatprep.mubr.bf16.mxu0 0
  %732 = vmatmul.mubr.bf16.gmra.mrb[0].mxu0 %v480
  %v733 = vpop.f32.mrb[0].mxu0
  %v734 = vadd.f32 0.0, %v733
  %v735 = vpop.f32.mrb[0].mxu0
  %v736 = vpop.f32.mrb[0].mxu0
  %v737 = vadd.f32 0.0, %v736
  %v738 = vpop.f32.mrb[0].mxu0
  %739 = vmatprep.mubr.bf16.mxu0 0
  %740 = vmatmul.mubr.bf16.gmra.mrb[0].mxu0 %v483
  %v741 = vpop.f32.mrb[0].mxu0
  %v742 = vadd.f32 0.0, %v741
  %v743 = vpop.f32.mrb[0].mxu0
  %v744 = vpop.f32.mrb[0].mxu0
  %v745 = vadd.f32 0.0, %v744
  %v746 = vpop.f32.mrb[0].mxu0
  %747 = vmatprep.mubr.bf16.mxu0 0
  %748 = vmatmul.mubr.bf16.gmra.mrb[0].mxu0 %v486
  %v749 = vpop.f32.mrb[0].mxu0
  %v750 = vadd.f32 0.0, %v749
  %v751 = vpop.f32.mrb[0].mxu0
  %v752 = vpop.f32.mrb[0].mxu0
  %v753 = vadd.f32 0.0, %v752
  %v754 = vpop.f32.mrb[0].mxu0
  %755 = vmatprep.mubr.bf16.mxu0 0
  %756 = vmatmul.mubr.bf16.gmra.mrb[0].mxu0 %v489
  %v757 = vpop.f32.mrb[0].mxu0
  %v758 = vadd.f32 0.0, %v757
  %v759 = vpop.f32.mrb[0].mxu0
  %v760 = vpop.f32.mrb[0].mxu0
  %v761 = vadd.f32 0.0, %v760
  %v762 = vpop.f32.mrb[0].mxu0
  %763 = vmatprep.mubr.bf16.mxu0 0
  %764 = vmatmul.mubr.bf16.gmra.mrb[0].mxu0 %v492
  %v765 = vpop.f32.mrb[0].mxu0
  %v766 = vadd.f32 0.0, %v765
  %v767 = vpop.f32.mrb[0].mxu0
  %v768 = vpop.f32.mrb[0].mxu0
  %v769 = vadd.f32 0.0, %v768
  %v770 = vpop.f32.mrb[0].mxu0
  %771 = vmatprep.mubr.bf16.mxu0 0
  %772 = vmatmul.mubr.bf16.gmra.mrb[0].mxu0 %v495
  %v773 = vpop.f32.mrb[0].mxu0
  %v774 = vadd.f32 0.0, %v773
  %v775 = vpop.f32.mrb[0].mxu0
  %v776 = vpop.f32.mrb[0].mxu0
  %v777 = vadd.f32 0.0, %v776
  %v778 = vpop.f32.mrb[0].mxu0
  %779 = vmatprep.mubr.bf16.mxu0 0
  %780 = vmatmul.mubr.bf16.gmra.mrb[0].mxu0 %v498
  %v781 = vpop.f32.mrb[0].mxu0
  %v782 = vadd.f32 0.0, %v781
  %v783 = vpop.f32.mrb[0].mxu0
  %v784 = vpop.f32.mrb[0].mxu0
  %v785 = vadd.f32 0.0, %v784
  %v786 = vpop.f32.mrb[0].mxu0
  %787 = vmatprep.mubr.bf16.mxu0 0
  %788 = vmatmul.mubr.bf16.gmra.mrb[0].mxu0 %v501
  %v789 = vpop.f32.mrb[0].mxu0
  %v790 = vadd.f32 0.0, %v789
  %v791 = vpop.f32.mrb[0].mxu0
  %v792 = vpop.f32.mrb[0].mxu0
  %v793 = vadd.f32 0.0, %v792
  %v794 = vpop.f32.mrb[0].mxu0
  %795 = vdwg.mxu0
  %v796 = vpack.c.bf16 %v545, %v542
  %v797 = vpack.c.bf16 %v553, %v550
  %v798 = vpack.c.bf16 %v561, %v558
  %v799 = vpack.c.bf16 %v569, %v566
  %v800 = vpack.c.bf16 %v577, %v574
  %v801 = vpack.c.bf16 %v585, %v582
  %v802 = vpack.c.bf16 %v593, %v590
  %v803 = vpack.c.bf16 %v601, %v598
  %v804 = vpack.c.bf16 %v609, %v606
  %v805 = vpack.c.bf16 %v617, %v614
  %v806 = vpack.c.bf16 %v625, %v622
  %v807 = vpack.c.bf16 %v633, %v630
  %v808 = vpack.c.bf16 %v641, %v638
  %v809 = vpack.c.bf16 %v649, %v646
  %v810 = vpack.c.bf16 %v657, %v654
  %v811 = vpack.c.bf16 %v665, %v662
  %v812 = vpack.c.bf16 %v673, %v670
  %v813 = vpack.c.bf16 %v681, %v678
  %v814 = vpack.c.bf16 %v689, %v686
  %v815 = vpack.c.bf16 %v697, %v694
  %v816 = vpack.c.bf16 %v705, %v702
  %v817 = vpack.c.bf16 %v713, %v710
  %v818 = vpack.c.bf16 %v721, %v718
  %v819 = vpack.c.bf16 %v729, %v726
  %v820 = vpack.c.bf16 %v737, %v734
  %v821 = vpack.c.bf16 %v745, %v742
  %v822 = vpack.c.bf16 %v753, %v750
  %v823 = vpack.c.bf16 %v761, %v758
  %v824 = vpack.c.bf16 %v769, %v766
  %v825 = vpack.c.bf16 %v777, %v774
  %v826 = vpack.c.bf16 %v785, %v782
  %v827 = vpack.c.bf16 %v793, %v790
  %v860 = vunpack.c.l.b16 %v796
  %v861 = vunpack.c.h.b16 %v796
  %v862 = vunpack.c.l.b16 %v797
  %v863 = vunpack.c.h.b16 %v797
  %v864 = vunpack.c.l.b16 %v798
  %v865 = vunpack.c.h.b16 %v798
  %v866 = vunpack.c.l.b16 %v799
  %v867 = vunpack.c.h.b16 %v799
  %v868 = vunpack.c.l.b16 %v800
  %v869 = vunpack.c.h.b16 %v800
  %v870 = vunpack.c.l.b16 %v801
  %v871 = vunpack.c.h.b16 %v801
  %v872 = vunpack.c.l.b16 %v802
  %v873 = vunpack.c.h.b16 %v802
  %v874 = vunpack.c.l.b16 %v803
  %v875 = vunpack.c.h.b16 %v803
  %v876 = vunpack.c.l.b16 %v804
  %v877 = vunpack.c.h.b16 %v804
  %v878 = vunpack.c.l.b16 %v805
  %v879 = vunpack.c.h.b16 %v805
  %v880 = vunpack.c.l.b16 %v806
  %v881 = vunpack.c.h.b16 %v806
  %v882 = vunpack.c.l.b16 %v807
  %v883 = vunpack.c.h.b16 %v807
  %v884 = vunpack.c.l.b16 %v808
  %v885 = vunpack.c.h.b16 %v808
  %v886 = vunpack.c.l.b16 %v809
  %v887 = vunpack.c.h.b16 %v809
  %v888 = vunpack.c.l.b16 %v810
  %v889 = vunpack.c.h.b16 %v810
  %v890 = vunpack.c.l.b16 %v811
  %v891 = vunpack.c.h.b16 %v811
  %v892 = vunpack.c.l.b16 %v812
  %v893 = vunpack.c.h.b16 %v812
  %v894 = vunpack.c.l.b16 %v813
  %v895 = vunpack.c.h.b16 %v813
  %v896 = vunpack.c.l.b16 %v814
  %v897 = vunpack.c.h.b16 %v814
  %v898 = vunpack.c.l.b16 %v815
  %v899 = vunpack.c.h.b16 %v815
  %v900 = vunpack.c.l.b16 %v816
  %v901 = vunpack.c.h.b16 %v816
  %v902 = vunpack.c.l.b16 %v817
  %v903 = vunpack.c.h.b16 %v817
  %v904 = vunpack.c.l.b16 %v818
  %v905 = vunpack.c.h.b16 %v818
  %v906 = vunpack.c.l.b16 %v819
  %v907 = vunpack.c.h.b16 %v819
  %v908 = vunpack.c.l.b16 %v820
  %v909 = vunpack.c.h.b16 %v820
  %v910 = vunpack.c.l.b16 %v821
  %v911 = vunpack.c.h.b16 %v821
  %v912 = vunpack.c.l.b16 %v822
  %v913 = vunpack.c.h.b16 %v822
  %v914 = vunpack.c.l.b16 %v823
  %v915 = vunpack.c.h.b16 %v823
  %v916 = vunpack.c.l.b16 %v824
  %v917 = vunpack.c.h.b16 %v824
  %v918 = vunpack.c.l.b16 %v825
  %v919 = vunpack.c.h.b16 %v825
  %v920 = vunpack.c.l.b16 %v826
  %v921 = vunpack.c.h.b16 %v826
  %v922 = vunpack.c.l.b16 %v827
  %v923 = vunpack.c.h.b16 %v827
  %v924 = vpack.c.b16 %v860, %v860
  %v925 = vpack.c.b16 %v861, %v861
  %v926 = vpack.c.b16 %v862, %v862
  %v927 = vpack.c.b16 %v863, %v863
  %v928 = vpack.c.b16 %v864, %v864
  %v929 = vpack.c.b16 %v865, %v865
  %v930 = vpack.c.b16 %v866, %v866
  %v931 = vpack.c.b16 %v867, %v867
  %v932 = vpack.c.b16 %v868, %v868
  %v933 = vpack.c.b16 %v869, %v869
  %v934 = vpack.c.b16 %v870, %v870
  %v935 = vpack.c.b16 %v871, %v871
  %v936 = vpack.c.b16 %v872, %v872
  %v937 = vpack.c.b16 %v873, %v873
  %v938 = vpack.c.b16 %v874, %v874
  %v939 = vpack.c.b16 %v875, %v875
  %v940 = vpack.c.b16 %v876, %v876
  %v941 = vpack.c.b16 %v877, %v877
  %v942 = vpack.c.b16 %v878, %v878
  %v943 = vpack.c.b16 %v879, %v879
  %v944 = vpack.c.b16 %v880, %v880
  %v945 = vpack.c.b16 %v881, %v881
  %v946 = vpack.c.b16 %v882, %v882
  %v947 = vpack.c.b16 %v883, %v883
  %v948 = vpack.c.b16 %v884, %v884
  %v949 = vpack.c.b16 %v885, %v885
  %v950 = vpack.c.b16 %v886, %v886
  %v951 = vpack.c.b16 %v887, %v887
  %v952 = vpack.c.b16 %v888, %v888
  %v953 = vpack.c.b16 %v889, %v889
  %v954 = vpack.c.b16 %v890, %v890
  %v955 = vpack.c.b16 %v891, %v891
  %v956 = vpack.c.b16 %v892, %v892
  %v957 = vpack.c.b16 %v893, %v893
  %v958 = vpack.c.b16 %v894, %v894
  %v959 = vpack.c.b16 %v895, %v895
  %v960 = vpack.c.b16 %v896, %v896
  %v961 = vpack.c.b16 %v897, %v897
  %v962 = vpack.c.b16 %v898, %v898
  %v963 = vpack.c.b16 %v899, %v899
  %v964 = vpack.c.b16 %v900, %v900
  %v965 = vpack.c.b16 %v901, %v901
  %v966 = vpack.c.b16 %v902, %v902
  %v967 = vpack.c.b16 %v903, %v903
  %v968 = vpack.c.b16 %v904, %v904
  %v969 = vpack.c.b16 %v905, %v905
  %v970 = vpack.c.b16 %v906, %v906
  %v971 = vpack.c.b16 %v907, %v907
  %v972 = vpack.c.b16 %v908, %v908
  %v973 = vpack.c.b16 %v909, %v909
  %v974 = vpack.c.b16 %v910, %v910
  %v975 = vpack.c.b16 %v911, %v911
  %v976 = vpack.c.b16 %v912, %v912
  %v977 = vpack.c.b16 %v913, %v913
  %v978 = vpack.c.b16 %v914, %v914
  %v979 = vpack.c.b16 %v915, %v915
  %v980 = vpack.c.b16 %v916, %v916
  %v981 = vpack.c.b16 %v917, %v917
  %v982 = vpack.c.b16 %v918, %v918
  %v983 = vpack.c.b16 %v919, %v919
  %v984 = vpack.c.b16 %v920, %v920
  %v985 = vpack.c.b16 %v921, %v921
  %v986 = vpack.c.b16 %v922, %v922
  %v987 = vpack.c.b16 %v923, %v923
  %vm1052 = vcmask 125952
  %1053 = vst.msk [vmem:[%s6] sm:$0xf] %vm1052, %v924
  %1054 = vst.msk [vmem:[%s6 + $0x4] sm:$0xf] %vm1052, %v925
  %1055 = vst.msk [vmem:[%s6 + $0x8] sm:$0xf] %vm1052, %v926
  %1056 = vst.msk [vmem:[%s6 + $0xc] sm:$0xf] %vm1052, %v927
  %1057 = vst.msk [vmem:[%s6 + $0x10] sm:$0xf] %vm1052, %v928
  %1058 = vst.msk [vmem:[%s6 + $0x14] sm:$0xf] %vm1052, %v929
  %1059 = vst.msk [vmem:[%s6 + $0x18] sm:$0xf] %vm1052, %v930
  %1060 = vst.msk [vmem:[%s6 + $0x1c] sm:$0xf] %vm1052, %v931
  %1061 = vst.msk [vmem:[%s6 + $0x20] sm:$0xf] %vm1052, %v932
  %1062 = vst.msk [vmem:[%s6 + $0x24] sm:$0xf] %vm1052, %v933
  %1063 = vst.msk [vmem:[%s6 + $0x28] sm:$0xf] %vm1052, %v934
  %1064 = vst.msk [vmem:[%s6 + $0x2c] sm:$0xf] %vm1052, %v935
  %1065 = vst.msk [vmem:[%s6 + $0x30] sm:$0xf] %vm1052, %v936
  %1066 = vst.msk [vmem:[%s6 + $0x34] sm:$0xf] %vm1052, %v937
  %1067 = vst.msk [vmem:[%s6 + $0x38] sm:$0xf] %vm1052, %v938
  %1068 = vst.msk [vmem:[%s6 + $0x3c] sm:$0xf] %vm1052, %v939
  %1069 = vst.msk [vmem:[%s6 + $0x40] sm:$0xf] %vm1052, %v940
  %1070 = vst.msk [vmem:[%s6 + $0x44] sm:$0xf] %vm1052, %v941
  %1071 = vst.msk [vmem:[%s6 + $0x48] sm:$0xf] %vm1052, %v942
  %1072 = vst.msk [vmem:[%s6 + $0x4c] sm:$0xf] %vm1052, %v943
  %1073 = vst.msk [vmem:[%s6 + $0x50] sm:$0xf] %vm1052, %v944
  %1074 = vst.msk [vmem:[%s6 + $0x54] sm:$0xf] %vm1052, %v945
  %1075 = vst.msk [vmem:[%s6 + $0x58] sm:$0xf] %vm1052, %v946
  %1076 = vst.msk [vmem:[%s6 + $0x5c] sm:$0xf] %vm1052, %v947
  %1077 = vst.msk [vmem:[%s6 + $0x60] sm:$0xf] %vm1052, %v948
  %1078 = vst.msk [vmem:[%s6 + $0x64] sm:$0xf] %vm1052, %v949
  %1079 = vst.msk [vmem:[%s6 + $0x68] sm:$0xf] %vm1052, %v950
  %1080 = vst.msk [vmem:[%s6 + $0x6c] sm:$0xf] %vm1052, %v951
  %1081 = vst.msk [vmem:[%s6 + $0x70] sm:$0xf] %vm1052, %v952
  %1082 = vst.msk [vmem:[%s6 + $0x74] sm:$0xf] %vm1052, %v953
  %1083 = vst.msk [vmem:[%s6 + $0x78] sm:$0xf] %vm1052, %v954
  %1084 = vst.msk [vmem:[%s6 + $0x7c] sm:$0xf] %vm1052, %v955
  %1085 = vst.msk [vmem:[%s6 + $0x80] sm:$0xf] %vm1052, %v956
  %1086 = vst.msk [vmem:[%s6 + $0x84] sm:$0xf] %vm1052, %v957
  %1087 = vst.msk [vmem:[%s6 + $0x88] sm:$0xf] %vm1052, %v958
  %1088 = vst.msk [vmem:[%s6 + $0x8c] sm:$0xf] %vm1052, %v959
  %1089 = vst.msk [vmem:[%s6 + $0x90] sm:$0xf] %vm1052, %v960
  %1090 = vst.msk [vmem:[%s6 + $0x94] sm:$0xf] %vm1052, %v961
  %1091 = vst.msk [vmem:[%s6 + $0x98] sm:$0xf] %vm1052, %v962
  %1092 = vst.msk [vmem:[%s6 + $0x9c] sm:$0xf] %vm1052, %v963
  %1093 = vst.msk [vmem:[%s6 + $0xa0] sm:$0xf] %vm1052, %v964
  %1094 = vst.msk [vmem:[%s6 + $0xa4] sm:$0xf] %vm1052, %v965
  %1095 = vst.msk [vmem:[%s6 + $0xa8] sm:$0xf] %vm1052, %v966
  %1096 = vst.msk [vmem:[%s6 + $0xac] sm:$0xf] %vm1052, %v967
  %1097 = vst.msk [vmem:[%s6 + $0xb0] sm:$0xf] %vm1052, %v968
  %1098 = vst.msk [vmem:[%s6 + $0xb4] sm:$0xf] %vm1052, %v969
  %1099 = vst.msk [vmem:[%s6 + $0xb8] sm:$0xf] %vm1052, %v970
  %1100 = vst.msk [vmem:[%s6 + $0xbc] sm:$0xf] %vm1052, %v971
  %1101 = vst.msk [vmem:[%s6 + $0xc0] sm:$0xf] %vm1052, %v972
  %1102 = vst.msk [vmem:[%s6 + $0xc4] sm:$0xf] %vm1052, %v973
  %1103 = vst.msk [vmem:[%s6 + $0xc8] sm:$0xf] %vm1052, %v974
  %1104 = vst.msk [vmem:[%s6 + $0xcc] sm:$0xf] %vm1052, %v975
  %1105 = vst.msk [vmem:[%s6 + $0xd0] sm:$0xf] %vm1052, %v976
  %1106 = vst.msk [vmem:[%s6 + $0xd4] sm:$0xf] %vm1052, %v977
  %1107 = vst.msk [vmem:[%s6 + $0xd8] sm:$0xf] %vm1052, %v978
  %1108 = vst.msk [vmem:[%s6 + $0xdc] sm:$0xf] %vm1052, %v979
  %1109 = vst.msk [vmem:[%s6 + $0xe0] sm:$0xf] %vm1052, %v980
  %1110 = vst.msk [vmem:[%s6 + $0xe4] sm:$0xf] %vm1052, %v981
  %1111 = vst.msk [vmem:[%s6 + $0xe8] sm:$0xf] %vm1052, %v982
  %1112 = vst.msk [vmem:[%s6 + $0xec] sm:$0xf] %vm1052, %v983
  %1113 = vst.msk [vmem:[%s6 + $0xf0] sm:$0xf] %vm1052, %v984
  %1114 = vst.msk [vmem:[%s6 + $0xf4] sm:$0xf] %vm1052, %v985
  %1115 = vst.msk [vmem:[%s6 + $0xf8] sm:$0xf] %vm1052, %v986
  %1116 = vst.msk [vmem:[%s6 + $0xfc] sm:$0xf] %vm1052, %v987
  %vm1117 = vcmask 130048
  %v1118 = vsel %vm1117, %v542, 0.0
  %v1119 = vsel %vm1117, %v545, 0.0
  %v1120 = vadd.f32 %v1118, %v1119
  %v1121 = vsel %vm1117, %v550, 0.0
  %v1122 = vadd.f32 %v1120, %v1121
  %v1123 = vsel %vm1117, %v553, 0.0
  %v1124 = vadd.f32 %v1122, %v1123
  %v1125 = vsel %vm1117, %v558, 0.0
  %v1126 = vadd.f32 %v1124, %v1125
  %v1127 = vsel %vm1117, %v561, 0.0
  %v1128 = vadd.f32 %v1126, %v1127
  %v1129 = vsel %vm1117, %v566, 0.0
  %v1130 = vadd.f32 %v1128, %v1129
  %v1131 = vsel %vm1117, %v569, 0.0
  %v1132 = vadd.f32 %v1130, %v1131
  %v1133 = vsel %vm1117, %v574, 0.0
  %v1134 = vadd.f32 %v1132, %v1133
  %v1135 = vsel %vm1117, %v577, 0.0
  %v1136 = vadd.f32 %v1134, %v1135
  %v1137 = vsel %vm1117, %v582, 0.0
  %v1138 = vadd.f32 %v1136, %v1137
  %v1139 = vsel %vm1117, %v585, 0.0
  %v1140 = vadd.f32 %v1138, %v1139
  %v1141 = vsel %vm1117, %v590, 0.0
  %v1142 = vadd.f32 %v1140, %v1141
  %v1143 = vsel %vm1117, %v593, 0.0
  %v1144 = vadd.f32 %v1142, %v1143
  %v1145 = vsel %vm1117, %v598, 0.0
  %v1146 = vadd.f32 %v1144, %v1145
  %v1147 = vsel %vm1117, %v601, 0.0
  %v1148 = vadd.f32 %v1146, %v1147
  %v1149 = vsel %vm1117, %v606, 0.0
  %v1150 = vadd.f32 %v1148, %v1149
  %v1151 = vsel %vm1117, %v609, 0.0
  %v1152 = vadd.f32 %v1150, %v1151
  %v1153 = vsel %vm1117, %v614, 0.0
  %v1154 = vadd.f32 %v1152, %v1153
  %v1155 = vsel %vm1117, %v617, 0.0
  %v1156 = vadd.f32 %v1154, %v1155
  %v1157 = vsel %vm1117, %v622, 0.0
  %v1158 = vadd.f32 %v1156, %v1157
  %v1159 = vsel %vm1117, %v625, 0.0
  %v1160 = vadd.f32 %v1158, %v1159
  %v1161 = vsel %vm1117, %v630, 0.0
  %v1162 = vadd.f32 %v1160, %v1161
  %v1163 = vsel %vm1117, %v633, 0.0
  %v1164 = vadd.f32 %v1162, %v1163
  %v1165 = vsel %vm1117, %v638, 0.0
  %v1166 = vadd.f32 %v1164, %v1165
  %v1167 = vsel %vm1117, %v641, 0.0
  %v1168 = vadd.f32 %v1166, %v1167
  %v1169 = vsel %vm1117, %v646, 0.0
  %v1170 = vadd.f32 %v1168, %v1169
  %v1171 = vsel %vm1117, %v649, 0.0
  %v1172 = vadd.f32 %v1170, %v1171
  %v1173 = vsel %vm1117, %v654, 0.0
  %v1174 = vadd.f32 %v1172, %v1173
  %v1175 = vsel %vm1117, %v657, 0.0
  %v1176 = vadd.f32 %v1174, %v1175
  %v1177 = vsel %vm1117, %v662, 0.0
  %v1178 = vadd.f32 %v1176, %v1177
  %v1179 = vsel %vm1117, %v665, 0.0
  %v1180 = vadd.f32 %v1178, %v1179
  %v1181 = vsel %vm1117, %v670, 0.0
  %v1182 = vadd.f32 %v1180, %v1181
  %v1183 = vsel %vm1117, %v673, 0.0
  %v1184 = vadd.f32 %v1182, %v1183
  %v1185 = vsel %vm1117, %v678, 0.0
  %v1186 = vadd.f32 %v1184, %v1185
  %v1187 = vsel %vm1117, %v681, 0.0
  %v1188 = vadd.f32 %v1186, %v1187
  %v1189 = vsel %vm1117, %v686, 0.0
  %v1190 = vadd.f32 %v1188, %v1189
  %v1191 = vsel %vm1117, %v689, 0.0
  %v1192 = vadd.f32 %v1190, %v1191
  %v1193 = vsel %vm1117, %v694, 0.0
  %v1194 = vadd.f32 %v1192, %v1193
  %v1195 = vsel %vm1117, %v697, 0.0
  %v1196 = vadd.f32 %v1194, %v1195
  %v1197 = vsel %vm1117, %v702, 0.0
  %v1198 = vadd.f32 %v1196, %v1197
  %v1199 = vsel %vm1117, %v705, 0.0
  %v1200 = vadd.f32 %v1198, %v1199
  %v1201 = vsel %vm1117, %v710, 0.0
  %v1202 = vadd.f32 %v1200, %v1201
  %v1203 = vsel %vm1117, %v713, 0.0
  %v1204 = vadd.f32 %v1202, %v1203
  %v1205 = vsel %vm1117, %v718, 0.0
  %v1206 = vadd.f32 %v1204, %v1205
  %v1207 = vsel %vm1117, %v721, 0.0
  %v1208 = vadd.f32 %v1206, %v1207
  %v1209 = vsel %vm1117, %v726, 0.0
  %v1210 = vadd.f32 %v1208, %v1209
  %v1211 = vsel %vm1117, %v729, 0.0
  %v1212 = vadd.f32 %v1210, %v1211
  %v1213 = vsel %vm1117, %v734, 0.0
  %v1214 = vadd.f32 %v1212, %v1213
  %v1215 = vsel %vm1117, %v737, 0.0
  %v1216 = vadd.f32 %v1214, %v1215
  %v1217 = vsel %vm1117, %v742, 0.0
  %v1218 = vadd.f32 %v1216, %v1217
  %v1219 = vsel %vm1117, %v745, 0.0
  %v1220 = vadd.f32 %v1218, %v1219
  %v1221 = vsel %vm1117, %v750, 0.0
  %v1222 = vadd.f32 %v1220, %v1221
  %v1223 = vsel %vm1117, %v753, 0.0
  %v1224 = vadd.f32 %v1222, %v1223
  %v1225 = vsel %vm1117, %v758, 0.0
  %v1226 = vadd.f32 %v1224, %v1225
  %v1227 = vsel %vm1117, %v761, 0.0
  %v1228 = vadd.f32 %v1226, %v1227
  %v1229 = vsel %vm1117, %v766, 0.0
  %v1230 = vadd.f32 %v1228, %v1229
  %v1231 = vsel %vm1117, %v769, 0.0
  %v1232 = vadd.f32 %v1230, %v1231
  %v1233 = vsel %vm1117, %v774, 0.0
  %v1234 = vadd.f32 %v1232, %v1233
  %v1235 = vsel %vm1117, %v777, 0.0
  %v1236 = vadd.f32 %v1234, %v1235
  %v1237 = vsel %vm1117, %v782, 0.0
  %v1238 = vadd.f32 %v1236, %v1237
  %v1239 = vsel %vm1117, %v785, 0.0
  %v1240 = vadd.f32 %v1238, %v1239
  %v1241 = vsel %vm1117, %v790, 0.0
  %v1242 = vadd.f32 %v1240, %v1241
  %v1243 = vsel %vm1117, %v793, 0.0
  %v1244 = vadd.f32 %v1242, %v1243
  %v1245 = vrot.slane %v1244, 4
  %v1246 = vadd.f32 %v1244, %v1245
  %v1247 = vrot.slane %v1246, 2
  %v1248 = vadd.f32 %v1246, %v1247
  %v1249 = vrot.slane %v1248, 1
  %v1250 = vadd.f32 %v1248, %v1249
  %vm1251 = vcmask 122880
  %1252 = vst.msk [vmem:[%s7] sm:$0x1] %vm1251, %v1250
  %v1253 = vmul.f32 %v542, %v542
  %v1254 = vmul.f32 %v545, %v545
  %v1255 = vmul.f32 %v550, %v550
  %v1256 = vmul.f32 %v553, %v553
  %v1257 = vmul.f32 %v558, %v558
  %v1258 = vmul.f32 %v561, %v561
  %v1259 = vmul.f32 %v566, %v566
  %v1260 = vmul.f32 %v569, %v569
  %v1261 = vmul.f32 %v574, %v574
  %v1262 = vmul.f32 %v577, %v577
  %v1263 = vmul.f32 %v582, %v582
  %v1264 = vmul.f32 %v585, %v585
  %v1265 = vmul.f32 %v590, %v590
  %v1266 = vmul.f32 %v593, %v593
  %v1267 = vmul.f32 %v598, %v598
  %v1268 = vmul.f32 %v601, %v601
  %v1269 = vmul.f32 %v606, %v606
  %v1270 = vmul.f32 %v609, %v609
  %v1271 = vmul.f32 %v614, %v614
  %v1272 = vmul.f32 %v617, %v617
  %v1273 = vmul.f32 %v622, %v622
  %v1274 = vmul.f32 %v625, %v625
  %v1275 = vmul.f32 %v630, %v630
  %v1276 = vmul.f32 %v633, %v633
  %v1277 = vmul.f32 %v638, %v638
  %v1278 = vmul.f32 %v641, %v641
  %v1279 = vmul.f32 %v646, %v646
  %v1280 = vmul.f32 %v649, %v649
  %v1281 = vmul.f32 %v654, %v654
  %v1282 = vmul.f32 %v657, %v657
  %v1283 = vmul.f32 %v662, %v662
  %v1284 = vmul.f32 %v665, %v665
  %v1285 = vmul.f32 %v670, %v670
  %v1286 = vmul.f32 %v673, %v673
  %v1287 = vmul.f32 %v678, %v678
  %v1288 = vmul.f32 %v681, %v681
  %v1289 = vmul.f32 %v686, %v686
  %v1290 = vmul.f32 %v689, %v689
  %v1291 = vmul.f32 %v694, %v694
  %v1292 = vmul.f32 %v697, %v697
  %v1293 = vmul.f32 %v702, %v702
  %v1294 = vmul.f32 %v705, %v705
  %v1295 = vmul.f32 %v710, %v710
  %v1296 = vmul.f32 %v713, %v713
  %v1297 = vmul.f32 %v718, %v718
  %v1298 = vmul.f32 %v721, %v721
  %v1299 = vmul.f32 %v726, %v726
  %v1300 = vmul.f32 %v729, %v729
  %v1301 = vmul.f32 %v734, %v734
  %v1302 = vmul.f32 %v737, %v737
  %v1303 = vmul.f32 %v742, %v742
  %v1304 = vmul.f32 %v745, %v745
  %v1305 = vmul.f32 %v750, %v750
  %v1306 = vmul.f32 %v753, %v753
  %v1307 = vmul.f32 %v758, %v758
  %v1308 = vmul.f32 %v761, %v761
  %v1309 = vmul.f32 %v766, %v766
  %v1310 = vmul.f32 %v769, %v769
  %v1311 = vmul.f32 %v774, %v774
  %v1312 = vmul.f32 %v777, %v777
  %v1313 = vmul.f32 %v782, %v782
  %v1314 = vmul.f32 %v785, %v785
  %v1315 = vmul.f32 %v790, %v790
  %v1316 = vmul.f32 %v793, %v793
  %v1317 = vsel %vm1117, %v1253, 0.0
  %v1318 = vsel %vm1117, %v1254, 0.0
  %v1319 = vadd.f32 %v1317, %v1318
  %v1320 = vsel %vm1117, %v1255, 0.0
  %v1321 = vadd.f32 %v1319, %v1320
  %v1322 = vsel %vm1117, %v1256, 0.0
  %v1323 = vadd.f32 %v1321, %v1322
  %v1324 = vsel %vm1117, %v1257, 0.0
  %v1325 = vadd.f32 %v1323, %v1324
  %v1326 = vsel %vm1117, %v1258, 0.0
  %v1327 = vadd.f32 %v1325, %v1326
  %v1328 = vsel %vm1117, %v1259, 0.0
  %v1329 = vadd.f32 %v1327, %v1328
  %v1330 = vsel %vm1117, %v1260, 0.0
  %v1331 = vadd.f32 %v1329, %v1330
  %v1332 = vsel %vm1117, %v1261, 0.0
  %v1333 = vadd.f32 %v1331, %v1332
  %v1334 = vsel %vm1117, %v1262, 0.0
  %v1335 = vadd.f32 %v1333, %v1334
  %v1336 = vsel %vm1117, %v1263, 0.0
  %v1337 = vadd.f32 %v1335, %v1336
  %v1338 = vsel %vm1117, %v1264, 0.0
  %v1339 = vadd.f32 %v1337, %v1338
  %v1340 = vsel %vm1117, %v1265, 0.0
  %v1341 = vadd.f32 %v1339, %v1340
  %v1342 = vsel %vm1117, %v1266, 0.0
  %v1343 = vadd.f32 %v1341, %v1342
  %v1344 = vsel %vm1117, %v1267, 0.0
  %v1345 = vadd.f32 %v1343, %v1344
  %v1346 = vsel %vm1117, %v1268, 0.0
  %v1347 = vadd.f32 %v1345, %v1346
  %v1348 = vsel %vm1117, %v1269, 0.0
  %v1349 = vadd.f32 %v1347, %v1348
  %v1350 = vsel %vm1117, %v1270, 0.0
  %v1351 = vadd.f32 %v1349, %v1350
  %v1352 = vsel %vm1117, %v1271, 0.0
  %v1353 = vadd.f32 %v1351, %v1352
  %v1354 = vsel %vm1117, %v1272, 0.0
  %v1355 = vadd.f32 %v1353, %v1354
  %v1356 = vsel %vm1117, %v1273, 0.0
  %v1357 = vadd.f32 %v1355, %v1356
  %v1358 = vsel %vm1117, %v1274, 0.0
  %v1359 = vadd.f32 %v1357, %v1358
  %v1360 = vsel %vm1117, %v1275, 0.0
  %v1361 = vadd.f32 %v1359, %v1360
  %v1362 = vsel %vm1117, %v1276, 0.0
  %v1363 = vadd.f32 %v1361, %v1362
  %v1364 = vsel %vm1117, %v1277, 0.0
  %v1365 = vadd.f32 %v1363, %v1364
  %v1366 = vsel %vm1117, %v1278, 0.0
  %v1367 = vadd.f32 %v1365, %v1366
  %v1368 = vsel %vm1117, %v1279, 0.0
  %v1369 = vadd.f32 %v1367, %v1368
  %v1370 = vsel %vm1117, %v1280, 0.0
  %v1371 = vadd.f32 %v1369, %v1370
  %v1372 = vsel %vm1117, %v1281, 0.0
  %v1373 = vadd.f32 %v1371, %v1372
  %v1374 = vsel %vm1117, %v1282, 0.0
  %v1375 = vadd.f32 %v1373, %v1374
  %v1376 = vsel %vm1117, %v1283, 0.0
  %v1377 = vadd.f32 %v1375, %v1376
  %v1378 = vsel %vm1117, %v1284, 0.0
  %v1379 = vadd.f32 %v1377, %v1378
  %v1380 = vsel %vm1117, %v1285, 0.0
  %v1381 = vadd.f32 %v1379, %v1380
  %v1382 = vsel %vm1117, %v1286, 0.0
  %v1383 = vadd.f32 %v1381, %v1382
  %v1384 = vsel %vm1117, %v1287, 0.0
  %v1385 = vadd.f32 %v1383, %v1384
  %v1386 = vsel %vm1117, %v1288, 0.0
  %v1387 = vadd.f32 %v1385, %v1386
  %v1388 = vsel %vm1117, %v1289, 0.0
  %v1389 = vadd.f32 %v1387, %v1388
  %v1390 = vsel %vm1117, %v1290, 0.0
  %v1391 = vadd.f32 %v1389, %v1390
  %v1392 = vsel %vm1117, %v1291, 0.0
  %v1393 = vadd.f32 %v1391, %v1392
  %v1394 = vsel %vm1117, %v1292, 0.0
  %v1395 = vadd.f32 %v1393, %v1394
  %v1396 = vsel %vm1117, %v1293, 0.0
  %v1397 = vadd.f32 %v1395, %v1396
  %v1398 = vsel %vm1117, %v1294, 0.0
  %v1399 = vadd.f32 %v1397, %v1398
  %v1400 = vsel %vm1117, %v1295, 0.0
  %v1401 = vadd.f32 %v1399, %v1400
  %v1402 = vsel %vm1117, %v1296, 0.0
  %v1403 = vadd.f32 %v1401, %v1402
  %v1404 = vsel %vm1117, %v1297, 0.0
  %v1405 = vadd.f32 %v1403, %v1404
  %v1406 = vsel %vm1117, %v1298, 0.0
  %v1407 = vadd.f32 %v1405, %v1406
  %v1408 = vsel %vm1117, %v1299, 0.0
  %v1409 = vadd.f32 %v1407, %v1408
  %v1410 = vsel %vm1117, %v1300, 0.0
  %v1411 = vadd.f32 %v1409, %v1410
  %v1412 = vsel %vm1117, %v1301, 0.0
  %v1413 = vadd.f32 %v1411, %v1412
  %v1414 = vsel %vm1117, %v1302, 0.0
  %v1415 = vadd.f32 %v1413, %v1414
  %v1416 = vsel %vm1117, %v1303, 0.0
  %v1417 = vadd.f32 %v1415, %v1416
  %v1418 = vsel %vm1117, %v1304, 0.0
  %v1419 = vadd.f32 %v1417, %v1418
  %v1420 = vsel %vm1117, %v1305, 0.0
  %v1421 = vadd.f32 %v1419, %v1420
  %v1422 = vsel %vm1117, %v1306, 0.0
  %v1423 = vadd.f32 %v1421, %v1422
  %v1424 = vsel %vm1117, %v1307, 0.0
  %v1425 = vadd.f32 %v1423, %v1424
  %v1426 = vsel %vm1117, %v1308, 0.0
  %v1427 = vadd.f32 %v1425, %v1426
  %v1428 = vsel %vm1117, %v1309, 0.0
  %v1429 = vadd.f32 %v1427, %v1428
  %v1430 = vsel %vm1117, %v1310, 0.0
  %v1431 = vadd.f32 %v1429, %v1430
  %v1432 = vsel %vm1117, %v1311, 0.0
  %v1433 = vadd.f32 %v1431, %v1432
  %v1434 = vsel %vm1117, %v1312, 0.0
  %v1435 = vadd.f32 %v1433, %v1434
  %v1436 = vsel %vm1117, %v1313, 0.0
  %v1437 = vadd.f32 %v1435, %v1436
  %v1438 = vsel %vm1117, %v1314, 0.0
  %v1439 = vadd.f32 %v1437, %v1438
  %v1440 = vsel %vm1117, %v1315, 0.0
  %v1441 = vadd.f32 %v1439, %v1440
  %v1442 = vsel %vm1117, %v1316, 0.0
  %v1443 = vadd.f32 %v1441, %v1442
  %v1444 = vrot.slane %v1443, 4
  %v1445 = vadd.f32 %v1443, %v1444
  %v1446 = vrot.slane %v1445, 2
  %v1447 = vadd.f32 %v1445, %v1446
  %v1448 = vrot.slane %v1447, 1
  %v1449 = vadd.f32 %v1447, %v1448
  %1450 = vst.msk [vmem:[%s8] sm:$0x1] %vm1251, %v1449
  // Predicated region
  $region26: #{bottleneck_forward.6} parent=0 // pred_check
    _
  $region27: #{bottleneck_forward.6} parent=0 // pred_check_branch
    %1452 = sbr.rel (0) target = $region29
  $region28: #{bottleneck_forward.6} parent=0 // pred_region
    _
  $region29: #{bottleneck_forward.6} parent=0 // pred_fallthru
    _
  // Predicated region
  $region30: #{bottleneck_forward.6} parent=0 // pred_check
    _
  $region31: #{bottleneck_forward.6} parent=0 // pred_check_branch
    %1454 = sbr.rel (0) target = $region33
  $region32: #{bottleneck_forward.6} parent=0 // pred_region
    _
  $region33: #{bottleneck_forward.6} parent=0 // pred_fallthru
    _
  // Predicated region
  $region34: #{bottleneck_forward.6} parent=0 // pred_check
    _
  $region35: #{bottleneck_forward.6} parent=0 // pred_check_branch
    %1456 = sbr.rel (0) target = $region37
  $region36: #{bottleneck_forward.6} parent=0 // pred_region
    _
  $region37: #{bottleneck_forward.6} parent=0 // pred_fallthru
    _
  // Predicated region
  $region38: #{bottleneck_forward.6} parent=0 // pred_check
    _
  $region39: #{bottleneck_forward.6} parent=0 // pred_check_branch
    %1458 = sbr.rel (0) target = $region41
  $region40: #{bottleneck_forward.6} parent=0 // pred_region
    _
  $region41: #{bottleneck_forward.6} parent=0 // pred_fallthru
    _
  // Predicated region
  $region42: #{bottleneck_forward.6} parent=0 // pred_check
    _
  $region43: #{bottleneck_forward.6} parent=0 // pred_check_branch
    %1460 = sbr.rel (0) target = $region45
  $region44: #{bottleneck_forward.6} parent=0 // pred_region
    _
  $region45: #{bottleneck_forward.6} parent=0 // pred_fallthru
    _
  // Predicated region
  $region46: #{bottleneck_forward.6} parent=0 // pred_check
    _
  $region47: #{bottleneck_forward.6} parent=0 // pred_check_branch
    %1462 = sbr.rel (0) target = $region49
  $region48: #{bottleneck_forward.6} parent=0 // pred_region
    _
  $region49: #{bottleneck_forward.6} parent=0 // pred_fallthru
    _

// kernel: bottleneck_forward.5
$region0: #{bottleneck_forward.5}
  #allocation0 [shape = 'u32[]', space=smem, size = 0x4, offset = 0x4, fixed_abs, tag = 'smem constant byte address 0x4 - core index']
  #allocation1 [shape = 'u32[144,128]{1,0:T(1,128)}', space=vmem, size = 0x12000, scoped, tag = 'internal scratch']
  #allocation2 [shape = 'f32[18,18,4]{2,1,0:T(8,128)}', space=vmem, size = 0x36000, scoped, tag = 'scratch operand']
  %s0 = inlined_call_operand.vmem [shape: bf16[2,16,16,4], index: 0, kind: input, shape index: {}]
  %s1 = inlined_call_operand.vmem [shape: f32[1,4], index: 1, kind: input, shape index: {}]
  %s2 = inlined_call_operand.vmem [shape: f32[1,4], index: 2, kind: input, shape index: {}]
  %s3 = inlined_call_operand.vmem [shape: f32[1,4], index: 3, kind: input, shape index: {}]
  %s4 = inlined_call_operand.vmem [shape: f32[1,4], index: 4, kind: input, shape index: {}]
  %s5 = inlined_call_operand.vmem [shape: bf16[36,4], index: 5, kind: input, shape index: {}]
  %s6 = inlined_call_operand.vmem [shape: bf16[2,256,4], index: 6, kind: output, shape index: {0}]
  %s7 = inlined_call_operand.vmem [shape: f32[2,1,4], index: 7, kind: output, shape index: {1}]
  %s8 = inlined_call_operand.vmem [shape: f32[2,1,4], index: 8, kind: output, shape index: {2}]
  %9 = xla_tuple %s6, %s7, %s8
  %s10 = sld [smem:[#allocation0]]
  $region73: #{bottleneck_forward.5} parent=0
    _
  %s12 = ssub.s32 1, %s10
  %s13 = scalar_select 0, %s12, %s10
  loop: start=0, step=1, limit=4
  $region2: #{bottleneck_forward.5} parent=0 // loop_pre_header
    _
  $region3: #{bottleneck_forward.5} parent=0 // loop_header
    %s15 = sphi 0, %s19
    %p16 = scmp.ge.s32.totalorder %s15, 4
    %s25 = sphi 0, %s27
    %s28 = sphi 0, %s25
    %s29 = sphi 0, %s28
    %s45 = sphi 0, %s29
    %s49 = sphi 0, %s49
    %s51 = sphi 0, %s49
    %s52 = sphi 0, %s51
    %s66 = sphi 0, %s52
    %s70 = sphi 0, %s70
    %s72 = sphi 0, %s70
    %s73 = sphi 0, %s72
    %s87 = sphi 0, %s73
    %s91 = sphi 0, %s91
    %s93 = sphi 0, %s91
    %s94 = sphi 0, %s93
    %s108 = sphi 0, %s94
    %s112 = sphi 0, %s112
    %s114 = sphi 0, %s112
    %s115 = sphi 0, %s114
    %s129 = sphi 0, %s115
    %s133 = sphi 0, %s133
    %s135 = sphi 0, %s133
    %s136 = sphi 0, %s135
    %s150 = sphi 0, %s136
    %s156 = sphi 0, %s158
    %s159 = sphi 0, %s156
    %s160 = sphi 0, %s159
    %s176 = sphi 0, %s160
    %s182 = sphi 0, %s184
    %s185 = sphi 0, %s182
    %s186 = sphi 0, %s185
    %s202 = sphi 0, %s186
    %s208 = sphi 0, %s210
    %s211 = sphi 0, %s208
    %s212 = sphi 0, %s211
    %s228 = sphi 0, %s212
  $region4: #{bottleneck_forward.5} parent=0 // loop_header_branch
    %18 = sbr.rel (%p16) target = $region8
  $region5: #{bottleneck_forward.5} parent=0 // loop_body
    %s20 = ssub.s32 %s15, 1
    %s21 = ssub.s32 %s15, 2
    %s22 = sadd.s32 %s15, 1
    %s23 = ssub.s32 %s15, %s22
    %p24 = scmp.eq.s32.totalorder %s23, 0
    %s26 = sadd.s32 %s25, 1
    %s27 = scalar_select %p24, %s25, %s26
    %p30 = pneg %p24
    %p31 = scmp.eq.s32.totalorder %s15, 1
    %p32 = por %p30, %p31
    %p33 = scmp.ne.s32.totalorder %s25, %s28
    %p34 = scmp.eq.s32.totalorder %s15, 0
    %p35 = por %p33, %p34
    %p36 = scmp.ne.s32.totalorder %s25, %s28
    %p37 = scmp.eq.s32.totalorder %s20, 1
    %p38 = por %p36, %p37
    %p39 = scmp.ne.s32.totalorder %s28, %s29
    %p40 = scmp.eq.s32.totalorder %s20, 0
    %p41 = por %p39, %p40
    %p42 = scmp.ne.s32.totalorder %s28, %s29
    %p43 = scmp.eq.s32.totalorder %s21, 1
    %p44 = por %p42, %p43
    %p46 = scmp.ne.s32.totalorder %s29, %s45
    %p47 = scmp.eq.s32.totalorder %s21, 0
    %p48 = por %p46, %p47
    %s50 = sadd.s32 %s49, 1
    %p53 = scmp.eq.s32.totalorder %s15, 1
    %p54 = scmp.ne.s32.totalorder %s49, %s51
    %p55 = scmp.eq.s32.totalorder %s15, 0
    %p56 = por %p54, %p55
    %p57 = scmp.ne.s32.totalorder %s49, %s51
    %p58 = scmp.eq.s32.totalorder %s20, 1
    %p59 = por %p57, %p58
    %p60 = scmp.ne.s32.totalorder %s51, %s52
    %p61 = scmp.eq.s32.totalorder %s20, 0
    %p62 = por %p60, %p61
    %p63 = scmp.ne.s32.totalorder %s51, %s52
    %p64 = scmp.eq.s32.totalorder %s21, 1
    %p65 = por %p63, %p64
    %p67 = scmp.ne.s32.totalorder %s52, %s66
    %p68 = scmp.eq.s32.totalorder %s21, 0
    %p69 = por %p67, %p68
    %s71 = sadd.s32 %s70, 1
    %p74 = scmp.eq.s32.totalorder %s15, 1
    %p75 = scmp.ne.s32.totalorder %s70, %s72
    %p76 = scmp.eq.s32.totalorder %s15, 0
    %p77 = por %p75, %p76
    %p78 = scmp.ne.s32.totalorder %s70, %s72
    %p79 = scmp.eq.s32.totalorder %s20, 1
    %p80 = por %p78, %p79
    %p81 = scmp.ne.s32.totalorder %s72, %s73
    %p82 = scmp.eq.s32.totalorder %s20, 0
    %p83 = por %p81, %p82
    %p84 = scmp.ne.s32.totalorder %s72, %s73
    %p85 = scmp.eq.s32.totalorder %s21, 1
    %p86 = por %p84, %p85
    %p88 = scmp.ne.s32.totalorder %s73, %s87
    %p89 = scmp.eq.s32.totalorder %s21, 0
    %p90 = por %p88, %p89
    %s92 = sadd.s32 %s91, 1
    %p95 = scmp.eq.s32.totalorder %s15, 1
    %p96 = scmp.ne.s32.totalorder %s91, %s93
    %p97 = scmp.eq.s32.totalorder %s15, 0
    %p98 = por %p96, %p97
    %p99 = scmp.ne.s32.totalorder %s91, %s93
    %p100 = scmp.eq.s32.totalorder %s20, 1
    %p101 = por %p99, %p100
    %p102 = scmp.ne.s32.totalorder %s93, %s94
    %p103 = scmp.eq.s32.totalorder %s20, 0
    %p104 = por %p102, %p103
    %p105 = scmp.ne.s32.totalorder %s93, %s94
    %p106 = scmp.eq.s32.totalorder %s21, 1
    %p107 = por %p105, %p106
    %p109 = scmp.ne.s32.totalorder %s94, %s108
    %p110 = scmp.eq.s32.totalorder %s21, 0
    %p111 = por %p109, %p110
    %s113 = sadd.s32 %s112, 1
    %p116 = scmp.eq.s32.totalorder %s15, 1
    %p117 = scmp.ne.s32.totalorder %s112, %s114
    %p118 = scmp.eq.s32.totalorder %s15, 0
    %p119 = por %p117, %p118
    %p120 = scmp.ne.s32.totalorder %s112, %s114
    %p121 = scmp.eq.s32.totalorder %s20, 1
    %p122 = por %p120, %p121
    %p123 = scmp.ne.s32.totalorder %s114, %s115
    %p124 = scmp.eq.s32.totalorder %s20, 0
    %p125 = por %p123, %p124
    %p126 = scmp.ne.s32.totalorder %s114, %s115
    %p127 = scmp.eq.s32.totalorder %s21, 1
    %p128 = por %p126, %p127
    %p130 = scmp.ne.s32.totalorder %s115, %s129
    %p131 = scmp.eq.s32.totalorder %s21, 0
    %p132 = por %p130, %p131
    %s134 = sadd.s32 %s133, 1
    %p137 = scmp.eq.s32.totalorder %s15, 1
    %p138 = scmp.ne.s32.totalorder %s133, %s135
    %p139 = scmp.eq.s32.totalorder %s15, 0
    %p140 = por %p138, %p139
    %p141 = scmp.ne.s32.totalorder %s133, %s135
    %p142 = scmp.eq.s32.totalorder %s20, 1
    %p143 = por %p141, %p142
    %p144 = scmp.ne.s32.totalorder %s135, %s136
    %p145 = scmp.eq.s32.totalorder %s20, 0
    %p146 = por %p144, %p145
    %p147 = scmp.ne.s32.totalorder %s135, %s136
    %p148 = scmp.eq.s32.totalorder %s21, 1
    %p149 = por %p147, %p148
    %p151 = scmp.ne.s32.totalorder %s136, %s150
    %p152 = scmp.eq.s32.totalorder %s21, 0
    %p153 = por %p151, %p152
    %s154 = ssub.s32 %s15, %s22
    %p155 = scmp.eq.s32.totalorder %s154, 0
    %s157 = sadd.s32 %s156, 1
    %s158 = scalar_select %p155, %s156, %s157
    %p161 = pneg %p155
    %p162 = scmp.eq.s32.totalorder %s15, 1
    %p163 = por %p161, %p162
    %p164 = scmp.ne.s32.totalorder %s156, %s159
    %p165 = scmp.eq.s32.totalorder %s15, 0
    %p166 = por %p164, %p165
    %p167 = scmp.ne.s32.totalorder %s156, %s159
    %p168 = scmp.eq.s32.totalorder %s20, 1
    %p169 = por %p167, %p168
    %p170 = scmp.ne.s32.totalorder %s159, %s160
    %p171 = scmp.eq.s32.totalorder %s20, 0
    %p172 = por %p170, %p171
    %p173 = scmp.ne.s32.totalorder %s159, %s160
    %p174 = scmp.eq.s32.totalorder %s21, 1
    %p175 = por %p173, %p174
    %p177 = scmp.ne.s32.totalorder %s160, %s176
    %p178 = scmp.eq.s32.totalorder %s21, 0
    %p179 = por %p177, %p178
    %s180 = ssub.s32 %s15, %s22
    %p181 = scmp.eq.s32.totalorder %s180, 0
    %s183 = sadd.s32 %s182, 1
    %s184 = scalar_select %p181, %s182, %s183
    %p187 = pneg %p181
    %p188 = scmp.eq.s32.totalorder %s15, 1
    %p189 = por %p187, %p188
    %p190 = scmp.ne.s32.totalorder %s182, %s185
    %p191 = scmp.eq.s32.totalorder %s15, 0
    %p192 = por %p190, %p191
    %p193 = scmp.ne.s32.totalorder %s182, %s185
    %p194 = scmp.eq.s32.totalorder %s20, 1
    %p195 = por %p193, %p194
    %p196 = scmp.ne.s32.totalorder %s185, %s186
    %p197 = scmp.eq.s32.totalorder %s20, 0
    %p198 = por %p196, %p197
    %p199 = scmp.ne.s32.totalorder %s185, %s186
    %p200 = scmp.eq.s32.totalorder %s21, 1
    %p201 = por %p199, %p200
    %p203 = scmp.ne.s32.totalorder %s186, %s202
    %p204 = scmp.eq.s32.totalorder %s21, 0
    %p205 = por %p203, %p204
    %s206 = ssub.s32 %s15, %s22
    %p207 = scmp.eq.s32.totalorder %s206, 0
    %s209 = sadd.s32 %s208, 1
    %s210 = scalar_select %p207, %s208, %s209
    %p213 = pneg %p207
    %p214 = scmp.eq.s32.totalorder %s15, 1
    %p215 = por %p213, %p214
    %p216 = scmp.ne.s32.totalorder %s208, %s211
    %p217 = scmp.eq.s32.totalorder %s15, 0
    %p218 = por %p216, %p217
    %p219 = scmp.ne.s32.totalorder %s208, %s211
    %p220 = scmp.eq.s32.totalorder %s20, 1
    %p221 = por %p219, %p220
    %p222 = scmp.ne.s32.totalorder %s211, %s212
    %p223 = scmp.eq.s32.totalorder %s20, 0
    %p224 = por %p222, %p223
    %p225 = scmp.ne.s32.totalorder %s211, %s212
    %p226 = scmp.eq.s32.totalorder %s21, 1
    %p227 = por %p225, %p226
    %p229 = scmp.ne.s32.totalorder %s212, %s228
    %p230 = scmp.eq.s32.totalorder %s21, 0
    %p231 = por %p229, %p230
    %p232 = scmp.le.s32.totalorder 1, %s15
    %p233 = scmp.lt.s32.totalorder %s15, 3
    %p234 = pnand %p232, %p233
    %p235 = pneg %p234
    // Predicated region
    $region9: #{bottleneck_forward.5} parent=5 // pred_check
      _
    $region10: #{bottleneck_forward.5} parent=5 // pred_check_branch
      %237 = sbr.rel (%p234) target = $region12
    $region11: #{bottleneck_forward.5} parent=5 // pred_region
      %s238 = ssub.s32 %s15, 1
      // Predicated region
      $region13: #{bottleneck_forward.5} parent=11 // pred_check
        %p239 = pneg %p62
      $region14: #{bottleneck_forward.5} parent=11 // pred_check_branch
        %241 = sbr.rel (%p239) target = $region16
      $region15: #{bottleneck_forward.5} parent=11 // pred_region
        _
      $region16: #{bottleneck_forward.5} parent=11 // pred_fallthru
        _
      // Predicated region
      $region17: #{bottleneck_forward.5} parent=11 // pred_check
        %p242 = pneg %p83
      $region18: #{bottleneck_forward.5} parent=11 // pred_check_branch
        %244 = sbr.rel (%p242) target = $region20
      $region19: #{bottleneck_forward.5} parent=11 // pred_region
        _
      $region20: #{bottleneck_forward.5} parent=11 // pred_fallthru
        _
      // Predicated region
      $region21: #{bottleneck_forward.5} parent=11 // pred_check
        %p245 = pneg %p104
      $region22: #{bottleneck_forward.5} parent=11 // pred_check_branch
        %247 = sbr.rel (%p245) target = $region24
      $region23: #{bottleneck_forward.5} parent=11 // pred_region
        _
      $region24: #{bottleneck_forward.5} parent=11 // pred_fallthru
        _
      // Predicated region
      $region25: #{bottleneck_forward.5} parent=11 // pred_check
        %p248 = pneg %p125
      $region26: #{bottleneck_forward.5} parent=11 // pred_check_branch
        %250 = sbr.rel (%p248) target = $region28
      $region27: #{bottleneck_forward.5} parent=11 // pred_region
        _
      $region28: #{bottleneck_forward.5} parent=11 // pred_fallthru
        _
      // Predicated region
      $region29: #{bottleneck_forward.5} parent=11 // pred_check
        %p251 = pneg %p146
      $region30: #{bottleneck_forward.5} parent=11 // pred_check_branch
        %253 = sbr.rel (%p251) target = $region32
      $region31: #{bottleneck_forward.5} parent=11 // pred_region
        _
      $region32: #{bottleneck_forward.5} parent=11 // pred_fallthru
        _
    $region12: #{bottleneck_forward.5} parent=5 // pred_fallthru
      _
    %p254 = scmp.lt.s32.totalorder %s15, 2
    // Predicated region
    $region33: #{bottleneck_forward.5} parent=5 // pred_check
      %p255 = pneg %p254
    $region34: #{bottleneck_forward.5} parent=5 // pred_check_branch
      %257 = sbr.rel (%p255) target = $region36
    $region35: #{bottleneck_forward.5} parent=5 // pred_region
      // Predicated region
      $region37: #{bottleneck_forward.5} parent=35 // pred_check
        %p258 = pneg %p35
      $region38: #{bottleneck_forward.5} parent=35 // pred_check_branch
        %260 = sbr.rel (%p258) target = $region40
      $region39: #{bottleneck_forward.5} parent=35 // pred_region
        %p261 = scmp.lt.s32.totalorder %s15, 1
        %s262 = scalar_select %p261, %s15, 1
        %s263 = smul.addr %s262, 32
        %s264 = smul.addr %s263, 4
        %s265 = scalar_lea.vmem %s0, %s264
      $region40: #{bottleneck_forward.5} parent=35 // pred_fallthru
        _
    $region36: #{bottleneck_forward.5} parent=5 // pred_fallthru
      _
    %p266 = scmp.le.s32.totalorder 1, %s15
    %p267 = scmp.lt.s32.totalorder %s15, 3
    %p268 = pnand %p266, %p267
    %p269 = pneg %p268
    // Predicated region
    $region41: #{bottleneck_forward.5} parent=5 // pred_check
      _
    $region42: #{bottleneck_forward.5} parent=5 // pred_check_branch
      %271 = sbr.rel (%p268) target = $region44
    $region43: #{bottleneck_forward.5} parent=5 // pred_region
      %s272 = ssub.s32 %s15, 1
      %p273 = scmp.lt.s32.totalorder %s20, 1
      %s274 = scalar_select %p273, %s20, 1
      %s275 = smul.addr %s274, 32
      %s276 = smul.addr %s275, 4
      %s277 = scalar_lea.vmem %s0, %s276
      %p278 = pneg %p41
      %p279 = pneg %p38
      %p280 = pneg %p62
      %p281 = pneg %p59
      %p282 = pneg %p83
      %p283 = pneg %p80
      %p284 = pneg %p104
      %p285 = pneg %p101
      %p286 = pneg %p125
      %p287 = pneg %p122
      %p288 = pneg %p146
      %p289 = pneg %p143
      %p290 = pneg %p172
      %p291 = pneg %p169
      %p292 = scmp.lt.s32.totalorder %s20, 1
      %s293 = scalar_select %p292, %s20, 1
      %s294 = smul.addr %s293, 32
      %s295 = smul.addr %s294, 4
      %s296 = scalar_lea.vmem %s6, %s295
      %p297 = pneg %p198
      %p298 = pneg %p195
      %p299 = scmp.lt.s32.totalorder %s20, 1
      %s300 = scalar_select %p299, %s20, 1
      %s301 = scalar_lea.vmem %s7, %s300
      %p302 = pneg %p224
      %p303 = pneg %p221
      %p304 = scmp.lt.s32.totalorder %s20, 1
      %s305 = scalar_select %p304, %s20, 1
      %s306 = scalar_lea.vmem %s8, %s305
      %p307 = scmp.lt.s32.totalorder %s20, 1
      %s308 = scalar_select %p307, %s20, 1
      %s309 = smul.addr %s308, 32
      %s310 = smul.addr %s309, 4
      %s311 = scalar_lea.vmem %s0, %s310
      %p312 = scmp.lt.s32.totalorder %s20, 1
      %s313 = scalar_select %p312, %s20, 1
      %s314 = smul.addr %s313, 32
      %s315 = smul.addr %s314, 4
      %s316 = scalar_lea.vmem %s6, %s315
      %p317 = scmp.lt.s32.totalorder %s20, 1
      %s318 = scalar_select %p317, %s20, 1
      %s319 = scalar_lea.vmem %s7, %s318
      %p320 = scmp.lt.s32.totalorder %s20, 1
      %s321 = scalar_select %p320, %s20, 1
      %s322 = scalar_lea.vmem %s8, %s321
      %vm324 = vcmask 31744
      %325 = vst.msk [vmem:[#allocation2] sm:$0xff] %vm324, 0.0
      %326 = vst.msk [vmem:[#allocation2 + $0x8] sm:$0xff] %vm324, 0.0
      %vm327 = vcmask 25600
      %328 = vst.msk [vmem:[#allocation2 + $0x10] sm:$0x3] %vm327, 0.0
      %s329 = scalar_lea.vmem [#allocation2], 408
      %330 = vst.msk [vmem:[%s329] sm:$0xff] %vm324, 0.0
      %331 = vst.msk [vmem:[%s329 + $0x8] sm:$0xff] %vm324, 0.0
      %332 = vst.msk [vmem:[%s329 + $0x10] sm:$0x3] %vm327, 0.0
      %vm333 = vcmask 24576
      %334 = vst.msk [vmem:[#allocation2] sm:$0x1] %vm333, 0.0
      %335 = vst.msk [vmem:[#allocation2 + $0x18] sm:$0x1] %vm333, 0.0
      %336 = vst.msk [vmem:[#allocation2 + $0x30] sm:$0x1] %vm333, 0.0
      %337 = vst.msk [vmem:[#allocation2 + $0x48] sm:$0x1] %vm333, 0.0
      %338 = vst.msk [vmem:[#allocation2 + $0x60] sm:$0x1] %vm333, 0.0
      %339 = vst.msk [vmem:[#allocation2 + $0x78] sm:$0x1] %vm333, 0.0
      %340 = vst.msk [vmem:[#allocation2 + $0x90] sm:$0x1] %vm333, 0.0
      %341 = vst.msk [vmem:[#allocation2 + $0xa8] sm:$0x1] %vm333, 0.0
      %342 = vst.msk [vmem:[#allocation2 + $0xc0] sm:$0x1] %vm333, 0.0
      %343 = vst.msk [vmem:[#allocation2 + $0xd8] sm:$0x1] %vm333, 0.0
      %344 = vst.msk [vmem:[#allocation2 + $0xf0] sm:$0x1] %vm333, 0.0
      %345 = vst.msk [vmem:[#allocation2 + $0x108] sm:$0x1] %vm333, 0.0
      %346 = vst.msk [vmem:[#allocation2 + $0x120] sm:$0x1] %vm333, 0.0
      %347 = vst.msk [vmem:[#allocation2 + $0x138] sm:$0x1] %vm333, 0.0
      %348 = vst.msk [vmem:[#allocation2 + $0x150] sm:$0x1] %vm333, 0.0
      %349 = vst.msk [vmem:[#allocation2 + $0x168] sm:$0x1] %vm333, 0.0
      %350 = vst.msk [vmem:[#allocation2 + $0x180] sm:$0x1] %vm333, 0.0
      %351 = vst.msk [vmem:[#allocation2 + $0x198] sm:$0x1] %vm333, 0.0
      %352 = vst.msk [vmem:[#allocation2 + $0x11] sm:$0x1] %vm333, 0.0
      %353 = vst.msk [vmem:[#allocation2 + $0x29] sm:$0x1] %vm333, 0.0
      %354 = vst.msk [vmem:[#allocation2 + $0x41] sm:$0x1] %vm333, 0.0
      %355 = vst.msk [vmem:[#allocation2 + $0x59] sm:$0x1] %vm333, 0.0
      %356 = vst.msk [vmem:[#allocation2 + $0x71] sm:$0x1] %vm333, 0.0
      %357 = vst.msk [vmem:[#allocation2 + $0x89] sm:$0x1] %vm333, 0.0
      %358 = vst.msk [vmem:[#allocation2 + $0xa1] sm:$0x1] %vm333, 0.0
      %359 = vst.msk [vmem:[#allocation2 + $0xb9] sm:$0x1] %vm333, 0.0
      %360 = vst.msk [vmem:[#allocation2 + $0xd1] sm:$0x1] %vm333, 0.0
      %361 = vst.msk [vmem:[#allocation2 + $0xe9] sm:$0x1] %vm333, 0.0
      %362 = vst.msk [vmem:[#allocation2 + $0x101] sm:$0x1] %vm333, 0.0
      %363 = vst.msk [vmem:[#allocation2 + $0x119] sm:$0x1] %vm333, 0.0
      %364 = vst.msk [vmem:[#allocation2 + $0x131] sm:$0x1] %vm333, 0.0
      %365 = vst.msk [vmem:[#allocation2 + $0x149] sm:$0x1] %vm333, 0.0
      %366 = vst.msk [vmem:[#allocation2 + $0x161] sm:$0x1] %vm333, 0.0
      %367 = vst.msk [vmem:[#allocation2 + $0x179] sm:$0x1] %vm333, 0.0
      %368 = vst.msk [vmem:[#allocation2 + $0x191] sm:$0x1] %vm333, 0.0
      %369 = vst.msk [vmem:[#allocation2 + $0x1a9] sm:$0x1] %vm333, 0.0
      %v370 = vld [vmem:[%s1] sm:$0x1]
      %v371 = vrcp.pop 512.0
      %v372 = vmul.f32 %v370, %v371
      %v373 = vld [vmem:[%s2] sm:$0x1]
      %v374 = vmul.f32 %v373, %v371
      %v375 = vmul.f32 %v372, %v372
      %v376 = vsub.f32 %v374, %v375
      %v377 = vadd.f32 %v376, 1e-05
      %v378 = vrsqrt.pop %v377
      %v379 = vld [vmem:[%s3] sm:$0x1]
      %v380 = vmul.f32 %v379, %v378
      %v381 = vld [vmem:[%s4] sm:$0x1]
      %v382 = vmul.f32 %v372, %v380
      %v383 = vsub.f32 %v381, %v382
      %v384 = vld [vmem:[%s311] sm:$0xf]
      %v385 = vld [vmem:[%s311 + $0x4] sm:$0xf]
      %v386 = vld [vmem:[%s311 + $0x8] sm:$0xf]
      %v387 = vld [vmem:[%s311 + $0xc] sm:$0xf]
      %v388 = vld [vmem:[%s311 + $0x10] sm:$0xf]
      %v389 = vld [vmem:[%s311 + $0x14] sm:$0xf]
      %v390 = vld [vmem:[%s311 + $0x18] sm:$0xf]
      %v391 = vld [vmem:[%s311 + $0x1c] sm:$0xf]
      %v392 = vld [vmem:[%s311 + $0x20] sm:$0xf]
      %v393 = vld [vmem:[%s311 + $0x24] sm:$0xf]
      %v394 = vld [vmem:[%s311 + $0x28] sm:$0xf]
      %v395 = vld [vmem:[%s311 + $0x2c] sm:$0xf]
      %v396 = vld [vmem:[%s311 + $0x30] sm:$0xf]
      %v397 = vld [vmem:[%s311 + $0x34] sm:$0xf]
      %v398 = vld [vmem:[%s311 + $0x38] sm:$0xf]
      %v399 = vld [vmem:[%s311 + $0x3c] sm:$0xf]
      %v400 = vld [vmem:[%s311 + $0x40] sm:$0xf]
      %v401 = vld [vmem:[%s311 + $0x44] sm:$0xf]
      %v402 = vld [vmem:[%s311 + $0x48] sm:$0xf]
      %v403 = vld [vmem:[%s311 + $0x4c] sm:$0xf]
      %v404 = vld [vmem:[%s311 + $0x50] sm:$0xf]
      %v405 = vld [vmem:[%s311 + $0x54] sm:$0xf]
      %v406 = vld [vmem:[%s311 + $0x58] sm:$0xf]
      %v407 = vld [vmem:[%s311 + $0x5c] sm:$0xf]
      %v408 = vld [vmem:[%s311 + $0x60] sm:$0xf]
      %v409 = vld [vmem:[%s311 + $0x64] sm:$0xf]
      %v410 = vld [vmem:[%s311 + $0x68] sm:$0xf]
      %v411 = vld [vmem:[%s311 + $0x6c] sm:$0xf]
      %v412 = vld [vmem:[%s311 + $0x70] sm:$0xf]
      %v413 = vld [vmem:[%s311 + $0x74] sm:$0xf]
      %v414 = vld [vmem:[%s311 + $0x78] sm:$0xf]
      %v415 = vld [vmem:[%s311 + $0x7c] sm:$0xf]
      %v416 = vunpack.c.l.bf16 %v384
      %v417 = vunpack.c.l.bf16 %v385
      %v418 = vunpack.c.l.bf16 %v386
      %v419 = vunpack.c.l.bf16 %v387
      %v420 = vunpack.c.l.bf16 %v388
      %v421 = vunpack.c.l.bf16 %v389
      %v422 = vunpack.c.l.bf16 %v390
      %v423 = vunpack.c.l.bf16 %v391
      %v424 = vunpack.c.l.bf16 %v392
      %v425 = vunpack.c.l.bf16 %v393
      %v426 = vunpack.c.l.bf16 %v394
      %v427 = vunpack.c.l.bf16 %v395
      %v428 = vunpack.c.l.bf16 %v396
      %v429 = vunpack.c.l.bf16 %v397
      %v430 = vunpack.c.l.bf16 %v398
      %v431 = vunpack.c.l.bf16 %v399
      %v432 = vunpack.c.l.bf16 %v400
      %v433 = vunpack.c.l.bf16 %v401
      %v434 = vunpack.c.l.bf16 %v402
      %v435 = vunpack.c.l.bf16 %v403
      %v436 = vunpack.c.l.bf16 %v404
      %v437 = vunpack.c.l.bf16 %v405
      %v438 = vunpack.c.l.bf16 %v406
      %v439 = vunpack.c.l.bf16 %v407
      %v440 = vunpack.c.l.bf16 %v408
      %v441 = vunpack.c.l.bf16 %v409
      %v442 = vunpack.c.l.bf16 %v410
      %v443 = vunpack.c.l.bf16 %v411
      %v444 = vunpack.c.l.bf16 %v412
      %v445 = vunpack.c.l.bf16 %v413
      %v446 = vunpack.c.l.bf16 %v414
      %v447 = vunpack.c.l.bf16 %v415
      %v449 = vlaneseq
      %v450 = vshrl.u32 %v449, 7
      %v451 = vsub.s32 0, %v450
      %v452 = vrot.slane %v380, %v451
      %v454 = vmul.f32 %v416, %v452
      %v455 = vmul.f32 %v417, %v452
      %v456 = vmul.f32 %v418, %v452
      %v457 = vmul.f32 %v419, %v452
      %v458 = vmul.f32 %v420, %v452
      %v459 = vmul.f32 %v421, %v452
      %v460 = vmul.f32 %v422, %v452
      %v461 = vmul.f32 %v423, %v452
      %v462 = vmul.f32 %v424, %v452
      %v463 = vmul.f32 %v425, %v452
      %v464 = vmul.f32 %v426, %v452
      %v465 = vmul.f32 %v427, %v452
      %v466 = vmul.f32 %v428, %v452
      %v467 = vmul.f32 %v429, %v452
      %v468 = vmul.f32 %v430, %v452
      %v469 = vmul.f32 %v431, %v452
      %v470 = vmul.f32 %v432, %v452
      %v471 = vmul.f32 %v433, %v452
      %v472 = vmul.f32 %v434, %v452
      %v473 = vmul.f32 %v435, %v452
      %v474 = vmul.f32 %v436, %v452
      %v475 = vmul.f32 %v437, %v452
      %v476 = vmul.f32 %v438, %v452
      %v477 = vmul.f32 %v439, %v452
      %v478 = vmul.f32 %v440, %v452
      %v479 = vmul.f32 %v441, %v452
      %v480 = vmul.f32 %v442, %v452
      %v481 = vmul.f32 %v443, %v452
      %v482 = vmul.f32 %v444, %v452
      %v483 = vmul.f32 %v445, %v452
      %v484 = vmul.f32 %v446, %v452
      %v485 = vmul.f32 %v447, %v452
      %v487 = vlaneseq
      %v488 = vshrl.u32 %v487, 7
      %v489 = vsub.s32 0, %v488
      %v490 = vrot.slane %v383, %v489
      %v492 = vadd.f32 %v454, %v490
      %v493 = vadd.f32 %v455, %v490
      %v494 = vadd.f32 %v456, %v490
      %v495 = vadd.f32 %v457, %v490
      %v496 = vadd.f32 %v458, %v490
      %v497 = vadd.f32 %v459, %v490
      %v498 = vadd.f32 %v460, %v490
      %v499 = vadd.f32 %v461, %v490
      %v500 = vadd.f32 %v462, %v490
      %v501 = vadd.f32 %v463, %v490
      %v502 = vadd.f32 %v464, %v490
      %v503 = vadd.f32 %v465, %v490
      %v504 = vadd.f32 %v466, %v490
      %v505 = vadd.f32 %v467, %v490
      %v506 = vadd.f32 %v468, %v490
      %v507 = vadd.f32 %v469, %v490
      %v508 = vadd.f32 %v470, %v490
      %v509 = vadd.f32 %v471, %v490
      %v510 = vadd.f32 %v472, %v490
      %v511 = vadd.f32 %v473, %v490
      %v512 = vadd.f32 %v474, %v490
      %v513 = vadd.f32 %v475, %v490
      %v514 = vadd.f32 %v476, %v490
      %v515 = vadd.f32 %v477, %v490
      %v516 = vadd.f32 %v478, %v490
      %v517 = vadd.f32 %v479, %v490
      %v518 = vadd.f32 %v480, %v490
      %v519 = vadd.f32 %v481, %v490
      %v520 = vadd.f32 %v482, %v490
      %v521 = vadd.f32 %v483, %v490
      %v522 = vadd.f32 %v484, %v490
      %v523 = vadd.f32 %v485, %v490
      %v524 = vmax.f32 %v492, 0.0
      %v525 = vmax.f32 %v493, 0.0
      %v526 = vmax.f32 %v494, 0.0
      %v527 = vmax.f32 %v495, 0.0
      %v528 = vmax.f32 %v496, 0.0
      %v529 = vmax.f32 %v497, 0.0
      %v530 = vmax.f32 %v498, 0.0
      %v531 = vmax.f32 %v499, 0.0
      %v532 = vmax.f32 %v500, 0.0
      %v533 = vmax.f32 %v501, 0.0
      %v534 = vmax.f32 %v502, 0.0
      %v535 = vmax.f32 %v503, 0.0
      %v536 = vmax.f32 %v504, 0.0
      %v537 = vmax.f32 %v505, 0.0
      %v538 = vmax.f32 %v506, 0.0
      %v539 = vmax.f32 %v507, 0.0
      %v540 = vmax.f32 %v508, 0.0
      %v541 = vmax.f32 %v509, 0.0
      %v542 = vmax.f32 %v510, 0.0
      %v543 = vmax.f32 %v511, 0.0
      %v544 = vmax.f32 %v512, 0.0
      %v545 = vmax.f32 %v513, 0.0
      %v546 = vmax.f32 %v514, 0.0
      %v547 = vmax.f32 %v515, 0.0
      %v548 = vmax.f32 %v516, 0.0
      %v549 = vmax.f32 %v517, 0.0
      %v550 = vmax.f32 %v518, 0.0
      %v551 = vmax.f32 %v519, 0.0
      %v552 = vmax.f32 %v520, 0.0
      %v553 = vmax.f32 %v521, 0.0
      %v554 = vmax.f32 %v522, 0.0
      %v555 = vmax.f32 %v523, 0.0
      %s556 = scalar_lea.vmem [#allocation2], 24
      %557 = vst.msk [vmem:[%s556 + $0x1] sm:$0xff] %vm324, %v524
      %558 = vst.msk [vmem:[%s556 + $0x9] sm:$0xff] %vm324, %v525
      %559 = vst.msk [vmem:[%s556 + $0x19] sm:$0xff] %vm324, %v526
      %560 = vst.msk [vmem:[%s556 + $0x21] sm:$0xff] %vm324, %v527
      %561 = vst.msk [vmem:[%s556 + $0x31] sm:$0xff] %vm324, %v528
      %562 = vst.msk [vmem:[%s556 + $0x39] sm:$0xff] %vm324, %v529
      %563 = vst.msk [vmem:[%s556 + $0x49] sm:$0xff] %vm324, %v530
      %564 = vst.msk [vmem:[%s556 + $0x51] sm:$0xff] %vm324, %v531
      %565 = vst.msk [vmem:[%s556 + $0x61] sm:$0xff] %vm324, %v532
      %566 = vst.msk [vmem:[%s556 + $0x69] sm:$0xff] %vm324, %v533
      %567 = vst.msk [vmem:[%s556 + $0x79] sm:$0xff] %vm324, %v534
      %568 = vst.msk [vmem:[%s556 + $0x81] sm:$0xff] %vm324, %v535
      %569 = vst.msk [vmem:[%s556 + $0x91] sm:$0xff] %vm324, %v536
      %570 = vst.msk [vmem:[%s556 + $0x99] sm:$0xff] %vm324, %v537
      %571 = vst.msk [vmem:[%s556 + $0xa9] sm:$0xff] %vm324, %v538
      %572 = vst.msk [vmem:[%s556 + $0xb1] sm:$0xff] %vm324, %v539
      %573 = vst.msk [vmem:[%s556 + $0xc1] sm:$0xff] %vm324, %v540
      %574 = vst.msk [vmem:[%s556 + $0xc9] sm:$0xff] %vm324, %v541
      %575 = vst.msk [vmem:[%s556 + $0xd9] sm:$0xff] %vm324, %v542
      %576 = vst.msk [vmem:[%s556 + $0xe1] sm:$0xff] %vm324, %v543
      %577 = vst.msk [vmem:[%s556 + $0xf1] sm:$0xff] %vm324, %v544
      %578 = vst.msk [vmem:[%s556 + $0xf9] sm:$0xff] %vm324, %v545
      %579 = vst.msk [vmem:[%s556 + $0x109] sm:$0xff] %vm324, %v546
      %580 = vst.msk [vmem:[%s556 + $0x111] sm:$0xff] %vm324, %v547
      %581 = vst.msk [vmem:[%s556 + $0x121] sm:$0xff] %vm324, %v548
      %582 = vst.msk [vmem:[%s556 + $0x129] sm:$0xff] %vm324, %v549
      %583 = vst.msk [vmem:[%s556 + $0x139] sm:$0xff] %vm324, %v550
      %584 = vst.msk [vmem:[%s556 + $0x141] sm:$0xff] %vm324, %v551
      %585 = vst.msk [vmem:[%s556 + $0x151] sm:$0xff] %vm324, %v552
      %586 = vst.msk [vmem:[%s556 + $0x159] sm:$0xff] %vm324, %v553
      %587 = vst.msk [vmem:[%s556 + $0x169] sm:$0xff] %vm324, %v554
      %588 = vst.msk [vmem:[%s556 + $0x171] sm:$0xff] %vm324, %v555
      %v589 = vld [vmem:[#allocation2] sm:$0xff]
      %v590 = vld [vmem:[#allocation2 + $0x8] sm:$0xff]
      %v591 = vld [vmem:[#allocation2 + $0x18] sm:$0xff]
      %v592 = vld [vmem:[#allocation2 + $0x20] sm:$0xff]
      %v593 = vld [vmem:[#allocation2 + $0x30] sm:$0xff]
      %v594 = vld [vmem:[#allocation2 + $0x38] sm:$0xff]
      %v595 = vld [vmem:[#allocation2 + $0x48] sm:$0xff]
      %v596 = vld [vmem:[#allocation2 + $0x50] sm:$0xff]
      %v597 = vld [vmem:[#allocation2 + $0x60] sm:$0xff]
      %v598 = vld [vmem:[#allocation2 + $0x68] sm:$0xff]
      %v599 = vld [vmem:[#allocation2 + $0x78] sm:$0xff]
      %v600 = vld [vmem:[#allocation2 + $0x80] sm:$0xff]
      %v601 = vld [vmem:[#allocation2 + $0x90] sm:$0xff]
      %v602 = vld [vmem:[#allocation2 + $0x98] sm:$0xff]
      %v603 = vld [vmem:[#allocation2 + $0xa8] sm:$0xff]
      %v604 = vld [vmem:[#allocation2 + $0xb0] sm:$0xff]
      %v605 = vld [vmem:[#allocation2 + $0xc0] sm:$0xff]
      %v606 = vld [vmem:[#allocation2 + $0xc8] sm:$0xff]
      %v607 = vld [vmem:[#allocation2 + $0xd8] sm:$0xff]
      %v608 = vld [vmem:[#allocation2 + $0xe0] sm:$0xff]
      %v609 = vld [vmem:[#allocation2 + $0xf0] sm:$0xff]
      %v610 = vld [vmem:[#allocation2 + $0xf8] sm:$0xff]
      %v611 = vld [vmem:[#allocation2 + $0x108] sm:$0xff]
      %v612 = vld [vmem:[#allocation2 + $0x110] sm:$0xff]
      %v613 = vld [vmem:[#allocation2 + $0x120] sm:$0xff]
      %v614 = vld [vmem:[#allocation2 + $0x128] sm:$0xff]
      %v615 = vld [vmem:[#allocation2 + $0x138] sm:$0xff]
      %v616 = vld [vmem:[#allocation2 + $0x140] sm:$0xff]
      %v617 = vld [vmem:[#allocation2 + $0x150] sm:$0xff]
      %v618 = vld [vmem:[#allocation2 + $0x158] sm:$0xff]
      %v619 = vld [vmem:[#allocation2 + $0x168] sm:$0xff]
      %v620 = vld [vmem:[#allocation2 + $0x170] sm:$0xff]
      %v621 = vpack.c.bf16 %v590, %v589
      %v622 = vpack.c.bf16 %v592, %v591
      %v623 = vpack.c.bf16 %v594, %v593
      %v624 = vpack.c.bf16 %v596, %v595
      %v625 = vpack.c.bf16 %v598, %v597
      %v626 = vpack.c.bf16 %v600, %v599
      %v627 = vpack.c.bf16 %v602, %v601
      %v628 = vpack.c.bf16 %v604, %v603
      %v629 = vpack.c.bf16 %v606, %v605
      %v630 = vpack.c.bf16 %v608, %v607
      %v631 = vpack.c.bf16 %v610, %v609
      %v632 = vpack.c.bf16 %v612, %v611
      %v633 = vpack.c.bf16 %v614, %v613
      %v634 = vpack.c.bf16 %v616, %v615
      %v635 = vpack.c.bf16 %v618, %v617
      %v636 = vpack.c.bf16 %v620, %v619
      %v637 = vld [vmem:[%s5] sm:$0x3]
      %v638 = vld [vmem:[#allocation2 + $0x1] sm:$0xff]
      %v639 = vld [vmem:[#allocation2 + $0x9] sm:$0xff]
      %v640 = vld [vmem:[#allocation2 + $0x19] sm:$0xff]
      %v641 = vld [vmem:[#allocation2 + $0x21] sm:$0xff]
      %v642 = vld [vmem:[#allocation2 + $0x31] sm:$0xff]
      %v643 = vld [vmem:[#allocation2 + $0x39] sm:$0xff]
      %v644 = vld [vmem:[#allocation2 + $0x49] sm:$0xff]
      %v645 = vld [vmem:[#allocation2 + $0x51] sm:$0xff]
      %v646 = vld [vmem:[#allocation2 + $0x61] sm:$0xff]
      %v647 = vld [vmem:[#allocation2 + $0x69] sm:$0xff]
      %v648 = vld [vmem:[#allocation2 + $0x79] sm:$0xff]
      %v649 = vld [vmem:[#allocation2 + $0x81] sm:$0xff]
      %v650 = vld [vmem:[#allocation2 + $0x91] sm:$0xff]
      %v651 = vld [vmem:[#allocation2 + $0x99] sm:$0xff]
      %v652 = vld [vmem:[#allocation2 + $0xa9] sm:$0xff]
      %v653 = vld [vmem:[#allocation2 + $0xb1] sm:$0xff]
      %v654 = vld [vmem:[#allocation2 + $0xc1] sm:$0xff]
      %v655 = vld [vmem:[#allocation2 + $0xc9] sm:$0xff]
      %v656 = vld [vmem:[#allocation2 + $0xd9] sm:$0xff]
      %v657 = vld [vmem:[#allocation2 + $0xe1] sm:$0xff]
      %v658 = vld [vmem:[#allocation2 + $0xf1] sm:$0xff]
      %v659 = vld [vmem:[#allocation2 + $0xf9] sm:$0xff]
      %v660 = vld [vmem:[#allocation2 + $0x109] sm:$0xff]
      %v661 = vld [vmem:[#allocation2 + $0x111] sm:$0xff]
      %v662 = vld [vmem:[#allocation2 + $0x121] sm:$0xff]
      %v663 = vld [vmem:[#allocation2 + $0x129] sm:$0xff]
      %v664 = vld [vmem:[#allocation2 + $0x139] sm:$0xff]
      %v665 = vld [vmem:[#allocation2 + $0x141] sm:$0xff]
      %v666 = vld [vmem:[#allocation2 + $0x151] sm:$0xff]
      %v667 = vld [vmem:[#allocation2 + $0x159] sm:$0xff]
      %v668 = vld [vmem:[#allocation2 + $0x169] sm:$0xff]
      %v669 = vld [vmem:[#allocation2 + $0x171] sm:$0xff]
      %v670 = vpack.c.bf16 %v639, %v638
      %v671 = vpack.c.bf16 %v641, %v640
      %v672 = vpack.c.bf16 %v643, %v642
      %v673 = vpack.c.bf16 %v645, %v644
      %v674 = vpack.c.bf16 %v647, %v646
      %v675 = vpack.c.bf16 %v649, %v648
      %v676 = vpack.c.bf16 %v651, %v650
      %v677 = vpack.c.bf16 %v653, %v652
      %v678 = vpack.c.bf16 %v655, %v654
      %v679 = vpack.c.bf16 %v657, %v656
      %v680 = vpack.c.bf16 %v659, %v658
      %v681 = vpack.c.bf16 %v661, %v660
      %v682 = vpack.c.bf16 %v663, %v662
      %v683 = vpack.c.bf16 %v665, %v664
      %v684 = vpack.c.bf16 %v667, %v666
      %v685 = vpack.c.bf16 %v669, %v668
      %v686 = vld [vmem:[%s5] sm:$0xc]
      %v688 = vunpack.c.l.b16 %v686
      %v689 = vpack.c.b16 %v688, %v688
      %v690 = vrot.slane %v689, 2
      %v692 = vsel %vm324, %v670, 0
      %v695 = vsel %vm324, %v671, 0
      %v698 = vsel %vm324, %v672, 0
      %v701 = vsel %vm324, %v673, 0
      %v704 = vsel %vm324, %v674, 0
      %v707 = vsel %vm324, %v675, 0
      %v710 = vsel %vm324, %v676, 0
      %v713 = vsel %vm324, %v677, 0
      %v716 = vsel %vm324, %v678, 0
      %v719 = vsel %vm324, %v679, 0
      %v722 = vsel %vm324, %v680, 0
      %v725 = vsel %vm324, %v681, 0
      %v728 = vsel %vm324, %v682, 0
      %v731 = vsel %vm324, %v683, 0
      %v734 = vsel %vm324, %v684, 0
      %v737 = vsel %vm324, %v685, 0
      %vm739 = vcmask 1041408
      %v741 = vsel %vm739, %v690, 0
      %743 = vmatprep.subr.bf16.mxu0 0
      %744 = vmatpush1.bf16.msra.mxu0 %v741
      %745 = vmatprep.subr.bf16.mxu0 0
      %746 = vmatpush1.bf16.msra.mxu0 0
      %747 = vmatprep.subr.bf16.mxu0 0
      %748 = vmatpush1.bf16.msra.mxu0 0
      %749 = vmatprep.subr.bf16.mxu0 0
      %750 = vmatpush1.bf16.msra.mxu0 0
      %751 = vmatprep.subr.bf16.mxu0 0
      %752 = vmatpush1.bf16.msra.mxu0 0
      %753 = vmatprep.subr.bf16.mxu0 0
      %754 = vmatpush1.bf16.msra.mxu0 0
      %755 = vmatprep.subr.bf16.mxu0 0
      %756 = vmatpush1.bf16.msra.mxu0 0
      %757 = vmatprep.subr.bf16.mxu0 0
      %758 = vmatpush1.bf16.msra.mxu0 0
      %759 = vmatprep.subr.bf16.mxu0 0
      %760 = vmatpush1.bf16.msra.mxu0 0
      %761 = vmatprep.subr.bf16.mxu0 0
      %762 = vmatpush1.bf16.msra.mxu0 0
      %763 = vmatprep.subr.bf16.mxu0 0
      %764 = vmatpush1.bf16.msra.mxu0 0
      %765 = vmatprep.subr.bf16.mxu0 0
      %766 = vmatpush1.bf16.msra.mxu0 0
      %767 = vmatprep.subr.bf16.mxu0 0
      %768 = vmatpush1.bf16.msra.mxu0 0
      %769 = vmatprep.subr.bf16.mxu0 0
      %770 = vmatpush1.bf16.msra.mxu0 0
      %771 = vmatprep.subr.bf16.mxu0 0
      %772 = vmatpush1.bf16.msra.mxu0 0
      %773 = vmatprep.subr.bf16.mxu0 0
      %774 = vmatpush1.bf16.msra.mxu0 0
      %775 = vmatprep.mubr.bf16.mxu0 0
      %776 = vmatmul.mubr.bf16.gmra.mrb[0].mxu0 %v692
      %v777 = vpop.f32.mrb[0].mxu0
      %v778 = vadd.f32 0.0, %v777
      %v779 = vpop.f32.mrb[0].mxu0
      %v780 = vpop.f32.mrb[0].mxu0
      %v781 = vadd.f32 0.0, %v780
      %v782 = vpop.f32.mrb[0].mxu0
      %783 = vmatprep.mubr.bf16.mxu0 0
      %784 = vmatmul.mubr.bf16.gmra.mrb[0].mxu0 %v695
      %v785 = vpop.f32.mrb[0].mxu0
      %v786 = vadd.f32 0.0, %v785
      %v787 = vpop.f32.mrb[0].mxu0
      %v788 = vpop.f32.mrb[0].mxu0
      %v789 = vadd.f32 0.0, %v788
      %v790 = vpop.f32.mrb[0].mxu0
      %791 = vmatprep.mubr.bf16.mxu0 0
      %792 = vmatmul.mubr.bf16.gmra.mrb[0].mxu0 %v698
      %v793 = vpop.f32.mrb[0].mxu0
      %v794 = vadd.f32 0.0, %v793
      %v795 = vpop.f32.mrb[0].mxu0
      %v796 = vpop.f32.mrb[0].mxu0
      %v797 = vadd.f32 0.0, %v796
      %v798 = vpop.f32.mrb[0].mxu0
      %799 = vmatprep.mubr.bf16.mxu0 0
      %800 = vmatmul.mubr.bf16.gmra.mrb[0].mxu0 %v701
      %v801 = vpop.f32.mrb[0].mxu0
      %v802 = vadd.f32 0.0, %v801
      %v803 = vpop.f32.mrb[0].mxu0
      %v804 = vpop.f32.mrb[0].mxu0
      %v805 = vadd.f32 0.0, %v804
      %v806 = vpop.f32.mrb[0].mxu0
      %807 = vmatprep.mubr.bf16.mxu0 0
      %808 = vmatmul.mubr.bf16.gmra.mrb[0].mxu0 %v704
      %v809 = vpop.f32.mrb[0].mxu0
      %v810 = vadd.f32 0.0, %v809
      %v811 = vpop.f32.mrb[0].mxu0
      %v812 = vpop.f32.mrb[0].mxu0
      %v813 = vadd.f32 0.0, %v812
      %v814 = vpop.f32.mrb[0].mxu0
      %815 = vmatprep.mubr.bf16.mxu0 0
      %816 = vmatmul.mubr.bf16.gmra.mrb[0].mxu0 %v707
      %v817 = vpop.f32.mrb[0].mxu0
      %v818 = vadd.f32 0.0, %v817
      %v819 = vpop.f32.mrb[0].mxu0
      %v820 = vpop.f32.mrb[0].mxu0
      %v821 = vadd.f32 0.0, %v820
      %v822 = vpop.f32.mrb[0].mxu0
      %823 = vmatprep.mubr.bf16.mxu0 0
      %824 = vmatmul.mubr.bf16.gmra.mrb[0].mxu0 %v710
      %v825 = vpop.f32.mrb[0].mxu0
      %v826 = vadd.f32 0.0, %v825
      %v827 = vpop.f32.mrb[0].mxu0
      %v828 = vpop.f32.mrb[0].mxu0
      %v829 = vadd.f32 0.0, %v828
      %v830 = vpop.f32.mrb[0].mxu0
      %831 = vmatprep.mubr.bf16.mxu0 0
      %832 = vmatmul.mubr.bf16.gmra.mrb[0].mxu0 %v713
      %v833 = vpop.f32.mrb[0].mxu0
      %v834 = vadd.f32 0.0, %v833
      %v835 = vpop.f32.mrb[0].mxu0
      %v836 = vpop.f32.mrb[0].mxu0
      %v837 = vadd.f32 0.0, %v836
      %v838 = vpop.f32.mrb[0].mxu0
      %839 = vmatprep.mubr.bf16.mxu0 0
      %840 = vmatmul.mubr.bf16.gmra.mrb[0].mxu0 %v716
      %v841 = vpop.f32.mrb[0].mxu0
      %v842 = vadd.f32 0.0, %v841
      %v843 = vpop.f32.mrb[0].mxu0
      %v844 = vpop.f32.mrb[0].mxu0
      %v845 = vadd.f32 0.0, %v844
      %v846 = vpop.f32.mrb[0].mxu0
      %847 = vmatprep.mubr.bf16.mxu0 0
      %848 = vmatmul.mubr.bf16.gmra.mrb[0].mxu0 %v719
      %v849 = vpop.f32.mrb[0].mxu0
      %v850 = vadd.f32 0.0, %v849
      %v851 = vpop.f32.mrb[0].mxu0
      %v852 = vpop.f32.mrb[0].mxu0
      %v853 = vadd.f32 0.0, %v852
      %v854 = vpop.f32.mrb[0].mxu0
      %855 = vmatprep.mubr.bf16.mxu0 0
      %856 = vmatmul.mubr.bf16.gmra.mrb[0].mxu0 %v722
      %v857 = vpop.f32.mrb[0].mxu0
      %v858 = vadd.f32 0.0, %v857
      %v859 = vpop.f32.mrb[0].mxu0
      %v860 = vpop.f32.mrb[0].mxu0
      %v861 = vadd.f32 0.0, %v860
      %v862 = vpop.f32.mrb[0].mxu0
      %863 = vmatprep.mubr.bf16.mxu0 0
      %864 = vmatmul.mubr.bf16.gmra.mrb[0].mxu0 %v725
      %v865 = vpop.f32.mrb[0].mxu0
      %v866 = vadd.f32 0.0, %v865
      %v867 = vpop.f32.mrb[0].mxu0
      %v868 = vpop.f32.mrb[0].mxu0
      %v869 = vadd.f32 0.0, %v868
      %v870 = vpop.f32.mrb[0].mxu0
      %871 = vmatprep.mubr.bf16.mxu0 0
      %872 = vmatmul.mubr.bf16.gmra.mrb[0].mxu0 %v728
      %v873 = vpop.f32.mrb[0].mxu0
      %v874 = vadd.f32 0.0, %v873
      %v875 = vpop.f32.mrb[0].mxu0
      %v876 = vpop.f32.mrb[0].mxu0
      %v877 = vadd.f32 0.0, %v876
      %v878 = vpop.f32.mrb[0].mxu0
      %879 = vmatprep.mubr.bf16.mxu0 0
      %880 = vmatmul.mubr.bf16.gmra.mrb[0].mxu0 %v731
      %v881 = vpop.f32.mrb[0].mxu0
      %v882 = vadd.f32 0.0, %v881
      %v883 = vpop.f32.mrb[0].mxu0
      %v884 = vpop.f32.mrb[0].mxu0
      %v885 = vadd.f32 0.0, %v884
      %v886 = vpop.f32.mrb[0].mxu0
      %887 = vmatprep.mubr.bf16.mxu0 0
      %888 = vmatmul.mubr.bf16.gmra.mrb[0].mxu0 %v734
      %v889 = vpop.f32.mrb[0].mxu0
      %v890 = vadd.f32 0.0, %v889
      %v891 = vpop.f32.mrb[0].mxu0
      %v892 = vpop.f32.mrb[0].mxu0
      %v893 = vadd.f32 0.0, %v892
      %v894 = vpop.f32.mrb[0].mxu0
      %895 = vmatprep.mubr.bf16.mxu0 0
      %896 = vmatmul.mubr.bf16.gmra.mrb[0].mxu0 %v737
      %v897 = vpop.f32.mrb[0].mxu0
      %v898 = vadd.f32 0.0, %v897
      %v899 = vpop.f32.mrb[0].mxu0
      %v900 = vpop.f32.mrb[0].mxu0
      %v901 = vadd.f32 0.0, %v900
      %v902 = vpop.f32.mrb[0].mxu0
      %903 = vdwg.mxu0
      %v905 = vsel %vm324, %v621, 0
      %v908 = vsel %vm324, %v622, 0
      %v911 = vsel %vm324, %v623, 0
      %v914 = vsel %vm324, %v624, 0
      %v917 = vsel %vm324, %v625, 0
      %v920 = vsel %vm324, %v626, 0
      %v923 = vsel %vm324, %v627, 0
      %v926 = vsel %vm324, %v628, 0
      %v929 = vsel %vm324, %v629, 0
      %v932 = vsel %vm324, %v630, 0
      %v935 = vsel %vm324, %v631, 0
      %v938 = vsel %vm324, %v632, 0
      %v941 = vsel %vm324, %v633, 0
      %v944 = vsel %vm324, %v634, 0
      %v947 = vsel %vm324, %v635, 0
      %v950 = vsel %vm324, %v636, 0
      %v953 = vsel %vm739, %v637, 0
      %955 = vmatprep.subr.bf16.mxu0 0
      %956 = vmatpush1.bf16.msra.mxu0 %v953
      %957 = vmatprep.subr.bf16.mxu0 0
      %958 = vmatpush1.bf16.msra.mxu0 0
      %959 = vmatprep.subr.bf16.mxu0 0
      %960 = vmatpush1.bf16.msra.mxu0 0
      %961 = vmatprep.subr.bf16.mxu0 0
      %962 = vmatpush1.bf16.msra.mxu0 0
      %963 = vmatprep.subr.bf16.mxu0 0
      %964 = vmatpush1.bf16.msra.mxu0 0
      %965 = vmatprep.subr.bf16.mxu0 0
      %966 = vmatpush1.bf16.msra.mxu0 0
      %967 = vmatprep.subr.bf16.mxu0 0
      %968 = vmatpush1.bf16.msra.mxu0 0
      %969 = vmatprep.subr.bf16.mxu0 0
      %970 = vmatpush1.bf16.msra.mxu0 0
      %971 = vmatprep.subr.bf16.mxu0 0
      %972 = vmatpush1.bf16.msra.mxu0 0
      %973 = vmatprep.subr.bf16.mxu0 0
      %974 = vmatpush1.bf16.msra.mxu0 0
      %975 = vmatprep.subr.bf16.mxu0 0
      %976 = vmatpush1.bf16.msra.mxu0 0
      %977 = vmatprep.subr.bf16.mxu0 0
      %978 = vmatpush1.bf16.msra.mxu0 0
      %979 = vmatprep.subr.bf16.mxu0 0
      %980 = vmatpush1.bf16.msra.mxu0 0
      %981 = vmatprep.subr.bf16.mxu0 0
      %982 = vmatpush1.bf16.msra.mxu0 0
      %983 = vmatprep.subr.bf16.mxu0 0
      %984 = vmatpush1.bf16.msra.mxu0 0
      %985 = vmatprep.subr.bf16.mxu0 0
      %986 = vmatpush1.bf16.msra.mxu0 0
      %987 = vmatprep.mubr.bf16.mxu0 0
      %988 = vmatmul.mubr.bf16.gmra.mrb[0].mxu0 %v905
      %v989 = vpop.f32.mrb[0].mxu0
      %v990 = vadd.f32 %v778, %v989
      %v991 = vpop.f32.mrb[0].mxu0
      %v992 = vpop.f32.mrb[0].mxu0
      %v993 = vadd.f32 %v781, %v992
      %v994 = vpop.f32.mrb[0].mxu0
      %995 = vmatprep.mubr.bf16.mxu0 0
      %996 = vmatmul.mubr.bf16.gmra.mrb[0].mxu0 %v908
      %v997 = vpop.f32.mrb[0].mxu0
      %v998 = vadd.f32 %v786, %v997
      %v999 = vpop.f32.mrb[0].mxu0
      %v1000 = vpop.f32.mrb[0].mxu0
      %v1001 = vadd.f32 %v789, %v1000
      %v1002 = vpop.f32.mrb[0].mxu0
      %1003 = vmatprep.mubr.bf16.mxu0 0
      %1004 = vmatmul.mubr.bf16.gmra.mrb[0].mxu0 %v911
      %v1005 = vpop.f32.mrb[0].mxu0
      %v1006 = vadd.f32 %v794, %v1005
      %v1007 = vpop.f32.mrb[0].mxu0
      %v1008 = vpop.f32.mrb[0].mxu0
      %v1009 = vadd.f32 %v797, %v1008
      %v1010 = vpop.f32.mrb[0].mxu0
      %1011 = vmatprep.mubr.bf16.mxu0 0
      %1012 = vmatmul.mubr.bf16.gmra.mrb[0].mxu0 %v914
      %v1013 = vpop.f32.mrb[0].mxu0
      %v1014 = vadd.f32 %v802, %v1013
      %v1015 = vpop.f32.mrb[0].mxu0
      %v1016 = vpop.f32.mrb[0].mxu0
      %v1017 = vadd.f32 %v805, %v1016
      %v1018 = vpop.f32.mrb[0].mxu0
      %1019 = vmatprep.mubr.bf16.mxu0 0
      %1020 = vmatmul.mubr.bf16.gmra.mrb[0].mxu0 %v917
      %v1021 = vpop.f32.mrb[0].mxu0
      %v1022 = vadd.f32 %v810, %v1021
      %v1023 = vpop.f32.mrb[0].mxu0
      %v1024 = vpop.f32.mrb[0].mxu0
      %v1025 = vadd.f32 %v813, %v1024
      %v1026 = vpop.f32.mrb[0].mxu0
      %1027 = vmatprep.mubr.bf16.mxu0 0
      %1028 = vmatmul.mubr.bf16.gmra.mrb[0].mxu0 %v920
      %v1029 = vpop.f32.mrb[0].mxu0
      %v1030 = vadd.f32 %v818, %v1029
      %v1031 = vpop.f32.mrb[0].mxu0
      %v1032 = vpop.f32.mrb[0].mxu0
      %v1033 = vadd.f32 %v821, %v1032
      %v1034 = vpop.f32.mrb[0].mxu0
      %1035 = vmatprep.mubr.bf16.mxu0 0
      %1036 = vmatmul.mubr.bf16.gmra.mrb[0].mxu0 %v923
      %v1037 = vpop.f32.mrb[0].mxu0
      %v1038 = vadd.f32 %v826, %v1037
      %v1039 = vpop.f32.mrb[0].mxu0
      %v1040 = vpop.f32.mrb[0].mxu0
      %v1041 = vadd.f32 %v829, %v1040
      %v1042 = vpop.f32.mrb[0].mxu0
      %1043 = vmatprep.mubr.bf16.mxu0 0
      %1044 = vmatmul.mubr.bf16.gmra.mrb[0].mxu0 %v926
      %v1045 = vpop.f32.mrb[0].mxu0
      %v1046 = vadd.f32 %v834, %v1045
      %v1047 = vpop.f32.mrb[0].mxu0
      %v1048 = vpop.f32.mrb[0].mxu0
      %v1049 = vadd.f32 %v837, %v1048
      %v1050 = vpop.f32.mrb[0].mxu0
      %1051 = vmatprep.mubr.bf16.mxu0 0
      %1052 = vmatmul.mubr.bf16.gmra.mrb[0].mxu0 %v929
      %v1053 = vpop.f32.mrb[0].mxu0
      %v1054 = vadd.f32 %v842, %v1053
      %v1055 = vpop.f32.mrb[0].mxu0
      %v1056 = vpop.f32.mrb[0].mxu0
      %v1057 = vadd.f32 %v845, %v1056
      %v1058 = vpop.f32.mrb[0].mxu0
      %1059 = vmatprep.mubr.bf16.mxu0 0
      %1060 = vmatmul.mubr.bf16.gmra.mrb[0].mxu0 %v932
      %v1061 = vpop.f32.mrb[0].mxu0
      %v1062 = vadd.f32 %v850, %v1061
      %v1063 = vpop.f32.mrb[0].mxu0
      %v1064 = vpop.f32.mrb[0].mxu0
      %v1065 = vadd.f32 %v853, %v1064
      %v1066 = vpop.f32.mrb[0].mxu0
      %1067 = vmatprep.mubr.bf16.mxu0 0
      %1068 = vmatmul.mubr.bf16.gmra.mrb[0].mxu0 %v935
      %v1069 = vpop.f32.mrb[0].mxu0
      %v1070 = vadd.f32 %v858, %v1069
      %v1071 = vpop.f32.mrb[0].mxu0
      %v1072 = vpop.f32.mrb[0].mxu0
      %v1073 = vadd.f32 %v861, %v1072
      %v1074 = vpop.f32.mrb[0].mxu0
      %1075 = vmatprep.mubr.bf16.mxu0 0
      %1076 = vmatmul.mubr.bf16.gmra.mrb[0].mxu0 %v938
      %v1077 = vpop.f32.mrb[0].mxu0
      %v1078 = vadd.f32 %v866, %v1077
      %v1079 = vpop.f32.mrb[0].mxu0
      %v1080 = vpop.f32.mrb[0].mxu0
      %v1081 = vadd.f32 %v869, %v1080
      %v1082 = vpop.f32.mrb[0].mxu0
      %1083 = vmatprep.mubr.bf16.mxu0 0
      %1084 = vmatmul.mubr.bf16.gmra.mrb[0].mxu0 %v941
      %v1085 = vpop.f32.mrb[0].mxu0
      %v1086 = vadd.f32 %v874, %v1085
      %v1087 = vpop.f32.mrb[0].mxu0
      %v1088 = vpop.f32.mrb[0].mxu0
      %v1089 = vadd.f32 %v877, %v1088
      %v1090 = vpop.f32.mrb[0].mxu0
      %1091 = vmatprep.mubr.bf16.mxu0 0
      %1092 = vmatmul.mubr.bf16.gmra.mrb[0].mxu0 %v944
      %v1093 = vpop.f32.mrb[0].mxu0
      %v1094 = vadd.f32 %v882, %v1093
      %v1095 = vpop.f32.mrb[0].mxu0
      %v1096 = vpop.f32.mrb[0].mxu0
      %v1097 = vadd.f32 %v885, %v1096
      %v1098 = vpop.f32.mrb[0].mxu0
      %1099 = vmatprep.mubr.bf16.mxu0 0
      %1100 = vmatmul.mubr.bf16.gmra.mrb[0].mxu0 %v947
      %v1101 = vpop.f32.mrb[0].mxu0
      %v1102 = vadd.f32 %v890, %v1101
      %v1103 = vpop.f32.mrb[0].mxu0
      %v1104 = vpop.f32.mrb[0].mxu0
      %v1105 = vadd.f32 %v893, %v1104
      %v1106 = vpop.f32.mrb[0].mxu0
      %1107 = vmatprep.mubr.bf16.mxu0 0
      %1108 = vmatmul.mubr.bf16.gmra.mrb[0].mxu0 %v950
      %v1109 = vpop.f32.mrb[0].mxu0
      %v1110 = vadd.f32 %v898, %v1109
      %v1111 = vpop.f32.mrb[0].mxu0
      %v1112 = vpop.f32.mrb[0].mxu0
      %v1113 = vadd.f32 %v901, %v1112
      %v1114 = vpop.f32.mrb[0].mxu0
      %1115 = vdwg.mxu0
      %v1116 = vld [vmem:[#allocation2 + $0x2] sm:$0xff]
      %v1117 = vld [vmem:[#allocation2 + $0xa] sm:$0xff]
      %v1118 = vld [vmem:[#allocation2 + $0x1a] sm:$0xff]
      %v1119 = vld [vmem:[#allocation2 + $0x22] sm:$0xff]
      %v1120 = vld [vmem:[#allocation2 + $0x32] sm:$0xff]
      %v1121 = vld [vmem:[#allocation2 + $0x3a] sm:$0xff]
      %v1122 = vld [vmem:[#allocation2 + $0x4a] sm:$0xff]
      %v1123 = vld [vmem:[#allocation2 + $0x52] sm:$0xff]
      %v1124 = vld [vmem:[#allocation2 + $0x62] sm:$0xff]
      %v1125 = vld [vmem:[#allocation2 + $0x6a] sm:$0xff]
      %v1126 = vld [vmem:[#allocation2 + $0x7a] sm:$0xff]
      %v1127 = vld [vmem:[#allocation2 + $0x82] sm:$0xff]
      %v1128 = vld [vmem:[#allocation2 + $0x92] sm:$0xff]
      %v1129 = vld [vmem:[#allocation2 + $0x9a] sm:$0xff]
      %v1130 = vld [vmem:[#allocation2 + $0xaa] sm:$0xff]
      %v1131 = vld [vmem:[#allocation2 + $0xb2] sm:$0xff]
      %v1132 = vld [vmem:[#allocation2 + $0xc2] sm:$0xff]
      %v1133 = vld [vmem:[#allocation2 + $0xca] sm:$0xff]
      %v1134 = vld [vmem:[#allocation2 + $0xda] sm:$0xff]
      %v1135 = vld [vmem:[#allocation2 + $0xe2] sm:$0xff]
      %v1136 = vld [vmem:[#allocation2 + $0xf2] sm:$0xff]
      %v1137 = vld [vmem:[#allocation2 + $0xfa] sm:$0xff]
      %v1138 = vld [vmem:[#allocation2 + $0x10a] sm:$0xff]
      %v1139 = vld [vmem:[#allocation2 + $0x112] sm:$0xff]
      %v1140 = vld [vmem:[#allocation2 + $0x122] sm:$0xff]
      %v1141 = vld [vmem:[#allocation2 + $0x12a] sm:$0xff]
      %v1142 = vld [vmem:[#allocation2 + $0x13a] sm:$0xff]
      %v1143 = vld [vmem:[#allocation2 + $0x142] sm:$0xff]
      %v1144 = vld [vmem:[#allocation2 + $0x152] sm:$0xff]
      %v1145 = vld [vmem:[#allocation2 + $0x15a] sm:$0xff]
      %v1146 = vld [vmem:[#allocation2 + $0x16a] sm:$0xff]
      %v1147 = vld [vmem:[#allocation2 + $0x172] sm:$0xff]
      %v1148 = vpack.c.bf16 %v1117, %v1116
      %v1149 = vpack.c.bf16 %v1119, %v1118
      %v1150 = vpack.c.bf16 %v1121, %v1120
      %v1151 = vpack.c.bf16 %v1123, %v1122
      %v1152 = vpack.c.bf16 %v1125, %v1124
      %v1153 = vpack.c.bf16 %v1127, %v1126
      %v1154 = vpack.c.bf16 %v1129, %v1128
      %v1155 = vpack.c.bf16 %v1131, %v1130
      %v1156 = vpack.c.bf16 %v1133, %v1132
      %v1157 = vpack.c.bf16 %v1135, %v1134
      %v1158 = vpack.c.bf16 %v1137, %v1136
      %v1159 = vpack.c.bf16 %v1139, %v1138
      %v1160 = vpack.c.bf16 %v1141, %v1140
      %v1161 = vpack.c.bf16 %v1143, %v1142
      %v1162 = vpack.c.bf16 %v1145, %v1144
      %v1163 = vpack.c.bf16 %v1147, %v1146
      %v1164 = vld [vmem:[%s5 + $0x4] sm:$0x3]
      %v1166 = vsel %vm324, %v1148, 0
      %v1169 = vsel %vm324, %v1149, 0
      %v1172 = vsel %vm324, %v1150, 0
      %v1175 = vsel %vm324, %v1151, 0
      %v1178 = vsel %vm324, %v1152, 0
      %v1181 = vsel %vm324, %v1153, 0
      %v1184 = vsel %vm324, %v1154, 0
      %v1187 = vsel %vm324, %v1155, 0
      %v1190 = vsel %vm324, %v1156, 0
      %v1193 = vsel %vm324, %v1157, 0
      %v1196 = vsel %vm324, %v1158, 0
      %v1199 = vsel %vm324, %v1159, 0
      %v1202 = vsel %vm324, %v1160, 0
      %v1205 = vsel %vm324, %v1161, 0
      %v1208 = vsel %vm324, %v1162, 0
      %v1211 = vsel %vm324, %v1163, 0
      %v1214 = vsel %vm739, %v1164, 0
      %1216 = vmatprep.subr.bf16.mxu0 0
      %1217 = vmatpush1.bf16.msra.mxu0 %v1214
      %1218 = vmatprep.subr.bf16.mxu0 0
      %1219 = vmatpush1.bf16.msra.mxu0 0
      %1220 = vmatprep.subr.bf16.mxu0 0
      %1221 = vmatpush1.bf16.msra.mxu0 0
      %1222 = vmatprep.subr.bf16.mxu0 0
      %1223 = vmatpush1.bf16.msra.mxu0 0
      %1224 = vmatprep.subr.bf16.mxu0 0
      %1225 = vmatpush1.bf16.msra.mxu0 0
      %1226 = vmatprep.subr.bf16.mxu0 0
      %1227 = vmatpush1.bf16.msra.mxu0 0
      %1228 = vmatprep.subr.bf16.mxu0 0
      %1229 = vmatpush1.bf16.msra.mxu0 0
      %1230 = vmatprep.subr.bf16.mxu0 0
      %1231 = vmatpush1.bf16.msra.mxu0 0
      %1232 = vmatprep.subr.bf16.mxu0 0
      %1233 = vmatpush1.bf16.msra.mxu0 0
      %1234 = vmatprep.subr.bf16.mxu0 0
      %1235 = vmatpush1.bf16.msra.mxu0 0
      %1236 = vmatprep.subr.bf16.mxu0 0
      %1237 = vmatpush1.bf16.msra.mxu0 0
      %1238 = vmatprep.subr.bf16.mxu0 0
      %1239 = vmatpush1.bf16.msra.mxu0 0
      %1240 = vmatprep.subr.bf16.mxu0 0
      %1241 = vmatpush1.bf16.msra.mxu0 0
      %1242 = vmatprep.subr.bf16.mxu0 0
      %1243 = vmatpush1.bf16.msra.mxu0 0
      %1244 = vmatprep.subr.bf16.mxu0 0
      %1245 = vmatpush1.bf16.msra.mxu0 0
      %1246 = vmatprep.subr.bf16.mxu0 0
      %1247 = vmatpush1.bf16.msra.mxu0 0
      %1248 = vmatprep.mubr.bf16.mxu0 0
      %1249 = vmatmul.mubr.bf16.gmra.mrb[0].mxu0 %v1166
      %v1250 = vpop.f32.mrb[0].mxu0
      %v1251 = vadd.f32 0.0, %v1250
      %v1252 = vpop.f32.mrb[0].mxu0
      %v1253 = vpop.f32.mrb[0].mxu0
      %v1254 = vadd.f32 0.0, %v1253
      %v1255 = vpop.f32.mrb[0].mxu0
      %1256 = vmatprep.mubr.bf16.mxu0 0
      %1257 = vmatmul.mubr.bf16.gmra.mrb[0].mxu0 %v1169
      %v1258 = vpop.f32.mrb[0].mxu0
      %v1259 = vadd.f32 0.0, %v1258
      %v1260 = vpop.f32.mrb[0].mxu0
      %v1261 = vpop.f32.mrb[0].mxu0
      %v1262 = vadd.f32 0.0, %v1261
      %v1263 = vpop.f32.mrb[0].mxu0
      %1264 = vmatprep.mubr.bf16.mxu0 0
      %1265 = vmatmul.mubr.bf16.gmra.mrb[0].mxu0 %v1172
      %v1266 = vpop.f32.mrb[0].mxu0
      %v1267 = vadd.f32 0.0, %v1266
      %v1268 = vpop.f32.mrb[0].mxu0
      %v1269 = vpop.f32.mrb[0].mxu0
      %v1270 = vadd.f32 0.0, %v1269
      %v1271 = vpop.f32.mrb[0].mxu0
      %1272 = vmatprep.mubr.bf16.mxu0 0
      %1273 = vmatmul.mubr.bf16.gmra.mrb[0].mxu0 %v1175
      %v1274 = vpop.f32.mrb[0].mxu0
      %v1275 = vadd.f32 0.0, %v1274
      %v1276 = vpop.f32.mrb[0].mxu0
      %v1277 = vpop.f32.mrb[0].mxu0
      %v1278 = vadd.f32 0.0, %v1277
      %v1279 = vpop.f32.mrb[0].mxu0
      %1280 = vmatprep.mubr.bf16.mxu0 0
      %1281 = vmatmul.mubr.bf16.gmra.mrb[0].mxu0 %v1178
      %v1282 = vpop.f32.mrb[0].mxu0
      %v1283 = vadd.f32 0.0, %v1282
      %v1284 = vpop.f32.mrb[0].mxu0
      %v1285 = vpop.f32.mrb[0].mxu0
      %v1286 = vadd.f32 0.0, %v1285
      %v1287 = vpop.f32.mrb[0].mxu0
      %1288 = vmatprep.mubr.bf16.mxu0 0
      %1289 = vmatmul.mubr.bf16.gmra.mrb[0].mxu0 %v1181
      %v1290 = vpop.f32.mrb[0].mxu0
      %v1291 = vadd.f32 0.0, %v1290
      %v1292 = vpop.f32.mrb[0].mxu0
      %v1293 = vpop.f32.mrb[0].mxu0
      %v1294 = vadd.f32 0.0, %v1293
      %v1295 = vpop.f32.mrb[0].mxu0
      %1296 = vmatprep.mubr.bf16.mxu0 0
      %1297 = vmatmul.mubr.bf16.gmra.mrb[0].mxu0 %v1184
      %v1298 = vpop.f32.mrb[0].mxu0
      %v1299 = vadd.f32 0.0, %v1298
      %v1300 = vpop.f32.mrb[0].mxu0
      %v1301 = vpop.f32.mrb[0].mxu0
      %v1302 = vadd.f32 0.0, %v1301
      %v1303 = vpop.f32.mrb[0].mxu0
      %1304 = vmatprep.mubr.bf16.mxu0 0
      %1305 = vmatmul.mubr.bf16.gmra.mrb[0].mxu0 %v1187
      %v1306 = vpop.f32.mrb[0].mxu0
      %v1307 = vadd.f32 0.0, %v1306
      %v1308 = vpop.f32.mrb[0].mxu0
      %v1309 = vpop.f32.mrb[0].mxu0
      %v1310 = vadd.f32 0.0, %v1309
      %v1311 = vpop.f32.mrb[0].mxu0
      %1312 = vmatprep.mubr.bf16.mxu0 0
      %1313 = vmatmul.mubr.bf16.gmra.mrb[0].mxu0 %v1190
      %v1314 = vpop.f32.mrb[0].mxu0
      %v1315 = vadd.f32 0.0, %v1314
      %v1316 = vpop.f32.mrb[0].mxu0
      %v1317 = vpop.f32.mrb[0].mxu0
      %v1318 = vadd.f32 0.0, %v1317
      %v1319 = vpop.f32.mrb[0].mxu0
      %1320 = vmatprep.mubr.bf16.mxu0 0
      %1321 = vmatmul.mubr.bf16.gmra.mrb[0].mxu0 %v1193
      %v1322 = vpop.f32.mrb[0].mxu0
      %v1323 = vadd.f32 0.0, %v1322
      %v1324 = vpop.f32.mrb[0].mxu0
      %v1325 = vpop.f32.mrb[0].mxu0
      %v1326 = vadd.f32 0.0, %v1325
      %v1327 = vpop.f32.mrb[0].mxu0
      %1328 = vmatprep.mubr.bf16.mxu0 0
      %1329 = vmatmul.mubr.bf16.gmra.mrb[0].mxu0 %v1196
      %v1330 = vpop.f32.mrb[0].mxu0
      %v1331 = vadd.f32 0.0, %v1330
      %v1332 = vpop.f32.mrb[0].mxu0
      %v1333 = vpop.f32.mrb[0].mxu0
      %v1334 = vadd.f32 0.0, %v1333
      %v1335 = vpop.f32.mrb[0].mxu0
      %1336 = vmatprep.mubr.bf16.mxu0 0
      %1337 = vmatmul.mubr.bf16.gmra.mrb[0].mxu0 %v1199
      %v1338 = vpop.f32.mrb[0].mxu0
      %v1339 = vadd.f32 0.0, %v1338
      %v1340 = vpop.f32.mrb[0].mxu0
      %v1341 = vpop.f32.mrb[0].mxu0
      %v1342 = vadd.f32 0.0, %v1341
      %v1343 = vpop.f32.mrb[0].mxu0
      %1344 = vmatprep.mubr.bf16.mxu0 0
      %1345 = vmatmul.mubr.bf16.gmra.mrb[0].mxu0 %v1202
      %v1346 = vpop.f32.mrb[0].mxu0
      %v1347 = vadd.f32 0.0, %v1346
      %v1348 = vpop.f32.mrb[0].mxu0
      %v1349 = vpop.f32.mrb[0].mxu0
      %v1350 = vadd.f32 0.0, %v1349
      %v1351 = vpop.f32.mrb[0].mxu0
      %1352 = vmatprep.mubr.bf16.mxu0 0
      %1353 = vmatmul.mubr.bf16.gmra.mrb[0].mxu0 %v1205
      %v1354 = vpop.f32.mrb[0].mxu0
      %v1355 = vadd.f32 0.0, %v1354
      %v1356 = vpop.f32.mrb[0].mxu0
      %v1357 = vpop.f32.mrb[0].mxu0
      %v1358 = vadd.f32 0.0, %v1357
      %v1359 = vpop.f32.mrb[0].mxu0
      %1360 = vmatprep.mubr.bf16.mxu0 0
      %1361 = vmatmul.mubr.bf16.gmra.mrb[0].mxu0 %v1208
      %v1362 = vpop.f32.mrb[0].mxu0
      %v1363 = vadd.f32 0.0, %v1362
      %v1364 = vpop.f32.mrb[0].mxu0
      %v1365 = vpop.f32.mrb[0].mxu0
      %v1366 = vadd.f32 0.0, %v1365
      %v1367 = vpop.f32.mrb[0].mxu0
      %1368 = vmatprep.mubr.bf16.mxu0 0
      %1369 = vmatmul.mubr.bf16.gmra.mrb[0].mxu0 %v1211
      %v1370 = vpop.f32.mrb[0].mxu0
      %v1371 = vadd.f32 0.0, %v1370
      %v1372 = vpop.f32.mrb[0].mxu0
      %v1373 = vpop.f32.mrb[0].mxu0
      %v1374 = vadd.f32 0.0, %v1373
      %v1375 = vpop.f32.mrb[0].mxu0
      %1376 = vdwg.mxu0
      %v1377 = vadd.f32 %v990, %v1251
      %v1378 = vadd.f32 %v993, %v1254
      %v1379 = vadd.f32 %v998, %v1259
      %v1380 = vadd.f32 %v1001, %v1262
      %v1381 = vadd.f32 %v1006, %v1267
      %v1382 = vadd.f32 %v1009, %v1270
      %v1383 = vadd.f32 %v1014, %v1275
      %v1384 = vadd.f32 %v1017, %v1278
      %v1385 = vadd.f32 %v1022, %v1283
      %v1386 = vadd.f32 %v1025, %v1286
      %v1387 = vadd.f32 %v1030, %v1291
      %v1388 = vadd.f32 %v1033, %v1294
      %v1389 = vadd.f32 %v1038, %v1299
      %v1390 = vadd.f32 %v1041, %v1302
      %v1391 = vadd.f32 %v1046, %v1307
      %v1392 = vadd.f32 %v1049, %v1310
      %v1393 = vadd.f32 %v1054, %v1315
      %v1394 = vadd.f32 %v1057, %v1318
      %v1395 = vadd.f32 %v1062, %v1323
      %v1396 = vadd.f32 %v1065, %v1326
      %v1397 = vadd.f32 %v1070, %v1331
      %v1398 = vadd.f32 %v1073, %v1334
      %v1399 = vadd.f32 %v1078, %v1339
      %v1400 = vadd.f32 %v1081, %v1342
      %v1401 = vadd.f32 %v1086, %v1347
      %v1402 = vadd.f32 %v1089, %v1350
      %v1403 = vadd.f32 %v1094, %v1355
      %v1404 = vadd.f32 %v1097, %v1358
      %v1405 = vadd.f32 %v1102, %v1363
      %v1406 = vadd.f32 %v1105, %v1366
      %v1407 = vadd.f32 %v1110, %v1371
      %v1408 = vadd.f32 %v1113, %v1374
      %v1409 = vld [vmem:[%s556] sm:$0xff]
      %v1410 = vld [vmem:[%s556 + $0x8] sm:$0xff]
      %v1411 = vld [vmem:[%s556 + $0x18] sm:$0xff]
      %v1412 = vld [vmem:[%s556 + $0x20] sm:$0xff]
      %v1413 = vld [vmem:[%s556 + $0x30] sm:$0xff]
      %v1414 = vld [vmem:[%s556 + $0x38] sm:$0xff]
      %v1415 = vld [vmem:[%s556 + $0x48] sm:$0xff]
      %v1416 = vld [vmem:[%s556 + $0x50] sm:$0xff]
      %v1417 = vld [vmem:[%s556 + $0x60] sm:$0xff]
      %v1418 = vld [vmem:[%s556 + $0x68] sm:$0xff]
      %v1419 = vld [vmem:[%s556 + $0x78] sm:$0xff]
      %v1420 = vld [vmem:[%s556 + $0x80] sm:$0xff]
      %v1421 = vld [vmem:[%s556 + $0x90] sm:$0xff]
      %v1422 = vld [vmem:[%s556 + $0x98] sm:$0xff]
      %v1423 = vld [vmem:[%s556 + $0xa8] sm:$0xff]
      %v1424 = vld [vmem:[%s556 + $0xb0] sm:$0xff]
      %v1425 = vld [vmem:[%s556 + $0xc0] sm:$0xff]
      %v1426 = vld [vmem:[%s556 + $0xc8] sm:$0xff]
      %v1427 = vld [vmem:[%s556 + $0xd8] sm:$0xff]
      %v1428 = vld [vmem:[%s556 + $0xe0] sm:$0xff]
      %v1429 = vld [vmem:[%s556 + $0xf0] sm:$0xff]
      %v1430 = vld [vmem:[%s556 + $0xf8] sm:$0xff]
      %v1431 = vld [vmem:[%s556 + $0x108] sm:$0xff]
      %v1432 = vld [vmem:[%s556 + $0x110] sm:$0xff]
      %v1433 = vld [vmem:[%s556 + $0x120] sm:$0xff]
      %v1434 = vld [vmem:[%s556 + $0x128] sm:$0xff]
      %v1435 = vld [vmem:[%s556 + $0x138] sm:$0xff]
      %v1436 = vld [vmem:[%s556 + $0x140] sm:$0xff]
      %v1437 = vld [vmem:[%s556 + $0x150] sm:$0xff]
      %v1438 = vld [vmem:[%s556 + $0x158] sm:$0xff]
      %v1439 = vld [vmem:[%s556 + $0x168] sm:$0xff]
      %v1440 = vld [vmem:[%s556 + $0x170] sm:$0xff]
      %v1441 = vpack.c.bf16 %v1410, %v1409
      %v1442 = vpack.c.bf16 %v1412, %v1411
      %v1443 = vpack.c.bf16 %v1414, %v1413
      %v1444 = vpack.c.bf16 %v1416, %v1415
      %v1445 = vpack.c.bf16 %v1418, %v1417
      %v1446 = vpack.c.bf16 %v1420, %v1419
      %v1447 = vpack.c.bf16 %v1422, %v1421
      %v1448 = vpack.c.bf16 %v1424, %v1423
      %v1449 = vpack.c.bf16 %v1426, %v1425
      %v1450 = vpack.c.bf16 %v1428, %v1427
      %v1451 = vpack.c.bf16 %v1430, %v1429
      %v1452 = vpack.c.bf16 %v1432, %v1431
      %v1453 = vpack.c.bf16 %v1434, %v1433
      %v1454 = vpack.c.bf16 %v1436, %v1435
      %v1455 = vpack.c.bf16 %v1438, %v1437
      %v1456 = vpack.c.bf16 %v1440, %v1439
      %v1457 = vld [vmem:[%s5 + $0x4] sm:$0xc]
      %v1459 = vunpack.c.l.b16 %v1457
      %v1460 = vpack.c.b16 %v1459, %v1459
      %v1461 = vrot.slane %v1460, 2
      %v1463 = vsel %vm324, %v1441, 0
      %v1466 = vsel %vm324, %v1442, 0
      %v1469 = vsel %vm324, %v1443, 0
      %v1472 = vsel %vm324, %v1444, 0
      %v1475 = vsel %vm324, %v1445, 0
      %v1478 = vsel %vm324, %v1446, 0
      %v1481 = vsel %vm324, %v1447, 0
      %v1484 = vsel %vm324, %v1448, 0
      %v1487 = vsel %vm324, %v1449, 0
      %v1490 = vsel %vm324, %v1450, 0
      %v1493 = vsel %vm324, %v1451, 0
      %v1496 = vsel %vm324, %v1452, 0
      %v1499 = vsel %vm324, %v1453, 0
      %v1502 = vsel %vm324, %v1454, 0
      %v1505 = vsel %vm324, %v1455, 0
      %v1508 = vsel %vm324, %v1456, 0
      %v1511 = vsel %vm739, %v1461, 0
      %1513 = vmatprep.subr.bf16.mxu0 0
      %1514 = vmatpush1.bf16.msra.mxu0 %v1511
      %1515 = vmatprep.subr.bf16.mxu0 0
      %1516 = vmatpush1.bf16.msra.mxu0 0
      %1517 = vmatprep.subr.bf16.mxu0 0
      %1518 = vmatpush1.bf16.msra.mxu0 0
      %1519 = vmatprep.subr.bf16.mxu0 0
      %1520 = vmatpush1.bf16.msra.mxu0 0
      %1521 = vmatprep.subr.bf16.mxu0 0
      %1522 = vmatpush1.bf16.msra.mxu0 0
      %1523 = vmatprep.subr.bf16.mxu0 0
      %1524 = vmatpush1.bf16.msra.mxu0 0
      %1525 = vmatprep.subr.bf16.mxu0 0
      %1526 = vmatpush1.bf16.msra.mxu0 0
      %1527 = vmatprep.subr.bf16.mxu0 0
      %1528 = vmatpush1.bf16.msra.mxu0 0
      %1529 = vmatprep.subr.bf16.mxu0 0
      %1530 = vmatpush1.bf16.msra.mxu0 0
      %1531 = vmatprep.subr.bf16.mxu0 0
      %1532 = vmatpush1.bf16.msra.mxu0 0
      %1533 = vmatprep.subr.bf16.mxu0 0
      %1534 = vmatpush1.bf16.msra.mxu0 0
      %1535 = vmatprep.subr.bf16.mxu0 0
      %1536 = vmatpush1.bf16.msra.mxu0 0
      %1537 = vmatprep.subr.bf16.mxu0 0
      %1538 = vmatpush1.bf16.msra.mxu0 0
      %1539 = vmatprep.subr.bf16.mxu0 0
      %1540 = vmatpush1.bf16.msra.mxu0 0
      %1541 = vmatprep.subr.bf16.mxu0 0
      %1542 = vmatpush1.bf16.msra.mxu0 0
      %1543 = vmatprep.subr.bf16.mxu0 0
      %1544 = vmatpush1.bf16.msra.mxu0 0
      %1545 = vmatprep.mubr.bf16.mxu0 0
      %1546 = vmatmul.mubr.bf16.gmra.mrb[0].mxu0 %v1463
      %v1547 = vpop.f32.mrb[0].mxu0
      %v1548 = vadd.f32 0.0, %v1547
      %v1549 = vpop.f32.mrb[0].mxu0
      %v1550 = vpop.f32.mrb[0].mxu0
      %v1551 = vadd.f32 0.0, %v1550
      %v1552 = vpop.f32.mrb[0].mxu0
      %1553 = vmatprep.mubr.bf16.mxu0 0
      %1554 = vmatmul.mubr.bf16.gmra.mrb[0].mxu0 %v1466
      %v1555 = vpop.f32.mrb[0].mxu0
      %v1556 = vadd.f32 0.0, %v1555
      %v1557 = vpop.f32.mrb[0].mxu0
      %v1558 = vpop.f32.mrb[0].mxu0
      %v1559 = vadd.f32 0.0, %v1558
      %v1560 = vpop.f32.mrb[0].mxu0
      %1561 = vmatprep.mubr.bf16.mxu0 0
      %1562 = vmatmul.mubr.bf16.gmra.mrb[0].mxu0 %v1469
      %v1563 = vpop.f32.mrb[0].mxu0
      %v1564 = vadd.f32 0.0, %v1563
      %v1565 = vpop.f32.mrb[0].mxu0
      %v1566 = vpop.f32.mrb[0].mxu0
      %v1567 = vadd.f32 0.0, %v1566
      %v1568 = vpop.f32.mrb[0].mxu0
      %1569 = vmatprep.mubr.bf16.mxu0 0
      %1570 = vmatmul.mubr.bf16.gmra.mrb[0].mxu0 %v1472
      %v1571 = vpop.f32.mrb[0].mxu0
      %v1572 = vadd.f32 0.0, %v1571
      %v1573 = vpop.f32.mrb[0].mxu0
      %v1574 = vpop.f32.mrb[0].mxu0
      %v1575 = vadd.f32 0.0, %v1574
      %v1576 = vpop.f32.mrb[0].mxu0
      %1577 = vmatprep.mubr.bf16.mxu0 0
      %1578 = vmatmul.mubr.bf16.gmra.mrb[0].mxu0 %v1475
      %v1579 = vpop.f32.mrb[0].mxu0
      %v1580 = vadd.f32 0.0, %v1579
      %v1581 = vpop.f32.mrb[0].mxu0
      %v1582 = vpop.f32.mrb[0].mxu0
      %v1583 = vadd.f32 0.0, %v1582
      %v1584 = vpop.f32.mrb[0].mxu0
      %1585 = vmatprep.mubr.bf16.mxu0 0
      %1586 = vmatmul.mubr.bf16.gmra.mrb[0].mxu0 %v1478
      %v1587 = vpop.f32.mrb[0].mxu0
      %v1588 = vadd.f32 0.0, %v1587
      %v1589 = vpop.f32.mrb[0].mxu0
      %v1590 = vpop.f32.mrb[0].mxu0
      %v1591 = vadd.f32 0.0, %v1590
      %v1592 = vpop.f32.mrb[0].mxu0
      %1593 = vmatprep.mubr.bf16.mxu0 0
      %1594 = vmatmul.mubr.bf16.gmra.mrb[0].mxu0 %v1481
      %v1595 = vpop.f32.mrb[0].mxu0
      %v1596 = vadd.f32 0.0, %v1595
      %v1597 = vpop.f32.mrb[0].mxu0
      %v1598 = vpop.f32.mrb[0].mxu0
      %v1599 = vadd.f32 0.0, %v1598
      %v1600 = vpop.f32.mrb[0].mxu0
      %1601 = vmatprep.mubr.bf16.mxu0 0
      %1602 = vmatmul.mubr.bf16.gmra.mrb[0].mxu0 %v1484
      %v1603 = vpop.f32.mrb[0].mxu0
      %v1604 = vadd.f32 0.0, %v1603
      %v1605 = vpop.f32.mrb[0].mxu0
      %v1606 = vpop.f32.mrb[0].mxu0
      %v1607 = vadd.f32 0.0, %v1606
      %v1608 = vpop.f32.mrb[0].mxu0
      %1609 = vmatprep.mubr.bf16.mxu0 0
      %1610 = vmatmul.mubr.bf16.gmra.mrb[0].mxu0 %v1487
      %v1611 = vpop.f32.mrb[0].mxu0
      %v1612 = vadd.f32 0.0, %v1611
      %v1613 = vpop.f32.mrb[0].mxu0
      %v1614 = vpop.f32.mrb[0].mxu0
      %v1615 = vadd.f32 0.0, %v1614
      %v1616 = vpop.f32.mrb[0].mxu0
      %1617 = vmatprep.mubr.bf16.mxu0 0
      %1618 = vmatmul.mubr.bf16.gmra.mrb[0].mxu0 %v1490
      %v1619 = vpop.f32.mrb[0].mxu0
      %v1620 = vadd.f32 0.0, %v1619
      %v1621 = vpop.f32.mrb[0].mxu0
      %v1622 = vpop.f32.mrb[0].mxu0
      %v1623 = vadd.f32 0.0, %v1622
      %v1624 = vpop.f32.mrb[0].mxu0
      %1625 = vmatprep.mubr.bf16.mxu0 0
      %1626 = vmatmul.mubr.bf16.gmra.mrb[0].mxu0 %v1493
      %v1627 = vpop.f32.mrb[0].mxu0
      %v1628 = vadd.f32 0.0, %v1627
      %v1629 = vpop.f32.mrb[0].mxu0
      %v1630 = vpop.f32.mrb[0].mxu0
      %v1631 = vadd.f32 0.0, %v1630
      %v1632 = vpop.f32.mrb[0].mxu0
      %1633 = vmatprep.mubr.bf16.mxu0 0
      %1634 = vmatmul.mubr.bf16.gmra.mrb[0].mxu0 %v1496
      %v1635 = vpop.f32.mrb[0].mxu0
      %v1636 = vadd.f32 0.0, %v1635
      %v1637 = vpop.f32.mrb[0].mxu0
      %v1638 = vpop.f32.mrb[0].mxu0
      %v1639 = vadd.f32 0.0, %v1638
      %v1640 = vpop.f32.mrb[0].mxu0
      %1641 = vmatprep.mubr.bf16.mxu0 0
      %1642 = vmatmul.mubr.bf16.gmra.mrb[0].mxu0 %v1499
      %v1643 = vpop.f32.mrb[0].mxu0
      %v1644 = vadd.f32 0.0, %v1643
      %v1645 = vpop.f32.mrb[0].mxu0
      %v1646 = vpop.f32.mrb[0].mxu0
      %v1647 = vadd.f32 0.0, %v1646
      %v1648 = vpop.f32.mrb[0].mxu0
      %1649 = vmatprep.mubr.bf16.mxu0 0
      %1650 = vmatmul.mubr.bf16.gmra.mrb[0].mxu0 %v1502
      %v1651 = vpop.f32.mrb[0].mxu0
      %v1652 = vadd.f32 0.0, %v1651
      %v1653 = vpop.f32.mrb[0].mxu0
      %v1654 = vpop.f32.mrb[0].mxu0
      %v1655 = vadd.f32 0.0, %v1654
      %v1656 = vpop.f32.mrb[0].mxu0
      %1657 = vmatprep.mubr.bf16.mxu0 0
      %1658 = vmatmul.mubr.bf16.gmra.mrb[0].mxu0 %v1505
      %v1659 = vpop.f32.mrb[0].mxu0
      %v1660 = vadd.f32 0.0, %v1659
      %v1661 = vpop.f32.mrb[0].mxu0
      %v1662 = vpop.f32.mrb[0].mxu0
      %v1663 = vadd.f32 0.0, %v1662
      %v1664 = vpop.f32.mrb[0].mxu0
      %1665 = vmatprep.mubr.bf16.mxu0 0
      %1666 = vmatmul.mubr.bf16.gmra.mrb[0].mxu0 %v1508
      %v1667 = vpop.f32.mrb[0].mxu0
      %v1668 = vadd.f32 0.0, %v1667
      %v1669 = vpop.f32.mrb[0].mxu0
      %v1670 = vpop.f32.mrb[0].mxu0
      %v1671 = vadd.f32 0.0, %v1670
      %v1672 = vpop.f32.mrb[0].mxu0
      %1673 = vdwg.mxu0
      %v1674 = vadd.f32 %v1377, %v1548
      %v1675 = vadd.f32 %v1378, %v1551
      %v1676 = vadd.f32 %v1379, %v1556
      %v1677 = vadd.f32 %v1380, %v1559
      %v1678 = vadd.f32 %v1381, %v1564
      %v1679 = vadd.f32 %v1382, %v1567
      %v1680 = vadd.f32 %v1383, %v1572
      %v1681 = vadd.f32 %v1384, %v1575
      %v1682 = vadd.f32 %v1385, %v1580
      %v1683 = vadd.f32 %v1386, %v1583
      %v1684 = vadd.f32 %v1387, %v1588
      %v1685 = vadd.f32 %v1388, %v1591
      %v1686 = vadd.f32 %v1389, %v1596
      %v1687 = vadd.f32 %v1390, %v1599
      %v1688 = vadd.f32 %v1391, %v1604
      %v1689 = vadd.f32 %v1392, %v1607
      %v1690 = vadd.f32 %v1393, %v1612
      %v1691 = vadd.f32 %v1394, %v1615
      %v1692 = vadd.f32 %v1395, %v1620
      %v1693 = vadd.f32 %v1396, %v1623
      %v1694 = vadd.f32 %v1397, %v1628
      %v1695 = vadd.f32 %v1398, %v1631
      %v1696 = vadd.f32 %v1399, %v1636
      %v1697 = vadd.f32 %v1400, %v1639
      %v1698 = vadd.f32 %v1401, %v1644
      %v1699 = vadd.f32 %v1402, %v1647
      %v1700 = vadd.f32 %v1403, %v1652
      %v1701 = vadd.f32 %v1404, %v1655
      %v1702 = vadd.f32 %v1405, %v1660
      %v1703 = vadd.f32 %v1406, %v1663
      %v1704 = vadd.f32 %v1407, %v1668
      %v1705 = vadd.f32 %v1408, %v1671
      %v1706 = vld [vmem:[%s556 + $0x1] sm:$0xff]
      %v1707 = vld [vmem:[%s556 + $0x9] sm:$0xff]
      %v1708 = vld [vmem:[%s556 + $0x19] sm:$0xff]
      %v1709 = vld [vmem:[%s556 + $0x21] sm:$0xff]
      %v1710 = vld [vmem:[%s556 + $0x31] sm:$0xff]
      %v1711 = vld [vmem:[%s556 + $0x39] sm:$0xff]
      %v1712 = vld [vmem:[%s556 + $0x49] sm:$0xff]
      %v1713 = vld [vmem:[%s556 + $0x51] sm:$0xff]
      %v1714 = vld [vmem:[%s556 + $0x61] sm:$0xff]
      %v1715 = vld [vmem:[%s556 + $0x69] sm:$0xff]
      %v1716 = vld [vmem:[%s556 + $0x79] sm:$0xff]
      %v1717 = vld [vmem:[%s556 + $0x81] sm:$0xff]
      %v1718 = vld [vmem:[%s556 + $0x91] sm:$0xff]
      %v1719 = vld [vmem:[%s556 + $0x99] sm:$0xff]
      %v1720 = vld [vmem:[%s556 + $0xa9] sm:$0xff]
      %v1721 = vld [vmem:[%s556 + $0xb1] sm:$0xff]
      %v1722 = vld [vmem:[%s556 + $0xc1] sm:$0xff]
      %v1723 = vld [vmem:[%s556 + $0xc9] sm:$0xff]
      %v1724 = vld [vmem:[%s556 + $0xd9] sm:$0xff]
      %v1725 = vld [vmem:[%s556 + $0xe1] sm:$0xff]
      %v1726 = vld [vmem:[%s556 + $0xf1] sm:$0xff]
      %v1727 = vld [vmem:[%s556 + $0xf9] sm:$0xff]
      %v1728 = vld [vmem:[%s556 + $0x109] sm:$0xff]
      %v1729 = vld [vmem:[%s556 + $0x111] sm:$0xff]
      %v1730 = vld [vmem:[%s556 + $0x121] sm:$0xff]
      %v1731 = vld [vmem:[%s556 + $0x129] sm:$0xff]
      %v1732 = vld [vmem:[%s556 + $0x139] sm:$0xff]
      %v1733 = vld [vmem:[%s556 + $0x141] sm:$0xff]
      %v1734 = vld [vmem:[%s556 + $0x151] sm:$0xff]
      %v1735 = vld [vmem:[%s556 + $0x159] sm:$0xff]
      %v1736 = vld [vmem:[%s556 + $0x169] sm:$0xff]
      %v1737 = vld [vmem:[%s556 + $0x171] sm:$0xff]
      %v1738 = vpack.c.bf16 %v1707, %v1706
      %v1739 = vpack.c.bf16 %v1709, %v1708
      %v1740 = vpack.c.bf16 %v1711, %v1710
      %v1741 = vpack.c.bf16 %v1713, %v1712
      %v1742 = vpack.c.bf16 %v1715, %v1714
      %v1743 = vpack.c.bf16 %v1717, %v1716
      %v1744 = vpack.c.bf16 %v1719, %v1718
      %v1745 = vpack.c.bf16 %v1721, %v1720
      %v1746 = vpack.c.bf16 %v1723, %v1722
      %v1747 = vpack.c.bf16 %v1725, %v1724
      %v1748 = vpack.c.bf16 %v1727, %v1726
      %v1749 = vpack.c.bf16 %v1729, %v1728
      %v1750 = vpack.c.bf16 %v1731, %v1730
      %v1751 = vpack.c.bf16 %v1733, %v1732
      %v1752 = vpack.c.bf16 %v1735, %v1734
      %v1753 = vpack.c.bf16 %v1737, %v1736
      %v1754 = vld [vmem:[%s5 + $0x8] sm:$0x3]
      %v1756 = vsel %vm324, %v1738, 0
      %v1759 = vsel %vm324, %v1739, 0
      %v1762 = vsel %vm324, %v1740, 0
      %v1765 = vsel %vm324, %v1741, 0
      %v1768 = vsel %vm324, %v1742, 0
      %v1771 = vsel %vm324, %v1743, 0
      %v1774 = vsel %vm324, %v1744, 0
      %v1777 = vsel %vm324, %v1745, 0
      %v1780 = vsel %vm324, %v1746, 0
      %v1783 = vsel %vm324, %v1747, 0
      %v1786 = vsel %vm324, %v1748, 0
      %v1789 = vsel %vm324, %v1749, 0
      %v1792 = vsel %vm324, %v1750, 0
      %v1795 = vsel %vm324, %v1751, 0
      %v1798 = vsel %vm324, %v1752, 0
      %v1801 = vsel %vm324, %v1753, 0
      %v1804 = vsel %vm739, %v1754, 0
      %1806 = vmatprep.subr.bf16.mxu0 0
      %1807 = vmatpush1.bf16.msra.mxu0 %v1804
      %1808 = vmatprep.subr.bf16.mxu0 0
      %1809 = vmatpush1.bf16.msra.mxu0 0
      %1810 = vmatprep.subr.bf16.mxu0 0
      %1811 = vmatpush1.bf16.msra.mxu0 0
      %1812 = vmatprep.subr.bf16.mxu0 0
      %1813 = vmatpush1.bf16.msra.mxu0 0
      %1814 = vmatprep.subr.bf16.mxu0 0
      %1815 = vmatpush1.bf16.msra.mxu0 0
      %1816 = vmatprep.subr.bf16.mxu0 0
      %1817 = vmatpush1.bf16.msra.mxu0 0
      %1818 = vmatprep.subr.bf16.mxu0 0
      %1819 = vmatpush1.bf16.msra.mxu0 0
      %1820 = vmatprep.subr.bf16.mxu0 0
      %1821 = vmatpush1.bf16.msra.mxu0 0
      %1822 = vmatprep.subr.bf16.mxu0 0
      %1823 = vmatpush1.bf16.msra.mxu0 0
      %1824 = vmatprep.subr.bf16.mxu0 0
      %1825 = vmatpush1.bf16.msra.mxu0 0
      %1826 = vmatprep.subr.bf16.mxu0 0
      %1827 = vmatpush1.bf16.msra.mxu0 0
      %1828 = vmatprep.subr.bf16.mxu0 0
      %1829 = vmatpush1.bf16.msra.mxu0 0
      %1830 = vmatprep.subr.bf16.mxu0 0
      %1831 = vmatpush1.bf16.msra.mxu0 0
      %1832 = vmatprep.subr.bf16.mxu0 0
      %1833 = vmatpush1.bf16.msra.mxu0 0
      %1834 = vmatprep.subr.bf16.mxu0 0
      %1835 = vmatpush1.bf16.msra.mxu0 0
      %1836 = vmatprep.subr.bf16.mxu0 0
      %1837 = vmatpush1.bf16.msra.mxu0 0
      %1838 = vmatprep.mubr.bf16.mxu0 0
      %1839 = vmatmul.mubr.bf16.gmra.mrb[0].mxu0 %v1756
      %v1840 = vpop.f32.mrb[0].mxu0
      %v1841 = vadd.f32 0.0, %v1840
      %v1842 = vpop.f32.mrb[0].mxu0
      %v1843 = vpop.f32.mrb[0].mxu0
      %v1844 = vadd.f32 0.0, %v1843
      %v1845 = vpop.f32.mrb[0].mxu0
      %1846 = vmatprep.mubr.bf16.mxu0 0
      %1847 = vmatmul.mubr.bf16.gmra.mrb[0].mxu0 %v1759
      %v1848 = vpop.f32.mrb[0].mxu0
      %v1849 = vadd.f32 0.0, %v1848
      %v1850 = vpop.f32.mrb[0].mxu0
      %v1851 = vpop.f32.mrb[0].mxu0
      %v1852 = vadd.f32 0.0, %v1851
      %v1853 = vpop.f32.mrb[0].mxu0
      %1854 = vmatprep.mubr.bf16.mxu0 0
      %1855 = vmatmul.mubr.bf16.gmra.mrb[0].mxu0 %v1762
      %v1856 = vpop.f32.mrb[0].mxu0
      %v1857 = vadd.f32 0.0, %v1856
      %v1858 = vpop.f32.mrb[0].mxu0
      %v1859 = vpop.f32.mrb[0].mxu0
      %v1860 = vadd.f32 0.0, %v1859
      %v1861 = vpop.f32.mrb[0].mxu0
      %1862 = vmatprep.mubr.bf16.mxu0 0
      %1863 = vmatmul.mubr.bf16.gmra.mrb[0].mxu0 %v1765
      %v1864 = vpop.f32.mrb[0].mxu0
      %v1865 = vadd.f32 0.0, %v1864
      %v1866 = vpop.f32.mrb[0].mxu0
      %v1867 = vpop.f32.mrb[0].mxu0
      %v1868 = vadd.f32 0.0, %v1867
      %v1869 = vpop.f32.mrb[0].mxu0
      %1870 = vmatprep.mubr.bf16.mxu0 0
      %1871 = vmatmul.mubr.bf16.gmra.mrb[0].mxu0 %v1768
      %v1872 = vpop.f32.mrb[0].mxu0
      %v1873 = vadd.f32 0.0, %v1872
      %v1874 = vpop.f32.mrb[0].mxu0
      %v1875 = vpop.f32.mrb[0].mxu0
      %v1876 = vadd.f32 0.0, %v1875
      %v1877 = vpop.f32.mrb[0].mxu0
      %1878 = vmatprep.mubr.bf16.mxu0 0
      %1879 = vmatmul.mubr.bf16.gmra.mrb[0].mxu0 %v1771
      %v1880 = vpop.f32.mrb[0].mxu0
      %v1881 = vadd.f32 0.0, %v1880
      %v1882 = vpop.f32.mrb[0].mxu0
      %v1883 = vpop.f32.mrb[0].mxu0
      %v1884 = vadd.f32 0.0, %v1883
      %v1885 = vpop.f32.mrb[0].mxu0
      %1886 = vmatprep.mubr.bf16.mxu0 0
      %1887 = vmatmul.mubr.bf16.gmra.mrb[0].mxu0 %v1774
      %v1888 = vpop.f32.mrb[0].mxu0
      %v1889 = vadd.f32 0.0, %v1888
      %v1890 = vpop.f32.mrb[0].mxu0
      %v1891 = vpop.f32.mrb[0].mxu0
      %v1892 = vadd.f32 0.0, %v1891
      %v1893 = vpop.f32.mrb[0].mxu0
      %1894 = vmatprep.mubr.bf16.mxu0 0
      %1895 = vmatmul.mubr.bf16.gmra.mrb[0].mxu0 %v1777
      %v1896 = vpop.f32.mrb[0].mxu0
      %v1897 = vadd.f32 0.0, %v1896
      %v1898 = vpop.f32.mrb[0].mxu0
      %v1899 = vpop.f32.mrb[0].mxu0
      %v1900 = vadd.f32 0.0, %v1899
      %v1901 = vpop.f32.mrb[0].mxu0
      %1902 = vmatprep.mubr.bf16.mxu0 0
      %1903 = vmatmul.mubr.bf16.gmra.mrb[0].mxu0 %v1780
      %v1904 = vpop.f32.mrb[0].mxu0
      %v1905 = vadd.f32 0.0, %v1904
      %v1906 = vpop.f32.mrb[0].mxu0
      %v1907 = vpop.f32.mrb[0].mxu0
      %v1908 = vadd.f32 0.0, %v1907
      %v1909 = vpop.f32.mrb[0].mxu0
      %1910 = vmatprep.mubr.bf16.mxu0 0
      %1911 = vmatmul.mubr.bf16.gmra.mrb[0].mxu0 %v1783
      %v1912 = vpop.f32.mrb[0].mxu0
      %v1913 = vadd.f32 0.0, %v1912
      %v1914 = vpop.f32.mrb[0].mxu0
      %v1915 = vpop.f32.mrb[0].mxu0
      %v1916 = vadd.f32 0.0, %v1915
      %v1917 = vpop.f32.mrb[0].mxu0
      %1918 = vmatprep.mubr.bf16.mxu0 0
      %1919 = vmatmul.mubr.bf16.gmra.mrb[0].mxu0 %v1786
      %v1920 = vpop.f32.mrb[0].mxu0
      %v1921 = vadd.f32 0.0, %v1920
      %v1922 = vpop.f32.mrb[0].mxu0
      %v1923 = vpop.f32.mrb[0].mxu0
      %v1924 = vadd.f32 0.0, %v1923
      %v1925 = vpop.f32.mrb[0].mxu0
      %1926 = vmatprep.mubr.bf16.mxu0 0
      %1927 = vmatmul.mubr.bf16.gmra.mrb[0].mxu0 %v1789
      %v1928 = vpop.f32.mrb[0].mxu0
      %v1929 = vadd.f32 0.0, %v1928
      %v1930 = vpop.f32.mrb[0].mxu0
      %v1931 = vpop.f32.mrb[0].mxu0
      %v1932 = vadd.f32 0.0, %v1931
      %v1933 = vpop.f32.mrb[0].mxu0
      %1934 = vmatprep.mubr.bf16.mxu0 0
      %1935 = vmatmul.mubr.bf16.gmra.mrb[0].mxu0 %v1792
      %v1936 = vpop.f32.mrb[0].mxu0
      %v1937 = vadd.f32 0.0, %v1936
      %v1938 = vpop.f32.mrb[0].mxu0
      %v1939 = vpop.f32.mrb[0].mxu0
      %v1940 = vadd.f32 0.0, %v1939
      %v1941 = vpop.f32.mrb[0].mxu0
      %1942 = vmatprep.mubr.bf16.mxu0 0
      %1943 = vmatmul.mubr.bf16.gmra.mrb[0].mxu0 %v1795
      %v1944 = vpop.f32.mrb[0].mxu0
      %v1945 = vadd.f32 0.0, %v1944
      %v1946 = vpop.f32.mrb[0].mxu0
      %v1947 = vpop.f32.mrb[0].mxu0
      %v1948 = vadd.f32 0.0, %v1947
      %v1949 = vpop.f32.mrb[0].mxu0
      %1950 = vmatprep.mubr.bf16.mxu0 0
      %1951 = vmatmul.mubr.bf16.gmra.mrb[0].mxu0 %v1798
      %v1952 = vpop.f32.mrb[0].mxu0
      %v1953 = vadd.f32 0.0, %v1952
      %v1954 = vpop.f32.mrb[0].mxu0
      %v1955 = vpop.f32.mrb[0].mxu0
      %v1956 = vadd.f32 0.0, %v1955
      %v1957 = vpop.f32.mrb[0].mxu0
      %1958 = vmatprep.mubr.bf16.mxu0 0
      %1959 = vmatmul.mubr.bf16.gmra.mrb[0].mxu0 %v1801
      %v1960 = vpop.f32.mrb[0].mxu0
      %v1961 = vadd.f32 0.0, %v1960
      %v1962 = vpop.f32.mrb[0].mxu0
      %v1963 = vpop.f32.mrb[0].mxu0
      %v1964 = vadd.f32 0.0, %v1963
      %v1965 = vpop.f32.mrb[0].mxu0
      %1966 = vdwg.mxu0
      %v1967 = vadd.f32 %v1674, %v1841
      %v1968 = vadd.f32 %v1675, %v1844
      %v1969 = vadd.f32 %v1676, %v1849
      %v1970 = vadd.f32 %v1677, %v1852
      %v1971 = vadd.f32 %v1678, %v1857
      %v1972 = vadd.f32 %v1679, %v1860
      %v1973 = vadd.f32 %v1680, %v1865
      %v1974 = vadd.f32 %v1681, %v1868
      %v1975 = vadd.f32 %v1682, %v1873
      %v1976 = vadd.f32 %v1683, %v1876
      %v1977 = vadd.f32 %v1684, %v1881
      %v1978 = vadd.f32 %v1685, %v1884
      %v1979 = vadd.f32 %v1686, %v1889
      %v1980 = vadd.f32 %v1687, %v1892
      %v1981 = vadd.f32 %v1688, %v1897
      %v1982 = vadd.f32 %v1689, %v1900
      %v1983 = vadd.f32 %v1690, %v1905
      %v1984 = vadd.f32 %v1691, %v1908
      %v1985 = vadd.f32 %v1692, %v1913
      %v1986 = vadd.f32 %v1693, %v1916
      %v1987 = vadd.f32 %v1694, %v1921
      %v1988 = vadd.f32 %v1695, %v1924
      %v1989 = vadd.f32 %v1696, %v1929
      %v1990 = vadd.f32 %v1697, %v1932
      %v1991 = vadd.f32 %v1698, %v1937
      %v1992 = vadd.f32 %v1699, %v1940
      %v1993 = vadd.f32 %v1700, %v1945
      %v1994 = vadd.f32 %v1701, %v1948
      %v1995 = vadd.f32 %v1702, %v1953
      %v1996 = vadd.f32 %v1703, %v1956
      %v1997 = vadd.f32 %v1704, %v1961
      %v1998 = vadd.f32 %v1705, %v1964
      %v1999 = vld [vmem:[%s556 + $0x2] sm:$0xff]
      %v2000 = vld [vmem:[%s556 + $0xa] sm:$0xff]
      %v2001 = vld [vmem:[%s556 + $0x1a] sm:$0xff]
      %v2002 = vld [vmem:[%s556 + $0x22] sm:$0xff]
      %v2003 = vld [vmem:[%s556 + $0x32] sm:$0xff]
      %v2004 = vld [vmem:[%s556 + $0x3a] sm:$0xff]
      %v2005 = vld [vmem:[%s556 + $0x4a] sm:$0xff]
      %v2006 = vld [vmem:[%s556 + $0x52] sm:$0xff]
      %v2007 = vld [vmem:[%s556 + $0x62] sm:$0xff]
      %v2008 = vld [vmem:[%s556 + $0x6a] sm:$0xff]
      %v2009 = vld [vmem:[%s556 + $0x7a] sm:$0xff]
      %v2010 = vld [vmem:[%s556 + $0x82] sm:$0xff]
      %v2011 = vld [vmem:[%s556 + $0x92] sm:$0xff]
      %v2012 = vld [vmem:[%s556 + $0x9a] sm:$0xff]
      %v2013 = vld [vmem:[%s556 + $0xaa] sm:$0xff]
      %v2014 = vld [vmem:[%s556 + $0xb2] sm:$0xff]
      %v2015 = vld [vmem:[%s556 + $0xc2] sm:$0xff]
      %v2016 = vld [vmem:[%s556 + $0xca] sm:$0xff]
      %v2017 = vld [vmem:[%s556 + $0xda] sm:$0xff]
      %v2018 = vld [vmem:[%s556 + $0xe2] sm:$0xff]
      %v2019 = vld [vmem:[%s556 + $0xf2] sm:$0xff]
      %v2020 = vld [vmem:[%s556 + $0xfa] sm:$0xff]
      %v2021 = vld [vmem:[%s556 + $0x10a] sm:$0xff]
      %v2022 = vld [vmem:[%s556 + $0x112] sm:$0xff]
      %v2023 = vld [vmem:[%s556 + $0x122] sm:$0xff]
      %v2024 = vld [vmem:[%s556 + $0x12a] sm:$0xff]
      %v2025 = vld [vmem:[%s556 + $0x13a] sm:$0xff]
      %v2026 = vld [vmem:[%s556 + $0x142] sm:$0xff]
      %v2027 = vld [vmem:[%s556 + $0x152] sm:$0xff]
      %v2028 = vld [vmem:[%s556 + $0x15a] sm:$0xff]
      %v2029 = vld [vmem:[%s556 + $0x16a] sm:$0xff]
      %v2030 = vld [vmem:[%s556 + $0x172] sm:$0xff]
      %v2031 = vpack.c.bf16 %v2000, %v1999
      %v2032 = vpack.c.bf16 %v2002, %v2001
      %v2033 = vpack.c.bf16 %v2004, %v2003
      %v2034 = vpack.c.bf16 %v2006, %v2005
      %v2035 = vpack.c.bf16 %v2008, %v2007
      %v2036 = vpack.c.bf16 %v2010, %v2009
      %v2037 = vpack.c.bf16 %v2012, %v2011
      %v2038 = vpack.c.bf16 %v2014, %v2013
      %v2039 = vpack.c.bf16 %v2016, %v2015
      %v2040 = vpack.c.bf16 %v2018, %v2017
      %v2041 = vpack.c.bf16 %v2020, %v2019
      %v2042 = vpack.c.bf16 %v2022, %v2021
      %v2043 = vpack.c.bf16 %v2024, %v2023
      %v2044 = vpack.c.bf16 %v2026, %v2025
      %v2045 = vpack.c.bf16 %v2028, %v2027
      %v2046 = vpack.c.bf16 %v2030, %v2029
      %v2047 = vld [vmem:[%s5 + $0x8] sm:$0xc]
      %v2049 = vunpack.c.l.b16 %v2047
      %v2050 = vpack.c.b16 %v2049, %v2049
      %v2051 = vrot.slane %v2050, 2
      %v2053 = vsel %vm324, %v2031, 0
      %v2056 = vsel %vm324, %v2032, 0
      %v2059 = vsel %vm324, %v2033, 0
      %v2062 = vsel %vm324, %v2034, 0
      %v2065 = vsel %vm324, %v2035, 0
      %v2068 = vsel %vm324, %v2036, 0
      %v2071 = vsel %vm324, %v2037, 0
      %v2074 = vsel %vm324, %v2038, 0
      %v2077 = vsel %vm324, %v2039, 0
      %v2080 = vsel %vm324, %v2040, 0
      %v2083 = vsel %vm324, %v2041, 0
      %v2086 = vsel %vm324, %v2042, 0
      %v2089 = vsel %vm324, %v2043, 0
      %v2092 = vsel %vm324, %v2044, 0
      %v2095 = vsel %vm324, %v2045, 0
      %v2098 = vsel %vm324, %v2046, 0
      %v2101 = vsel %vm739, %v2051, 0
      %2103 = vmatprep.subr.bf16.mxu0 0
      %2104 = vmatpush1.bf16.msra.mxu0 %v2101
      %2105 = vmatprep.subr.bf16.mxu0 0
      %2106 = vmatpush1.bf16.msra.mxu0 0
      %2107 = vmatprep.subr.bf16.mxu0 0
      %2108 = vmatpush1.bf16.msra.mxu0 0
      %2109 = vmatprep.subr.bf16.mxu0 0
      %2110 = vmatpush1.bf16.msra.mxu0 0
      %2111 = vmatprep.subr.bf16.mxu0 0
      %2112 = vmatpush1.bf16.msra.mxu0 0
      %2113 = vmatprep.subr.bf16.mxu0 0
      %2114 = vmatpush1.bf16.msra.mxu0 0
      %2115 = vmatprep.subr.bf16.mxu0 0
      %2116 = vmatpush1.bf16.msra.mxu0 0
      %2117 = vmatprep.subr.bf16.mxu0 0
      %2118 = vmatpush1.bf16.msra.mxu0 0
      %2119 = vmatprep.subr.bf16.mxu0 0
      %2120 = vmatpush1.bf16.msra.mxu0 0
      %2121 = vmatprep.subr.bf16.mxu0 0
      %2122 = vmatpush1.bf16.msra.mxu0 0
      %2123 = vmatprep.subr.bf16.mxu0 0
      %2124 = vmatpush1.bf16.msra.mxu0 0
      %2125 = vmatprep.subr.bf16.mxu0 0
      %2126 = vmatpush1.bf16.msra.mxu0 0
      %2127 = vmatprep.subr.bf16.mxu0 0
      %2128 = vmatpush1.bf16.msra.mxu0 0
      %2129 = vmatprep.subr.bf16.mxu0 0
      %2130 = vmatpush1.bf16.msra.mxu0 0
      %2131 = vmatprep.subr.bf16.mxu0 0
      %2132 = vmatpush1.bf16.msra.mxu0 0
      %2133 = vmatprep.subr.bf16.mxu0 0
      %2134 = vmatpush1.bf16.msra.mxu0 0
      %2135 = vmatprep.mubr.bf16.mxu0 0
      %2136 = vmatmul.mubr.bf16.gmra.mrb[0].mxu0 %v2053
      %v2137 = vpop.f32.mrb[0].mxu0
      %v2138 = vadd.f32 0.0, %v2137
      %v2139 = vpop.f32.mrb[0].mxu0
      %v2140 = vpop.f32.mrb[0].mxu0
      %v2141 = vadd.f32 0.0, %v2140
      %v2142 = vpop.f32.mrb[0].mxu0
      %2143 = vmatprep.mubr.bf16.mxu0 0
      %2144 = vmatmul.mubr.bf16.gmra.mrb[0].mxu0 %v2056
      %v2145 = vpop.f32.mrb[0].mxu0
      %v2146 = vadd.f32 0.0, %v2145
      %v2147 = vpop.f32.mrb[0].mxu0
      %v2148 = vpop.f32.mrb[0].mxu0
      %v2149 = vadd.f32 0.0, %v2148
      %v2150 = vpop.f32.mrb[0].mxu0
      %2151 = vmatprep.mubr.bf16.mxu0 0
      %2152 = vmatmul.mubr.bf16.gmra.mrb[0].mxu0 %v2059
      %v2153 = vpop.f32.mrb[0].mxu0
      %v2154 = vadd.f32 0.0, %v2153
      %v2155 = vpop.f32.mrb[0].mxu0
      %v2156 = vpop.f32.mrb[0].mxu0
      %v2157 = vadd.f32 0.0, %v2156
      %v2158 = vpop.f32.mrb[0].mxu0
      %2159 = vmatprep.mubr.bf16.mxu0 0
      %2160 = vmatmul.mubr.bf16.gmra.mrb[0].mxu0 %v2062
      %v2161 = vpop.f32.mrb[0].mxu0
      %v2162 = vadd.f32 0.0, %v2161
      %v2163 = vpop.f32.mrb[0].mxu0
      %v2164 = vpop.f32.mrb[0].mxu0
      %v2165 = vadd.f32 0.0, %v2164
      %v2166 = vpop.f32.mrb[0].mxu0
      %2167 = vmatprep.mubr.bf16.mxu0 0
      %2168 = vmatmul.mubr.bf16.gmra.mrb[0].mxu0 %v2065
      %v2169 = vpop.f32.mrb[0].mxu0
      %v2170 = vadd.f32 0.0, %v2169
      %v2171 = vpop.f32.mrb[0].mxu0
      %v2172 = vpop.f32.mrb[0].mxu0
      %v2173 = vadd.f32 0.0, %v2172
      %v2174 = vpop.f32.mrb[0].mxu0
      %2175 = vmatprep.mubr.bf16.mxu0 0
      %2176 = vmatmul.mubr.bf16.gmra.mrb[0].mxu0 %v2068
      %v2177 = vpop.f32.mrb[0].mxu0
      %v2178 = vadd.f32 0.0, %v2177
      %v2179 = vpop.f32.mrb[0].mxu0
      %v2180 = vpop.f32.mrb[0].mxu0
      %v2181 = vadd.f32 0.0, %v2180
      %v2182 = vpop.f32.mrb[0].mxu0
      %2183 = vmatprep.mubr.bf16.mxu0 0
      %2184 = vmatmul.mubr.bf16.gmra.mrb[0].mxu0 %v2071
      %v2185 = vpop.f32.mrb[0].mxu0
      %v2186 = vadd.f32 0.0, %v2185
      %v2187 = vpop.f32.mrb[0].mxu0
      %v2188 = vpop.f32.mrb[0].mxu0
      %v2189 = vadd.f32 0.0, %v2188
      %v2190 = vpop.f32.mrb[0].mxu0
      %2191 = vmatprep.mubr.bf16.mxu0 0
      %2192 = vmatmul.mubr.bf16.gmra.mrb[0].mxu0 %v2074
      %v2193 = vpop.f32.mrb[0].mxu0
      %v2194 = vadd.f32 0.0, %v2193
      %v2195 = vpop.f32.mrb[0].mxu0
      %v2196 = vpop.f32.mrb[0].mxu0
      %v2197 = vadd.f32 0.0, %v2196
      %v2198 = vpop.f32.mrb[0].mxu0
      %2199 = vmatprep.mubr.bf16.mxu0 0
      %2200 = vmatmul.mubr.bf16.gmra.mrb[0].mxu0 %v2077
      %v2201 = vpop.f32.mrb[0].mxu0
      %v2202 = vadd.f32 0.0, %v2201
      %v2203 = vpop.f32.mrb[0].mxu0
      %v2204 = vpop.f32.mrb[0].mxu0
      %v2205 = vadd.f32 0.0, %v2204
      %v2206 = vpop.f32.mrb[0].mxu0
      %2207 = vmatprep.mubr.bf16.mxu0 0
      %2208 = vmatmul.mubr.bf16.gmra.mrb[0].mxu0 %v2080
      %v2209 = vpop.f32.mrb[0].mxu0
      %v2210 = vadd.f32 0.0, %v2209
      %v2211 = vpop.f32.mrb[0].mxu0
      %v2212 = vpop.f32.mrb[0].mxu0
      %v2213 = vadd.f32 0.0, %v2212
      %v2214 = vpop.f32.mrb[0].mxu0
      %2215 = vmatprep.mubr.bf16.mxu0 0
      %2216 = vmatmul.mubr.bf16.gmra.mrb[0].mxu0 %v2083
      %v2217 = vpop.f32.mrb[0].mxu0
      %v2218 = vadd.f32 0.0, %v2217
      %v2219 = vpop.f32.mrb[0].mxu0
      %v2220 = vpop.f32.mrb[0].mxu0
      %v2221 = vadd.f32 0.0, %v2220
      %v2222 = vpop.f32.mrb[0].mxu0
      %2223 = vmatprep.mubr.bf16.mxu0 0
      %2224 = vmatmul.mubr.bf16.gmra.mrb[0].mxu0 %v2086
      %v2225 = vpop.f32.mrb[0].mxu0
      %v2226 = vadd.f32 0.0, %v2225
      %v2227 = vpop.f32.mrb[0].mxu0
      %v2228 = vpop.f32.mrb[0].mxu0
      %v2229 = vadd.f32 0.0, %v2228
      %v2230 = vpop.f32.mrb[0].mxu0
      %2231 = vmatprep.mubr.bf16.mxu0 0
      %2232 = vmatmul.mubr.bf16.gmra.mrb[0].mxu0 %v2089
      %v2233 = vpop.f32.mrb[0].mxu0
      %v2234 = vadd.f32 0.0, %v2233
      %v2235 = vpop.f32.mrb[0].mxu0
      %v2236 = vpop.f32.mrb[0].mxu0
      %v2237 = vadd.f32 0.0, %v2236
      %v2238 = vpop.f32.mrb[0].mxu0
      %2239 = vmatprep.mubr.bf16.mxu0 0
      %2240 = vmatmul.mubr.bf16.gmra.mrb[0].mxu0 %v2092
      %v2241 = vpop.f32.mrb[0].mxu0
      %v2242 = vadd.f32 0.0, %v2241
      %v2243 = vpop.f32.mrb[0].mxu0
      %v2244 = vpop.f32.mrb[0].mxu0
      %v2245 = vadd.f32 0.0, %v2244
      %v2246 = vpop.f32.mrb[0].mxu0
      %2247 = vmatprep.mubr.bf16.mxu0 0
      %2248 = vmatmul.mubr.bf16.gmra.mrb[0].mxu0 %v2095
      %v2249 = vpop.f32.mrb[0].mxu0
      %v2250 = vadd.f32 0.0, %v2249
      %v2251 = vpop.f32.mrb[0].mxu0
      %v2252 = vpop.f32.mrb[0].mxu0
      %v2253 = vadd.f32 0.0, %v2252
      %v2254 = vpop.f32.mrb[0].mxu0
      %2255 = vmatprep.mubr.bf16.mxu0 0
      %2256 = vmatmul.mubr.bf16.gmra.mrb[0].mxu0 %v2098
      %v2257 = vpop.f32.mrb[0].mxu0
      %v2258 = vadd.f32 0.0, %v2257
      %v2259 = vpop.f32.mrb[0].mxu0
      %v2260 = vpop.f32.mrb[0].mxu0
      %v2261 = vadd.f32 0.0, %v2260
      %v2262 = vpop.f32.mrb[0].mxu0
      %2263 = vdwg.mxu0
      %v2264 = vadd.f32 %v1967, %v2138
      %v2265 = vadd.f32 %v1968, %v2141
      %v2266 = vadd.f32 %v1969, %v2146
      %v2267 = vadd.f32 %v1970, %v2149
      %v2268 = vadd.f32 %v1971, %v2154
      %v2269 = vadd.f32 %v1972, %v2157
      %v2270 = vadd.f32 %v1973, %v2162
      %v2271 = vadd.f32 %v1974, %v2165
      %v2272 = vadd.f32 %v1975, %v2170
      %v2273 = vadd.f32 %v1976, %v2173
      %v2274 = vadd.f32 %v1977, %v2178
      %v2275 = vadd.f32 %v1978, %v2181
      %v2276 = vadd.f32 %v1979, %v2186
      %v2277 = vadd.f32 %v1980, %v2189
      %v2278 = vadd.f32 %v1981, %v2194
      %v2279 = vadd.f32 %v1982, %v2197
      %v2280 = vadd.f32 %v1983, %v2202
      %v2281 = vadd.f32 %v1984, %v2205
      %v2282 = vadd.f32 %v1985, %v2210
      %v2283 = vadd.f32 %v1986, %v2213
      %v2284 = vadd.f32 %v1987, %v2218
      %v2285 = vadd.f32 %v1988, %v2221
      %v2286 = vadd.f32 %v1989, %v2226
      %v2287 = vadd.f32 %v1990, %v2229
      %v2288 = vadd.f32 %v1991, %v2234
      %v2289 = vadd.f32 %v1992, %v2237
      %v2290 = vadd.f32 %v1993, %v2242
      %v2291 = vadd.f32 %v1994, %v2245
      %v2292 = vadd.f32 %v1995, %v2250
      %v2293 = vadd.f32 %v1996, %v2253
      %v2294 = vadd.f32 %v1997, %v2258
      %v2295 = vadd.f32 %v1998, %v2261
      %s2296 = scalar_lea.vmem [#allocation2], 48
      %v2297 = vld [vmem:[%s2296] sm:$0xff]
      %v2298 = vld [vmem:[%s2296 + $0x8] sm:$0xff]
      %v2299 = vld [vmem:[%s2296 + $0x18] sm:$0xff]
      %v2300 = vld [vmem:[%s2296 + $0x20] sm:$0xff]
      %v2301 = vld [vmem:[%s2296 + $0x30] sm:$0xff]
      %v2302 = vld [vmem:[%s2296 + $0x38] sm:$0xff]
      %v2303 = vld [vmem:[%s2296 + $0x48] sm:$0xff]
      %v2304 = vld [vmem:[%s2296 + $0x50] sm:$0xff]
      %v2305 = vld [vmem:[%s2296 + $0x60] sm:$0xff]
      %v2306 = vld [vmem:[%s2296 + $0x68] sm:$0xff]
      %v2307 = vld [vmem:[%s2296 + $0x78] sm:$0xff]
      %v2308 = vld [vmem:[%s2296 + $0x80] sm:$0xff]
      %v2309 = vld [vmem:[%s2296 + $0x90] sm:$0xff]
      %v2310 = vld [vmem:[%s2296 + $0x98] sm:$0xff]
      %v2311 = vld [vmem:[%s2296 + $0xa8] sm:$0xff]
      %v2312 = vld [vmem:[%s2296 + $0xb0] sm:$0xff]
      %v2313 = vld [vmem:[%s2296 + $0xc0] sm:$0xff]
      %v2314 = vld [vmem:[%s2296 + $0xc8] sm:$0xff]
      %v2315 = vld [vmem:[%s2296 + $0xd8] sm:$0xff]
      %v2316 = vld [vmem:[%s2296 + $0xe0] sm:$0xff]
      %v2317 = vld [vmem:[%s2296 + $0xf0] sm:$0xff]
      %v2318 = vld [vmem:[%s2296 + $0xf8] sm:$0xff]
      %v2319 = vld [vmem:[%s2296 + $0x108] sm:$0xff]
      %v2320 = vld [vmem:[%s2296 + $0x110] sm:$0xff]
      %v2321 = vld [vmem:[%s2296 + $0x120] sm:$0xff]
      %v2322 = vld [vmem:[%s2296 + $0x128] sm:$0xff]
      %v2323 = vld [vmem:[%s2296 + $0x138] sm:$0xff]
      %v2324 = vld [vmem:[%s2296 + $0x140] sm:$0xff]
      %v2325 = vld [vmem:[%s2296 + $0x150] sm:$0xff]
      %v2326 = vld [vmem:[%s2296 + $0x158] sm:$0xff]
      %v2327 = vld [vmem:[%s2296 + $0x168] sm:$0xff]
      %v2328 = vld [vmem:[%s2296 + $0x170] sm:$0xff]
      %v2329 = vpack.c.bf16 %v2298, %v2297
      %v2330 = vpack.c.bf16 %v2300, %v2299
      %v2331 = vpack.c.bf16 %v2302, %v2301
      %v2332 = vpack.c.bf16 %v2304, %v2303
      %v2333 = vpack.c.bf16 %v2306, %v2305
      %v2334 = vpack.c.bf16 %v2308, %v2307
      %v2335 = vpack.c.bf16 %v2310, %v2309
      %v2336 = vpack.c.bf16 %v2312, %v2311
      %v2337 = vpack.c.bf16 %v2314, %v2313
      %v2338 = vpack.c.bf16 %v2316, %v2315
      %v2339 = vpack.c.bf16 %v2318, %v2317
      %v2340 = vpack.c.bf16 %v2320, %v2319
      %v2341 = vpack.c.bf16 %v2322, %v2321
      %v2342 = vpack.c.bf16 %v2324, %v2323
      %v2343 = vpack.c.bf16 %v2326, %v2325
      %v2344 = vpack.c.bf16 %v2328, %v2327
      %v2345 = vld [vmem:[%s5 + $0xc] sm:$0x3]
      %v2347 = vsel %vm324, %v2329, 0
      %v2350 = vsel %vm324, %v2330, 0
      %v2353 = vsel %vm324, %v2331, 0
      %v2356 = vsel %vm324, %v2332, 0
      %v2359 = vsel %vm324, %v2333, 0
      %v2362 = vsel %vm324, %v2334, 0
      %v2365 = vsel %vm324, %v2335, 0
      %v2368 = vsel %vm324, %v2336, 0
      %v2371 = vsel %vm324, %v2337, 0
      %v2374 = vsel %vm324, %v2338, 0
      %v2377 = vsel %vm324, %v2339, 0
      %v2380 = vsel %vm324, %v2340, 0
      %v2383 = vsel %vm324, %v2341, 0
      %v2386 = vsel %vm324, %v2342, 0
      %v2389 = vsel %vm324, %v2343, 0
      %v2392 = vsel %vm324, %v2344, 0
      %v2395 = vsel %vm739, %v2345, 0
      %2397 = vmatprep.subr.bf16.mxu0 0
      %2398 = vmatpush1.bf16.msra.mxu0 %v2395
      %2399 = vmatprep.subr.bf16.mxu0 0
      %2400 = vmatpush1.bf16.msra.mxu0 0
      %2401 = vmatprep.subr.bf16.mxu0 0
      %2402 = vmatpush1.bf16.msra.mxu0 0
      %2403 = vmatprep.subr.bf16.mxu0 0
      %2404 = vmatpush1.bf16.msra.mxu0 0
      %2405 = vmatprep.subr.bf16.mxu0 0
      %2406 = vmatpush1.bf16.msra.mxu0 0
      %2407 = vmatprep.subr.bf16.mxu0 0
      %2408 = vmatpush1.bf16.msra.mxu0 0
      %2409 = vmatprep.subr.bf16.mxu0 0
      %2410 = vmatpush1.bf16.msra.mxu0 0
      %2411 = vmatprep.subr.bf16.mxu0 0
      %2412 = vmatpush1.bf16.msra.mxu0 0
      %2413 = vmatprep.subr.bf16.mxu0 0
      %2414 = vmatpush1.bf16.msra.mxu0 0
      %2415 = vmatprep.subr.bf16.mxu0 0
      %2416 = vmatpush1.bf16.msra.mxu0 0
      %2417 = vmatprep.subr.bf16.mxu0 0
      %2418 = vmatpush1.bf16.msra.mxu0 0
      %2419 = vmatprep.subr.bf16.mxu0 0
      %2420 = vmatpush1.bf16.msra.mxu0 0
      %2421 = vmatprep.subr.bf16.mxu0 0
      %2422 = vmatpush1.bf16.msra.mxu0 0
      %2423 = vmatprep.subr.bf16.mxu0 0
      %2424 = vmatpush1.bf16.msra.mxu0 0
      %2425 = vmatprep.subr.bf16.mxu0 0
      %2426 = vmatpush1.bf16.msra.mxu0 0
      %2427 = vmatprep.subr.bf16.mxu0 0
      %2428 = vmatpush1.bf16.msra.mxu0 0
      %2429 = vmatprep.mubr.bf16.mxu0 0
      %2430 = vmatmul.mubr.bf16.gmra.mrb[0].mxu0 %v2347
      %v2431 = vpop.f32.mrb[0].mxu0
      %v2432 = vadd.f32 0.0, %v2431
      %v2433 = vpop.f32.mrb[0].mxu0
      %v2434 = vpop.f32.mrb[0].mxu0
      %v2435 = vadd.f32 0.0, %v2434
      %v2436 = vpop.f32.mrb[0].mxu0
      %2437 = vmatprep.mubr.bf16.mxu0 0
      %2438 = vmatmul.mubr.bf16.gmra.mrb[0].mxu0 %v2350
      %v2439 = vpop.f32.mrb[0].mxu0
      %v2440 = vadd.f32 0.0, %v2439
      %v2441 = vpop.f32.mrb[0].mxu0
      %v2442 = vpop.f32.mrb[0].mxu0
      %v2443 = vadd.f32 0.0, %v2442
      %v2444 = vpop.f32.mrb[0].mxu0
      %2445 = vmatprep.mubr.bf16.mxu0 0
      %2446 = vmatmul.mubr.bf16.gmra.mrb[0].mxu0 %v2353
      %v2447 = vpop.f32.mrb[0].mxu0
      %v2448 = vadd.f32 0.0, %v2447
      %v2449 = vpop.f32.mrb[0].mxu0
      %v2450 = vpop.f32.mrb[0].mxu0
      %v2451 = vadd.f32 0.0, %v2450
      %v2452 = vpop.f32.mrb[0].mxu0
      %2453 = vmatprep.mubr.bf16.mxu0 0
      %2454 = vmatmul.mubr.bf16.gmra.mrb[0].mxu0 %v2356
      %v2455 = vpop.f32.mrb[0].mxu0
      %v2456 = vadd.f32 0.0, %v2455
      %v2457 = vpop.f32.mrb[0].mxu0
      %v2458 = vpop.f32.mrb[0].mxu0
      %v2459 = vadd.f32 0.0, %v2458
      %v2460 = vpop.f32.mrb[0].mxu0
      %2461 = vmatprep.mubr.bf16.mxu0 0
      %2462 = vmatmul.mubr.bf16.gmra.mrb[0].mxu0 %v2359
      %v2463 = vpop.f32.mrb[0].mxu0
      %v2464 = vadd.f32 0.0, %v2463
      %v2465 = vpop.f32.mrb[0].mxu0
      %v2466 = vpop.f32.mrb[0].mxu0
      %v2467 = vadd.f32 0.0, %v2466
      %v2468 = vpop.f32.mrb[0].mxu0
      %2469 = vmatprep.mubr.bf16.mxu0 0
      %2470 = vmatmul.mubr.bf16.gmra.mrb[0].mxu0 %v2362
      %v2471 = vpop.f32.mrb[0].mxu0
      %v2472 = vadd.f32 0.0, %v2471
      %v2473 = vpop.f32.mrb[0].mxu0
      %v2474 = vpop.f32.mrb[0].mxu0
      %v2475 = vadd.f32 0.0, %v2474
      %v2476 = vpop.f32.mrb[0].mxu0
      %2477 = vmatprep.mubr.bf16.mxu0 0
      %2478 = vmatmul.mubr.bf16.gmra.mrb[0].mxu0 %v2365
      %v2479 = vpop.f32.mrb[0].mxu0
      %v2480 = vadd.f32 0.0, %v2479
      %v2481 = vpop.f32.mrb[0].mxu0
      %v2482 = vpop.f32.mrb[0].mxu0
      %v2483 = vadd.f32 0.0, %v2482
      %v2484 = vpop.f32.mrb[0].mxu0
      %2485 = vmatprep.mubr.bf16.mxu0 0
      %2486 = vmatmul.mubr.bf16.gmra.mrb[0].mxu0 %v2368
      %v2487 = vpop.f32.mrb[0].mxu0
      %v2488 = vadd.f32 0.0, %v2487
      %v2489 = vpop.f32.mrb[0].mxu0
      %v2490 = vpop.f32.mrb[0].mxu0
      %v2491 = vadd.f32 0.0, %v2490
      %v2492 = vpop.f32.mrb[0].mxu0
      %2493 = vmatprep.mubr.bf16.mxu0 0
      %2494 = vmatmul.mubr.bf16.gmra.mrb[0].mxu0 %v2371
      %v2495 = vpop.f32.mrb[0].mxu0
      %v2496 = vadd.f32 0.0, %v2495
      %v2497 = vpop.f32.mrb[0].mxu0
      %v2498 = vpop.f32.mrb[0].mxu0
      %v2499 = vadd.f32 0.0, %v2498
      %v2500 = vpop.f32.mrb[0].mxu0
      %2501 = vmatprep.mubr.bf16.mxu0 0
      %2502 = vmatmul.mubr.bf16.gmra.mrb[0].mxu0 %v2374
      %v2503 = vpop.f32.mrb[0].mxu0
      %v2504 = vadd.f32 0.0, %v2503
      %v2505 = vpop.f32.mrb[0].mxu0
      %v2506 = vpop.f32.mrb[0].mxu0
      %v2507 = vadd.f32 0.0, %v2506
      %v2508 = vpop.f32.mrb[0].mxu0
      %2509 = vmatprep.mubr.bf16.mxu0 0
      %2510 = vmatmul.mubr.bf16.gmra.mrb[0].mxu0 %v2377
      %v2511 = vpop.f32.mrb[0].mxu0
      %v2512 = vadd.f32 0.0, %v2511
      %v2513 = vpop.f32.mrb[0].mxu0
      %v2514 = vpop.f32.mrb[0].mxu0
      %v2515 = vadd.f32 0.0, %v2514
      %v2516 = vpop.f32.mrb[0].mxu0
      %2517 = vmatprep.mubr.bf16.mxu0 0
      %2518 = vmatmul.mubr.bf16.gmra.mrb[0].mxu0 %v2380
      %v2519 = vpop.f32.mrb[0].mxu0
      %v2520 = vadd.f32 0.0, %v2519
      %v2521 = vpop.f32.mrb[0].mxu0
      %v2522 = vpop.f32.mrb[0].mxu0
      %v2523 = vadd.f32 0.0, %v2522
      %v2524 = vpop.f32.mrb[0].mxu0
      %2525 = vmatprep.mubr.bf16.mxu0 0
      %2526 = vmatmul.mubr.bf16.gmra.mrb[0].mxu0 %v2383
      %v2527 = vpop.f32.mrb[0].mxu0
      %v2528 = vadd.f32 0.0, %v2527
      %v2529 = vpop.f32.mrb[0].mxu0
      %v2530 = vpop.f32.mrb[0].mxu0
      %v2531 = vadd.f32 0.0, %v2530
      %v2532 = vpop.f32.mrb[0].mxu0
      %2533 = vmatprep.mubr.bf16.mxu0 0
      %2534 = vmatmul.mubr.bf16.gmra.mrb[0].mxu0 %v2386
      %v2535 = vpop.f32.mrb[0].mxu0
      %v2536 = vadd.f32 0.0, %v2535
      %v2537 = vpop.f32.mrb[0].mxu0
      %v2538 = vpop.f32.mrb[0].mxu0
      %v2539 = vadd.f32 0.0, %v2538
      %v2540 = vpop.f32.mrb[0].mxu0
      %2541 = vmatprep.mubr.bf16.mxu0 0
      %2542 = vmatmul.mubr.bf16.gmra.mrb[0].mxu0 %v2389
      %v2543 = vpop.f32.mrb[0].mxu0
      %v2544 = vadd.f32 0.0, %v2543
      %v2545 = vpop.f32.mrb[0].mxu0
      %v2546 = vpop.f32.mrb[0].mxu0
      %v2547 = vadd.f32 0.0, %v2546
      %v2548 = vpop.f32.mrb[0].mxu0
      %2549 = vmatprep.mubr.bf16.mxu0 0
      %2550 = vmatmul.mubr.bf16.gmra.mrb[0].mxu0 %v2392
      %v2551 = vpop.f32.mrb[0].mxu0
      %v2552 = vadd.f32 0.0, %v2551
      %v2553 = vpop.f32.mrb[0].mxu0
      %v2554 = vpop.f32.mrb[0].mxu0
      %v2555 = vadd.f32 0.0, %v2554
      %v2556 = vpop.f32.mrb[0].mxu0
      %2557 = vdwg.mxu0
      %v2558 = vadd.f32 %v2264, %v2432
      %v2559 = vadd.f32 %v2265, %v2435
      %v2560 = vadd.f32 %v2266, %v2440
      %v2561 = vadd.f32 %v2267, %v2443
      %v2562 = vadd.f32 %v2268, %v2448
      %v2563 = vadd.f32 %v2269, %v2451
      %v2564 = vadd.f32 %v2270, %v2456
      %v2565 = vadd.f32 %v2271, %v2459
      %v2566 = vadd.f32 %v2272, %v2464
      %v2567 = vadd.f32 %v2273, %v2467
      %v2568 = vadd.f32 %v2274, %v2472
      %v2569 = vadd.f32 %v2275, %v2475
      %v2570 = vadd.f32 %v2276, %v2480
      %v2571 = vadd.f32 %v2277, %v2483
      %v2572 = vadd.f32 %v2278, %v2488
      %v2573 = vadd.f32 %v2279, %v2491
      %v2574 = vadd.f32 %v2280, %v2496
      %v2575 = vadd.f32 %v2281, %v2499
      %v2576 = vadd.f32 %v2282, %v2504
      %v2577 = vadd.f32 %v2283, %v2507
      %v2578 = vadd.f32 %v2284, %v2512
      %v2579 = vadd.f32 %v2285, %v2515
      %v2580 = vadd.f32 %v2286, %v2520
      %v2581 = vadd.f32 %v2287, %v2523
      %v2582 = vadd.f32 %v2288, %v2528
      %v2583 = vadd.f32 %v2289, %v2531
      %v2584 = vadd.f32 %v2290, %v2536
      %v2585 = vadd.f32 %v2291, %v2539
      %v2586 = vadd.f32 %v2292, %v2544
      %v2587 = vadd.f32 %v2293, %v2547
      %v2588 = vadd.f32 %v2294, %v2552
      %v2589 = vadd.f32 %v2295, %v2555
      %v2590 = vld [vmem:[%s2296 + $0x1] sm:$0xff]
      %v2591 = vld [vmem:[%s2296 + $0x9] sm:$0xff]
      %v2592 = vld [vmem:[%s2296 + $0x19] sm:$0xff]
      %v2593 = vld [vmem:[%s2296 + $0x21] sm:$0xff]
      %v2594 = vld [vmem:[%s2296 + $0x31] sm:$0xff]
      %v2595 = vld [vmem:[%s2296 + $0x39] sm:$0xff]
      %v2596 = vld [vmem:[%s2296 + $0x49] sm:$0xff]
      %v2597 = vld [vmem:[%s2296 + $0x51] sm:$0xff]
      %v2598 = vld [vmem:[%s2296 + $0x61] sm:$0xff]
      %v2599 = vld [vmem:[%s2296 + $0x69] sm:$0xff]
      %v2600 = vld [vmem:[%s2296 + $0x79] sm:$0xff]
      %v2601 = vld [vmem:[%s2296 + $0x81] sm:$0xff]
      %v2602 = vld [vmem:[%s2296 + $0x91] sm:$0xff]
      %v2603 = vld [vmem:[%s2296 + $0x99] sm:$0xff]
      %v2604 = vld [vmem:[%s2296 + $0xa9] sm:$0xff]
      %v2605 = vld [vmem:[%s2296 + $0xb1] sm:$0xff]
      %v2606 = vld [vmem:[%s2296 + $0xc1] sm:$0xff]
      %v2607 = vld [vmem:[%s2296 + $0xc9] sm:$0xff]
      %v2608 = vld [vmem:[%s2296 + $0xd9] sm:$0xff]
      %v2609 = vld [vmem:[%s2296 + $0xe1] sm:$0xff]
      %v2610 = vld [vmem:[%s2296 + $0xf1] sm:$0xff]
      %v2611 = vld [vmem:[%s2296 + $0xf9] sm:$0xff]
      %v2612 = vld [vmem:[%s2296 + $0x109] sm:$0xff]
      %v2613 = vld [vmem:[%s2296 + $0x111] sm:$0xff]
      %v2614 = vld [vmem:[%s2296 + $0x121] sm:$0xff]
      %v2615 = vld [vmem:[%s2296 + $0x129] sm:$0xff]
      %v2616 = vld [vmem:[%s2296 + $0x139] sm:$0xff]
      %v2617 = vld [vmem:[%s2296 + $0x141] sm:$0xff]
      %v2618 = vld [vmem:[%s2296 + $0x151] sm:$0xff]
      %v2619 = vld [vmem:[%s2296 + $0x159] sm:$0xff]
      %v2620 = vld [vmem:[%s2296 + $0x169] sm:$0xff]
      %v2621 = vld [vmem:[%s2296 + $0x171] sm:$0xff]
      %v2622 = vpack.c.bf16 %v2591, %v2590
      %v2623 = vpack.c.bf16 %v2593, %v2592
      %v2624 = vpack.c.bf16 %v2595, %v2594
      %v2625 = vpack.c.bf16 %v2597, %v2596
      %v2626 = vpack.c.bf16 %v2599, %v2598
      %v2627 = vpack.c.bf16 %v2601, %v2600
      %v2628 = vpack.c.bf16 %v2603, %v2602
      %v2629 = vpack.c.bf16 %v2605, %v2604
      %v2630 = vpack.c.bf16 %v2607, %v2606
      %v2631 = vpack.c.bf16 %v2609, %v2608
      %v2632 = vpack.c.bf16 %v2611, %v2610
      %v2633 = vpack.c.bf16 %v2613, %v2612
      %v2634 = vpack.c.bf16 %v2615, %v2614
      %v2635 = vpack.c.bf16 %v2617, %v2616
      %v2636 = vpack.c.bf16 %v2619, %v2618
      %v2637 = vpack.c.bf16 %v2621, %v2620
      %v2638 = vld [vmem:[%s5 + $0xc] sm:$0xc]
      %v2640 = vunpack.c.l.b16 %v2638
      %v2641 = vpack.c.b16 %v2640, %v2640
      %v2642 = vrot.slane %v2641, 2
      %v2644 = vsel %vm324, %v2622, 0
      %v2647 = vsel %vm324, %v2623, 0
      %v2650 = vsel %vm324, %v2624, 0
      %v2653 = vsel %vm324, %v2625, 0
      %v2656 = vsel %vm324, %v2626, 0
      %v2659 = vsel %vm324, %v2627, 0
      %v2662 = vsel %vm324, %v2628, 0
      %v2665 = vsel %vm324, %v2629, 0
      %v2668 = vsel %vm324, %v2630, 0
      %v2671 = vsel %vm324, %v2631, 0
      %v2674 = vsel %vm324, %v2632, 0
      %v2677 = vsel %vm324, %v2633, 0
      %v2680 = vsel %vm324, %v2634, 0
      %v2683 = vsel %vm324, %v2635, 0
      %v2686 = vsel %vm324, %v2636, 0
      %v2689 = vsel %vm324, %v2637, 0
      %v2692 = vsel %vm739, %v2642, 0
      %2694 = vmatprep.subr.bf16.mxu0 0
      %2695 = vmatpush1.bf16.msra.mxu0 %v2692
      %2696 = vmatprep.subr.bf16.mxu0 0
      %2697 = vmatpush1.bf16.msra.mxu0 0
      %2698 = vmatprep.subr.bf16.mxu0 0
      %2699 = vmatpush1.bf16.msra.mxu0 0
      %2700 = vmatprep.subr.bf16.mxu0 0
      %2701 = vmatpush1.bf16.msra.mxu0 0
      %2702 = vmatprep.subr.bf16.mxu0 0
      %2703 = vmatpush1.bf16.msra.mxu0 0
      %2704 = vmatprep.subr.bf16.mxu0 0
      %2705 = vmatpush1.bf16.msra.mxu0 0
      %2706 = vmatprep.subr.bf16.mxu0 0
      %2707 = vmatpush1.bf16.msra.mxu0 0
      %2708 = vmatprep.subr.bf16.mxu0 0
      %2709 = vmatpush1.bf16.msra.mxu0 0
      %2710 = vmatprep.subr.bf16.mxu0 0
      %2711 = vmatpush1.bf16.msra.mxu0 0
      %2712 = vmatprep.subr.bf16.mxu0 0
      %2713 = vmatpush1.bf16.msra.mxu0 0
      %2714 = vmatprep.subr.bf16.mxu0 0
      %2715 = vmatpush1.bf16.msra.mxu0 0
      %2716 = vmatprep.subr.bf16.mxu0 0
      %2717 = vmatpush1.bf16.msra.mxu0 0
      %2718 = vmatprep.subr.bf16.mxu0 0
      %2719 = vmatpush1.bf16.msra.mxu0 0
      %2720 = vmatprep.subr.bf16.mxu0 0
      %2721 = vmatpush1.bf16.msra.mxu0 0
      %2722 = vmatprep.subr.bf16.mxu0 0
      %2723 = vmatpush1.bf16.msra.mxu0 0
      %2724 = vmatprep.subr.bf16.mxu0 0
      %2725 = vmatpush1.bf16.msra.mxu0 0
      %2726 = vmatprep.mubr.bf16.mxu0 0
      %2727 = vmatmul.mubr.bf16.gmra.mrb[0].mxu0 %v2644
      %v2728 = vpop.f32.mrb[0].mxu0
      %v2729 = vadd.f32 0.0, %v2728
      %v2730 = vpop.f32.mrb[0].mxu0
      %v2731 = vpop.f32.mrb[0].mxu0
      %v2732 = vadd.f32 0.0, %v2731
      %v2733 = vpop.f32.mrb[0].mxu0
      %2734 = vmatprep.mubr.bf16.mxu0 0
      %2735 = vmatmul.mubr.bf16.gmra.mrb[0].mxu0 %v2647
      %v2736 = vpop.f32.mrb[0].mxu0
      %v2737 = vadd.f32 0.0, %v2736
      %v2738 = vpop.f32.mrb[0].mxu0
      %v2739 = vpop.f32.mrb[0].mxu0
      %v2740 = vadd.f32 0.0, %v2739
      %v2741 = vpop.f32.mrb[0].mxu0
      %2742 = vmatprep.mubr.bf16.mxu0 0
      %2743 = vmatmul.mubr.bf16.gmra.mrb[0].mxu0 %v2650
      %v2744 = vpop.f32.mrb[0].mxu0
      %v2745 = vadd.f32 0.0, %v2744
      %v2746 = vpop.f32.mrb[0].mxu0
      %v2747 = vpop.f32.mrb[0].mxu0
      %v2748 = vadd.f32 0.0, %v2747
      %v2749 = vpop.f32.mrb[0].mxu0
      %2750 = vmatprep.mubr.bf16.mxu0 0
      %2751 = vmatmul.mubr.bf16.gmra.mrb[0].mxu0 %v2653
      %v2752 = vpop.f32.mrb[0].mxu0
      %v2753 = vadd.f32 0.0, %v2752
      %v2754 = vpop.f32.mrb[0].mxu0
      %v2755 = vpop.f32.mrb[0].mxu0
      %v2756 = vadd.f32 0.0, %v2755
      %v2757 = vpop.f32.mrb[0].mxu0
      %2758 = vmatprep.mubr.bf16.mxu0 0
      %2759 = vmatmul.mubr.bf16.gmra.mrb[0].mxu0 %v2656
      %v2760 = vpop.f32.mrb[0].mxu0
      %v2761 = vadd.f32 0.0, %v2760
      %v2762 = vpop.f32.mrb[0].mxu0
      %v2763 = vpop.f32.mrb[0].mxu0
      %v2764 = vadd.f32 0.0, %v2763
      %v2765 = vpop.f32.mrb[0].mxu0
      %2766 = vmatprep.mubr.bf16.mxu0 0
      %2767 = vmatmul.mubr.bf16.gmra.mrb[0].mxu0 %v2659
      %v2768 = vpop.f32.mrb[0].mxu0
      %v2769 = vadd.f32 0.0, %v2768
      %v2770 = vpop.f32.mrb[0].mxu0
      %v2771 = vpop.f32.mrb[0].mxu0
      %v2772 = vadd.f32 0.0, %v2771
      %v2773 = vpop.f32.mrb[0].mxu0
      %2774 = vmatprep.mubr.bf16.mxu0 0
      %2775 = vmatmul.mubr.bf16.gmra.mrb[0].mxu0 %v2662
      %v2776 = vpop.f32.mrb[0].mxu0
      %v2777 = vadd.f32 0.0, %v2776
      %v2778 = vpop.f32.mrb[0].mxu0
      %v2779 = vpop.f32.mrb[0].mxu0
      %v2780 = vadd.f32 0.0, %v2779
      %v2781 = vpop.f32.mrb[0].mxu0
      %2782 = vmatprep.mubr.bf16.mxu0 0
      %2783 = vmatmul.mubr.bf16.gmra.mrb[0].mxu0 %v2665
      %v2784 = vpop.f32.mrb[0].mxu0
      %v2785 = vadd.f32 0.0, %v2784
      %v2786 = vpop.f32.mrb[0].mxu0
      %v2787 = vpop.f32.mrb[0].mxu0
      %v2788 = vadd.f32 0.0, %v2787
      %v2789 = vpop.f32.mrb[0].mxu0
      %2790 = vmatprep.mubr.bf16.mxu0 0
      %2791 = vmatmul.mubr.bf16.gmra.mrb[0].mxu0 %v2668
      %v2792 = vpop.f32.mrb[0].mxu0
      %v2793 = vadd.f32 0.0, %v2792
      %v2794 = vpop.f32.mrb[0].mxu0
      %v2795 = vpop.f32.mrb[0].mxu0
      %v2796 = vadd.f32 0.0, %v2795
      %v2797 = vpop.f32.mrb[0].mxu0
      %2798 = vmatprep.mubr.bf16.mxu0 0
      %2799 = vmatmul.mubr.bf16.gmra.mrb[0].mxu0 %v2671
      %v2800 = vpop.f32.mrb[0].mxu0
      %v2801 = vadd.f32 0.0, %v2800
      %v2802 = vpop.f32.mrb[0].mxu0
      %v2803 = vpop.f32.mrb[0].mxu0
      %v2804 = vadd.f32 0.0, %v2803
      %v2805 = vpop.f32.mrb[0].mxu0
      %2806 = vmatprep.mubr.bf16.mxu0 0
      %2807 = vmatmul.mubr.bf16.gmra.mrb[0].mxu0 %v2674
      %v2808 = vpop.f32.mrb[0].mxu0
      %v2809 = vadd.f32 0.0, %v2808
      %v2810 = vpop.f32.mrb[0].mxu0
      %v2811 = vpop.f32.mrb[0].mxu0
      %v2812 = vadd.f32 0.0, %v2811
      %v2813 = vpop.f32.mrb[0].mxu0
      %2814 = vmatprep.mubr.bf16.mxu0 0
      %2815 = vmatmul.mubr.bf16.gmra.mrb[0].mxu0 %v2677
      %v2816 = vpop.f32.mrb[0].mxu0
      %v2817 = vadd.f32 0.0, %v2816
      %v2818 = vpop.f32.mrb[0].mxu0
      %v2819 = vpop.f32.mrb[0].mxu0
      %v2820 = vadd.f32 0.0, %v2819
      %v2821 = vpop.f32.mrb[0].mxu0
      %2822 = vmatprep.mubr.bf16.mxu0 0
      %2823 = vmatmul.mubr.bf16.gmra.mrb[0].mxu0 %v2680
      %v2824 = vpop.f32.mrb[0].mxu0
      %v2825 = vadd.f32 0.0, %v2824
      %v2826 = vpop.f32.mrb[0].mxu0
      %v2827 = vpop.f32.mrb[0].mxu0
      %v2828 = vadd.f32 0.0, %v2827
      %v2829 = vpop.f32.mrb[0].mxu0
      %2830 = vmatprep.mubr.bf16.mxu0 0
      %2831 = vmatmul.mubr.bf16.gmra.mrb[0].mxu0 %v2683
      %v2832 = vpop.f32.mrb[0].mxu0
      %v2833 = vadd.f32 0.0, %v2832
      %v2834 = vpop.f32.mrb[0].mxu0
      %v2835 = vpop.f32.mrb[0].mxu0
      %v2836 = vadd.f32 0.0, %v2835
      %v2837 = vpop.f32.mrb[0].mxu0
      %2838 = vmatprep.mubr.bf16.mxu0 0
      %2839 = vmatmul.mubr.bf16.gmra.mrb[0].mxu0 %v2686
      %v2840 = vpop.f32.mrb[0].mxu0
      %v2841 = vadd.f32 0.0, %v2840
      %v2842 = vpop.f32.mrb[0].mxu0
      %v2843 = vpop.f32.mrb[0].mxu0
      %v2844 = vadd.f32 0.0, %v2843
      %v2845 = vpop.f32.mrb[0].mxu0
      %2846 = vmatprep.mubr.bf16.mxu0 0
      %2847 = vmatmul.mubr.bf16.gmra.mrb[0].mxu0 %v2689
      %v2848 = vpop.f32.mrb[0].mxu0
      %v2849 = vadd.f32 0.0, %v2848
      %v2850 = vpop.f32.mrb[0].mxu0
      %v2851 = vpop.f32.mrb[0].mxu0
      %v2852 = vadd.f32 0.0, %v2851
      %v2853 = vpop.f32.mrb[0].mxu0
      %2854 = vdwg.mxu0
      %v2855 = vadd.f32 %v2558, %v2729
      %v2856 = vadd.f32 %v2559, %v2732
      %v2857 = vadd.f32 %v2560, %v2737
      %v2858 = vadd.f32 %v2561, %v2740
      %v2859 = vadd.f32 %v2562, %v2745
      %v2860 = vadd.f32 %v2563, %v2748
      %v2861 = vadd.f32 %v2564, %v2753
      %v2862 = vadd.f32 %v2565, %v2756
      %v2863 = vadd.f32 %v2566, %v2761
      %v2864 = vadd.f32 %v2567, %v2764
      %v2865 = vadd.f32 %v2568, %v2769
      %v2866 = vadd.f32 %v2569, %v2772
      %v2867 = vadd.f32 %v2570, %v2777
      %v2868 = vadd.f32 %v2571, %v2780
      %v2869 = vadd.f32 %v2572, %v2785
      %v2870 = vadd.f32 %v2573, %v2788
      %v2871 = vadd.f32 %v2574, %v2793
      %v2872 = vadd.f32 %v2575, %v2796
      %v2873 = vadd.f32 %v2576, %v2801
      %v2874 = vadd.f32 %v2577, %v2804
      %v2875 = vadd.f32 %v2578, %v2809
      %v2876 = vadd.f32 %v2579, %v2812
      %v2877 = vadd.f32 %v2580, %v2817
      %v2878 = vadd.f32 %v2581, %v2820
      %v2879 = vadd.f32 %v2582, %v2825
      %v2880 = vadd.f32 %v2583, %v2828
      %v2881 = vadd.f32 %v2584, %v2833
      %v2882 = vadd.f32 %v2585, %v2836
      %v2883 = vadd.f32 %v2586, %v2841
      %v2884 = vadd.f32 %v2587, %v2844
      %v2885 = vadd.f32 %v2588, %v2849
      %v2886 = vadd.f32 %v2589, %v2852
      %v2887 = vld [vmem:[%s2296 + $0x2] sm:$0xff]
      %v2888 = vld [vmem:[%s2296 + $0xa] sm:$0xff]
      %v2889 = vld [vmem:[%s2296 + $0x1a] sm:$0xff]
      %v2890 = vld [vmem:[%s2296 + $0x22] sm:$0xff]
      %v2891 = vld [vmem:[%s2296 + $0x32] sm:$0xff]
      %v2892 = vld [vmem:[%s2296 + $0x3a] sm:$0xff]
      %v2893 = vld [vmem:[%s2296 + $0x4a] sm:$0xff]
      %v2894 = vld [vmem:[%s2296 + $0x52] sm:$0xff]
      %v2895 = vld [vmem:[%s2296 + $0x62] sm:$0xff]
      %v2896 = vld [vmem:[%s2296 + $0x6a] sm:$0xff]
      %v2897 = vld [vmem:[%s2296 + $0x7a] sm:$0xff]
      %v2898 = vld [vmem:[%s2296 + $0x82] sm:$0xff]
      %v2899 = vld [vmem:[%s2296 + $0x92] sm:$0xff]
      %v2900 = vld [vmem:[%s2296 + $0x9a] sm:$0xff]
      %v2901 = vld [vmem:[%s2296 + $0xaa] sm:$0xff]
      %v2902 = vld [vmem:[%s2296 + $0xb2] sm:$0xff]
      %v2903 = vld [vmem:[%s2296 + $0xc2] sm:$0xff]
      %v2904 = vld [vmem:[%s2296 + $0xca] sm:$0xff]
      %v2905 = vld [vmem:[%s2296 + $0xda] sm:$0xff]
      %v2906 = vld [vmem:[%s2296 + $0xe2] sm:$0xff]
      %v2907 = vld [vmem:[%s2296 + $0xf2] sm:$0xff]
      %v2908 = vld [vmem:[%s2296 + $0xfa] sm:$0xff]
      %v2909 = vld [vmem:[%s2296 + $0x10a] sm:$0xff]
      %v2910 = vld [vmem:[%s2296 + $0x112] sm:$0xff]
      %v2911 = vld [vmem:[%s2296 + $0x122] sm:$0xff]
      %v2912 = vld [vmem:[%s2296 + $0x12a] sm:$0xff]
      %v2913 = vld [vmem:[%s2296 + $0x13a] sm:$0xff]
      %v2914 = vld [vmem:[%s2296 + $0x142] sm:$0xff]
      %v2915 = vld [vmem:[%s2296 + $0x152] sm:$0xff]
      %v2916 = vld [vmem:[%s2296 + $0x15a] sm:$0xff]
      %v2917 = vld [vmem:[%s2296 + $0x16a] sm:$0xff]
      %v2918 = vld [vmem:[%s2296 + $0x172] sm:$0xff]
      %v2919 = vpack.c.bf16 %v2888, %v2887
      %v2920 = vpack.c.bf16 %v2890, %v2889
      %v2921 = vpack.c.bf16 %v2892, %v2891
      %v2922 = vpack.c.bf16 %v2894, %v2893
      %v2923 = vpack.c.bf16 %v2896, %v2895
      %v2924 = vpack.c.bf16 %v2898, %v2897
      %v2925 = vpack.c.bf16 %v2900, %v2899
      %v2926 = vpack.c.bf16 %v2902, %v2901
      %v2927 = vpack.c.bf16 %v2904, %v2903
      %v2928 = vpack.c.bf16 %v2906, %v2905
      %v2929 = vpack.c.bf16 %v2908, %v2907
      %v2930 = vpack.c.bf16 %v2910, %v2909
      %v2931 = vpack.c.bf16 %v2912, %v2911
      %v2932 = vpack.c.bf16 %v2914, %v2913
      %v2933 = vpack.c.bf16 %v2916, %v2915
      %v2934 = vpack.c.bf16 %v2918, %v2917
      %v2935 = vld [vmem:[%s5 + $0x10] sm:$0x3]
      %v2937 = vsel %vm324, %v2919, 0
      %v2940 = vsel %vm324, %v2920, 0
      %v2943 = vsel %vm324, %v2921, 0
      %v2946 = vsel %vm324, %v2922, 0
      %v2949 = vsel %vm324, %v2923, 0
      %v2952 = vsel %vm324, %v2924, 0
      %v2955 = vsel %vm324, %v2925, 0
      %v2958 = vsel %vm324, %v2926, 0
      %v2961 = vsel %vm324, %v2927, 0
      %v2964 = vsel %vm324, %v2928, 0
      %v2967 = vsel %vm324, %v2929, 0
      %v2970 = vsel %vm324, %v2930, 0
      %v2973 = vsel %vm324, %v2931, 0
      %v2976 = vsel %vm324, %v2932, 0
      %v2979 = vsel %vm324, %v2933, 0
      %v2982 = vsel %vm324, %v2934, 0
      %v2985 = vsel %vm739, %v2935, 0
      %2987 = vmatprep.subr.bf16.mxu0 0
      %2988 = vmatpush1.bf16.msra.mxu0 %v2985
      %2989 = vmatprep.subr.bf16.mxu0 0
      %2990 = vmatpush1.bf16.msra.mxu0 0
      %2991 = vmatprep.subr.bf16.mxu0 0
      %2992 = vmatpush1.bf16.msra.mxu0 0
      %2993 = vmatprep.subr.bf16.mxu0 0
      %2994 = vmatpush1.bf16.msra.mxu0 0
      %2995 = vmatprep.subr.bf16.mxu0 0
      %2996 = vmatpush1.bf16.msra.mxu0 0
      %2997 = vmatprep.subr.bf16.mxu0 0
      %2998 = vmatpush1.bf16.msra.mxu0 0
      %2999 = vmatprep.subr.bf16.mxu0 0
      %3000 = vmatpush1.bf16.msra.mxu0 0
      %3001 = vmatprep.subr.bf16.mxu0 0
      %3002 = vmatpush1.bf16.msra.mxu0 0
      %3003 = vmatprep.subr.bf16.mxu0 0
      %3004 = vmatpush1.bf16.msra.mxu0 0
      %3005 = vmatprep.subr.bf16.mxu0 0
      %3006 = vmatpush1.bf16.msra.mxu0 0
      %3007 = vmatprep.subr.bf16.mxu0 0
      %3008 = vmatpush1.bf16.msra.mxu0 0
      %3009 = vmatprep.subr.bf16.mxu0 0
      %3010 = vmatpush1.bf16.msra.mxu0 0
      %3011 = vmatprep.subr.bf16.mxu0 0
      %3012 = vmatpush1.bf16.msra.mxu0 0
      %3013 = vmatprep.subr.bf16.mxu0 0
      %3014 = vmatpush1.bf16.msra.mxu0 0
      %3015 = vmatprep.subr.bf16.mxu0 0
      %3016 = vmatpush1.bf16.msra.mxu0 0
      %3017 = vmatprep.subr.bf16.mxu0 0
      %3018 = vmatpush1.bf16.msra.mxu0 0
      %3019 = vmatprep.mubr.bf16.mxu0 0
      %3020 = vmatmul.mubr.bf16.gmra.mrb[0].mxu0 %v2937
      %v3021 = vpop.f32.mrb[0].mxu0
      %v3022 = vadd.f32 0.0, %v3021
      %v3023 = vpop.f32.mrb[0].mxu0
      %v3024 = vpop.f32.mrb[0].mxu0
      %v3025 = vadd.f32 0.0, %v3024
      %v3026 = vpop.f32.mrb[0].mxu0
      %3027 = vmatprep.mubr.bf16.mxu0 0
      %3028 = vmatmul.mubr.bf16.gmra.mrb[0].mxu0 %v2940
      %v3029 = vpop.f32.mrb[0].mxu0
      %v3030 = vadd.f32 0.0, %v3029
      %v3031 = vpop.f32.mrb[0].mxu0
      %v3032 = vpop.f32.mrb[0].mxu0
      %v3033 = vadd.f32 0.0, %v3032
      %v3034 = vpop.f32.mrb[0].mxu0
      %3035 = vmatprep.mubr.bf16.mxu0 0
      %3036 = vmatmul.mubr.bf16.gmra.mrb[0].mxu0 %v2943
      %v3037 = vpop.f32.mrb[0].mxu0
      %v3038 = vadd.f32 0.0, %v3037
      %v3039 = vpop.f32.mrb[0].mxu0
      %v3040 = vpop.f32.mrb[0].mxu0
      %v3041 = vadd.f32 0.0, %v3040
      %v3042 = vpop.f32.mrb[0].mxu0
      %3043 = vmatprep.mubr.bf16.mxu0 0
      %3044 = vmatmul.mubr.bf16.gmra.mrb[0].mxu0 %v2946
      %v3045 = vpop.f32.mrb[0].mxu0
      %v3046 = vadd.f32 0.0, %v3045
      %v3047 = vpop.f32.mrb[0].mxu0
      %v3048 = vpop.f32.mrb[0].mxu0
      %v3049 = vadd.f32 0.0, %v3048
      %v3050 = vpop.f32.mrb[0].mxu0
      %3051 = vmatprep.mubr.bf16.mxu0 0
      %3052 = vmatmul.mubr.bf16.gmra.mrb[0].mxu0 %v2949
      %v3053 = vpop.f32.mrb[0].mxu0
      %v3054 = vadd.f32 0.0, %v3053
      %v3055 = vpop.f32.mrb[0].mxu0
      %v3056 = vpop.f32.mrb[0].mxu0
      %v3057 = vadd.f32 0.0, %v3056
      %v3058 = vpop.f32.mrb[0].mxu0
      %3059 = vmatprep.mubr.bf16.mxu0 0
      %3060 = vmatmul.mubr.bf16.gmra.mrb[0].mxu0 %v2952
      %v3061 = vpop.f32.mrb[0].mxu0
      %v3062 = vadd.f32 0.0, %v3061
      %v3063 = vpop.f32.mrb[0].mxu0
      %v3064 = vpop.f32.mrb[0].mxu0
      %v3065 = vadd.f32 0.0, %v3064
      %v3066 = vpop.f32.mrb[0].mxu0
      %3067 = vmatprep.mubr.bf16.mxu0 0
      %3068 = vmatmul.mubr.bf16.gmra.mrb[0].mxu0 %v2955
      %v3069 = vpop.f32.mrb[0].mxu0
      %v3070 = vadd.f32 0.0, %v3069
      %v3071 = vpop.f32.mrb[0].mxu0
      %v3072 = vpop.f32.mrb[0].mxu0
      %v3073 = vadd.f32 0.0, %v3072
      %v3074 = vpop.f32.mrb[0].mxu0
      %3075 = vmatprep.mubr.bf16.mxu0 0
      %3076 = vmatmul.mubr.bf16.gmra.mrb[0].mxu0 %v2958
      %v3077 = vpop.f32.mrb[0].mxu0
      %v3078 = vadd.f32 0.0, %v3077
      %v3079 = vpop.f32.mrb[0].mxu0
      %v3080 = vpop.f32.mrb[0].mxu0
      %v3081 = vadd.f32 0.0, %v3080
      %v3082 = vpop.f32.mrb[0].mxu0
      %3083 = vmatprep.mubr.bf16.mxu0 0
      %3084 = vmatmul.mubr.bf16.gmra.mrb[0].mxu0 %v2961
      %v3085 = vpop.f32.mrb[0].mxu0
      %v3086 = vadd.f32 0.0, %v3085
      %v3087 = vpop.f32.mrb[0].mxu0
      %v3088 = vpop.f32.mrb[0].mxu0
      %v3089 = vadd.f32 0.0, %v3088
      %v3090 = vpop.f32.mrb[0].mxu0
      %3091 = vmatprep.mubr.bf16.mxu0 0
      %3092 = vmatmul.mubr.bf16.gmra.mrb[0].mxu0 %v2964
      %v3093 = vpop.f32.mrb[0].mxu0
      %v3094 = vadd.f32 0.0, %v3093
      %v3095 = vpop.f32.mrb[0].mxu0
      %v3096 = vpop.f32.mrb[0].mxu0
      %v3097 = vadd.f32 0.0, %v3096
      %v3098 = vpop.f32.mrb[0].mxu0
      %3099 = vmatprep.mubr.bf16.mxu0 0
      %3100 = vmatmul.mubr.bf16.gmra.mrb[0].mxu0 %v2967
      %v3101 = vpop.f32.mrb[0].mxu0
      %v3102 = vadd.f32 0.0, %v3101
      %v3103 = vpop.f32.mrb[0].mxu0
      %v3104 = vpop.f32.mrb[0].mxu0
      %v3105 = vadd.f32 0.0, %v3104
      %v3106 = vpop.f32.mrb[0].mxu0
      %3107 = vmatprep.mubr.bf16.mxu0 0
      %3108 = vmatmul.mubr.bf16.gmra.mrb[0].mxu0 %v2970
      %v3109 = vpop.f32.mrb[0].mxu0
      %v3110 = vadd.f32 0.0, %v3109
      %v3111 = vpop.f32.mrb[0].mxu0
      %v3112 = vpop.f32.mrb[0].mxu0
      %v3113 = vadd.f32 0.0, %v3112
      %v3114 = vpop.f32.mrb[0].mxu0
      %3115 = vmatprep.mubr.bf16.mxu0 0
      %3116 = vmatmul.mubr.bf16.gmra.mrb[0].mxu0 %v2973
      %v3117 = vpop.f32.mrb[0].mxu0
      %v3118 = vadd.f32 0.0, %v3117
      %v3119 = vpop.f32.mrb[0].mxu0
      %v3120 = vpop.f32.mrb[0].mxu0
      %v3121 = vadd.f32 0.0, %v3120
      %v3122 = vpop.f32.mrb[0].mxu0
      %3123 = vmatprep.mubr.bf16.mxu0 0
      %3124 = vmatmul.mubr.bf16.gmra.mrb[0].mxu0 %v2976
      %v3125 = vpop.f32.mrb[0].mxu0
      %v3126 = vadd.f32 0.0, %v3125
      %v3127 = vpop.f32.mrb[0].mxu0
      %v3128 = vpop.f32.mrb[0].mxu0
      %v3129 = vadd.f32 0.0, %v3128
      %v3130 = vpop.f32.mrb[0].mxu0
      %3131 = vmatprep.mubr.bf16.mxu0 0
      %3132 = vmatmul.mubr.bf16.gmra.mrb[0].mxu0 %v2979
      %v3133 = vpop.f32.mrb[0].mxu0
      %v3134 = vadd.f32 0.0, %v3133
      %v3135 = vpop.f32.mrb[0].mxu0
      %v3136 = vpop.f32.mrb[0].mxu0
      %v3137 = vadd.f32 0.0, %v3136
      %v3138 = vpop.f32.mrb[0].mxu0
      %3139 = vmatprep.mubr.bf16.mxu0 0
      %3140 = vmatmul.mubr.bf16.gmra.mrb[0].mxu0 %v2982
      %v3141 = vpop.f32.mrb[0].mxu0
      %v3142 = vadd.f32 0.0, %v3141
      %v3143 = vpop.f32.mrb[0].mxu0
      %v3144 = vpop.f32.mrb[0].mxu0
      %v3145 = vadd.f32 0.0, %v3144
      %v3146 = vpop.f32.mrb[0].mxu0
      %3147 = vdwg.mxu0
      %v3148 = vadd.f32 %v2855, %v3022
      %v3149 = vadd.f32 %v2856, %v3025
      %v3150 = vadd.f32 %v2857, %v3030
      %v3151 = vadd.f32 %v2858, %v3033
      %v3152 = vadd.f32 %v2859, %v3038
      %v3153 = vadd.f32 %v2860, %v3041
      %v3154 = vadd.f32 %v2861, %v3046
      %v3155 = vadd.f32 %v2862, %v3049
      %v3156 = vadd.f32 %v2863, %v3054
      %v3157 = vadd.f32 %v2864, %v3057
      %v3158 = vadd.f32 %v2865, %v3062
      %v3159 = vadd.f32 %v2866, %v3065
      %v3160 = vadd.f32 %v2867, %v3070
      %v3161 = vadd.f32 %v2868, %v3073
      %v3162 = vadd.f32 %v2869, %v3078
      %v3163 = vadd.f32 %v2870, %v3081
      %v3164 = vadd.f32 %v2871, %v3086
      %v3165 = vadd.f32 %v2872, %v3089
      %v3166 = vadd.f32 %v2873, %v3094
      %v3167 = vadd.f32 %v2874, %v3097
      %v3168 = vadd.f32 %v2875, %v3102
      %v3169 = vadd.f32 %v2876, %v3105
      %v3170 = vadd.f32 %v2877, %v3110
      %v3171 = vadd.f32 %v2878, %v3113
      %v3172 = vadd.f32 %v2879, %v3118
      %v3173 = vadd.f32 %v2880, %v3121
      %v3174 = vadd.f32 %v2881, %v3126
      %v3175 = vadd.f32 %v2882, %v3129
      %v3176 = vadd.f32 %v2883, %v3134
      %v3177 = vadd.f32 %v2884, %v3137
      %v3178 = vadd.f32 %v2885, %v3142
      %v3179 = vadd.f32 %v2886, %v3145
      %v3180 = vpack.c.bf16 %v3149, %v3148
      %v3181 = vpack.c.bf16 %v3151, %v3150
      %v3182 = vpack.c.bf16 %v3153, %v3152
      %v3183 = vpack.c.bf16 %v3155, %v3154
      %v3184 = vpack.c.bf16 %v3157, %v3156
      %v3185 = vpack.c.bf16 %v3159, %v3158
      %v3186 = vpack.c.bf16 %v3161, %v3160
      %v3187 = vpack.c.bf16 %v3163, %v3162
      %v3188 = vpack.c.bf16 %v3165, %v3164
      %v3189 = vpack.c.bf16 %v3167, %v3166
      %v3190 = vpack.c.bf16 %v3169, %v3168
      %v3191 = vpack.c.bf16 %v3171, %v3170
      %v3192 = vpack.c.bf16 %v3173, %v3172
      %v3193 = vpack.c.bf16 %v3175, %v3174
      %v3194 = vpack.c.bf16 %v3177, %v3176
      %v3195 = vpack.c.bf16 %v3179, %v3178
      %v3212 = vunpack.c.l.b16 %v3180
      %v3213 = vunpack.c.h.b16 %v3180
      %v3214 = vunpack.c.l.b16 %v3181
      %v3215 = vunpack.c.h.b16 %v3181
      %v3216 = vunpack.c.l.b16 %v3182
      %v3217 = vunpack.c.h.b16 %v3182
      %v3218 = vunpack.c.l.b16 %v3183
      %v3219 = vunpack.c.h.b16 %v3183
      %v3220 = vunpack.c.l.b16 %v3184
      %v3221 = vunpack.c.h.b16 %v3184
      %v3222 = vunpack.c.l.b16 %v3185
      %v3223 = vunpack.c.h.b16 %v3185
      %v3224 = vunpack.c.l.b16 %v3186
      %v3225 = vunpack.c.h.b16 %v3186
      %v3226 = vunpack.c.l.b16 %v3187
      %v3227 = vunpack.c.h.b16 %v3187
      %v3228 = vunpack.c.l.b16 %v3188
      %v3229 = vunpack.c.h.b16 %v3188
      %v3230 = vunpack.c.l.b16 %v3189
      %v3231 = vunpack.c.h.b16 %v3189
      %v3232 = vunpack.c.l.b16 %v3190
      %v3233 = vunpack.c.h.b16 %v3190
      %v3234 = vunpack.c.l.b16 %v3191
      %v3235 = vunpack.c.h.b16 %v3191
      %v3236 = vunpack.c.l.b16 %v3192
      %v3237 = vunpack.c.h.b16 %v3192
      %v3238 = vunpack.c.l.b16 %v3193
      %v3239 = vunpack.c.h.b16 %v3193
      %v3240 = vunpack.c.l.b16 %v3194
      %v3241 = vunpack.c.h.b16 %v3194
      %v3242 = vunpack.c.l.b16 %v3195
      %v3243 = vunpack.c.h.b16 %v3195
      %v3244 = vpack.c.b16 %v3212, %v3212
      %v3245 = vpack.c.b16 %v3213, %v3213
      %v3246 = vpack.c.b16 %v3214, %v3214
      %v3247 = vpack.c.b16 %v3215, %v3215
      %v3248 = vpack.c.b16 %v3216, %v3216
      %v3249 = vpack.c.b16 %v3217, %v3217
      %v3250 = vpack.c.b16 %v3218, %v3218
      %v3251 = vpack.c.b16 %v3219, %v3219
      %v3252 = vpack.c.b16 %v3220, %v3220
      %v3253 = vpack.c.b16 %v3221, %v3221
      %v3254 = vpack.c.b16 %v3222, %v3222
      %v3255 = vpack.c.b16 %v3223, %v3223
      %v3256 = vpack.c.b16 %v3224, %v3224
      %v3257 = vpack.c.b16 %v3225, %v3225
      %v3258 = vpack.c.b16 %v3226, %v3226
      %v3259 = vpack.c.b16 %v3227, %v3227
      %v3260 = vpack.c.b16 %v3228, %v3228
      %v3261 = vpack.c.b16 %v3229, %v3229
      %v3262 = vpack.c.b16 %v3230, %v3230
      %v3263 = vpack.c.b16 %v3231, %v3231
      %v3264 = vpack.c.b16 %v3232, %v3232
      %v3265 = vpack.c.b16 %v3233, %v3233
      %v3266 = vpack.c.b16 %v3234, %v3234
      %v3267 = vpack.c.b16 %v3235, %v3235
      %v3268 = vpack.c.b16 %v3236, %v3236
      %v3269 = vpack.c.b16 %v3237, %v3237
      %v3270 = vpack.c.b16 %v3238, %v3238
      %v3271 = vpack.c.b16 %v3239, %v3239
      %v3272 = vpack.c.b16 %v3240, %v3240
      %v3273 = vpack.c.b16 %v3241, %v3241
      %v3274 = vpack.c.b16 %v3242, %v3242
      %v3275 = vpack.c.b16 %v3243, %v3243
      %vm3308 = vcmask 27648
      %3309 = vst.msk [vmem:[%s316] sm:$0xf] %vm3308, %v3244
      %3310 = vst.msk [vmem:[%s316 + $0x4] sm:$0xf] %vm3308, %v3245
      %3311 = vst.msk [vmem:[%s316 + $0x8] sm:$0xf] %vm3308, %v3246
      %3312 = vst.msk [vmem:[%s316 + $0xc] sm:$0xf] %vm3308, %v3247
      %3313 = vst.msk [vmem:[%s316 + $0x10] sm:$0xf] %vm3308, %v3248
      %3314 = vst.msk [vmem:[%s316 + $0x14] sm:$0xf] %vm3308, %v3249
      %3315 = vst.msk [vmem:[%s316 + $0x18] sm:$0xf] %vm3308, %v3250
      %3316 = vst.msk [vmem:[%s316 + $0x1c] sm:$0xf] %vm3308, %v3251
      %3317 = vst.msk [vmem:[%s316 + $0x20] sm:$0xf] %vm3308, %v3252
      %3318 = vst.msk [vmem:[%s316 + $0x24] sm:$0xf] %vm3308, %v3253
      %3319 = vst.msk [vmem:[%s316 + $0x28] sm:$0xf] %vm3308, %v3254
      %3320 = vst.msk [vmem:[%s316 + $0x2c] sm:$0xf] %vm3308, %v3255
      %3321 = vst.msk [vmem:[%s316 + $0x30] sm:$0xf] %vm3308, %v3256
      %3322 = vst.msk [vmem:[%s316 + $0x34] sm:$0xf] %vm3308, %v3257
      %3323 = vst.msk [vmem:[%s316 + $0x38] sm:$0xf] %vm3308, %v3258
      %3324 = vst.msk [vmem:[%s316 + $0x3c] sm:$0xf] %vm3308, %v3259
      %3325 = vst.msk [vmem:[%s316 + $0x40] sm:$0xf] %vm3308, %v3260
      %3326 = vst.msk [vmem:[%s316 + $0x44] sm:$0xf] %vm3308, %v3261
      %3327 = vst.msk [vmem:[%s316 + $0x48] sm:$0xf] %vm3308, %v3262
      %3328 = vst.msk [vmem:[%s316 + $0x4c] sm:$0xf] %vm3308, %v3263
      %3329 = vst.msk [vmem:[%s316 + $0x50] sm:$0xf] %vm3308, %v3264
      %3330 = vst.msk [vmem:[%s316 + $0x54] sm:$0xf] %vm3308, %v3265
      %3331 = vst.msk [vmem:[%s316 + $0x58] sm:$0xf] %vm3308, %v3266
      %3332 = vst.msk [vmem:[%s316 + $0x5c] sm:$0xf] %vm3308, %v3267
      %3333 = vst.msk [vmem:[%s316 + $0x60] sm:$0xf] %vm3308, %v3268
      %3334 = vst.msk [vmem:[%s316 + $0x64] sm:$0xf] %vm3308, %v3269
      %3335 = vst.msk [vmem:[%s316 + $0x68] sm:$0xf] %vm3308, %v3270
      %3336 = vst.msk [vmem:[%s316 + $0x6c] sm:$0xf] %vm3308, %v3271
      %3337 = vst.msk [vmem:[%s316 + $0x70] sm:$0xf] %vm3308, %v3272
      %3338 = vst.msk [vmem:[%s316 + $0x74] sm:$0xf] %vm3308, %v3273
      %3339 = vst.msk [vmem:[%s316 + $0x78] sm:$0xf] %vm3308, %v3274
      %3340 = vst.msk [vmem:[%s316 + $0x7c] sm:$0xf] %vm3308, %v3275
      %v3341 = vsel %vm324, %v3148, 0.0
      %v3342 = vsel %vm324, %v3149, 0.0
      %v3343 = vadd.f32 %v3341, %v3342
      %v3344 = vsel %vm324, %v3150, 0.0
      %v3345 = vadd.f32 %v3343, %v3344
      %v3346 = vsel %vm324, %v3151, 0.0
      %v3347 = vadd.f32 %v3345, %v3346
      %v3348 = vsel %vm324, %v3152, 0.0
      %v3349 = vadd.f32 %v3347, %v3348
      %v3350 = vsel %vm324, %v3153, 0.0
      %v3351 = vadd.f32 %v3349, %v3350
      %v3352 = vsel %vm324, %v3154, 0.0
      %v3353 = vadd.f32 %v3351, %v3352
      %v3354 = vsel %vm324, %v3155, 0.0
      %v3355 = vadd.f32 %v3353, %v3354
      %v3356 = vsel %vm324, %v3156, 0.0
      %v3357 = vadd.f32 %v3355, %v3356
      %v3358 = vsel %vm324, %v3157, 0.0
      %v3359 = vadd.f32 %v3357, %v3358
      %v3360 = vsel %vm324, %v3158, 0.0
      %v3361 = vadd.f32 %v3359, %v3360
      %v3362 = vsel %vm324, %v3159, 0.0
      %v3363 = vadd.f32 %v3361, %v3362
      %v3364 = vsel %vm324, %v3160, 0.0
      %v3365 = vadd.f32 %v3363, %v3364
      %v3366 = vsel %vm324, %v3161, 0.0
      %v3367 = vadd.f32 %v3365, %v3366
      %v3368 = vsel %vm324, %v3162, 0.0
      %v3369 = vadd.f32 %v3367, %v3368
      %v3370 = vsel %vm324, %v3163, 0.0
      %v3371 = vadd.f32 %v3369, %v3370
      %v3372 = vsel %vm324, %v3164, 0.0
      %v3373 = vadd.f32 %v3371, %v3372
      %v3374 = vsel %vm324, %v3165, 0.0
      %v3375 = vadd.f32 %v3373, %v3374
      %v3376 = vsel %vm324, %v3166, 0.0
      %v3377 = vadd.f32 %v3375, %v3376
      %v3378 = vsel %vm324, %v3167, 0.0
      %v3379 = vadd.f32 %v3377, %v3378
      %v3380 = vsel %vm324, %v3168, 0.0
      %v3381 = vadd.f32 %v3379, %v3380
      %v3382 = vsel %vm324, %v3169, 0.0
      %v3383 = vadd.f32 %v3381, %v3382
      %v3384 = vsel %vm324, %v3170, 0.0
      %v3385 = vadd.f32 %v3383, %v3384
      %v3386 = vsel %vm324, %v3171, 0.0
      %v3387 = vadd.f32 %v3385, %v3386
      %v3388 = vsel %vm324, %v3172, 0.0
      %v3389 = vadd.f32 %v3387, %v3388
      %v3390 = vsel %vm324, %v3173, 0.0
      %v3391 = vadd.f32 %v3389, %v3390
      %v3392 = vsel %vm324, %v3174, 0.0
      %v3393 = vadd.f32 %v3391, %v3392
      %v3394 = vsel %vm324, %v3175, 0.0
      %v3395 = vadd.f32 %v3393, %v3394
      %v3396 = vsel %vm324, %v3176, 0.0
      %v3397 = vadd.f32 %v3395, %v3396
      %v3398 = vsel %vm324, %v3177, 0.0
      %v3399 = vadd.f32 %v3397, %v3398
      %v3400 = vsel %vm324, %v3178, 0.0
      %v3401 = vadd.f32 %v3399, %v3400
      %v3402 = vsel %vm324, %v3179, 0.0
      %v3403 = vadd.f32 %v3401, %v3402
      %v3404 = vrot.slane %v3403, 4
      %v3405 = vadd.f32 %v3403, %v3404
      %v3406 = vrot.slane %v3405, 2
      %v3407 = vadd.f32 %v3405, %v3406
      %v3408 = vrot.slane %v3407, 1
      %v3409 = vadd.f32 %v3407, %v3408
      %3410 = vst.msk [vmem:[%s319] sm:$0x1] %vm333, %v3409
      %v3411 = vmul.f32 %v3148, %v3148
      %v3412 = vmul.f32 %v3149, %v3149
      %v3413 = vmul.f32 %v3150, %v3150
      %v3414 = vmul.f32 %v3151, %v3151
      %v3415 = vmul.f32 %v3152, %v3152
      %v3416 = vmul.f32 %v3153, %v3153
      %v3417 = vmul.f32 %v3154, %v3154
      %v3418 = vmul.f32 %v3155, %v3155
      %v3419 = vmul.f32 %v3156, %v3156
      %v3420 = vmul.f32 %v3157, %v3157
      %v3421 = vmul.f32 %v3158, %v3158
      %v3422 = vmul.f32 %v3159, %v3159
      %v3423 = vmul.f32 %v3160, %v3160
      %v3424 = vmul.f32 %v3161, %v3161
      %v3425 = vmul.f32 %v3162, %v3162
      %v3426 = vmul.f32 %v3163, %v3163
      %v3427 = vmul.f32 %v3164, %v3164
      %v3428 = vmul.f32 %v3165, %v3165
      %v3429 = vmul.f32 %v3166, %v3166
      %v3430 = vmul.f32 %v3167, %v3167
      %v3431 = vmul.f32 %v3168, %v3168
      %v3432 = vmul.f32 %v3169, %v3169
      %v3433 = vmul.f32 %v3170, %v3170
      %v3434 = vmul.f32 %v3171, %v3171
      %v3435 = vmul.f32 %v3172, %v3172
      %v3436 = vmul.f32 %v3173, %v3173
      %v3437 = vmul.f32 %v3174, %v3174
      %v3438 = vmul.f32 %v3175, %v3175
      %v3439 = vmul.f32 %v3176, %v3176
      %v3440 = vmul.f32 %v3177, %v3177
      %v3441 = vmul.f32 %v3178, %v3178
      %v3442 = vmul.f32 %v3179, %v3179
      %v3443 = vsel %vm324, %v3411, 0.0
      %v3444 = vsel %vm324, %v3412, 0.0
      %v3445 = vadd.f32 %v3443, %v3444
      %v3446 = vsel %vm324, %v3413, 0.0
      %v3447 = vadd.f32 %v3445, %v3446
      %v3448 = vsel %vm324, %v3414, 0.0
      %v3449 = vadd.f32 %v3447, %v3448
      %v3450 = vsel %vm324, %v3415, 0.0
      %v3451 = vadd.f32 %v3449, %v3450
      %v3452 = vsel %vm324, %v3416, 0.0
      %v3453 = vadd.f32 %v3451, %v3452
      %v3454 = vsel %vm324, %v3417, 0.0
      %v3455 = vadd.f32 %v3453, %v3454
      %v3456 = vsel %vm324, %v3418, 0.0
      %v3457 = vadd.f32 %v3455, %v3456
      %v3458 = vsel %vm324, %v3419, 0.0
      %v3459 = vadd.f32 %v3457, %v3458
      %v3460 = vsel %vm324, %v3420, 0.0
      %v3461 = vadd.f32 %v3459, %v3460
      %v3462 = vsel %vm324, %v3421, 0.0
      %v3463 = vadd.f32 %v3461, %v3462
      %v3464 = vsel %vm324, %v3422, 0.0
      %v3465 = vadd.f32 %v3463, %v3464
      %v3466 = vsel %vm324, %v3423, 0.0
      %v3467 = vadd.f32 %v3465, %v3466
      %v3468 = vsel %vm324, %v3424, 0.0
      %v3469 = vadd.f32 %v3467, %v3468
      %v3470 = vsel %vm324, %v3425, 0.0
      %v3471 = vadd.f32 %v3469, %v3470
      %v3472 = vsel %vm324, %v3426, 0.0
      %v3473 = vadd.f32 %v3471, %v3472
      %v3474 = vsel %vm324, %v3427, 0.0
      %v3475 = vadd.f32 %v3473, %v3474
      %v3476 = vsel %vm324, %v3428, 0.0
      %v3477 = vadd.f32 %v3475, %v3476
      %v3478 = vsel %vm324, %v3429, 0.0
      %v3479 = vadd.f32 %v3477, %v3478
      %v3480 = vsel %vm324, %v3430, 0.0
      %v3481 = vadd.f32 %v3479, %v3480
      %v3482 = vsel %vm324, %v3431, 0.0
      %v3483 = vadd.f32 %v3481, %v3482
      %v3484 = vsel %vm324, %v3432, 0.0
      %v3485 = vadd.f32 %v3483, %v3484
      %v3486 = vsel %vm324, %v3433, 0.0
      %v3487 = vadd.f32 %v3485, %v3486
      %v3488 = vsel %vm324, %v3434, 0.0
      %v3489 = vadd.f32 %v3487, %v3488
      %v3490 = vsel %vm324, %v3435, 0.0
      %v3491 = vadd.f32 %v3489, %v3490
      %v3492 = vsel %vm324, %v3436, 0.0
      %v3493 = vadd.f32 %v3491, %v3492
      %v3494 = vsel %vm324, %v3437, 0.0
      %v3495 = vadd.f32 %v3493, %v3494
      %v3496 = vsel %vm324, %v3438, 0.0
      %v3497 = vadd.f32 %v3495, %v3496
      %v3498 = vsel %vm324, %v3439, 0.0
      %v3499 = vadd.f32 %v3497, %v3498
      %v3500 = vsel %vm324, %v3440, 0.0
      %v3501 = vadd.f32 %v3499, %v3500
      %v3502 = vsel %vm324, %v3441, 0.0
      %v3503 = vadd.f32 %v3501, %v3502
      %v3504 = vsel %vm324, %v3442, 0.0
      %v3505 = vadd.f32 %v3503, %v3504
      %v3506 = vrot.slane %v3505, 4
      %v3507 = vadd.f32 %v3505, %v3506
      %v3508 = vrot.slane %v3507, 2
      %v3509 = vadd.f32 %v3507, %v3508
      %v3510 = vrot.slane %v3509, 1
      %v3511 = vadd.f32 %v3509, %v3510
      %3512 = vst.msk [vmem:[%s322] sm:$0x1] %vm333, %v3511
      %p3513 = scmp.lt.s32.totalorder %s20, 1
      %s3514 = scalar_select %p3513, %s20, 1
      %s3515 = smul.addr %s3514, 32
      %s3516 = smul.addr %s3515, 4
      %s3517 = scalar_lea.vmem %s6, %s3516
      %p3518 = scmp.lt.s32.totalorder %s20, 1
      %s3519 = scalar_select %p3518, %s20, 1
      %s3520 = scalar_lea.vmem %s7, %s3519
      %p3521 = scmp.lt.s32.totalorder %s20, 1
      %s3522 = scalar_select %p3521, %s20, 1
      %s3523 = scalar_lea.vmem %s8, %s3522
      // Predicated region
      $region45: #{bottleneck_forward.5} parent=43 // pred_check
        %p3524 = pneg %p169
      $region46: #{bottleneck_forward.5} parent=43 // pred_check_branch
        %3526 = sbr.rel (%p3524) target = $region48
      $region47: #{bottleneck_forward.5} parent=43 // pred_region
        _
      $region48: #{bottleneck_forward.5} parent=43 // pred_fallthru
        _
      // Predicated region
      $region49: #{bottleneck_forward.5} parent=43 // pred_check
        %p3527 = pneg %p195
      $region50: #{bottleneck_forward.5} parent=43 // pred_check_branch
        %3529 = sbr.rel (%p3527) target = $region52
      $region51: #{bottleneck_forward.5} parent=43 // pred_region
        _
      $region52: #{bottleneck_forward.5} parent=43 // pred_fallthru
        _
      // Predicated region
      $region53: #{bottleneck_forward.5} parent=43 // pred_check
        %p3530 = pneg %p221
      $region54: #{bottleneck_forward.5} parent=43 // pred_check_branch
        %3532 = sbr.rel (%p3530) target = $region56
      $region55: #{bottleneck_forward.5} parent=43 // pred_region
        _
      $region56: #{bottleneck_forward.5} parent=43 // pred_fallthru
        _
    $region44: #{bottleneck_forward.5} parent=5 // pred_fallthru
      _
    %p3533 = scmp.le.s32.totalorder 2, %s15
    // Predicated region
    $region57: #{bottleneck_forward.5} parent=5 // pred_check
      %p3534 = pneg %p3533
    $region58: #{bottleneck_forward.5} parent=5 // pred_check_branch
      %3536 = sbr.rel (%p3534) target = $region60
    $region59: #{bottleneck_forward.5} parent=5 // pred_region
      %s3537 = ssub.s32 %s15, 2
      // Predicated region
      $region61: #{bottleneck_forward.5} parent=59 // pred_check
        %p3538 = pneg %p175
      $region62: #{bottleneck_forward.5} parent=59 // pred_check_branch
        %3540 = sbr.rel (%p3538) target = $region64
      $region63: #{bottleneck_forward.5} parent=59 // pred_region
        %p3541 = scmp.lt.s32.totalorder %s21, 1
        %s3542 = scalar_select %p3541, %s21, 1
        %s3543 = smul.addr %s3542, 32
        %s3544 = smul.addr %s3543, 4
        %s3545 = scalar_lea.vmem %s6, %s3544
      $region64: #{bottleneck_forward.5} parent=59 // pred_fallthru
        _
      // Predicated region
      $region65: #{bottleneck_forward.5} parent=59 // pred_check
        %p3546 = pneg %p201
      $region66: #{bottleneck_forward.5} parent=59 // pred_check_branch
        %3548 = sbr.rel (%p3546) target = $region68
      $region67: #{bottleneck_forward.5} parent=59 // pred_region
        %p3549 = scmp.lt.s32.totalorder %s21, 1
        %s3550 = scalar_select %p3549, %s21, 1
        %s3551 = scalar_lea.vmem %s7, %s3550
      $region68: #{bottleneck_forward.5} parent=59 // pred_fallthru
        _
      // Predicated region
      $region69: #{bottleneck_forward.5} parent=59 // pred_check
        %p3552 = pneg %p227
      $region70: #{bottleneck_forward.5} parent=59 // pred_check_branch
        %3554 = sbr.rel (%p3552) target = $region72
      $region71: #{bottleneck_forward.5} parent=59 // pred_region
        %p3555 = scmp.lt.s32.totalorder %s21, 1
        %s3556 = scalar_select %p3555, %s21, 1
        %s3557 = scalar_lea.vmem %s8, %s3556
      $region72: #{bottleneck_forward.5} parent=59 // pred_fallthru
        _
    $region60: #{bottleneck_forward.5} parent=5 // pred_fallthru
      _
  $region6: #{bottleneck_forward.5} parent=0 // loop_footer
    %s19 = sadd.s32 1, %s15
  $region7: #{bottleneck_forward.5} parent=0 // loop_footer_branch
    %14 = sbr.rel target = $region3
  $region8: #{bottleneck_forward.5} parent=0 // loop_exit
    _

</llo_original>
